<compile_context>
chip_gen: v7x
topology: tpu7x:2x2x1
jax: 0.10.0
libtpu: 0.0.40
codegen_flags: <defaults>
</compile_context>

<pallas_src>
import functools

import numpy as np

import jax
import jax.numpy as jnp
from jax.experimental import pallas as pl
from jax.experimental.pallas import tpu as pltpu


def _round_up(x, m=128):
    return ((x + m - 1) // m) * m


# ---------------------------------------------------------------------------
# Fused kernel
# ---------------------------------------------------------------------------
def _conv_down_fused_kernel(*refs, layers, compute_dtype):
    """Full Conv_down stack for one batch element, activations resident in VMEM.

    refs = [x, mask] + [w_i, b_i (, sel_i if strided)] per layer + [out, col, act]

      x    : (1, c_in, na0)         flat zero-padded input, lanes = rup((H+2)(W+2))
      mask : (1, na0)               1 at interior positions, 0 elsewhere
      w_i  : (cout, 9*cin)          weights, im2col K order (dy*3+dx)*cin + ci
      b_i  : (cout, 1)              f32 bias (lane-broadcast)
      sel_i: (na_in, na_out)        0/1 subsample matrix for strided layers
      out  : (1, c_in, na_last)     final conv output, flat padded layout
      col  : (9*64, na0)            im2col staging scratch (compute dtype)
      act  : (64, na0)              resident activation scratch (compute dtype)

    layers: static tuple of (cin, cout, stride, relu, h_in, w_in).
    """
    it = iter(refs)
    x_ref = next(it)
    mask_ref = next(it)
    layer_refs = []
    for (cin, cout, stride, relu, h, w) in layers:
        w_ref = next(it)
        b_ref = next(it)
        sel_ref = next(it) if stride > 1 else None
        layer_refs.append((w_ref, b_ref, sel_ref))
    o_ref = next(it)
    col_ref = next(it)
    act_ref = next(it)

    n_layers = len(layers)
    src = x_ref[0]                                    # (c_in, na0), compute dtype

    for li, (cin, cout, stride, relu, h, w) in enumerate(layers):
        w_ref, b_ref, sel_ref = layer_refs[li]
        wp = w + 2
        na = _round_up((h + 2) * (w + 2), 128)        # lane width of this stage
        k = 9 * cin
        is_last = li == n_layers - 1

        # Tap t = dy*3+dx of a zero-padded 3x3 conv in flat padded layout is a
        # lane rotation of the activation by (dy-1)*(w+2) + (dx-1); the zero
        # halo (and zero lane tail) makes the borders exact at every interior
        # position, and garbage at halo/tail positions is masked away below.
        offs = tuple((dy - 1) * wp + (dx - 1)
                     for dy in range(3) for dx in range(3))

        def tap(t):
            shift = (-offs[t]) % na
            return pltpu.roll(src, shift, 1) if shift else src

        if cin % 8 == 0:
            # Stage the 9 taps (sublane offsets multiples of 64 -> aligned,
            # lane width multiple of 128 -> unmasked stores), then ONE MXU
            # matmul with K = 9*cin and the spatial dim on lanes.
            for t in range(9):
                col_ref[t * cin:(t + 1) * cin, 0:na] = tap(t)
            acc = jnp.dot(w_ref[...], col_ref[0:k, 0:na],
                          preferred_element_type=jnp.float32)
        else:
            # Tiny first layer (cin == network input channels): 9 accumulating
            # K=cin dots avoid sublane-misaligned staging entirely.
            acc = jnp.dot(w_ref[:, 0:cin], tap(0),
                          preferred_element_type=jnp.float32)
            for t in range(1, 9):
                acc = acc + jnp.dot(w_ref[:, t * cin:(t + 1) * cin], tap(t),
                                    preferred_element_type=jnp.float32)

        acc = acc + b_ref[...]                         # (cout, na) + (cout, 1)
        if relu:
            acc = jnp.maximum(acc, 0.0)

        if is_last:
            # Lane-dense result store; wrapper strips the halo (-> NCHW).
            o_ref[0] = acc.astype(o_ref.dtype)
        else:
            act = acc.astype(compute_dtype)
            if stride > 1:
                # Exact 0/1 subsample into the next (smaller) padded-flat
                # stage; zero selector rows/cols keep halo and lane tail zero.
                act = jnp.dot(act, sel_ref[...],
                              preferred_element_type=jnp.float32
                              ).astype(compute_dtype)
                h2, w2 = layers[li + 1][4], layers[li + 1][5]
                na = _round_up((h2 + 2) * (w2 + 2), 128)
            else:
                # Keep halo + lane tail zero so the next layer reads zeros.
                act = act * mask_ref[...]
            act_ref[0:cout, 0:na] = act
            src = act_ref[0:cout, 0:na]


# ---------------------------------------------------------------------------
# Wrapper (NCHW in / NCHW out, like the PyTorch module)
# ---------------------------------------------------------------------------
def _layer_config(c_in, up_factor, H, W):
    if up_factor == 4:
        chans = [("body0", c_in, 64, 1, True), ("body1", 64, 64, 1, True),
                 ("body2", 64, 64, 1, True),
                 ("tail0", 64, 64, 2, False), ("tail1", 64, 64, 2, False),
                 ("tail2", 64, c_in, 1, False)]
    elif up_factor in (2, 3):
        chans = [("body0", c_in, 64, 1, True), ("body1", 64, 64, 1, True),
                 ("body2", 64, 64, 1, True),
                 ("tail0", 64, 64, up_factor, False),
                 ("tail1", 64, c_in, 1, False)]
    else:
        raise ValueError("up_factor must be 2, 3 or 4")
    cfg = []
    h, w = H, W
    for (name, cin, cout, s, relu) in chans:
        cfg.append((name, cin, cout, s, relu, h, w))
        h = (h - 1) // s + 1
        w = (w - 1) // s + 1
    return cfg, (h, w)


def _make_stride_selector(h, w, stride, dtype):
    """0/1 matrix mapping padded-flat stride-1 positions of an (h, w) stage to
    padded-flat positions of the strided output stage (halo / tail cols = 0)."""
    ho = (h - 1) // stride + 1
    wo = (w - 1) // stride + 1
    wp, wop = w + 2, wo + 2
    na_in = _round_up((h + 2) * wp, 128)
    na_out = _round_up((ho + 2) * wop, 128)
    sel = np.zeros((na_in, na_out), np.float32)
    for oy in range(ho):
        for ox in range(wo):
            sel[(oy * stride + 1) * wp + (ox * stride + 1),
                (oy + 1) * wop + (ox + 1)] = 1.0
    return jnp.asarray(sel, dtype)


def conv_down_forward(x_nchw, params, up_factor, compute_dtype=jnp.bfloat16):
    N, c_in, H, W = x_nchw.shape
    cfg, (ho, wo) = _layer_config(c_in, up_factor, H, W)
    n0 = (H + 2) * (W + 2)
    na0 = _round_up(n0, 128)
    n_out = (ho + 2) * (wo + 2)
    na_out = _round_up(n_out, 128)

    # Pad the network input halo ONCE, flatten spatial onto lanes, pad lanes.
    x_pad = jnp.pad(x_nchw, ((0, 0), (0, 0), (1, 1), (1, 1)))
    x_pad = x_pad.reshape(N, c_in, n0)
    x_pad = jnp.pad(x_pad, ((0, 0), (0, 0), (0, na0 - n0))).astype(compute_dtype)

    # Interior mask of the (H, W) stage; all stride-1 hidden layers live there.
    m2 = np.zeros((H + 2, W + 2), np.float32)
    m2[1:H + 1, 1:W + 1] = 1.0
    m = np.zeros((1, na0), np.float32)
    m[0, :n0] = m2.reshape(-1)
    mask0 = jnp.asarray(m, compute_dtype)

    inputs = [x_pad, mask0]
    in_specs = [pl.BlockSpec((1, c_in, na0), lambda b: (b, 0, 0)),
                pl.BlockSpec((1, na0), lambda b: (0, 0))]

    layers = []
    for idx, (name, cin, cout, s, relu, h, w) in enumerate(cfg):
        is_last = idx == len(cfg) - 1
        if s == 1 and not is_last:
            assert (h, w) == (H, W), "hidden stride-1 layer off the (H, W) stage"
        wgt, bias = params[name]
        # (3,3,cin,cout) -> (cout, 9*cin); row-major flatten == im2col K order.
        w_mat = jnp.transpose(wgt.reshape(9 * cin, cout)).astype(compute_dtype)
        b_col = bias.reshape(cout, 1).astype(jnp.float32)
        inputs += [w_mat, b_col]
        in_specs += [pl.BlockSpec((cout, 9 * cin), lambda b: (0, 0)),
                     pl.BlockSpec((cout, 1), lambda b: (0, 0))]
        if s > 1:
            sel = _make_stride_selector(h, w, s, compute_dtype)
            inputs.append(sel)
            in_specs.append(pl.BlockSpec(sel.shape, lambda b: (0, 0)))
        layers.append((cin, cout, s, relu, h, w))

    kernel = functools.partial(_conv_down_fused_kernel,
                               layers=tuple(layers),
                               compute_dtype=compute_dtype)

    # Explicit VMEM budget: scratch + (double-buffered) IO + slack.
    itemsize = np.dtype(compute_dtype).itemsize
    scratch_bytes = (9 * 64 + 64) * na0 * itemsize
    io_bytes = sum(int(np.prod(a.shape)) * a.dtype.itemsize for a in inputs)
    io_bytes += c_in * na_out * x_nchw.dtype.itemsize
    vmem_limit = int(min(100 * 1024 * 1024,
                         max(32 * 1024 * 1024,
                             2 * scratch_bytes + 4 * io_bytes + (4 << 20))))

    out_pad = pl.pallas_call(
        kernel,
        out_shape=jax.ShapeDtypeStruct((N, c_in, na_out), x_nchw.dtype),
        grid=(N,),
        in_specs=in_specs,
        out_specs=pl.BlockSpec((1, c_in, na_out), lambda b: (b, 0, 0)),
        scratch_shapes=[
            pltpu.VMEM((9 * 64, na0), compute_dtype),   # im2col staging
            pltpu.VMEM((64, na0), compute_dtype),       # resident activation
        ],
        compiler_params=pltpu.CompilerParams(
            dimension_semantics=("parallel",),          # batch across TCs
            vmem_limit_bytes=vmem_limit),
    )(*inputs)

    out = out_pad[:, :, :n_out].reshape(N, c_in, ho + 2, wo + 2)
    return out[:, :, 1:ho + 1, 1:wo + 1]                # NCHW, halo removed


# ---------------------------------------------------------------------------
# Params + pure-JAX reference (for sanity check)
# ---------------------------------------------------------------------------
def _init_conv(key, cin, cout, scale=0.05):
    kw, kb = jax.random.split(key)
    w = jax.random.normal(kw, (3, 3, cin, cout), jnp.float32) * scale
    b = jax.random.normal(kb, (cout,), jnp.float32) * scale
    return w, b


def init_conv_down_params(key, c_in, up_factor):
    keys = jax.random.split(key, 6)
    params = {"body0": _init_conv(keys[0], c_in, 64),
              "body1": _init_conv(keys[1], 64, 64),
              "body2": _init_conv(keys[2], 64, 64)}
    if up_factor == 4:
        params["tail0"] = _init_conv(keys[3], 64, 64)
        params["tail1"] = _init_conv(keys[4], 64, 64)
        params["tail2"] = _init_conv(keys[5], 64, c_in)
    elif up_factor in (2, 3):
        params["tail0"] = _init_conv(keys[3], 64, 64)
        params["tail1"] = _init_conv(keys[4], 64, c_in)
    else:
        raise ValueError("up_factor must be 2, 3 or 4")
    return params


def _ref_conv3x3(x, w, b, stride=1):
    y = jax.lax.conv_general_dilated(
        x, w, window_strides=(stride, stride), padding=((1, 1), (1, 1)),
        dimension_numbers=("NHWC", "HWIO", "NHWC"))
    return y + b.reshape(1, 1, 1, -1)


def conv_down_reference(x_nchw, params, up_factor):
    x = jnp.transpose(x_nchw, (0, 2, 3, 1))
    x = jax.nn.relu(_ref_conv3x3(x, *params["body0"]))
    x = jax.nn.relu(_ref_conv3x3(x, *params["body1"]))
    x = jax.nn.relu(_ref_conv3x3(x, *params["body2"]))
    if up_factor == 4:
        x = _ref_conv3x3(x, *params["tail0"], stride=2)
        x = _ref_conv3x3(x, *params["tail1"], stride=2)
        x = _ref_conv3x3(x, *params["tail2"])
    else:
        x = _ref_conv3x3(x, *params["tail0"], stride=up_factor)
        x = _ref_conv3x3(x, *params["tail1"])
    return jnp.transpose(x, (0, 3, 1, 2))


if __name__ == "__main__":
    c_in = 4
    key = jax.random.PRNGKey(0)
    k_x, k_p = jax.random.split(key)
    x = jax.random.normal(k_x, (2, c_in, 16, 16), jnp.float32)       # NCHW

    for up_factor, expect_hw in ((2, (8, 8)), (4, (4, 4))):
        params = init_conv_down_params(k_p, c_in, up_factor)
        ref = jax.block_until_ready(conv_down_reference(x, params, up_factor))

        # Exact-layout sanity check: f32 compute path vs XLA conv reference.
        out_f32 = jax.block_until_ready(
            conv_down_forward(x, params, up_factor, compute_dtype=jnp.float32))
        assert out_f32.shape == (2, c_in) + expect_hw, out_f32.shape
        err = float(jnp.max(jnp.abs(out_f32 - ref)))
        assert err < 1e-3, f"f32 path mismatch (up_factor={up_factor}): {err}"

        # Default fast path: bf16 MXU operands / activations, f32 accumulate.
        out = jax.block_until_ready(conv_down_forward(x, params, up_factor))
        assert out.shape == (2, c_in) + expect_hw, out.shape
        err = float(jnp.max(jnp.abs(out - ref)))
        assert err < 8e-2, f"bf16 path mismatch (up_factor={up_factor}): {err}"

    print("KERNEL_OK")
</pallas_src>

<mosaic_0001>
module attributes {stable_mosaic.version = 11 : i64} {
  func.func @_conv_down_fused_kernel(%arg0: i32, %arg1: memref<1x4x384xf32, #tpu.memory_space<vmem>>, %arg2: memref<1x384xf32, #tpu.memory_space<vmem>>, %arg3: memref<64x36xf32, #tpu.memory_space<vmem>>, %arg4: memref<64x1xf32, #tpu.memory_space<vmem>>, %arg5: memref<64x576xf32, #tpu.memory_space<vmem>>, %arg6: memref<64x1xf32, #tpu.memory_space<vmem>>, %arg7: memref<64x576xf32, #tpu.memory_space<vmem>>, %arg8: memref<64x1xf32, #tpu.memory_space<vmem>>, %arg9: memref<64x576xf32, #tpu.memory_space<vmem>>, %arg10: memref<64x1xf32, #tpu.memory_space<vmem>>, %arg11: memref<384x128xf32, #tpu.memory_space<vmem>>, %arg12: memref<4x576xf32, #tpu.memory_space<vmem>>, %arg13: memref<4x1xf32, #tpu.memory_space<vmem>>, %arg14: memref<1x4x128xf32, #tpu.memory_space<vmem>>, %arg15: memref<576x384xf32, #tpu.memory_space<vmem>>, %arg16: memref<64x384xf32, #tpu.memory_space<vmem>>) attributes {dimension_semantics = [#tpu.dimension_semantics<parallel>], iteration_bounds = array<i64: 2>, scalar_prefetch = 0 : i64, scratch_operands = 2 : i64, tpu.core_type = #tpu.core_type<tc>, window_params = [{transform_indices = @transform_0, window_bounds = array<i64: 1, 4, 384>}, {pipeline_mode = #tpu.pipeline_mode<synchronous>, transform_indices = @transform_1, window_bounds = array<i64: 1, 384>}, {pipeline_mode = #tpu.pipeline_mode<synchronous>, transform_indices = @transform_2, window_bounds = array<i64: 64, 36>}, {pipeline_mode = #tpu.pipeline_mode<synchronous>, transform_indices = @transform_3, window_bounds = array<i64: 64, 1>}, {pipeline_mode = #tpu.pipeline_mode<synchronous>, transform_indices = @transform_4, window_bounds = array<i64: 64, 576>}, {pipeline_mode = #tpu.pipeline_mode<synchronous>, transform_indices = @transform_5, window_bounds = array<i64: 64, 1>}, {pipeline_mode = #tpu.pipeline_mode<synchronous>, transform_indices = @transform_6, window_bounds = array<i64: 64, 576>}, {pipeline_mode = #tpu.pipeline_mode<synchronous>, transform_indices = @transform_7, window_bounds = array<i64: 64, 1>}, {pipeline_mode = #tpu.pipeline_mode<synchronous>, transform_indices = @transform_8, window_bounds = array<i64: 64, 576>}, {pipeline_mode = #tpu.pipeline_mode<synchronous>, transform_indices = @transform_9, window_bounds = array<i64: 64, 1>}, {pipeline_mode = #tpu.pipeline_mode<synchronous>, transform_indices = @transform_10, window_bounds = array<i64: 384, 128>}, {pipeline_mode = #tpu.pipeline_mode<synchronous>, transform_indices = @transform_11, window_bounds = array<i64: 4, 576>}, {pipeline_mode = #tpu.pipeline_mode<synchronous>, transform_indices = @transform_12, window_bounds = array<i64: 4, 1>}, {transform_indices = @transform_13, window_bounds = array<i64: 1, 4, 128>}]} {
    %c0 = arith.constant 0 : index
    %c0_0 = arith.constant 0 : index
    %c0_1 = arith.constant 0 : index
    %0 = vector.load %arg1[%c0, %c0_0, %c0_1] : memref<1x4x384xf32, #tpu.memory_space<vmem>>, vector<1x4x384xf32>
    %1 = vector.shape_cast %0 : vector<1x4x384xf32> to vector<4x384xf32>
    %c0_2 = arith.constant 0 : index
    %c0_3 = arith.constant 0 : index
    %2 = vector.load %arg3[%c0_2, %c0_3] : memref<64x36xf32, #tpu.memory_space<vmem>>, vector<64x4xf32>
    %c19_i32 = arith.constant 19 : i32
    %3 = tpu.dynamic_rotate %1 by %c19_i32 dim 1 : vector<4x384xf32>, i32 -> vector<4x384xf32>
    %cst = arith.constant dense<0.000000e+00> : vector<64x384xf32>
    %4 = tpu.matmul %2, %3, %cst {dimension_numbers = #tpu.dot_dimension_numbers<[1], [0], [0], [1], [0, 0, 1, 1], [], []>} : vector<64x4xf32>, vector<4x384xf32>, vector<64x384xf32> -> vector<64x384xf32>
    %c0_4 = arith.constant 0 : index
    %c4 = arith.constant 4 : index
    %5 = vector.load %arg3[%c0_4, %c4] : memref<64x36xf32, #tpu.memory_space<vmem>>, vector<64x4xf32>
    %c18_i32 = arith.constant 18 : i32
    %6 = tpu.dynamic_rotate %1 by %c18_i32 dim 1 : vector<4x384xf32>, i32 -> vector<4x384xf32>
    %cst_5 = arith.constant dense<0.000000e+00> : vector<64x384xf32>
    %7 = tpu.matmul %5, %6, %cst_5 {dimension_numbers = #tpu.dot_dimension_numbers<[1], [0], [0], [1], [0, 0, 1, 1], [], []>} : vector<64x4xf32>, vector<4x384xf32>, vector<64x384xf32> -> vector<64x384xf32>
    %8 = arith.addf %4, %7 : vector<64x384xf32>
    %c0_6 = arith.constant 0 : index
    %c8 = arith.constant 8 : index
    %9 = vector.load %arg3[%c0_6, %c8] : memref<64x36xf32, #tpu.memory_space<vmem>>, vector<64x4xf32>
    %c17_i32 = arith.constant 17 : i32
    %10 = tpu.dynamic_rotate %1 by %c17_i32 dim 1 : vector<4x384xf32>, i32 -> vector<4x384xf32>
    %cst_7 = arith.constant dense<0.000000e+00> : vector<64x384xf32>
    %11 = tpu.matmul %9, %10, %cst_7 {dimension_numbers = #tpu.dot_dimension_numbers<[1], [0], [0], [1], [0, 0, 1, 1], [], []>} : vector<64x4xf32>, vector<4x384xf32>, vector<64x384xf32> -> vector<64x384xf32>
    %12 = arith.addf %8, %11 : vector<64x384xf32>
    %c0_8 = arith.constant 0 : index
    %c12 = arith.constant 12 : index
    %13 = vector.load %arg3[%c0_8, %c12] : memref<64x36xf32, #tpu.memory_space<vmem>>, vector<64x4xf32>
    %c1_i32 = arith.constant 1 : i32
    %14 = tpu.dynamic_rotate %1 by %c1_i32 dim 1 : vector<4x384xf32>, i32 -> vector<4x384xf32>
    %cst_9 = arith.constant dense<0.000000e+00> : vector<64x384xf32>
    %15 = tpu.matmul %13, %14, %cst_9 {dimension_numbers = #tpu.dot_dimension_numbers<[1], [0], [0], [1], [0, 0, 1, 1], [], []>} : vector<64x4xf32>, vector<4x384xf32>, vector<64x384xf32> -> vector<64x384xf32>
    %16 = arith.addf %12, %15 : vector<64x384xf32>
    %c0_10 = arith.constant 0 : index
    %c16 = arith.constant 16 : index
    %17 = vector.load %arg3[%c0_10, %c16] : memref<64x36xf32, #tpu.memory_space<vmem>>, vector<64x4xf32>
    %cst_11 = arith.constant dense<0.000000e+00> : vector<64x384xf32>
    %18 = tpu.matmul %17, %1, %cst_11 {dimension_numbers = #tpu.dot_dimension_numbers<[1], [0], [0], [1], [0, 0, 1, 1], [], []>} : vector<64x4xf32>, vector<4x384xf32>, vector<64x384xf32> -> vector<64x384xf32>
    %19 = arith.addf %16, %18 : vector<64x384xf32>
    %c0_12 = arith.constant 0 : index
    %c20 = arith.constant 20 : index
    %20 = vector.load %arg3[%c0_12, %c20] : memref<64x36xf32, #tpu.memory_space<vmem>>, vector<64x4xf32>
    %c383_i32 = arith.constant 383 : i32
    %21 = tpu.dynamic_rotate %1 by %c383_i32 dim 1 : vector<4x384xf32>, i32 -> vector<4x384xf32>
    %cst_13 = arith.constant dense<0.000000e+00> : vector<64x384xf32>
    %22 = tpu.matmul %20, %21, %cst_13 {dimension_numbers = #tpu.dot_dimension_numbers<[1], [0], [0], [1], [0, 0, 1, 1], [], []>} : vector<64x4xf32>, vector<4x384xf32>, vector<64x384xf32> -> vector<64x384xf32>
    %23 = arith.addf %19, %22 : vector<64x384xf32>
    %c0_14 = arith.constant 0 : index
    %c24 = arith.constant 24 : index
    %24 = vector.load %arg3[%c0_14, %c24] : memref<64x36xf32, #tpu.memory_space<vmem>>, vector<64x4xf32>
    %c367_i32 = arith.constant 367 : i32
    %25 = tpu.dynamic_rotate %1 by %c367_i32 dim 1 : vector<4x384xf32>, i32 -> vector<4x384xf32>
    %cst_15 = arith.constant dense<0.000000e+00> : vector<64x384xf32>
    %26 = tpu.matmul %24, %25, %cst_15 {dimension_numbers = #tpu.dot_dimension_numbers<[1], [0], [0], [1], [0, 0, 1, 1], [], []>} : vector<64x4xf32>, vector<4x384xf32>, vector<64x384xf32> -> vector<64x384xf32>
    %27 = arith.addf %23, %26 : vector<64x384xf32>
    %c0_16 = arith.constant 0 : index
    %c28 = arith.constant 28 : index
    %28 = vector.load %arg3[%c0_16, %c28] : memref<64x36xf32, #tpu.memory_space<vmem>>, vector<64x4xf32>
    %c366_i32 = arith.constant 366 : i32
    %29 = tpu.dynamic_rotate %1 by %c366_i32 dim 1 : vector<4x384xf32>, i32 -> vector<4x384xf32>
    %cst_17 = arith.constant dense<0.000000e+00> : vector<64x384xf32>
    %30 = tpu.matmul %28, %29, %cst_17 {dimension_numbers = #tpu.dot_dimension_numbers<[1], [0], [0], [1], [0, 0, 1, 1], [], []>} : vector<64x4xf32>, vector<4x384xf32>, vector<64x384xf32> -> vector<64x384xf32>
    %31 = arith.addf %27, %30 : vector<64x384xf32>
    %c0_18 = arith.constant 0 : index
    %c32 = arith.constant 32 : index
    %32 = vector.load %arg3[%c0_18, %c32] : memref<64x36xf32, #tpu.memory_space<vmem>>, vector<64x4xf32>
    %c365_i32 = arith.constant 365 : i32
    %33 = tpu.dynamic_rotate %1 by %c365_i32 dim 1 : vector<4x384xf32>, i32 -> vector<4x384xf32>
    %cst_19 = arith.constant dense<0.000000e+00> : vector<64x384xf32>
    %34 = tpu.matmul %32, %33, %cst_19 {dimension_numbers = #tpu.dot_dimension_numbers<[1], [0], [0], [1], [0, 0, 1, 1], [], []>} : vector<64x4xf32>, vector<4x384xf32>, vector<64x384xf32> -> vector<64x384xf32>
    %35 = arith.addf %31, %34 : vector<64x384xf32>
    %c0_20 = arith.constant 0 : index
    %c0_21 = arith.constant 0 : index
    %36 = vector.load %arg4[%c0_20, %c0_21] : memref<64x1xf32, #tpu.memory_space<vmem>>, vector<64x1xf32>
    %37 = vector.broadcast %36 : vector<64x1xf32> to vector<64x384xf32>
    %38 = arith.addf %35, %37 : vector<64x384xf32>
    %cst_22 = arith.constant 0.000000e+00 : f32
    %39 = vector.broadcast %cst_22 : f32 to vector<64x384xf32>
    %40 = arith.maximumf %38, %39 : vector<64x384xf32>
    %c0_23 = arith.constant 0 : index
    %c0_24 = arith.constant 0 : index
    %41 = vector.load %arg2[%c0_23, %c0_24] : memref<1x384xf32, #tpu.memory_space<vmem>>, vector<1x384xf32>
    %42 = vector.broadcast %41 : vector<1x384xf32> to vector<64x384xf32>
    %43 = arith.mulf %40, %42 : vector<64x384xf32>
    %c0_25 = arith.constant 0 : index
    %c0_26 = arith.constant 0 : index
    %44 = vector.load %arg16[%c0_25, %c0_26] : memref<64x384xf32, #tpu.memory_space<vmem>>, vector<64x384xf32>
    tpu.vector_store %arg16[%c0_25, %c0_26], %43 {strides = array<i32>} : memref<64x384xf32, #tpu.memory_space<vmem>>, vector<64x384xf32>,
    %c0_27 = arith.constant 0 : index
    %c0_28 = arith.constant 0 : index
    %45 = vector.load %arg16[%c0_27, %c0_28] : memref<64x384xf32, #tpu.memory_space<vmem>>, vector<64x384xf32>
    %c19_i32_29 = arith.constant 19 : i32
    %46 = tpu.dynamic_rotate %45 by %c19_i32_29 dim 1 : vector<64x384xf32>, i32 -> vector<64x384xf32>
    %c0_30 = arith.constant 0 : index
    %c0_31 = arith.constant 0 : index
    %47 = vector.load %arg15[%c0_30, %c0_31] : memref<576x384xf32, #tpu.memory_space<vmem>>, vector<64x384xf32>
    tpu.vector_store %arg15[%c0_30, %c0_31], %46 {strides = array<i32>} : memref<576x384xf32, #tpu.memory_space<vmem>>, vector<64x384xf32>,
    %c18_i32_32 = arith.constant 18 : i32
    %48 = tpu.dynamic_rotate %45 by %c18_i32_32 dim 1 : vector<64x384xf32>, i32 -> vector<64x384xf32>
    %c64 = arith.constant 64 : index
    %c0_33 = arith.constant 0 : index
    %49 = vector.load %arg15[%c64, %c0_33] : memref<576x384xf32, #tpu.memory_space<vmem>>, vector<64x384xf32>
    tpu.vector_store %arg15[%c64, %c0_33], %48 {strides = array<i32>} : memref<576x384xf32, #tpu.memory_space<vmem>>, vector<64x384xf32>,
    %c17_i32_34 = arith.constant 17 : i32
    %50 = tpu.dynamic_rotate %45 by %c17_i32_34 dim 1 : vector<64x384xf32>, i32 -> vector<64x384xf32>
    %c128 = arith.constant 128 : index
    %c0_35 = arith.constant 0 : index
    %51 = vector.load %arg15[%c128, %c0_35] : memref<576x384xf32, #tpu.memory_space<vmem>>, vector<64x384xf32>
    tpu.vector_store %arg15[%c128, %c0_35], %50 {strides = array<i32>} : memref<576x384xf32, #tpu.memory_space<vmem>>, vector<64x384xf32>,
    %c1_i32_36 = arith.constant 1 : i32
    %52 = tpu.dynamic_rotate %45 by %c1_i32_36 dim 1 : vector<64x384xf32>, i32 -> vector<64x384xf32>
    %c192 = arith.constant 192 : index
    %c0_37 = arith.constant 0 : index
    %53 = vector.load %arg15[%c192, %c0_37] : memref<576x384xf32, #tpu.memory_space<vmem>>, vector<64x384xf32>
    tpu.vector_store %arg15[%c192, %c0_37], %52 {strides = array<i32>} : memref<576x384xf32, #tpu.memory_space<vmem>>, vector<64x384xf32>,
    %c256 = arith.constant 256 : index
    %c0_38 = arith.constant 0 : index
    %54 = vector.load %arg15[%c256, %c0_38] : memref<576x384xf32, #tpu.memory_space<vmem>>, vector<64x384xf32>
    tpu.vector_store %arg15[%c256, %c0_38], %45 {strides = array<i32>} : memref<576x384xf32, #tpu.memory_space<vmem>>, vector<64x384xf32>,
    %c383_i32_39 = arith.constant 383 : i32
    %55 = tpu.dynamic_rotate %45 by %c383_i32_39 dim 1 : vector<64x384xf32>, i32 -> vector<64x384xf32>
    %c320 = arith.constant 320 : index
    %c0_40 = arith.constant 0 : index
    %56 = vector.load %arg15[%c320, %c0_40] : memref<576x384xf32, #tpu.memory_space<vmem>>, vector<64x384xf32>
    tpu.vector_store %arg15[%c320, %c0_40], %55 {strides = array<i32>} : memref<576x384xf32, #tpu.memory_space<vmem>>, vector<64x384xf32>,
    %c367_i32_41 = arith.constant 367 : i32
    %57 = tpu.dynamic_rotate %45 by %c367_i32_41 dim 1 : vector<64x384xf32>, i32 -> vector<64x384xf32>
    %c384 = arith.constant 384 : index
    %c0_42 = arith.constant 0 : index
    %58 = vector.load %arg15[%c384, %c0_42] : memref<576x384xf32, #tpu.memory_space<vmem>>, vector<64x384xf32>
    tpu.vector_store %arg15[%c384, %c0_42], %57 {strides = array<i32>} : memref<576x384xf32, #tpu.memory_space<vmem>>, vector<64x384xf32>,
    %c366_i32_43 = arith.constant 366 : i32
    %59 = tpu.dynamic_rotate %45 by %c366_i32_43 dim 1 : vector<64x384xf32>, i32 -> vector<64x384xf32>
    %c448 = arith.constant 448 : index
    %c0_44 = arith.constant 0 : index
    %60 = vector.load %arg15[%c448, %c0_44] : memref<576x384xf32, #tpu.memory_space<vmem>>, vector<64x384xf32>
    tpu.vector_store %arg15[%c448, %c0_44], %59 {strides = array<i32>} : memref<576x384xf32, #tpu.memory_space<vmem>>, vector<64x384xf32>,
    %c365_i32_45 = arith.constant 365 : i32
    %61 = tpu.dynamic_rotate %45 by %c365_i32_45 dim 1 : vector<64x384xf32>, i32 -> vector<64x384xf32>
    %c512 = arith.constant 512 : index
    %c0_46 = arith.constant 0 : index
    %62 = vector.load %arg15[%c512, %c0_46] : memref<576x384xf32, #tpu.memory_space<vmem>>, vector<64x384xf32>
    tpu.vector_store %arg15[%c512, %c0_46], %61 {strides = array<i32>} : memref<576x384xf32, #tpu.memory_space<vmem>>, vector<64x384xf32>,
    %c0_47 = arith.constant 0 : index
    %c0_48 = arith.constant 0 : index
    %63 = vector.load %arg5[%c0_47, %c0_48] : memref<64x576xf32, #tpu.memory_space<vmem>>, vector<64x576xf32>
    %c0_49 = arith.constant 0 : index
    %c0_50 = arith.constant 0 : index
    %64 = vector.load %arg15[%c0_49, %c0_50] : memref<576x384xf32, #tpu.memory_space<vmem>>, vector<576x384xf32>
    %cst_51 = arith.constant dense<0.000000e+00> : vector<64x384xf32>
    %65 = tpu.matmul %63, %64, %cst_51 {dimension_numbers = #tpu.dot_dimension_numbers<[1], [0], [0], [1], [0, 0, 1, 1], [], []>} : vector<64x576xf32>, vector<576x384xf32>, vector<64x384xf32> -> vector<64x384xf32>
    %c0_52 = arith.constant 0 : index
    %c0_53 = arith.constant 0 : index
    %66 = vector.load %arg6[%c0_52, %c0_53] : memref<64x1xf32, #tpu.memory_space<vmem>>, vector<64x1xf32>
    %67 = vector.broadcast %66 : vector<64x1xf32> to vector<64x384xf32>
    %68 = arith.addf %65, %67 : vector<64x384xf32>
    %cst_54 = arith.constant 0.000000e+00 : f32
    %69 = vector.broadcast %cst_54 : f32 to vector<64x384xf32>
    %70 = arith.maximumf %68, %69 : vector<64x384xf32>
    %c0_55 = arith.constant 0 : index
    %c0_56 = arith.constant 0 : index
    %71 = vector.load %arg2[%c0_55, %c0_56] : memref<1x384xf32, #tpu.memory_space<vmem>>, vector<1x384xf32>
    %72 = vector.broadcast %71 : vector<1x384xf32> to vector<64x384xf32>
    %73 = arith.mulf %70, %72 : vector<64x384xf32>
    %c0_57 = arith.constant 0 : index
    %c0_58 = arith.constant 0 : index
    %74 = vector.load %arg16[%c0_57, %c0_58] : memref<64x384xf32, #tpu.memory_space<vmem>>, vector<64x384xf32>
    tpu.vector_store %arg16[%c0_57, %c0_58], %73 {strides = array<i32>} : memref<64x384xf32, #tpu.memory_space<vmem>>, vector<64x384xf32>,
    %c0_59 = arith.constant 0 : index
    %c0_60 = arith.constant 0 : index
    %75 = vector.load %arg16[%c0_59, %c0_60] : memref<64x384xf32, #tpu.memory_space<vmem>>, vector<64x384xf32>
    %c19_i32_61 = arith.constant 19 : i32
    %76 = tpu.dynamic_rotate %75 by %c19_i32_61 dim 1 : vector<64x384xf32>, i32 -> vector<64x384xf32>
    %c0_62 = arith.constant 0 : index
    %c0_63 = arith.constant 0 : index
    %77 = vector.load %arg15[%c0_62, %c0_63] : memref<576x384xf32, #tpu.memory_space<vmem>>, vector<64x384xf32>
    tpu.vector_store %arg15[%c0_62, %c0_63], %76 {strides = array<i32>} : memref<576x384xf32, #tpu.memory_space<vmem>>, vector<64x384xf32>,
    %c18_i32_64 = arith.constant 18 : i32
    %78 = tpu.dynamic_rotate %75 by %c18_i32_64 dim 1 : vector<64x384xf32>, i32 -> vector<64x384xf32>
    %c64_65 = arith.constant 64 : index
    %c0_66 = arith.constant 0 : index
    %79 = vector.load %arg15[%c64_65, %c0_66] : memref<576x384xf32, #tpu.memory_space<vmem>>, vector<64x384xf32>
    tpu.vector_store %arg15[%c64_65, %c0_66], %78 {strides = array<i32>} : memref<576x384xf32, #tpu.memory_space<vmem>>, vector<64x384xf32>,
    %c17_i32_67 = arith.constant 17 : i32
    %80 = tpu.dynamic_rotate %75 by %c17_i32_67 dim 1 : vector<64x384xf32>, i32 -> vector<64x384xf32>
    %c128_68 = arith.constant 128 : index
    %c0_69 = arith.constant 0 : index
    %81 = vector.load %arg15[%c128_68, %c0_69] : memref<576x384xf32, #tpu.memory_space<vmem>>, vector<64x384xf32>
    tpu.vector_store %arg15[%c128_68, %c0_69], %80 {strides = array<i32>} : memref<576x384xf32, #tpu.memory_space<vmem>>, vector<64x384xf32>,
    %c1_i32_70 = arith.constant 1 : i32
    %82 = tpu.dynamic_rotate %75 by %c1_i32_70 dim 1 : vector<64x384xf32>, i32 -> vector<64x384xf32>
    %c192_71 = arith.constant 192 : index
    %c0_72 = arith.constant 0 : index
    %83 = vector.load %arg15[%c192_71, %c0_72] : memref<576x384xf32, #tpu.memory_space<vmem>>, vector<64x384xf32>
    tpu.vector_store %arg15[%c192_71, %c0_72], %82 {strides = array<i32>} : memref<576x384xf32, #tpu.memory_space<vmem>>, vector<64x384xf32>,
    %c256_73 = arith.constant 256 : index
    %c0_74 = arith.constant 0 : index
    %84 = vector.load %arg15[%c256_73, %c0_74] : memref<576x384xf32, #tpu.memory_space<vmem>>, vector<64x384xf32>
    tpu.vector_store %arg15[%c256_73, %c0_74], %75 {strides = array<i32>} : memref<576x384xf32, #tpu.memory_space<vmem>>, vector<64x384xf32>,
    %c383_i32_75 = arith.constant 383 : i32
    %85 = tpu.dynamic_rotate %75 by %c383_i32_75 dim 1 : vector<64x384xf32>, i32 -> vector<64x384xf32>
    %c320_76 = arith.constant 320 : index
    %c0_77 = arith.constant 0 : index
    %86 = vector.load %arg15[%c320_76, %c0_77] : memref<576x384xf32, #tpu.memory_space<vmem>>, vector<64x384xf32>
    tpu.vector_store %arg15[%c320_76, %c0_77], %85 {strides = array<i32>} : memref<576x384xf32, #tpu.memory_space<vmem>>, vector<64x384xf32>,
    %c367_i32_78 = arith.constant 367 : i32
    %87 = tpu.dynamic_rotate %75 by %c367_i32_78 dim 1 : vector<64x384xf32>, i32 -> vector<64x384xf32>
    %c384_79 = arith.constant 384 : index
    %c0_80 = arith.constant 0 : index
    %88 = vector.load %arg15[%c384_79, %c0_80] : memref<576x384xf32, #tpu.memory_space<vmem>>, vector<64x384xf32>
    tpu.vector_store %arg15[%c384_79, %c0_80], %87 {strides = array<i32>} : memref<576x384xf32, #tpu.memory_space<vmem>>, vector<64x384xf32>,
    %c366_i32_81 = arith.constant 366 : i32
    %89 = tpu.dynamic_rotate %75 by %c366_i32_81 dim 1 : vector<64x384xf32>, i32 -> vector<64x384xf32>
    %c448_82 = arith.constant 448 : index
    %c0_83 = arith.constant 0 : index
    %90 = vector.load %arg15[%c448_82, %c0_83] : memref<576x384xf32, #tpu.memory_space<vmem>>, vector<64x384xf32>
    tpu.vector_store %arg15[%c448_82, %c0_83], %89 {strides = array<i32>} : memref<576x384xf32, #tpu.memory_space<vmem>>, vector<64x384xf32>,
    %c365_i32_84 = arith.constant 365 : i32
    %91 = tpu.dynamic_rotate %75 by %c365_i32_84 dim 1 : vector<64x384xf32>, i32 -> vector<64x384xf32>
    %c512_85 = arith.constant 512 : index
    %c0_86 = arith.constant 0 : index
    %92 = vector.load %arg15[%c512_85, %c0_86] : memref<576x384xf32, #tpu.memory_space<vmem>>, vector<64x384xf32>
    tpu.vector_store %arg15[%c512_85, %c0_86], %91 {strides = array<i32>} : memref<576x384xf32, #tpu.memory_space<vmem>>, vector<64x384xf32>,
    %c0_87 = arith.constant 0 : index
    %c0_88 = arith.constant 0 : index
    %93 = vector.load %arg7[%c0_87, %c0_88] : memref<64x576xf32, #tpu.memory_space<vmem>>, vector<64x576xf32>
    %c0_89 = arith.constant 0 : index
    %c0_90 = arith.constant 0 : index
    %94 = vector.load %arg15[%c0_89, %c0_90] : memref<576x384xf32, #tpu.memory_space<vmem>>, vector<576x384xf32>
    %cst_91 = arith.constant dense<0.000000e+00> : vector<64x384xf32>
    %95 = tpu.matmul %93, %94, %cst_91 {dimension_numbers = #tpu.dot_dimension_numbers<[1], [0], [0], [1], [0, 0, 1, 1], [], []>} : vector<64x576xf32>, vector<576x384xf32>, vector<64x384xf32> -> vector<64x384xf32>
    %c0_92 = arith.constant 0 : index
    %c0_93 = arith.constant 0 : index
    %96 = vector.load %arg8[%c0_92, %c0_93] : memref<64x1xf32, #tpu.memory_space<vmem>>, vector<64x1xf32>
    %97 = vector.broadcast %96 : vector<64x1xf32> to vector<64x384xf32>
    %98 = arith.addf %95, %97 : vector<64x384xf32>
    %cst_94 = arith.constant 0.000000e+00 : f32
    %99 = vector.broadcast %cst_94 : f32 to vector<64x384xf32>
    %100 = arith.maximumf %98, %99 : vector<64x384xf32>
    %c0_95 = arith.constant 0 : index
    %c0_96 = arith.constant 0 : index
    %101 = vector.load %arg2[%c0_95, %c0_96] : memref<1x384xf32, #tpu.memory_space<vmem>>, vector<1x384xf32>
    %102 = vector.broadcast %101 : vector<1x384xf32> to vector<64x384xf32>
    %103 = arith.mulf %100, %102 : vector<64x384xf32>
    %c0_97 = arith.constant 0 : index
    %c0_98 = arith.constant 0 : index
    %104 = vector.load %arg16[%c0_97, %c0_98] : memref<64x384xf32, #tpu.memory_space<vmem>>, vector<64x384xf32>
    tpu.vector_store %arg16[%c0_97, %c0_98], %103 {strides = array<i32>} : memref<64x384xf32, #tpu.memory_space<vmem>>, vector<64x384xf32>,
    %c0_99 = arith.constant 0 : index
    %c0_100 = arith.constant 0 : index
    %105 = vector.load %arg16[%c0_99, %c0_100] : memref<64x384xf32, #tpu.memory_space<vmem>>, vector<64x384xf32>
    %c19_i32_101 = arith.constant 19 : i32
    %106 = tpu.dynamic_rotate %105 by %c19_i32_101 dim 1 : vector<64x384xf32>, i32 -> vector<64x384xf32>
    %c0_102 = arith.constant 0 : index
    %c0_103 = arith.constant 0 : index
    %107 = vector.load %arg15[%c0_102, %c0_103] : memref<576x384xf32, #tpu.memory_space<vmem>>, vector<64x384xf32>
    tpu.vector_store %arg15[%c0_102, %c0_103], %106 {strides = array<i32>} : memref<576x384xf32, #tpu.memory_space<vmem>>, vector<64x384xf32>,
    %c18_i32_104 = arith.constant 18 : i32
    %108 = tpu.dynamic_rotate %105 by %c18_i32_104 dim 1 : vector<64x384xf32>, i32 -> vector<64x384xf32>
    %c64_105 = arith.constant 64 : index
    %c0_106 = arith.constant 0 : index
    %109 = vector.load %arg15[%c64_105, %c0_106] : memref<576x384xf32, #tpu.memory_space<vmem>>, vector<64x384xf32>
    tpu.vector_store %arg15[%c64_105, %c0_106], %108 {strides = array<i32>} : memref<576x384xf32, #tpu.memory_space<vmem>>, vector<64x384xf32>,
    %c17_i32_107 = arith.constant 17 : i32
    %110 = tpu.dynamic_rotate %105 by %c17_i32_107 dim 1 : vector<64x384xf32>, i32 -> vector<64x384xf32>
    %c128_108 = arith.constant 128 : index
    %c0_109 = arith.constant 0 : index
    %111 = vector.load %arg15[%c128_108, %c0_109] : memref<576x384xf32, #tpu.memory_space<vmem>>, vector<64x384xf32>
    tpu.vector_store %arg15[%c128_108, %c0_109], %110 {strides = array<i32>} : memref<576x384xf32, #tpu.memory_space<vmem>>, vector<64x384xf32>,
    %c1_i32_110 = arith.constant 1 : i32
    %112 = tpu.dynamic_rotate %105 by %c1_i32_110 dim 1 : vector<64x384xf32>, i32 -> vector<64x384xf32>
    %c192_111 = arith.constant 192 : index
    %c0_112 = arith.constant 0 : index
    %113 = vector.load %arg15[%c192_111, %c0_112] : memref<576x384xf32, #tpu.memory_space<vmem>>, vector<64x384xf32>
    tpu.vector_store %arg15[%c192_111, %c0_112], %112 {strides = array<i32>} : memref<576x384xf32, #tpu.memory_space<vmem>>, vector<64x384xf32>,
    %c256_113 = arith.constant 256 : index
    %c0_114 = arith.constant 0 : index
    %114 = vector.load %arg15[%c256_113, %c0_114] : memref<576x384xf32, #tpu.memory_space<vmem>>, vector<64x384xf32>
    tpu.vector_store %arg15[%c256_113, %c0_114], %105 {strides = array<i32>} : memref<576x384xf32, #tpu.memory_space<vmem>>, vector<64x384xf32>,
    %c383_i32_115 = arith.constant 383 : i32
    %115 = tpu.dynamic_rotate %105 by %c383_i32_115 dim 1 : vector<64x384xf32>, i32 -> vector<64x384xf32>
    %c320_116 = arith.constant 320 : index
    %c0_117 = arith.constant 0 : index
    %116 = vector.load %arg15[%c320_116, %c0_117] : memref<576x384xf32, #tpu.memory_space<vmem>>, vector<64x384xf32>
    tpu.vector_store %arg15[%c320_116, %c0_117], %115 {strides = array<i32>} : memref<576x384xf32, #tpu.memory_space<vmem>>, vector<64x384xf32>,
    %c367_i32_118 = arith.constant 367 : i32
    %117 = tpu.dynamic_rotate %105 by %c367_i32_118 dim 1 : vector<64x384xf32>, i32 -> vector<64x384xf32>
    %c384_119 = arith.constant 384 : index
    %c0_120 = arith.constant 0 : index
    %118 = vector.load %arg15[%c384_119, %c0_120] : memref<576x384xf32, #tpu.memory_space<vmem>>, vector<64x384xf32>
    tpu.vector_store %arg15[%c384_119, %c0_120], %117 {strides = array<i32>} : memref<576x384xf32, #tpu.memory_space<vmem>>, vector<64x384xf32>,
    %c366_i32_121 = arith.constant 366 : i32
    %119 = tpu.dynamic_rotate %105 by %c366_i32_121 dim 1 : vector<64x384xf32>, i32 -> vector<64x384xf32>
    %c448_122 = arith.constant 448 : index
    %c0_123 = arith.constant 0 : index
    %120 = vector.load %arg15[%c448_122, %c0_123] : memref<576x384xf32, #tpu.memory_space<vmem>>, vector<64x384xf32>
    tpu.vector_store %arg15[%c448_122, %c0_123], %119 {strides = array<i32>} : memref<576x384xf32, #tpu.memory_space<vmem>>, vector<64x384xf32>,
    %c365_i32_124 = arith.constant 365 : i32
    %121 = tpu.dynamic_rotate %105 by %c365_i32_124 dim 1 : vector<64x384xf32>, i32 -> vector<64x384xf32>
    %c512_125 = arith.constant 512 : index
    %c0_126 = arith.constant 0 : index
    %122 = vector.load %arg15[%c512_125, %c0_126] : memref<576x384xf32, #tpu.memory_space<vmem>>, vector<64x384xf32>
    tpu.vector_store %arg15[%c512_125, %c0_126], %121 {strides = array<i32>} : memref<576x384xf32, #tpu.memory_space<vmem>>, vector<64x384xf32>,
    %c0_127 = arith.constant 0 : index
    %c0_128 = arith.constant 0 : index
    %123 = vector.load %arg9[%c0_127, %c0_128] : memref<64x576xf32, #tpu.memory_space<vmem>>, vector<64x576xf32>
    %c0_129 = arith.constant 0 : index
    %c0_130 = arith.constant 0 : index
    %124 = vector.load %arg15[%c0_129, %c0_130] : memref<576x384xf32, #tpu.memory_space<vmem>>, vector<576x384xf32>
    %cst_131 = arith.constant dense<0.000000e+00> : vector<64x384xf32>
    %125 = tpu.matmul %123, %124, %cst_131 {dimension_numbers = #tpu.dot_dimension_numbers<[1], [0], [0], [1], [0, 0, 1, 1], [], []>} : vector<64x576xf32>, vector<576x384xf32>, vector<64x384xf32> -> vector<64x384xf32>
    %c0_132 = arith.constant 0 : index
    %c0_133 = arith.constant 0 : index
    %126 = vector.load %arg10[%c0_132, %c0_133] : memref<64x1xf32, #tpu.memory_space<vmem>>, vector<64x1xf32>
    %127 = vector.broadcast %126 : vector<64x1xf32> to vector<64x384xf32>
    %128 = arith.addf %125, %127 : vector<64x384xf32>
    %c0_134 = arith.constant 0 : index
    %c0_135 = arith.constant 0 : index
    %129 = vector.load %arg11[%c0_134, %c0_135] : memref<384x128xf32, #tpu.memory_space<vmem>>, vector<384x128xf32>
    %cst_136 = arith.constant dense<0.000000e+00> : vector<64x128xf32>
    %130 = tpu.matmul %128, %129, %cst_136 {dimension_numbers = #tpu.dot_dimension_numbers<[1], [0], [0], [1], [0, 0, 1, 1], [], []>} : vector<64x384xf32>, vector<384x128xf32>, vector<64x128xf32> -> vector<64x128xf32>
    %c0_137 = arith.constant 0 : index
    %c0_138 = arith.constant 0 : index
    %131 = vector.load %arg16[%c0_137, %c0_138] : memref<64x384xf32, #tpu.memory_space<vmem>>, vector<64x128xf32>
    tpu.vector_store %arg16[%c0_137, %c0_138], %130 {strides = array<i32>} : memref<64x384xf32, #tpu.memory_space<vmem>>, vector<64x128xf32>,
    %c0_139 = arith.constant 0 : index
    %c0_140 = arith.constant 0 : index
    %132 = vector.load %arg16[%c0_139, %c0_140] : memref<64x384xf32, #tpu.memory_space<vmem>>, vector<64x128xf32>
    %c11_i32 = arith.constant 11 : i32
    %133 = tpu.dynamic_rotate %132 by %c11_i32 dim 1 : vector<64x128xf32>, i32 -> vector<64x128xf32>
    %c0_141 = arith.constant 0 : index
    %c0_142 = arith.constant 0 : index
    %134 = vector.load %arg15[%c0_141, %c0_142] : memref<576x384xf32, #tpu.memory_space<vmem>>, vector<64x128xf32>
    tpu.vector_store %arg15[%c0_141, %c0_142], %133 {strides = array<i32>} : memref<576x384xf32, #tpu.memory_space<vmem>>, vector<64x128xf32>,
    %c10_i32 = arith.constant 10 : i32
    %135 = tpu.dynamic_rotate %132 by %c10_i32 dim 1 : vector<64x128xf32>, i32 -> vector<64x128xf32>
    %c64_143 = arith.constant 64 : index
    %c0_144 = arith.constant 0 : index
    %136 = vector.load %arg15[%c64_143, %c0_144] : memref<576x384xf32, #tpu.memory_space<vmem>>, vector<64x128xf32>
    tpu.vector_store %arg15[%c64_143, %c0_144], %135 {strides = array<i32>} : memref<576x384xf32, #tpu.memory_space<vmem>>, vector<64x128xf32>,
    %c9_i32 = arith.constant 9 : i32
    %137 = tpu.dynamic_rotate %132 by %c9_i32 dim 1 : vector<64x128xf32>, i32 -> vector<64x128xf32>
    %c128_145 = arith.constant 128 : index
    %c0_146 = arith.constant 0 : index
    %138 = vector.load %arg15[%c128_145, %c0_146] : memref<576x384xf32, #tpu.memory_space<vmem>>, vector<64x128xf32>
    tpu.vector_store %arg15[%c128_145, %c0_146], %137 {strides = array<i32>} : memref<576x384xf32, #tpu.memory_space<vmem>>, vector<64x128xf32>,
    %c1_i32_147 = arith.constant 1 : i32
    %139 = tpu.dynamic_rotate %132 by %c1_i32_147 dim 1 : vector<64x128xf32>, i32 -> vector<64x128xf32>
    %c192_148 = arith.constant 192 : index
    %c0_149 = arith.constant 0 : index
    %140 = vector.load %arg15[%c192_148, %c0_149] : memref<576x384xf32, #tpu.memory_space<vmem>>, vector<64x128xf32>
    tpu.vector_store %arg15[%c192_148, %c0_149], %139 {strides = array<i32>} : memref<576x384xf32, #tpu.memory_space<vmem>>, vector<64x128xf32>,
    %c256_150 = arith.constant 256 : index
    %c0_151 = arith.constant 0 : index
    %141 = vector.load %arg15[%c256_150, %c0_151] : memref<576x384xf32, #tpu.memory_space<vmem>>, vector<64x128xf32>
    tpu.vector_store %arg15[%c256_150, %c0_151], %132 {strides = array<i32>} : memref<576x384xf32, #tpu.memory_space<vmem>>, vector<64x128xf32>,
    %c127_i32 = arith.constant 127 : i32
    %142 = tpu.dynamic_rotate %132 by %c127_i32 dim 1 : vector<64x128xf32>, i32 -> vector<64x128xf32>
    %c320_152 = arith.constant 320 : index
    %c0_153 = arith.constant 0 : index
    %143 = vector.load %arg15[%c320_152, %c0_153] : memref<576x384xf32, #tpu.memory_space<vmem>>, vector<64x128xf32>
    tpu.vector_store %arg15[%c320_152, %c0_153], %142 {strides = array<i32>} : memref<576x384xf32, #tpu.memory_space<vmem>>, vector<64x128xf32>,
    %c119_i32 = arith.constant 119 : i32
    %144 = tpu.dynamic_rotate %132 by %c119_i32 dim 1 : vector<64x128xf32>, i32 -> vector<64x128xf32>
    %c384_154 = arith.constant 384 : index
    %c0_155 = arith.constant 0 : index
    %145 = vector.load %arg15[%c384_154, %c0_155] : memref<576x384xf32, #tpu.memory_space<vmem>>, vector<64x128xf32>
    tpu.vector_store %arg15[%c384_154, %c0_155], %144 {strides = array<i32>} : memref<576x384xf32, #tpu.memory_space<vmem>>, vector<64x128xf32>,
    %c118_i32 = arith.constant 118 : i32
    %146 = tpu.dynamic_rotate %132 by %c118_i32 dim 1 : vector<64x128xf32>, i32 -> vector<64x128xf32>
    %c448_156 = arith.constant 448 : index
    %c0_157 = arith.constant 0 : index
    %147 = vector.load %arg15[%c448_156, %c0_157] : memref<576x384xf32, #tpu.memory_space<vmem>>, vector<64x128xf32>
    tpu.vector_store %arg15[%c448_156, %c0_157], %146 {strides = array<i32>} : memref<576x384xf32, #tpu.memory_space<vmem>>, vector<64x128xf32>,
    %c117_i32 = arith.constant 117 : i32
    %148 = tpu.dynamic_rotate %132 by %c117_i32 dim 1 : vector<64x128xf32>, i32 -> vector<64x128xf32>
    %c512_158 = arith.constant 512 : index
    %c0_159 = arith.constant 0 : index
    %149 = vector.load %arg15[%c512_158, %c0_159] : memref<576x384xf32, #tpu.memory_space<vmem>>, vector<64x128xf32>
    tpu.vector_store %arg15[%c512_158, %c0_159], %148 {strides = array<i32>} : memref<576x384xf32, #tpu.memory_space<vmem>>, vector<64x128xf32>,
    %c0_160 = arith.constant 0 : index
    %c0_161 = arith.constant 0 : index
    %150 = vector.load %arg12[%c0_160, %c0_161] : memref<4x576xf32, #tpu.memory_space<vmem>>, vector<4x576xf32>
    %c0_162 = arith.constant 0 : index
    %c0_163 = arith.constant 0 : index
    %151 = vector.load %arg15[%c0_162, %c0_163] : memref<576x384xf32, #tpu.memory_space<vmem>>, vector<576x128xf32>
    %cst_164 = arith.constant dense<0.000000e+00> : vector<4x128xf32>
    %152 = tpu.matmul %150, %151, %cst_164 {dimension_numbers = #tpu.dot_dimension_numbers<[1], [0], [0], [1], [0, 0, 1, 1], [], []>} : vector<4x576xf32>, vector<576x128xf32>, vector<4x128xf32> -> vector<4x128xf32>
    %c0_165 = arith.constant 0 : index
    %c0_166 = arith.constant 0 : index
    %153 = vector.load %arg13[%c0_165, %c0_166] : memref<4x1xf32, #tpu.memory_space<vmem>>, vector<4x1xf32>
    %154 = vector.broadcast %153 : vector<4x1xf32> to vector<4x128xf32>
    %155 = arith.addf %152, %154 : vector<4x128xf32>
    %c0_167 = arith.constant 0 : index
    %c0_168 = arith.constant 0 : index
    %c0_169 = arith.constant 0 : index
    %156 = vector.load %arg14[%c0_167, %c0_168, %c0_169] : memref<1x4x128xf32, #tpu.memory_space<vmem>>, vector<1x4x128xf32>
    %157 = vector.shape_cast %156 : vector<1x4x128xf32> to vector<4x128xf32>
    %158 = vector.shape_cast %155 : vector<4x128xf32> to vector<1x4x128xf32>
    tpu.vector_store %arg14[%c0_167, %c0_168, %c0_169], %158 {strides = array<i32>} : memref<1x4x128xf32, #tpu.memory_space<vmem>>, vector<1x4x128xf32>,
    return
  }
  func.func @transform_0(%arg0: i32) -> (i32, i32, i32) {
    %c0_i32 = arith.constant 0 : i32
    %c0_i32_0 = arith.constant 0 : i32
    %c0_i32_1 = arith.constant 0 : i32
    return %arg0, %c0_i32, %c0_i32_0 : i32, i32, i32
  }
  func.func @transform_1(%arg0: i32) -> (i32, i32) {
    %c0_i32 = arith.constant 0 : i32
    %c0_i32_0 = arith.constant 0 : i32
    %c0_i32_1 = arith.constant 0 : i32
    return %c0_i32, %c0_i32_0 : i32, i32
  }
  func.func @transform_2(%arg0: i32) -> (i32, i32) {
    %c0_i32 = arith.constant 0 : i32
    %c0_i32_0 = arith.constant 0 : i32
    %c0_i32_1 = arith.constant 0 : i32
    return %c0_i32, %c0_i32_0 : i32, i32
  }
  func.func @transform_3(%arg0: i32) -> (i32, i32) {
    %c0_i32 = arith.constant 0 : i32
    %c0_i32_0 = arith.constant 0 : i32
    %c0_i32_1 = arith.constant 0 : i32
    return %c0_i32, %c0_i32_0 : i32, i32
  }
  func.func @transform_4(%arg0: i32) -> (i32, i32) {
    %c0_i32 = arith.constant 0 : i32
    %c0_i32_0 = arith.constant 0 : i32
    %c0_i32_1 = arith.constant 0 : i32
    return %c0_i32, %c0_i32_0 : i32, i32
  }
  func.func @transform_5(%arg0: i32) -> (i32, i32) {
    %c0_i32 = arith.constant 0 : i32
    %c0_i32_0 = arith.constant 0 : i32
    %c0_i32_1 = arith.constant 0 : i32
    return %c0_i32, %c0_i32_0 : i32, i32
  }
  func.func @transform_6(%arg0: i32) -> (i32, i32) {
    %c0_i32 = arith.constant 0 : i32
    %c0_i32_0 = arith.constant 0 : i32
    %c0_i32_1 = arith.constant 0 : i32
    return %c0_i32, %c0_i32_0 : i32, i32
  }
  func.func @transform_7(%arg0: i32) -> (i32, i32) {
    %c0_i32 = arith.constant 0 : i32
    %c0_i32_0 = arith.constant 0 : i32
    %c0_i32_1 = arith.constant 0 : i32
    return %c0_i32, %c0_i32_0 : i32, i32
  }
  func.func @transform_8(%arg0: i32) -> (i32, i32) {
    %c0_i32 = arith.constant 0 : i32
    %c0_i32_0 = arith.constant 0 : i32
    %c0_i32_1 = arith.constant 0 : i32
    return %c0_i32, %c0_i32_0 : i32, i32
  }
  func.func @transform_9(%arg0: i32) -> (i32, i32) {
    %c0_i32 = arith.constant 0 : i32
    %c0_i32_0 = arith.constant 0 : i32
    %c0_i32_1 = arith.constant 0 : i32
    return %c0_i32, %c0_i32_0 : i32, i32
  }
  func.func @transform_10(%arg0: i32) -> (i32, i32) {
    %c0_i32 = arith.constant 0 : i32
    %c0_i32_0 = arith.constant 0 : i32
    %c0_i32_1 = arith.constant 0 : i32
    return %c0_i32, %c0_i32_0 : i32, i32
  }
  func.func @transform_11(%arg0: i32) -> (i32, i32) {
    %c0_i32 = arith.constant 0 : i32
    %c0_i32_0 = arith.constant 0 : i32
    %c0_i32_1 = arith.constant 0 : i32
    return %c0_i32, %c0_i32_0 : i32, i32
  }
  func.func @transform_12(%arg0: i32) -> (i32, i32) {
    %c0_i32 = arith.constant 0 : i32
    %c0_i32_0 = arith.constant 0 : i32
    %c0_i32_1 = arith.constant 0 : i32
    return %c0_i32, %c0_i32_0 : i32, i32
  }
  func.func @transform_13(%arg0: i32) -> (i32, i32, i32) {
    %c0_i32 = arith.constant 0 : i32
    %c0_i32_0 = arith.constant 0 : i32
    %c0_i32_1 = arith.constant 0 : i32
    return %arg0, %c0_i32, %c0_i32_0 : i32, i32, i32
  }
}

</mosaic_0001>

<llo_original>
// kernel: tpu_custom_call.1
$region0: #{tpu_custom_call.1}
  #allocation0 [shape = 'u32[]', space=smem, size = 0x4, offset = 0x4, fixed_abs, tag = 'smem constant byte address 0x4 - core index']
  #allocation1 [shape = 'u32[144,128]{1,0:T(1,128)}', space=vmem, size = 0x12000, scoped, tag = 'internal scratch']
  #allocation2 [shape = 'f32[576,384]{1,0:T(8,128)}', space=vmem, size = 0xd8000, scoped, tag = 'scratch operand']
  #allocation3 [shape = 'f32[64,384]{1,0:T(8,128)}', space=vmem, size = 0x18000, scoped, tag = 'scratch operand']
  %s0 = inlined_call_operand.hbm [shape: f32[2,4,384], index: 0, kind: input, shape index: {}]
  %s1 = inlined_call_operand.hbm [shape: f32[1,384], index: 1, kind: input, shape index: {}]
  %s2 = inlined_call_operand.vmem [shape: f32[64,36], index: 2, kind: input, shape index: {}]
  %s3 = inlined_call_operand.vmem [shape: f32[64,1], index: 3, kind: input, shape index: {}]
  %s4 = inlined_call_operand.hbm [shape: f32[64,576], index: 4, kind: input, shape index: {}]
  %s5 = inlined_call_operand.vmem [shape: f32[64,1], index: 5, kind: input, shape index: {}]
  %s6 = inlined_call_operand.hbm [shape: f32[64,576], index: 6, kind: input, shape index: {}]
  %s7 = inlined_call_operand.vmem [shape: f32[64,1], index: 7, kind: input, shape index: {}]
  %s8 = inlined_call_operand.hbm [shape: f32[64,576], index: 8, kind: input, shape index: {}]
  %s9 = inlined_call_operand.vmem [shape: f32[64,1], index: 9, kind: input, shape index: {}]
  %s10 = inlined_call_operand.vmem [shape: f32[384,128], index: 10, kind: input, shape index: {}]
  %s11 = inlined_call_operand.vmem [shape: f32[4,576], index: 11, kind: input, shape index: {}]
  %s12 = inlined_call_operand.vmem [shape: f32[4,1], index: 12, kind: input, shape index: {}]
  %s13 = inlined_call_operand.hbm [shape: f32[2,4,128], index: 13, kind: output, shape index: {}]
  %s14 = sld [smem:[#allocation0]]
  $region105: #{tpu_custom_call.1} parent=0
    _
  %s16 = ssub.s32 1, %s14
  %s17 = scalar_select 0, %s16, %s14
  $region1: #{tpu_custom_call.1} parent=0
    #allocation4 [shape = 'u8[12288]{0}', space=vmem, size = 0x3000, scoped, tag = 'input window, operand 0']
    #allocation5 [shape = 's32[2]{0}', space=sflag, size = 0x8, scoped, tag = 'scoped memory for tpu_custom_call.1']
    #allocation6 [shape = 's32[2]{0}', space=sflag, size = 0x8, scoped, tag = 'scoped memory for tpu_custom_call.1']
    #allocation7 [shape = 'u8[1536]{0}', space=vmem, size = 0x800, scoped, tag = 'input window, operand 1, single buffered']
    #allocation8 [shape = 's32[1]{0}', space=sflag, size = 0x4, scoped, tag = 'scoped memory for tpu_custom_call.1']
    #allocation9 [shape = 'u8[163840]{0}', space=vmem, size = 0x28000, scoped, tag = 'input window, operand 4, single buffered']
    #allocation10 [shape = 'u8[163840]{0}', space=vmem, size = 0x28000, scoped, tag = 'input window, operand 6, single buffered']
    #allocation11 [shape = 's32[1]{0}', space=sflag, size = 0x4, scoped, tag = 'scoped memory for tpu_custom_call.1']
    #allocation12 [shape = 'u8[163840]{0}', space=vmem, size = 0x28000, scoped, tag = 'input window, operand 8, single buffered']
    #allocation13 [shape = 'u8[4096]{0}', space=vmem, size = 0x1000, scoped, tag = 'output window, operand 0']
    %18 = vsyncpa [#allocation5], 0
    %s19 = scalar_lea.sflag [#allocation5], 1
    %20 = vsyncpa %s19, 0
    %21 = vsyncpa [#allocation8], 0
    %22 = vsyncpa [#allocation11], 0
    %23 = vsyncpa [#allocation6], 0
    %s24 = scalar_lea.sflag [#allocation6], 1
    %25 = vsyncpa %s24, 0
    loop: start=0, step=1, limit=4
    $region2: #{tpu_custom_call.1} parent=1 // loop_pre_header
      _
    $region3: #{tpu_custom_call.1} parent=1 // loop_header
      %s27 = sphi 0, %s31
      %p28 = scmp.ge.s32.totalorder %s27, 4
      %s37 = sphi 0, %s39
      %s40 = sphi 0, %s37
      %s41 = sphi 0, %s40
      %s57 = sphi 0, %s41
      %s61 = sphi 0, %s61
      %s63 = sphi 0, %s61
      %s64 = sphi 0, %s63
      %s78 = sphi 0, %s64
      %s82 = sphi 0, %s82
      %s84 = sphi 0, %s82
      %s85 = sphi 0, %s84
      %s99 = sphi 0, %s85
      %s103 = sphi 0, %s103
      %s105 = sphi 0, %s103
      %s106 = sphi 0, %s105
      %s120 = sphi 0, %s106
      %s124 = sphi 0, %s124
      %s126 = sphi 0, %s124
      %s127 = sphi 0, %s126
      %s141 = sphi 0, %s127
      %s145 = sphi 0, %s145
      %s147 = sphi 0, %s145
      %s148 = sphi 0, %s147
      %s162 = sphi 0, %s148
      %s166 = sphi 0, %s166
      %s168 = sphi 0, %s166
      %s169 = sphi 0, %s168
      %s183 = sphi 0, %s169
      %s187 = sphi 0, %s187
      %s189 = sphi 0, %s187
      %s190 = sphi 0, %s189
      %s204 = sphi 0, %s190
      %s208 = sphi 0, %s208
      %s210 = sphi 0, %s208
      %s211 = sphi 0, %s210
      %s225 = sphi 0, %s211
      %s229 = sphi 0, %s229
      %s231 = sphi 0, %s229
      %s232 = sphi 0, %s231
      %s246 = sphi 0, %s232
      %s250 = sphi 0, %s250
      %s252 = sphi 0, %s250
      %s253 = sphi 0, %s252
      %s267 = sphi 0, %s253
      %s271 = sphi 0, %s271
      %s273 = sphi 0, %s271
      %s274 = sphi 0, %s273
      %s288 = sphi 0, %s274
      %s292 = sphi 0, %s292
      %s294 = sphi 0, %s292
      %s295 = sphi 0, %s294
      %s309 = sphi 0, %s295
      %s315 = sphi 0, %s317
      %s318 = sphi 0, %s315
      %s319 = sphi 0, %s318
      %s335 = sphi 0, %s319
    $region4: #{tpu_custom_call.1} parent=1 // loop_header_branch
      %30 = sbr.rel (%p28) target = $region8
    $region5: #{tpu_custom_call.1} parent=1 // loop_body
      %s32 = ssub.s32 %s27, 1
      %s33 = ssub.s32 %s27, 2
      %s34 = sadd.s32 %s27, 1
      %s35 = ssub.s32 %s27, %s34
      %p36 = scmp.eq.s32.totalorder %s35, 0
      %s38 = sadd.s32 %s37, 1
      %s39 = scalar_select %p36, %s37, %s38
      %p42 = pneg %p36
      %p43 = scmp.eq.s32.totalorder %s27, 1
      %p44 = por %p42, %p43
      %p45 = scmp.ne.s32.totalorder %s37, %s40
      %p46 = scmp.eq.s32.totalorder %s27, 0
      %p47 = por %p45, %p46
      %p48 = scmp.ne.s32.totalorder %s37, %s40
      %p49 = scmp.eq.s32.totalorder %s32, 1
      %p50 = por %p48, %p49
      %p51 = scmp.ne.s32.totalorder %s40, %s41
      %p52 = scmp.eq.s32.totalorder %s32, 0
      %p53 = por %p51, %p52
      %p54 = scmp.ne.s32.totalorder %s40, %s41
      %p55 = scmp.eq.s32.totalorder %s33, 1
      %p56 = por %p54, %p55
      %p58 = scmp.ne.s32.totalorder %s41, %s57
      %p59 = scmp.eq.s32.totalorder %s33, 0
      %p60 = por %p58, %p59
      %s62 = sadd.s32 %s61, 1
      %p65 = scmp.eq.s32.totalorder %s27, 1
      %p66 = scmp.ne.s32.totalorder %s61, %s63
      %p67 = scmp.eq.s32.totalorder %s27, 0
      %p68 = por %p66, %p67
      %p69 = scmp.ne.s32.totalorder %s61, %s63
      %p70 = scmp.eq.s32.totalorder %s32, 1
      %p71 = por %p69, %p70
      %p72 = scmp.ne.s32.totalorder %s63, %s64
      %p73 = scmp.eq.s32.totalorder %s32, 0
      %p74 = por %p72, %p73
      %p75 = scmp.ne.s32.totalorder %s63, %s64
      %p76 = scmp.eq.s32.totalorder %s33, 1
      %p77 = por %p75, %p76
      %p79 = scmp.ne.s32.totalorder %s64, %s78
      %p80 = scmp.eq.s32.totalorder %s33, 0
      %p81 = por %p79, %p80
      %s83 = sadd.s32 %s82, 1
      %p86 = scmp.eq.s32.totalorder %s27, 1
      %p87 = scmp.ne.s32.totalorder %s82, %s84
      %p88 = scmp.eq.s32.totalorder %s27, 0
      %p89 = por %p87, %p88
      %p90 = scmp.ne.s32.totalorder %s82, %s84
      %p91 = scmp.eq.s32.totalorder %s32, 1
      %p92 = por %p90, %p91
      %p93 = scmp.ne.s32.totalorder %s84, %s85
      %p94 = scmp.eq.s32.totalorder %s32, 0
      %p95 = por %p93, %p94
      %p96 = scmp.ne.s32.totalorder %s84, %s85
      %p97 = scmp.eq.s32.totalorder %s33, 1
      %p98 = por %p96, %p97
      %p100 = scmp.ne.s32.totalorder %s85, %s99
      %p101 = scmp.eq.s32.totalorder %s33, 0
      %p102 = por %p100, %p101
      %s104 = sadd.s32 %s103, 1
      %p107 = scmp.eq.s32.totalorder %s27, 1
      %p108 = scmp.ne.s32.totalorder %s103, %s105
      %p109 = scmp.eq.s32.totalorder %s27, 0
      %p110 = por %p108, %p109
      %p111 = scmp.ne.s32.totalorder %s103, %s105
      %p112 = scmp.eq.s32.totalorder %s32, 1
      %p113 = por %p111, %p112
      %p114 = scmp.ne.s32.totalorder %s105, %s106
      %p115 = scmp.eq.s32.totalorder %s32, 0
      %p116 = por %p114, %p115
      %p117 = scmp.ne.s32.totalorder %s105, %s106
      %p118 = scmp.eq.s32.totalorder %s33, 1
      %p119 = por %p117, %p118
      %p121 = scmp.ne.s32.totalorder %s106, %s120
      %p122 = scmp.eq.s32.totalorder %s33, 0
      %p123 = por %p121, %p122
      %s125 = sadd.s32 %s124, 1
      %p128 = scmp.eq.s32.totalorder %s27, 1
      %p129 = scmp.ne.s32.totalorder %s124, %s126
      %p130 = scmp.eq.s32.totalorder %s27, 0
      %p131 = por %p129, %p130
      %p132 = scmp.ne.s32.totalorder %s124, %s126
      %p133 = scmp.eq.s32.totalorder %s32, 1
      %p134 = por %p132, %p133
      %p135 = scmp.ne.s32.totalorder %s126, %s127
      %p136 = scmp.eq.s32.totalorder %s32, 0
      %p137 = por %p135, %p136
      %p138 = scmp.ne.s32.totalorder %s126, %s127
      %p139 = scmp.eq.s32.totalorder %s33, 1
      %p140 = por %p138, %p139
      %p142 = scmp.ne.s32.totalorder %s127, %s141
      %p143 = scmp.eq.s32.totalorder %s33, 0
      %p144 = por %p142, %p143
      %s146 = sadd.s32 %s145, 1
      %p149 = scmp.eq.s32.totalorder %s27, 1
      %p150 = scmp.ne.s32.totalorder %s145, %s147
      %p151 = scmp.eq.s32.totalorder %s27, 0
      %p152 = por %p150, %p151
      %p153 = scmp.ne.s32.totalorder %s145, %s147
      %p154 = scmp.eq.s32.totalorder %s32, 1
      %p155 = por %p153, %p154
      %p156 = scmp.ne.s32.totalorder %s147, %s148
      %p157 = scmp.eq.s32.totalorder %s32, 0
      %p158 = por %p156, %p157
      %p159 = scmp.ne.s32.totalorder %s147, %s148
      %p160 = scmp.eq.s32.totalorder %s33, 1
      %p161 = por %p159, %p160
      %p163 = scmp.ne.s32.totalorder %s148, %s162
      %p164 = scmp.eq.s32.totalorder %s33, 0
      %p165 = por %p163, %p164
      %s167 = sadd.s32 %s166, 1
      %p170 = scmp.eq.s32.totalorder %s27, 1
      %p171 = scmp.ne.s32.totalorder %s166, %s168
      %p172 = scmp.eq.s32.totalorder %s27, 0
      %p173 = por %p171, %p172
      %p174 = scmp.ne.s32.totalorder %s166, %s168
      %p175 = scmp.eq.s32.totalorder %s32, 1
      %p176 = por %p174, %p175
      %p177 = scmp.ne.s32.totalorder %s168, %s169
      %p178 = scmp.eq.s32.totalorder %s32, 0
      %p179 = por %p177, %p178
      %p180 = scmp.ne.s32.totalorder %s168, %s169
      %p181 = scmp.eq.s32.totalorder %s33, 1
      %p182 = por %p180, %p181
      %p184 = scmp.ne.s32.totalorder %s169, %s183
      %p185 = scmp.eq.s32.totalorder %s33, 0
      %p186 = por %p184, %p185
      %s188 = sadd.s32 %s187, 1
      %p191 = scmp.eq.s32.totalorder %s27, 1
      %p192 = scmp.ne.s32.totalorder %s187, %s189
      %p193 = scmp.eq.s32.totalorder %s27, 0
      %p194 = por %p192, %p193
      %p195 = scmp.ne.s32.totalorder %s187, %s189
      %p196 = scmp.eq.s32.totalorder %s32, 1
      %p197 = por %p195, %p196
      %p198 = scmp.ne.s32.totalorder %s189, %s190
      %p199 = scmp.eq.s32.totalorder %s32, 0
      %p200 = por %p198, %p199
      %p201 = scmp.ne.s32.totalorder %s189, %s190
      %p202 = scmp.eq.s32.totalorder %s33, 1
      %p203 = por %p201, %p202
      %p205 = scmp.ne.s32.totalorder %s190, %s204
      %p206 = scmp.eq.s32.totalorder %s33, 0
      %p207 = por %p205, %p206
      %s209 = sadd.s32 %s208, 1
      %p212 = scmp.eq.s32.totalorder %s27, 1
      %p213 = scmp.ne.s32.totalorder %s208, %s210
      %p214 = scmp.eq.s32.totalorder %s27, 0
      %p215 = por %p213, %p214
      %p216 = scmp.ne.s32.totalorder %s208, %s210
      %p217 = scmp.eq.s32.totalorder %s32, 1
      %p218 = por %p216, %p217
      %p219 = scmp.ne.s32.totalorder %s210, %s211
      %p220 = scmp.eq.s32.totalorder %s32, 0
      %p221 = por %p219, %p220
      %p222 = scmp.ne.s32.totalorder %s210, %s211
      %p223 = scmp.eq.s32.totalorder %s33, 1
      %p224 = por %p222, %p223
      %p226 = scmp.ne.s32.totalorder %s211, %s225
      %p227 = scmp.eq.s32.totalorder %s33, 0
      %p228 = por %p226, %p227
      %s230 = sadd.s32 %s229, 1
      %p233 = scmp.eq.s32.totalorder %s27, 1
      %p234 = scmp.ne.s32.totalorder %s229, %s231
      %p235 = scmp.eq.s32.totalorder %s27, 0
      %p236 = por %p234, %p235
      %p237 = scmp.ne.s32.totalorder %s229, %s231
      %p238 = scmp.eq.s32.totalorder %s32, 1
      %p239 = por %p237, %p238
      %p240 = scmp.ne.s32.totalorder %s231, %s232
      %p241 = scmp.eq.s32.totalorder %s32, 0
      %p242 = por %p240, %p241
      %p243 = scmp.ne.s32.totalorder %s231, %s232
      %p244 = scmp.eq.s32.totalorder %s33, 1
      %p245 = por %p243, %p244
      %p247 = scmp.ne.s32.totalorder %s232, %s246
      %p248 = scmp.eq.s32.totalorder %s33, 0
      %p249 = por %p247, %p248
      %s251 = sadd.s32 %s250, 1
      %p254 = scmp.eq.s32.totalorder %s27, 1
      %p255 = scmp.ne.s32.totalorder %s250, %s252
      %p256 = scmp.eq.s32.totalorder %s27, 0
      %p257 = por %p255, %p256
      %p258 = scmp.ne.s32.totalorder %s250, %s252
      %p259 = scmp.eq.s32.totalorder %s32, 1
      %p260 = por %p258, %p259
      %p261 = scmp.ne.s32.totalorder %s252, %s253
      %p262 = scmp.eq.s32.totalorder %s32, 0
      %p263 = por %p261, %p262
      %p264 = scmp.ne.s32.totalorder %s252, %s253
      %p265 = scmp.eq.s32.totalorder %s33, 1
      %p266 = por %p264, %p265
      %p268 = scmp.ne.s32.totalorder %s253, %s267
      %p269 = scmp.eq.s32.totalorder %s33, 0
      %p270 = por %p268, %p269
      %s272 = sadd.s32 %s271, 1
      %p275 = scmp.eq.s32.totalorder %s27, 1
      %p276 = scmp.ne.s32.totalorder %s271, %s273
      %p277 = scmp.eq.s32.totalorder %s27, 0
      %p278 = por %p276, %p277
      %p279 = scmp.ne.s32.totalorder %s271, %s273
      %p280 = scmp.eq.s32.totalorder %s32, 1
      %p281 = por %p279, %p280
      %p282 = scmp.ne.s32.totalorder %s273, %s274
      %p283 = scmp.eq.s32.totalorder %s32, 0
      %p284 = por %p282, %p283
      %p285 = scmp.ne.s32.totalorder %s273, %s274
      %p286 = scmp.eq.s32.totalorder %s33, 1
      %p287 = por %p285, %p286
      %p289 = scmp.ne.s32.totalorder %s274, %s288
      %p290 = scmp.eq.s32.totalorder %s33, 0
      %p291 = por %p289, %p290
      %s293 = sadd.s32 %s292, 1
      %p296 = scmp.eq.s32.totalorder %s27, 1
      %p297 = scmp.ne.s32.totalorder %s292, %s294
      %p298 = scmp.eq.s32.totalorder %s27, 0
      %p299 = por %p297, %p298
      %p300 = scmp.ne.s32.totalorder %s292, %s294
      %p301 = scmp.eq.s32.totalorder %s32, 1
      %p302 = por %p300, %p301
      %p303 = scmp.ne.s32.totalorder %s294, %s295
      %p304 = scmp.eq.s32.totalorder %s32, 0
      %p305 = por %p303, %p304
      %p306 = scmp.ne.s32.totalorder %s294, %s295
      %p307 = scmp.eq.s32.totalorder %s33, 1
      %p308 = por %p306, %p307
      %p310 = scmp.ne.s32.totalorder %s295, %s309
      %p311 = scmp.eq.s32.totalorder %s33, 0
      %p312 = por %p310, %p311
      %s313 = ssub.s32 %s27, %s34
      %p314 = scmp.eq.s32.totalorder %s313, 0
      %s316 = sadd.s32 %s315, 1
      %s317 = scalar_select %p314, %s315, %s316
      %p320 = pneg %p314
      %p321 = scmp.eq.s32.totalorder %s27, 1
      %p322 = por %p320, %p321
      %p323 = scmp.ne.s32.totalorder %s315, %s318
      %p324 = scmp.eq.s32.totalorder %s27, 0
      %p325 = por %p323, %p324
      %p326 = scmp.ne.s32.totalorder %s315, %s318
      %p327 = scmp.eq.s32.totalorder %s32, 1
      %p328 = por %p326, %p327
      %p329 = scmp.ne.s32.totalorder %s318, %s319
      %p330 = scmp.eq.s32.totalorder %s32, 0
      %p331 = por %p329, %p330
      %p332 = scmp.ne.s32.totalorder %s318, %s319
      %p333 = scmp.eq.s32.totalorder %s33, 1
      %p334 = por %p332, %p333
      %p336 = scmp.ne.s32.totalorder %s319, %s335
      %p337 = scmp.eq.s32.totalorder %s33, 0
      %p338 = por %p336, %p337
      %p339 = scmp.le.s32.totalorder 1, %s27
      %p340 = scmp.lt.s32.totalorder %s27, 3
      %p341 = pnand %p339, %p340
      %p342 = pneg %p341
      // Predicated region
      $region9: #{tpu_custom_call.1} parent=5 // pred_check
        _
      $region10: #{tpu_custom_call.1} parent=5 // pred_check_branch
        %344 = sbr.rel (%p341) target = $region12
      $region11: #{tpu_custom_call.1} parent=5 // pred_region
        %s345 = ssub.s32 %s27, 1
        // Predicated region
        $region13: #{tpu_custom_call.1} parent=11 // pred_check
          %p346 = pneg %p74
        $region14: #{tpu_custom_call.1} parent=11 // pred_check_branch
          %348 = sbr.rel (%p346) target = $region16
        $region15: #{tpu_custom_call.1} parent=11 // pred_region
          %s350 = ssub.s32 48, 48
          %351 = vsyncadd [#allocation8], %s350
          %s353 = sshll.u32 [#allocation7], 4
          %s354 = int_to_ptr.vmem [resolvable:$true] %s353
          %356 = dma.hbm_to_vmem [thread:$0]  %s1, 48, %s354, [#allocation8]
        $region16: #{tpu_custom_call.1} parent=11 // pred_fallthru
          _
        // Predicated region
        $region17: #{tpu_custom_call.1} parent=11 // pred_check
          %p357 = pneg %p95
        $region18: #{tpu_custom_call.1} parent=11 // pred_check_branch
          %359 = sbr.rel (%p357) target = $region20
        $region19: #{tpu_custom_call.1} parent=11 // pred_region
          _
        $region20: #{tpu_custom_call.1} parent=11 // pred_fallthru
          _
        // Predicated region
        $region21: #{tpu_custom_call.1} parent=11 // pred_check
          %p360 = pneg %p116
        $region22: #{tpu_custom_call.1} parent=11 // pred_check_branch
          %362 = sbr.rel (%p360) target = $region24
        $region23: #{tpu_custom_call.1} parent=11 // pred_region
          _
        $region24: #{tpu_custom_call.1} parent=11 // pred_fallthru
          _
        // Predicated region
        $region25: #{tpu_custom_call.1} parent=11 // pred_check
          %p363 = pneg %p137
        $region26: #{tpu_custom_call.1} parent=11 // pred_check_branch
          %365 = sbr.rel (%p363) target = $region28
        $region27: #{tpu_custom_call.1} parent=11 // pred_region
          %s367 = ssub.s32 5120, 5120
          %368 = vsyncadd [#allocation8], %s367
          %s369 = sshll.u32 [#allocation9], 4
          %s370 = int_to_ptr.vmem [resolvable:$true] %s369
          %375 = dma.hbm_to_vmem [thread:$0]  %s4, 5120, %s370, [#allocation8], 640, 640, 40
        $region28: #{tpu_custom_call.1} parent=11 // pred_fallthru
          _
        // Predicated region
        $region29: #{tpu_custom_call.1} parent=11 // pred_check
          %p376 = pneg %p158
        $region30: #{tpu_custom_call.1} parent=11 // pred_check_branch
          %378 = sbr.rel (%p376) target = $region32
        $region31: #{tpu_custom_call.1} parent=11 // pred_region
          _
        $region32: #{tpu_custom_call.1} parent=11 // pred_fallthru
          _
        // Predicated region
        $region33: #{tpu_custom_call.1} parent=11 // pred_check
          %p379 = pneg %p179
        $region34: #{tpu_custom_call.1} parent=11 // pred_check_branch
          %381 = sbr.rel (%p379) target = $region36
        $region35: #{tpu_custom_call.1} parent=11 // pred_region
          %s383 = ssub.s32 5120, 5120
          %384 = vsyncadd [#allocation11], %s383
          %s385 = sshll.u32 [#allocation10], 4
          %s386 = int_to_ptr.vmem [resolvable:$true] %s385
          %391 = dma.hbm_to_vmem [thread:$0]  %s6, 5120, %s386, [#allocation11], 640, 640, 40
        $region36: #{tpu_custom_call.1} parent=11 // pred_fallthru
          _
        // Predicated region
        $region37: #{tpu_custom_call.1} parent=11 // pred_check
          %p392 = pneg %p200
        $region38: #{tpu_custom_call.1} parent=11 // pred_check_branch
          %394 = sbr.rel (%p392) target = $region40
        $region39: #{tpu_custom_call.1} parent=11 // pred_region
          _
        $region40: #{tpu_custom_call.1} parent=11 // pred_fallthru
          _
        // Predicated region
        $region41: #{tpu_custom_call.1} parent=11 // pred_check
          %p395 = pneg %p221
        $region42: #{tpu_custom_call.1} parent=11 // pred_check_branch
          %397 = sbr.rel (%p395) target = $region44
        $region43: #{tpu_custom_call.1} parent=11 // pred_region
          %s399 = ssub.s32 5120, 5120
          %400 = vsyncadd [#allocation11], %s399
          %s401 = sshll.u32 [#allocation12], 4
          %s402 = int_to_ptr.vmem [resolvable:$true] %s401
          %407 = dma.hbm_to_vmem [thread:$0]  %s8, 5120, %s402, [#allocation11], 640, 640, 40
        $region44: #{tpu_custom_call.1} parent=11 // pred_fallthru
          _
        // Predicated region
        $region45: #{tpu_custom_call.1} parent=11 // pred_check
          %p408 = pneg %p242
        $region46: #{tpu_custom_call.1} parent=11 // pred_check_branch
          %410 = sbr.rel (%p408) target = $region48
        $region47: #{tpu_custom_call.1} parent=11 // pred_region
          _
        $region48: #{tpu_custom_call.1} parent=11 // pred_fallthru
          _
        // Predicated region
        $region49: #{tpu_custom_call.1} parent=11 // pred_check
          %p411 = pneg %p263
        $region50: #{tpu_custom_call.1} parent=11 // pred_check_branch
          %413 = sbr.rel (%p411) target = $region52
        $region51: #{tpu_custom_call.1} parent=11 // pred_region
          _
        $region52: #{tpu_custom_call.1} parent=11 // pred_fallthru
          _
        // Predicated region
        $region53: #{tpu_custom_call.1} parent=11 // pred_check
          %p414 = pneg %p284
        $region54: #{tpu_custom_call.1} parent=11 // pred_check_branch
          %416 = sbr.rel (%p414) target = $region56
        $region55: #{tpu_custom_call.1} parent=11 // pred_region
          _
        $region56: #{tpu_custom_call.1} parent=11 // pred_fallthru
          _
        // Predicated region
        $region57: #{tpu_custom_call.1} parent=11 // pred_check
          %p417 = pneg %p305
        $region58: #{tpu_custom_call.1} parent=11 // pred_check_branch
          %419 = sbr.rel (%p417) target = $region60
        $region59: #{tpu_custom_call.1} parent=11 // pred_region
          _
        $region60: #{tpu_custom_call.1} parent=11 // pred_fallthru
          _
      $region12: #{tpu_custom_call.1} parent=5 // pred_fallthru
        _
      %p420 = scmp.lt.s32.totalorder %s27, 2
      // Predicated region
      $region61: #{tpu_custom_call.1} parent=5 // pred_check
        %p421 = pneg %p420
      $region62: #{tpu_custom_call.1} parent=5 // pred_check_branch
        %423 = sbr.rel (%p421) target = $region64
      $region63: #{tpu_custom_call.1} parent=5 // pred_region
        // Predicated region
        $region65: #{tpu_custom_call.1} parent=63 // pred_check
          %p424 = pneg %p47
        $region66: #{tpu_custom_call.1} parent=63 // pred_check_branch
          %426 = sbr.rel (%p424) target = $region68
        $region67: #{tpu_custom_call.1} parent=63 // pred_region
          %s427 = sand.u32 %s37, 1
          %s428 = scalar_lea.sflag [#allocation5], %s427
          %s429 = sand.u32 %s37, 1
          %s430 = smul.addr %s429, 12
          %s431 = scalar_lea.vmem [#allocation4], %s430
          %s433 = ssub.s32 192, 192
          %434 = vsyncadd %s428, %s433
          %s435 = smul.addr %s27, 3
          %s436 = smul.addr %s435, 64
          %s437 = scalar_lea.hbm %s0, %s436
          %s439 = sshll.u32 %s431, 4
          %s440 = int_to_ptr.vmem [resolvable:$true] %s439
          %442 = dma.hbm_to_vmem [thread:$0]  %s437, 192, %s440, %s428
        $region68: #{tpu_custom_call.1} parent=63 // pred_fallthru
          _
      $region64: #{tpu_custom_call.1} parent=5 // pred_fallthru
        _
      %p443 = scmp.le.s32.totalorder 1, %s27
      %p444 = scmp.lt.s32.totalorder %s27, 3
      %p445 = pnand %p443, %p444
      %p446 = pneg %p445
      // Predicated region
      $region69: #{tpu_custom_call.1} parent=5 // pred_check
        _
      $region70: #{tpu_custom_call.1} parent=5 // pred_check_branch
        %448 = sbr.rel (%p445) target = $region72
      $region71: #{tpu_custom_call.1} parent=5 // pred_region
        %s449 = ssub.s32 %s27, 1
        %s450 = sand.u32 %s40, 1
        %s451 = scalar_lea.sflag [#allocation5], %s450
        %s452 = sand.u32 %s40, 1
        %s453 = smul.addr %s452, 12
        %s454 = scalar_lea.vmem [#allocation4], %s453
        // Predicated region
        $region73: #{tpu_custom_call.1} parent=71 // pred_check
          %p455 = pneg %p53
        $region74: #{tpu_custom_call.1} parent=71 // pred_check_branch
          %457 = sbr.rel (%p455) target = $region76
        $region75: #{tpu_custom_call.1} parent=71 // pred_region
          %458 = dma.done %s451, 192
        $region76: #{tpu_custom_call.1} parent=71 // pred_fallthru
          _
        // Predicated region
        $region77: #{tpu_custom_call.1} parent=71 // pred_check
          %p459 = pneg %p74
        $region78: #{tpu_custom_call.1} parent=71 // pred_check_branch
          %461 = sbr.rel (%p459) target = $region80
        $region79: #{tpu_custom_call.1} parent=71 // pred_region
          %462 = dma.done [#allocation8], 48
        $region80: #{tpu_custom_call.1} parent=71 // pred_fallthru
          _
        // Predicated region
        $region81: #{tpu_custom_call.1} parent=71 // pred_check
          %p463 = pneg %p137
        $region82: #{tpu_custom_call.1} parent=71 // pred_check_branch
          %465 = sbr.rel (%p463) target = $region84
        $region83: #{tpu_custom_call.1} parent=71 // pred_region
          %466 = dma.done [#allocation8], 5120
        $region84: #{tpu_custom_call.1} parent=71 // pred_fallthru
          _
        // Predicated region
        $region85: #{tpu_custom_call.1} parent=71 // pred_check
          %p467 = pneg %p179
        $region86: #{tpu_custom_call.1} parent=71 // pred_check_branch
          %469 = sbr.rel (%p467) target = $region88
        $region87: #{tpu_custom_call.1} parent=71 // pred_region
          %470 = dma.done [#allocation11], 5120
        $region88: #{tpu_custom_call.1} parent=71 // pred_fallthru
          _
        // Predicated region
        $region89: #{tpu_custom_call.1} parent=71 // pred_check
          %p471 = pneg %p221
        $region90: #{tpu_custom_call.1} parent=71 // pred_check_branch
          %473 = sbr.rel (%p471) target = $region92
        $region91: #{tpu_custom_call.1} parent=71 // pred_region
          %474 = dma.done [#allocation11], 5120
        $region92: #{tpu_custom_call.1} parent=71 // pred_fallthru
          _
        %s475 = sand.u32 %s40, 1
        %s476 = scalar_lea.sflag [#allocation5], %s475
        %s477 = sand.u32 %s40, 1
        %s478 = smul.addr %s477, 12
        %s479 = scalar_lea.vmem [#allocation4], %s478
        %p480 = pneg %p53
        %p481 = pneg %p50
        %p482 = pneg %p74
        %p483 = pneg %p71
        %p484 = pneg %p95
        %p485 = pneg %p92
        %p486 = pneg %p116
        %p487 = pneg %p113
        %p488 = pneg %p137
        %p489 = pneg %p134
        %p490 = pneg %p158
        %p491 = pneg %p155
        %p492 = pneg %p179
        %p493 = pneg %p176
        %p494 = pneg %p200
        %p495 = pneg %p197
        %p496 = pneg %p221
        %p497 = pneg %p218
        %p498 = pneg %p242
        %p499 = pneg %p239
        %p500 = pneg %p263
        %p501 = pneg %p260
        %p502 = pneg %p284
        %p503 = pneg %p281
        %p504 = pneg %p305
        %p505 = pneg %p302
        %p506 = pneg %p331
        %p507 = pneg %p328
        %s508 = sand.u32 %s318, 1
        %s509 = scalar_lea.sflag [#allocation6], %s508
        %s510 = sand.u32 %s318, 1
        %s511 = smul.addr %s510, 4
        %s512 = scalar_lea.vmem [#allocation13], %s511
        %v513 = vld [vmem:[%s454] sm:$0xff]
        %v514 = vld [vmem:[%s454 + $0x8] sm:$0xf]
        %v515 = vld [vmem:[%s2] sm:$0xff]
        %v516 = vld [vmem:[%s2 + $0x8] sm:$0xff]
        %v517 = vld [vmem:[%s2 + $0x10] sm:$0xff]
        %v518 = vld [vmem:[%s2 + $0x18] sm:$0xff]
        %v519 = vld [vmem:[%s2 + $0x20] sm:$0xff]
        %v520 = vld [vmem:[%s2 + $0x28] sm:$0xff]
        %v521 = vld [vmem:[%s2 + $0x30] sm:$0xff]
        %v522 = vld [vmem:[%s2 + $0x38] sm:$0xff]
        %v525 = vcombine.high %v513, %v513
        %527 = vrot.lane.b32.xlu0 %v513, 19
        %v528 = vpop.permute.xlu0 %527
        %529 = vrot.lane.b32.xlu0 %v525, 19
        %v530 = vpop.permute.xlu0 %529
        %531 = vrot.lane.b32.xlu0 %v514, 19
        %v532 = vpop.permute.xlu0 %531
        %v533 = vlaneseq
        %v534 = vand.u32 %v533, 127
        %vm535 = vcmp.lt.s32.totalorder %v534, 19
        %v536 = vsel %vm535, %v530, %v532
        %v537 = vsel %vm535, %v528, %v530
        %v538 = vsel %vm535, %v532, %v528
        %v539 = vld [vmem:[%s2] sm:$0xff]
        %v540 = vld [vmem:[%s2 + $0x8] sm:$0xff]
        %v541 = vld [vmem:[%s2 + $0x10] sm:$0xff]
        %v542 = vld [vmem:[%s2 + $0x18] sm:$0xff]
        %v543 = vld [vmem:[%s2 + $0x20] sm:$0xff]
        %v544 = vld [vmem:[%s2 + $0x28] sm:$0xff]
        %v545 = vld [vmem:[%s2 + $0x30] sm:$0xff]
        %v546 = vld [vmem:[%s2 + $0x38] sm:$0xff]
        %547 = vrot.lane.b32.xlu0 %v513, 18
        %v548 = vpop.permute.xlu0 %547
        %549 = vrot.lane.b32.xlu0 %v525, 18
        %v550 = vpop.permute.xlu0 %549
        %551 = vrot.lane.b32.xlu0 %v514, 18
        %v552 = vpop.permute.xlu0 %551
        %vm553 = vcmp.lt.s32.totalorder %v534, 18
        %v554 = vsel %vm553, %v550, %v552
        %v555 = vsel %vm553, %v548, %v550
        %v556 = vsel %vm553, %v552, %v548
        %565 = vrot.lane.b32.xlu0 %v539, 124
        %v566 = vpop.permute.xlu0 %565
        %567 = vrot.lane.b32.xlu0 %v540, 124
        %v568 = vpop.permute.xlu0 %567
        %569 = vrot.lane.b32.xlu0 %v541, 124
        %v570 = vpop.permute.xlu0 %569
        %571 = vrot.lane.b32.xlu0 %v542, 124
        %v572 = vpop.permute.xlu0 %571
        %573 = vrot.lane.b32.xlu0 %v543, 124
        %v574 = vpop.permute.xlu0 %573
        %575 = vrot.lane.b32.xlu0 %v544, 124
        %v576 = vpop.permute.xlu0 %575
        %577 = vrot.lane.b32.xlu0 %v545, 124
        %v578 = vpop.permute.xlu0 %577
        %579 = vrot.lane.b32.xlu0 %v546, 124
        %v580 = vpop.permute.xlu0 %579
        %vm581 = vcmask 31744
        %v582 = vsel %vm581, %v566, 0
        %v584 = vsel %vm581, %v568, 0
        %v586 = vsel %vm581, %v570, 0
        %v588 = vsel %vm581, %v572, 0
        %v590 = vsel %vm581, %v574, 0
        %v592 = vsel %vm581, %v576, 0
        %v594 = vsel %vm581, %v578, 0
        %v596 = vsel %vm581, %v580, 0
        %vm598 = vcmask 1043456
        %v600 = vsel %vm598, %v556, 0
        %v603 = vsel %vm598, %v555, 0
        %v606 = vsel %vm598, %v554, 0
        %608 = vmatprep.subr.mxu0 %v603
        %609 = vmatpush1.msra.mxu0 %v600
        %610 = vmatprep.subr.mxu0 0.0
        %611 = vmatpush1.msra.mxu0 0.0
        %612 = vmatprep.subr.mxu0 0.0
        %613 = vmatpush1.msra.mxu0 0.0
        %614 = vmatprep.subr.mxu0 0.0
        %615 = vmatpush1.msra.mxu0 0.0
        %616 = vmatprep.subr.mxu0 0.0
        %617 = vmatpush1.msra.mxu0 0.0
        %618 = vmatprep.subr.mxu0 0.0
        %619 = vmatpush1.msra.mxu0 0.0
        %620 = vmatprep.subr.mxu0 0.0
        %621 = vmatpush1.msra.mxu0 0.0
        %622 = vmatprep.subr.mxu0 0.0
        %623 = vmatpush1.msra.mxu0 0.0
        %624 = vmatprep.subr.mxu0 0.0
        %625 = vmatpush1.msra.mxu0 0.0
        %626 = vmatprep.subr.mxu0 0.0
        %627 = vmatpush1.msra.mxu0 0.0
        %628 = vmatprep.subr.mxu0 0.0
        %629 = vmatpush1.msra.mxu0 0.0
        %630 = vmatprep.subr.mxu0 0.0
        %631 = vmatpush1.msra.mxu0 0.0
        %632 = vmatprep.subr.mxu0 0.0
        %633 = vmatpush1.msra.mxu0 0.0
        %634 = vmatprep.subr.mxu0 0.0
        %635 = vmatpush1.msra.mxu0 0.0
        %636 = vmatprep.subr.mxu0 0.0
        %637 = vmatpush1.msra.mxu0 0.0
        %638 = vmatprep.subr.mxu0 0.0
        %639 = vmatpush1.msra.mxu0 0.0
        %640 = vmatprep.subr.mxu0 0.0
        %641 = vmatpush1.msra.mxu0 0.0
        %642 = vmatprep.subr.mxu0 0.0
        %643 = vmatpush1.msra.mxu0 0.0
        %644 = vmatprep.subr.mxu0 0.0
        %645 = vmatpush1.msra.mxu0 0.0
        %646 = vmatprep.subr.mxu0 0.0
        %647 = vmatpush1.msra.mxu0 0.0
        %648 = vmatprep.subr.mxu0 0.0
        %649 = vmatpush1.msra.mxu0 0.0
        %650 = vmatprep.subr.mxu0 0.0
        %651 = vmatpush1.msra.mxu0 0.0
        %652 = vmatprep.subr.mxu0 0.0
        %653 = vmatpush1.msra.mxu0 0.0
        %654 = vmatprep.subr.mxu0 0.0
        %655 = vmatpush1.msra.mxu0 0.0
        %656 = vmatprep.subr.mxu0 0.0
        %657 = vmatpush1.msra.mxu0 0.0
        %658 = vmatprep.subr.mxu0 0.0
        %659 = vmatpush1.msra.mxu0 0.0
        %660 = vmatprep.subr.mxu0 0.0
        %661 = vmatpush1.msra.mxu0 0.0
        %662 = vmatprep.subr.mxu0 0.0
        %663 = vmatpush1.msra.mxu0 0.0
        %664 = vmatprep.subr.mxu0 0.0
        %665 = vmatpush1.msra.mxu0 0.0
        %666 = vmatprep.subr.mxu0 0.0
        %667 = vmatpush1.msra.mxu0 0.0
        %668 = vmatprep.subr.mxu0 0.0
        %669 = vmatpush1.msra.mxu0 0.0
        %670 = vmatprep.subr.mxu0 0.0
        %671 = vmatpush1.msra.mxu0 0.0
        %672 = vmatprep.mubr.f32.mxu0 0.0
        %673 = vmatmul.mubr.f32.gmra.mrb[0].mxu0 %v582
        %v674 = vpop.f32.mrb[0].mxu0
        %v675 = vadd.f32 0.0, %v674
        %v676 = vpop.f32.mrb[0].mxu0
        %v677 = vadd.f32 0.0, %v676
        %678 = vmatprep.mubr.f32.mxu0 0.0
        %679 = vmatmul.mubr.f32.gmra.mrb[0].mxu0 %v584
        %v680 = vpop.f32.mrb[0].mxu0
        %v681 = vadd.f32 0.0, %v680
        %v682 = vpop.f32.mrb[0].mxu0
        %v683 = vadd.f32 0.0, %v682
        %684 = vmatprep.mubr.f32.mxu0 0.0
        %685 = vmatmul.mubr.f32.gmra.mrb[0].mxu0 %v586
        %v686 = vpop.f32.mrb[0].mxu0
        %v687 = vadd.f32 0.0, %v686
        %v688 = vpop.f32.mrb[0].mxu0
        %v689 = vadd.f32 0.0, %v688
        %690 = vmatprep.mubr.f32.mxu0 0.0
        %691 = vmatmul.mubr.f32.gmra.mrb[0].mxu0 %v588
        %v692 = vpop.f32.mrb[0].mxu0
        %v693 = vadd.f32 0.0, %v692
        %v694 = vpop.f32.mrb[0].mxu0
        %v695 = vadd.f32 0.0, %v694
        %696 = vmatprep.mubr.f32.mxu0 0.0
        %697 = vmatmul.mubr.f32.gmra.mrb[0].mxu0 %v590
        %v698 = vpop.f32.mrb[0].mxu0
        %v699 = vadd.f32 0.0, %v698
        %v700 = vpop.f32.mrb[0].mxu0
        %v701 = vadd.f32 0.0, %v700
        %702 = vmatprep.mubr.f32.mxu0 0.0
        %703 = vmatmul.mubr.f32.gmra.mrb[0].mxu0 %v592
        %v704 = vpop.f32.mrb[0].mxu0
        %v705 = vadd.f32 0.0, %v704
        %v706 = vpop.f32.mrb[0].mxu0
        %v707 = vadd.f32 0.0, %v706
        %708 = vmatprep.mubr.f32.mxu0 0.0
        %709 = vmatmul.mubr.f32.gmra.mrb[0].mxu0 %v594
        %v710 = vpop.f32.mrb[0].mxu0
        %v711 = vadd.f32 0.0, %v710
        %v712 = vpop.f32.mrb[0].mxu0
        %v713 = vadd.f32 0.0, %v712
        %714 = vmatprep.mubr.f32.mxu0 0.0
        %715 = vmatmul.mubr.f32.gmra.mrb[0].mxu0 %v596
        %v716 = vpop.f32.mrb[0].mxu0
        %v717 = vadd.f32 0.0, %v716
        %v718 = vpop.f32.mrb[0].mxu0
        %v719 = vadd.f32 0.0, %v718
        %720 = vdwg.mxu0
        %721 = vmatprep.subr.mxu0 0.0
        %722 = vmatpush1.msra.mxu0 %v606
        %723 = vmatprep.subr.mxu0 0.0
        %724 = vmatpush1.msra.mxu0 0.0
        %725 = vmatprep.subr.mxu0 0.0
        %726 = vmatpush1.msra.mxu0 0.0
        %727 = vmatprep.subr.mxu0 0.0
        %728 = vmatpush1.msra.mxu0 0.0
        %729 = vmatprep.subr.mxu0 0.0
        %730 = vmatpush1.msra.mxu0 0.0
        %731 = vmatprep.subr.mxu0 0.0
        %732 = vmatpush1.msra.mxu0 0.0
        %733 = vmatprep.subr.mxu0 0.0
        %734 = vmatpush1.msra.mxu0 0.0
        %735 = vmatprep.subr.mxu0 0.0
        %736 = vmatpush1.msra.mxu0 0.0
        %737 = vmatprep.subr.mxu0 0.0
        %738 = vmatpush1.msra.mxu0 0.0
        %739 = vmatprep.subr.mxu0 0.0
        %740 = vmatpush1.msra.mxu0 0.0
        %741 = vmatprep.subr.mxu0 0.0
        %742 = vmatpush1.msra.mxu0 0.0
        %743 = vmatprep.subr.mxu0 0.0
        %744 = vmatpush1.msra.mxu0 0.0
        %745 = vmatprep.subr.mxu0 0.0
        %746 = vmatpush1.msra.mxu0 0.0
        %747 = vmatprep.subr.mxu0 0.0
        %748 = vmatpush1.msra.mxu0 0.0
        %749 = vmatprep.subr.mxu0 0.0
        %750 = vmatpush1.msra.mxu0 0.0
        %751 = vmatprep.subr.mxu0 0.0
        %752 = vmatpush1.msra.mxu0 0.0
        %753 = vmatprep.subr.mxu0 0.0
        %754 = vmatpush1.msra.mxu0 0.0
        %755 = vmatprep.subr.mxu0 0.0
        %756 = vmatpush1.msra.mxu0 0.0
        %757 = vmatprep.subr.mxu0 0.0
        %758 = vmatpush1.msra.mxu0 0.0
        %759 = vmatprep.subr.mxu0 0.0
        %760 = vmatpush1.msra.mxu0 0.0
        %761 = vmatprep.subr.mxu0 0.0
        %762 = vmatpush1.msra.mxu0 0.0
        %763 = vmatprep.subr.mxu0 0.0
        %764 = vmatpush1.msra.mxu0 0.0
        %765 = vmatprep.subr.mxu0 0.0
        %766 = vmatpush1.msra.mxu0 0.0
        %767 = vmatprep.subr.mxu0 0.0
        %768 = vmatpush1.msra.mxu0 0.0
        %769 = vmatprep.subr.mxu0 0.0
        %770 = vmatpush1.msra.mxu0 0.0
        %771 = vmatprep.subr.mxu0 0.0
        %772 = vmatpush1.msra.mxu0 0.0
        %773 = vmatprep.subr.mxu0 0.0
        %774 = vmatpush1.msra.mxu0 0.0
        %775 = vmatprep.subr.mxu0 0.0
        %776 = vmatpush1.msra.mxu0 0.0
        %777 = vmatprep.subr.mxu0 0.0
        %778 = vmatpush1.msra.mxu0 0.0
        %779 = vmatprep.subr.mxu0 0.0
        %780 = vmatpush1.msra.mxu0 0.0
        %781 = vmatprep.subr.mxu0 0.0
        %782 = vmatpush1.msra.mxu0 0.0
        %783 = vmatprep.subr.mxu0 0.0
        %784 = vmatpush1.msra.mxu0 0.0
        %785 = vmatprep.mubr.f32.mxu0 0.0
        %786 = vmatmul.mubr.f32.gmra.mrb[0].mxu0 %v582
        %v787 = vpop.f32.mrb[0].mxu0
        %v788 = vadd.f32 0.0, %v787
        %v789 = vpop.f32.mrb[0].mxu0
        %790 = vmatprep.mubr.f32.mxu0 0.0
        %791 = vmatmul.mubr.f32.gmra.mrb[0].mxu0 %v584
        %v792 = vpop.f32.mrb[0].mxu0
        %v793 = vadd.f32 0.0, %v792
        %v794 = vpop.f32.mrb[0].mxu0
        %795 = vmatprep.mubr.f32.mxu0 0.0
        %796 = vmatmul.mubr.f32.gmra.mrb[0].mxu0 %v586
        %v797 = vpop.f32.mrb[0].mxu0
        %v798 = vadd.f32 0.0, %v797
        %v799 = vpop.f32.mrb[0].mxu0
        %800 = vmatprep.mubr.f32.mxu0 0.0
        %801 = vmatmul.mubr.f32.gmra.mrb[0].mxu0 %v588
        %v802 = vpop.f32.mrb[0].mxu0
        %v803 = vadd.f32 0.0, %v802
        %v804 = vpop.f32.mrb[0].mxu0
        %805 = vmatprep.mubr.f32.mxu0 0.0
        %806 = vmatmul.mubr.f32.gmra.mrb[0].mxu0 %v590
        %v807 = vpop.f32.mrb[0].mxu0
        %v808 = vadd.f32 0.0, %v807
        %v809 = vpop.f32.mrb[0].mxu0
        %810 = vmatprep.mubr.f32.mxu0 0.0
        %811 = vmatmul.mubr.f32.gmra.mrb[0].mxu0 %v592
        %v812 = vpop.f32.mrb[0].mxu0
        %v813 = vadd.f32 0.0, %v812
        %v814 = vpop.f32.mrb[0].mxu0
        %815 = vmatprep.mubr.f32.mxu0 0.0
        %816 = vmatmul.mubr.f32.gmra.mrb[0].mxu0 %v594
        %v817 = vpop.f32.mrb[0].mxu0
        %v818 = vadd.f32 0.0, %v817
        %v819 = vpop.f32.mrb[0].mxu0
        %820 = vmatprep.mubr.f32.mxu0 0.0
        %821 = vmatmul.mubr.f32.gmra.mrb[0].mxu0 %v596
        %v822 = vpop.f32.mrb[0].mxu0
        %v823 = vadd.f32 0.0, %v822
        %v824 = vpop.f32.mrb[0].mxu0
        %825 = vdwg.mxu0
        %v827 = vsel %vm581, %v515, 0
        %v830 = vsel %vm581, %v516, 0
        %v833 = vsel %vm581, %v517, 0
        %v836 = vsel %vm581, %v518, 0
        %v839 = vsel %vm581, %v519, 0
        %v842 = vsel %vm581, %v520, 0
        %v845 = vsel %vm581, %v521, 0
        %v848 = vsel %vm581, %v522, 0
        %v851 = vsel %vm598, %v538, 0
        %v854 = vsel %vm598, %v537, 0
        %v857 = vsel %vm598, %v536, 0
        %859 = vmatprep.subr.mxu0 %v854
        %860 = vmatpush1.msra.mxu0 %v851
        %861 = vmatprep.subr.mxu0 0.0
        %862 = vmatpush1.msra.mxu0 0.0
        %863 = vmatprep.subr.mxu0 0.0
        %864 = vmatpush1.msra.mxu0 0.0
        %865 = vmatprep.subr.mxu0 0.0
        %866 = vmatpush1.msra.mxu0 0.0
        %867 = vmatprep.subr.mxu0 0.0
        %868 = vmatpush1.msra.mxu0 0.0
        %869 = vmatprep.subr.mxu0 0.0
        %870 = vmatpush1.msra.mxu0 0.0
        %871 = vmatprep.subr.mxu0 0.0
        %872 = vmatpush1.msra.mxu0 0.0
        %873 = vmatprep.subr.mxu0 0.0
        %874 = vmatpush1.msra.mxu0 0.0
        %875 = vmatprep.subr.mxu0 0.0
        %876 = vmatpush1.msra.mxu0 0.0
        %877 = vmatprep.subr.mxu0 0.0
        %878 = vmatpush1.msra.mxu0 0.0
        %879 = vmatprep.subr.mxu0 0.0
        %880 = vmatpush1.msra.mxu0 0.0
        %881 = vmatprep.subr.mxu0 0.0
        %882 = vmatpush1.msra.mxu0 0.0
        %883 = vmatprep.subr.mxu0 0.0
        %884 = vmatpush1.msra.mxu0 0.0
        %885 = vmatprep.subr.mxu0 0.0
        %886 = vmatpush1.msra.mxu0 0.0
        %887 = vmatprep.subr.mxu0 0.0
        %888 = vmatpush1.msra.mxu0 0.0
        %889 = vmatprep.subr.mxu0 0.0
        %890 = vmatpush1.msra.mxu0 0.0
        %891 = vmatprep.subr.mxu0 0.0
        %892 = vmatpush1.msra.mxu0 0.0
        %893 = vmatprep.subr.mxu0 0.0
        %894 = vmatpush1.msra.mxu0 0.0
        %895 = vmatprep.subr.mxu0 0.0
        %896 = vmatpush1.msra.mxu0 0.0
        %897 = vmatprep.subr.mxu0 0.0
        %898 = vmatpush1.msra.mxu0 0.0
        %899 = vmatprep.subr.mxu0 0.0
        %900 = vmatpush1.msra.mxu0 0.0
        %901 = vmatprep.subr.mxu0 0.0
        %902 = vmatpush1.msra.mxu0 0.0
        %903 = vmatprep.subr.mxu0 0.0
        %904 = vmatpush1.msra.mxu0 0.0
        %905 = vmatprep.subr.mxu0 0.0
        %906 = vmatpush1.msra.mxu0 0.0
        %907 = vmatprep.subr.mxu0 0.0
        %908 = vmatpush1.msra.mxu0 0.0
        %909 = vmatprep.subr.mxu0 0.0
        %910 = vmatpush1.msra.mxu0 0.0
        %911 = vmatprep.subr.mxu0 0.0
        %912 = vmatpush1.msra.mxu0 0.0
        %913 = vmatprep.subr.mxu0 0.0
        %914 = vmatpush1.msra.mxu0 0.0
        %915 = vmatprep.subr.mxu0 0.0
        %916 = vmatpush1.msra.mxu0 0.0
        %917 = vmatprep.subr.mxu0 0.0
        %918 = vmatpush1.msra.mxu0 0.0
        %919 = vmatprep.subr.mxu0 0.0
        %920 = vmatpush1.msra.mxu0 0.0
        %921 = vmatprep.subr.mxu0 0.0
        %922 = vmatpush1.msra.mxu0 0.0
        %923 = vmatprep.mubr.f32.mxu0 0.0
        %924 = vmatmul.mubr.f32.gmra.mrb[0].mxu0 %v827
        %v925 = vpop.f32.mrb[0].mxu0
        %v926 = vadd.f32 %v675, %v925
        %v927 = vpop.f32.mrb[0].mxu0
        %v928 = vadd.f32 %v677, %v927
        %929 = vmatprep.mubr.f32.mxu0 0.0
        %930 = vmatmul.mubr.f32.gmra.mrb[0].mxu0 %v830
        %v931 = vpop.f32.mrb[0].mxu0
        %v932 = vadd.f32 %v681, %v931
        %v933 = vpop.f32.mrb[0].mxu0
        %v934 = vadd.f32 %v683, %v933
        %935 = vmatprep.mubr.f32.mxu0 0.0
        %936 = vmatmul.mubr.f32.gmra.mrb[0].mxu0 %v833
        %v937 = vpop.f32.mrb[0].mxu0
        %v938 = vadd.f32 %v687, %v937
        %v939 = vpop.f32.mrb[0].mxu0
        %v940 = vadd.f32 %v689, %v939
        %941 = vmatprep.mubr.f32.mxu0 0.0
        %942 = vmatmul.mubr.f32.gmra.mrb[0].mxu0 %v836
        %v943 = vpop.f32.mrb[0].mxu0
        %v944 = vadd.f32 %v693, %v943
        %v945 = vpop.f32.mrb[0].mxu0
        %v946 = vadd.f32 %v695, %v945
        %947 = vmatprep.mubr.f32.mxu0 0.0
        %948 = vmatmul.mubr.f32.gmra.mrb[0].mxu0 %v839
        %v949 = vpop.f32.mrb[0].mxu0
        %v950 = vadd.f32 %v699, %v949
        %v951 = vpop.f32.mrb[0].mxu0
        %v952 = vadd.f32 %v701, %v951
        %953 = vmatprep.mubr.f32.mxu0 0.0
        %954 = vmatmul.mubr.f32.gmra.mrb[0].mxu0 %v842
        %v955 = vpop.f32.mrb[0].mxu0
        %v956 = vadd.f32 %v705, %v955
        %v957 = vpop.f32.mrb[0].mxu0
        %v958 = vadd.f32 %v707, %v957
        %959 = vmatprep.mubr.f32.mxu0 0.0
        %960 = vmatmul.mubr.f32.gmra.mrb[0].mxu0 %v845
        %v961 = vpop.f32.mrb[0].mxu0
        %v962 = vadd.f32 %v711, %v961
        %v963 = vpop.f32.mrb[0].mxu0
        %v964 = vadd.f32 %v713, %v963
        %965 = vmatprep.mubr.f32.mxu0 0.0
        %966 = vmatmul.mubr.f32.gmra.mrb[0].mxu0 %v848
        %v967 = vpop.f32.mrb[0].mxu0
        %v968 = vadd.f32 %v717, %v967
        %v969 = vpop.f32.mrb[0].mxu0
        %v970 = vadd.f32 %v719, %v969
        %971 = vdwg.mxu0
        %972 = vmatprep.subr.mxu0 0.0
        %973 = vmatpush1.msra.mxu0 %v857
        %974 = vmatprep.subr.mxu0 0.0
        %975 = vmatpush1.msra.mxu0 0.0
        %976 = vmatprep.subr.mxu0 0.0
        %977 = vmatpush1.msra.mxu0 0.0
        %978 = vmatprep.subr.mxu0 0.0
        %979 = vmatpush1.msra.mxu0 0.0
        %980 = vmatprep.subr.mxu0 0.0
        %981 = vmatpush1.msra.mxu0 0.0
        %982 = vmatprep.subr.mxu0 0.0
        %983 = vmatpush1.msra.mxu0 0.0
        %984 = vmatprep.subr.mxu0 0.0
        %985 = vmatpush1.msra.mxu0 0.0
        %986 = vmatprep.subr.mxu0 0.0
        %987 = vmatpush1.msra.mxu0 0.0
        %988 = vmatprep.subr.mxu0 0.0
        %989 = vmatpush1.msra.mxu0 0.0
        %990 = vmatprep.subr.mxu0 0.0
        %991 = vmatpush1.msra.mxu0 0.0
        %992 = vmatprep.subr.mxu0 0.0
        %993 = vmatpush1.msra.mxu0 0.0
        %994 = vmatprep.subr.mxu0 0.0
        %995 = vmatpush1.msra.mxu0 0.0
        %996 = vmatprep.subr.mxu0 0.0
        %997 = vmatpush1.msra.mxu0 0.0
        %998 = vmatprep.subr.mxu0 0.0
        %999 = vmatpush1.msra.mxu0 0.0
        %1000 = vmatprep.subr.mxu0 0.0
        %1001 = vmatpush1.msra.mxu0 0.0
        %1002 = vmatprep.subr.mxu0 0.0
        %1003 = vmatpush1.msra.mxu0 0.0
        %1004 = vmatprep.subr.mxu0 0.0
        %1005 = vmatpush1.msra.mxu0 0.0
        %1006 = vmatprep.subr.mxu0 0.0
        %1007 = vmatpush1.msra.mxu0 0.0
        %1008 = vmatprep.subr.mxu0 0.0
        %1009 = vmatpush1.msra.mxu0 0.0
        %1010 = vmatprep.subr.mxu0 0.0
        %1011 = vmatpush1.msra.mxu0 0.0
        %1012 = vmatprep.subr.mxu0 0.0
        %1013 = vmatpush1.msra.mxu0 0.0
        %1014 = vmatprep.subr.mxu0 0.0
        %1015 = vmatpush1.msra.mxu0 0.0
        %1016 = vmatprep.subr.mxu0 0.0
        %1017 = vmatpush1.msra.mxu0 0.0
        %1018 = vmatprep.subr.mxu0 0.0
        %1019 = vmatpush1.msra.mxu0 0.0
        %1020 = vmatprep.subr.mxu0 0.0
        %1021 = vmatpush1.msra.mxu0 0.0
        %1022 = vmatprep.subr.mxu0 0.0
        %1023 = vmatpush1.msra.mxu0 0.0
        %1024 = vmatprep.subr.mxu0 0.0
        %1025 = vmatpush1.msra.mxu0 0.0
        %1026 = vmatprep.subr.mxu0 0.0
        %1027 = vmatpush1.msra.mxu0 0.0
        %1028 = vmatprep.subr.mxu0 0.0
        %1029 = vmatpush1.msra.mxu0 0.0
        %1030 = vmatprep.subr.mxu0 0.0
        %1031 = vmatpush1.msra.mxu0 0.0
        %1032 = vmatprep.subr.mxu0 0.0
        %1033 = vmatpush1.msra.mxu0 0.0
        %1034 = vmatprep.subr.mxu0 0.0
        %1035 = vmatpush1.msra.mxu0 0.0
        %1036 = vmatprep.mubr.f32.mxu0 0.0
        %1037 = vmatmul.mubr.f32.gmra.mrb[0].mxu0 %v827
        %v1038 = vpop.f32.mrb[0].mxu0
        %v1039 = vadd.f32 %v788, %v1038
        %v1040 = vpop.f32.mrb[0].mxu0
        %1041 = vmatprep.mubr.f32.mxu0 0.0
        %1042 = vmatmul.mubr.f32.gmra.mrb[0].mxu0 %v830
        %v1043 = vpop.f32.mrb[0].mxu0
        %v1044 = vadd.f32 %v793, %v1043
        %v1045 = vpop.f32.mrb[0].mxu0
        %1046 = vmatprep.mubr.f32.mxu0 0.0
        %1047 = vmatmul.mubr.f32.gmra.mrb[0].mxu0 %v833
        %v1048 = vpop.f32.mrb[0].mxu0
        %v1049 = vadd.f32 %v798, %v1048
        %v1050 = vpop.f32.mrb[0].mxu0
        %1051 = vmatprep.mubr.f32.mxu0 0.0
        %1052 = vmatmul.mubr.f32.gmra.mrb[0].mxu0 %v836
        %v1053 = vpop.f32.mrb[0].mxu0
        %v1054 = vadd.f32 %v803, %v1053
        %v1055 = vpop.f32.mrb[0].mxu0
        %1056 = vmatprep.mubr.f32.mxu0 0.0
        %1057 = vmatmul.mubr.f32.gmra.mrb[0].mxu0 %v839
        %v1058 = vpop.f32.mrb[0].mxu0
        %v1059 = vadd.f32 %v808, %v1058
        %v1060 = vpop.f32.mrb[0].mxu0
        %1061 = vmatprep.mubr.f32.mxu0 0.0
        %1062 = vmatmul.mubr.f32.gmra.mrb[0].mxu0 %v842
        %v1063 = vpop.f32.mrb[0].mxu0
        %v1064 = vadd.f32 %v813, %v1063
        %v1065 = vpop.f32.mrb[0].mxu0
        %1066 = vmatprep.mubr.f32.mxu0 0.0
        %1067 = vmatmul.mubr.f32.gmra.mrb[0].mxu0 %v845
        %v1068 = vpop.f32.mrb[0].mxu0
        %v1069 = vadd.f32 %v818, %v1068
        %v1070 = vpop.f32.mrb[0].mxu0
        %1071 = vmatprep.mubr.f32.mxu0 0.0
        %1072 = vmatmul.mubr.f32.gmra.mrb[0].mxu0 %v848
        %v1073 = vpop.f32.mrb[0].mxu0
        %v1074 = vadd.f32 %v823, %v1073
        %v1075 = vpop.f32.mrb[0].mxu0
        %1076 = vdwg.mxu0
        %v1077 = vld [vmem:[%s2] sm:$0xff]
        %v1078 = vld [vmem:[%s2 + $0x8] sm:$0xff]
        %v1079 = vld [vmem:[%s2 + $0x10] sm:$0xff]
        %v1080 = vld [vmem:[%s2 + $0x18] sm:$0xff]
        %v1081 = vld [vmem:[%s2 + $0x20] sm:$0xff]
        %v1082 = vld [vmem:[%s2 + $0x28] sm:$0xff]
        %v1083 = vld [vmem:[%s2 + $0x30] sm:$0xff]
        %v1084 = vld [vmem:[%s2 + $0x38] sm:$0xff]
        %1085 = vrot.lane.b32.xlu0 %v513, 17
        %v1086 = vpop.permute.xlu0 %1085
        %1087 = vrot.lane.b32.xlu0 %v525, 17
        %v1088 = vpop.permute.xlu0 %1087
        %1089 = vrot.lane.b32.xlu0 %v514, 17
        %v1090 = vpop.permute.xlu0 %1089
        %vm1091 = vcmp.lt.s32.totalorder %v534, 17
        %v1092 = vsel %vm1091, %v1088, %v1090
        %v1093 = vsel %vm1091, %v1086, %v1088
        %v1094 = vsel %vm1091, %v1090, %v1086
        %1103 = vrot.lane.b32.xlu0 %v1077, 120
        %v1104 = vpop.permute.xlu0 %1103
        %1105 = vrot.lane.b32.xlu0 %v1078, 120
        %v1106 = vpop.permute.xlu0 %1105
        %1107 = vrot.lane.b32.xlu0 %v1079, 120
        %v1108 = vpop.permute.xlu0 %1107
        %1109 = vrot.lane.b32.xlu0 %v1080, 120
        %v1110 = vpop.permute.xlu0 %1109
        %1111 = vrot.lane.b32.xlu0 %v1081, 120
        %v1112 = vpop.permute.xlu0 %1111
        %1113 = vrot.lane.b32.xlu0 %v1082, 120
        %v1114 = vpop.permute.xlu0 %1113
        %1115 = vrot.lane.b32.xlu0 %v1083, 120
        %v1116 = vpop.permute.xlu0 %1115
        %1117 = vrot.lane.b32.xlu0 %v1084, 120
        %v1118 = vpop.permute.xlu0 %1117
        %v1119 = vsel %vm581, %v1104, 0
        %v1121 = vsel %vm581, %v1106, 0
        %v1123 = vsel %vm581, %v1108, 0
        %v1125 = vsel %vm581, %v1110, 0
        %v1127 = vsel %vm581, %v1112, 0
        %v1129 = vsel %vm581, %v1114, 0
        %v1131 = vsel %vm581, %v1116, 0
        %v1133 = vsel %vm581, %v1118, 0
        %v1136 = vsel %vm598, %v1094, 0
        %v1139 = vsel %vm598, %v1093, 0
        %v1142 = vsel %vm598, %v1092, 0
        %1144 = vmatprep.subr.mxu0 %v1139
        %1145 = vmatpush1.msra.mxu0 %v1136
        %1146 = vmatprep.subr.mxu0 0.0
        %1147 = vmatpush1.msra.mxu0 0.0
        %1148 = vmatprep.subr.mxu0 0.0
        %1149 = vmatpush1.msra.mxu0 0.0
        %1150 = vmatprep.subr.mxu0 0.0
        %1151 = vmatpush1.msra.mxu0 0.0
        %1152 = vmatprep.subr.mxu0 0.0
        %1153 = vmatpush1.msra.mxu0 0.0
        %1154 = vmatprep.subr.mxu0 0.0
        %1155 = vmatpush1.msra.mxu0 0.0
        %1156 = vmatprep.subr.mxu0 0.0
        %1157 = vmatpush1.msra.mxu0 0.0
        %1158 = vmatprep.subr.mxu0 0.0
        %1159 = vmatpush1.msra.mxu0 0.0
        %1160 = vmatprep.subr.mxu0 0.0
        %1161 = vmatpush1.msra.mxu0 0.0
        %1162 = vmatprep.subr.mxu0 0.0
        %1163 = vmatpush1.msra.mxu0 0.0
        %1164 = vmatprep.subr.mxu0 0.0
        %1165 = vmatpush1.msra.mxu0 0.0
        %1166 = vmatprep.subr.mxu0 0.0
        %1167 = vmatpush1.msra.mxu0 0.0
        %1168 = vmatprep.subr.mxu0 0.0
        %1169 = vmatpush1.msra.mxu0 0.0
        %1170 = vmatprep.subr.mxu0 0.0
        %1171 = vmatpush1.msra.mxu0 0.0
        %1172 = vmatprep.subr.mxu0 0.0
        %1173 = vmatpush1.msra.mxu0 0.0
        %1174 = vmatprep.subr.mxu0 0.0
        %1175 = vmatpush1.msra.mxu0 0.0
        %1176 = vmatprep.subr.mxu0 0.0
        %1177 = vmatpush1.msra.mxu0 0.0
        %1178 = vmatprep.subr.mxu0 0.0
        %1179 = vmatpush1.msra.mxu0 0.0
        %1180 = vmatprep.subr.mxu0 0.0
        %1181 = vmatpush1.msra.mxu0 0.0
        %1182 = vmatprep.subr.mxu0 0.0
        %1183 = vmatpush1.msra.mxu0 0.0
        %1184 = vmatprep.subr.mxu0 0.0
        %1185 = vmatpush1.msra.mxu0 0.0
        %1186 = vmatprep.subr.mxu0 0.0
        %1187 = vmatpush1.msra.mxu0 0.0
        %1188 = vmatprep.subr.mxu0 0.0
        %1189 = vmatpush1.msra.mxu0 0.0
        %1190 = vmatprep.subr.mxu0 0.0
        %1191 = vmatpush1.msra.mxu0 0.0
        %1192 = vmatprep.subr.mxu0 0.0
        %1193 = vmatpush1.msra.mxu0 0.0
        %1194 = vmatprep.subr.mxu0 0.0
        %1195 = vmatpush1.msra.mxu0 0.0
        %1196 = vmatprep.subr.mxu0 0.0
        %1197 = vmatpush1.msra.mxu0 0.0
        %1198 = vmatprep.subr.mxu0 0.0
        %1199 = vmatpush1.msra.mxu0 0.0
        %1200 = vmatprep.subr.mxu0 0.0
        %1201 = vmatpush1.msra.mxu0 0.0
        %1202 = vmatprep.subr.mxu0 0.0
        %1203 = vmatpush1.msra.mxu0 0.0
        %1204 = vmatprep.subr.mxu0 0.0
        %1205 = vmatpush1.msra.mxu0 0.0
        %1206 = vmatprep.subr.mxu0 0.0
        %1207 = vmatpush1.msra.mxu0 0.0
        %1208 = vmatprep.mubr.f32.mxu0 0.0
        %1209 = vmatmul.mubr.f32.gmra.mrb[0].mxu0 %v1119
        %v1210 = vpop.f32.mrb[0].mxu0
        %v1211 = vadd.f32 0.0, %v1210
        %v1212 = vpop.f32.mrb[0].mxu0
        %v1213 = vadd.f32 0.0, %v1212
        %1214 = vmatprep.mubr.f32.mxu0 0.0
        %1215 = vmatmul.mubr.f32.gmra.mrb[0].mxu0 %v1121
        %v1216 = vpop.f32.mrb[0].mxu0
        %v1217 = vadd.f32 0.0, %v1216
        %v1218 = vpop.f32.mrb[0].mxu0
        %v1219 = vadd.f32 0.0, %v1218
        %1220 = vmatprep.mubr.f32.mxu0 0.0
        %1221 = vmatmul.mubr.f32.gmra.mrb[0].mxu0 %v1123
        %v1222 = vpop.f32.mrb[0].mxu0
        %v1223 = vadd.f32 0.0, %v1222
        %v1224 = vpop.f32.mrb[0].mxu0
        %v1225 = vadd.f32 0.0, %v1224
        %1226 = vmatprep.mubr.f32.mxu0 0.0
        %1227 = vmatmul.mubr.f32.gmra.mrb[0].mxu0 %v1125
        %v1228 = vpop.f32.mrb[0].mxu0
        %v1229 = vadd.f32 0.0, %v1228
        %v1230 = vpop.f32.mrb[0].mxu0
        %v1231 = vadd.f32 0.0, %v1230
        %1232 = vmatprep.mubr.f32.mxu0 0.0
        %1233 = vmatmul.mubr.f32.gmra.mrb[0].mxu0 %v1127
        %v1234 = vpop.f32.mrb[0].mxu0
        %v1235 = vadd.f32 0.0, %v1234
        %v1236 = vpop.f32.mrb[0].mxu0
        %v1237 = vadd.f32 0.0, %v1236
        %1238 = vmatprep.mubr.f32.mxu0 0.0
        %1239 = vmatmul.mubr.f32.gmra.mrb[0].mxu0 %v1129
        %v1240 = vpop.f32.mrb[0].mxu0
        %v1241 = vadd.f32 0.0, %v1240
        %v1242 = vpop.f32.mrb[0].mxu0
        %v1243 = vadd.f32 0.0, %v1242
        %1244 = vmatprep.mubr.f32.mxu0 0.0
        %1245 = vmatmul.mubr.f32.gmra.mrb[0].mxu0 %v1131
        %v1246 = vpop.f32.mrb[0].mxu0
        %v1247 = vadd.f32 0.0, %v1246
        %v1248 = vpop.f32.mrb[0].mxu0
        %v1249 = vadd.f32 0.0, %v1248
        %1250 = vmatprep.mubr.f32.mxu0 0.0
        %1251 = vmatmul.mubr.f32.gmra.mrb[0].mxu0 %v1133
        %v1252 = vpop.f32.mrb[0].mxu0
        %v1253 = vadd.f32 0.0, %v1252
        %v1254 = vpop.f32.mrb[0].mxu0
        %v1255 = vadd.f32 0.0, %v1254
        %1256 = vdwg.mxu0
        %1257 = vmatprep.subr.mxu0 0.0
        %1258 = vmatpush1.msra.mxu0 %v1142
        %1259 = vmatprep.subr.mxu0 0.0
        %1260 = vmatpush1.msra.mxu0 0.0
        %1261 = vmatprep.subr.mxu0 0.0
        %1262 = vmatpush1.msra.mxu0 0.0
        %1263 = vmatprep.subr.mxu0 0.0
        %1264 = vmatpush1.msra.mxu0 0.0
        %1265 = vmatprep.subr.mxu0 0.0
        %1266 = vmatpush1.msra.mxu0 0.0
        %1267 = vmatprep.subr.mxu0 0.0
        %1268 = vmatpush1.msra.mxu0 0.0
        %1269 = vmatprep.subr.mxu0 0.0
        %1270 = vmatpush1.msra.mxu0 0.0
        %1271 = vmatprep.subr.mxu0 0.0
        %1272 = vmatpush1.msra.mxu0 0.0
        %1273 = vmatprep.subr.mxu0 0.0
        %1274 = vmatpush1.msra.mxu0 0.0
        %1275 = vmatprep.subr.mxu0 0.0
        %1276 = vmatpush1.msra.mxu0 0.0
        %1277 = vmatprep.subr.mxu0 0.0
        %1278 = vmatpush1.msra.mxu0 0.0
        %1279 = vmatprep.subr.mxu0 0.0
        %1280 = vmatpush1.msra.mxu0 0.0
        %1281 = vmatprep.subr.mxu0 0.0
        %1282 = vmatpush1.msra.mxu0 0.0
        %1283 = vmatprep.subr.mxu0 0.0
        %1284 = vmatpush1.msra.mxu0 0.0
        %1285 = vmatprep.subr.mxu0 0.0
        %1286 = vmatpush1.msra.mxu0 0.0
        %1287 = vmatprep.subr.mxu0 0.0
        %1288 = vmatpush1.msra.mxu0 0.0
        %1289 = vmatprep.subr.mxu0 0.0
        %1290 = vmatpush1.msra.mxu0 0.0
        %1291 = vmatprep.subr.mxu0 0.0
        %1292 = vmatpush1.msra.mxu0 0.0
        %1293 = vmatprep.subr.mxu0 0.0
        %1294 = vmatpush1.msra.mxu0 0.0
        %1295 = vmatprep.subr.mxu0 0.0
        %1296 = vmatpush1.msra.mxu0 0.0
        %1297 = vmatprep.subr.mxu0 0.0
        %1298 = vmatpush1.msra.mxu0 0.0
        %1299 = vmatprep.subr.mxu0 0.0
        %1300 = vmatpush1.msra.mxu0 0.0
        %1301 = vmatprep.subr.mxu0 0.0
        %1302 = vmatpush1.msra.mxu0 0.0
        %1303 = vmatprep.subr.mxu0 0.0
        %1304 = vmatpush1.msra.mxu0 0.0
        %1305 = vmatprep.subr.mxu0 0.0
        %1306 = vmatpush1.msra.mxu0 0.0
        %1307 = vmatprep.subr.mxu0 0.0
        %1308 = vmatpush1.msra.mxu0 0.0
        %1309 = vmatprep.subr.mxu0 0.0
        %1310 = vmatpush1.msra.mxu0 0.0
        %1311 = vmatprep.subr.mxu0 0.0
        %1312 = vmatpush1.msra.mxu0 0.0
        %1313 = vmatprep.subr.mxu0 0.0
        %1314 = vmatpush1.msra.mxu0 0.0
        %1315 = vmatprep.subr.mxu0 0.0
        %1316 = vmatpush1.msra.mxu0 0.0
        %1317 = vmatprep.subr.mxu0 0.0
        %1318 = vmatpush1.msra.mxu0 0.0
        %1319 = vmatprep.subr.mxu0 0.0
        %1320 = vmatpush1.msra.mxu0 0.0
        %1321 = vmatprep.mubr.f32.mxu0 0.0
        %1322 = vmatmul.mubr.f32.gmra.mrb[0].mxu0 %v1119
        %v1323 = vpop.f32.mrb[0].mxu0
        %v1324 = vadd.f32 0.0, %v1323
        %v1325 = vpop.f32.mrb[0].mxu0
        %1326 = vmatprep.mubr.f32.mxu0 0.0
        %1327 = vmatmul.mubr.f32.gmra.mrb[0].mxu0 %v1121
        %v1328 = vpop.f32.mrb[0].mxu0
        %v1329 = vadd.f32 0.0, %v1328
        %v1330 = vpop.f32.mrb[0].mxu0
        %1331 = vmatprep.mubr.f32.mxu0 0.0
        %1332 = vmatmul.mubr.f32.gmra.mrb[0].mxu0 %v1123
        %v1333 = vpop.f32.mrb[0].mxu0
        %v1334 = vadd.f32 0.0, %v1333
        %v1335 = vpop.f32.mrb[0].mxu0
        %1336 = vmatprep.mubr.f32.mxu0 0.0
        %1337 = vmatmul.mubr.f32.gmra.mrb[0].mxu0 %v1125
        %v1338 = vpop.f32.mrb[0].mxu0
        %v1339 = vadd.f32 0.0, %v1338
        %v1340 = vpop.f32.mrb[0].mxu0
        %1341 = vmatprep.mubr.f32.mxu0 0.0
        %1342 = vmatmul.mubr.f32.gmra.mrb[0].mxu0 %v1127
        %v1343 = vpop.f32.mrb[0].mxu0
        %v1344 = vadd.f32 0.0, %v1343
        %v1345 = vpop.f32.mrb[0].mxu0
        %1346 = vmatprep.mubr.f32.mxu0 0.0
        %1347 = vmatmul.mubr.f32.gmra.mrb[0].mxu0 %v1129
        %v1348 = vpop.f32.mrb[0].mxu0
        %v1349 = vadd.f32 0.0, %v1348
        %v1350 = vpop.f32.mrb[0].mxu0
        %1351 = vmatprep.mubr.f32.mxu0 0.0
        %1352 = vmatmul.mubr.f32.gmra.mrb[0].mxu0 %v1131
        %v1353 = vpop.f32.mrb[0].mxu0
        %v1354 = vadd.f32 0.0, %v1353
        %v1355 = vpop.f32.mrb[0].mxu0
        %1356 = vmatprep.mubr.f32.mxu0 0.0
        %1357 = vmatmul.mubr.f32.gmra.mrb[0].mxu0 %v1133
        %v1358 = vpop.f32.mrb[0].mxu0
        %v1359 = vadd.f32 0.0, %v1358
        %v1360 = vpop.f32.mrb[0].mxu0
        %1361 = vdwg.mxu0
        %v1362 = vadd.f32 %v926, %v1211
        %v1363 = vadd.f32 %v928, %v1213
        %v1364 = vadd.f32 %v1039, %v1324
        %v1365 = vadd.f32 %v932, %v1217
        %v1366 = vadd.f32 %v934, %v1219
        %v1367 = vadd.f32 %v1044, %v1329
        %v1368 = vadd.f32 %v938, %v1223
        %v1369 = vadd.f32 %v940, %v1225
        %v1370 = vadd.f32 %v1049, %v1334
        %v1371 = vadd.f32 %v944, %v1229
        %v1372 = vadd.f32 %v946, %v1231
        %v1373 = vadd.f32 %v1054, %v1339
        %v1374 = vadd.f32 %v950, %v1235
        %v1375 = vadd.f32 %v952, %v1237
        %v1376 = vadd.f32 %v1059, %v1344
        %v1377 = vadd.f32 %v956, %v1241
        %v1378 = vadd.f32 %v958, %v1243
        %v1379 = vadd.f32 %v1064, %v1349
        %v1380 = vadd.f32 %v962, %v1247
        %v1381 = vadd.f32 %v964, %v1249
        %v1382 = vadd.f32 %v1069, %v1354
        %v1383 = vadd.f32 %v968, %v1253
        %v1384 = vadd.f32 %v970, %v1255
        %v1385 = vadd.f32 %v1074, %v1359
        %v1386 = vld [vmem:[%s2] sm:$0xff]
        %v1387 = vld [vmem:[%s2 + $0x8] sm:$0xff]
        %v1388 = vld [vmem:[%s2 + $0x10] sm:$0xff]
        %v1389 = vld [vmem:[%s2 + $0x18] sm:$0xff]
        %v1390 = vld [vmem:[%s2 + $0x20] sm:$0xff]
        %v1391 = vld [vmem:[%s2 + $0x28] sm:$0xff]
        %v1392 = vld [vmem:[%s2 + $0x30] sm:$0xff]
        %v1393 = vld [vmem:[%s2 + $0x38] sm:$0xff]
        %1394 = vrot.lane.b32.xlu0 %v513, 1
        %v1395 = vpop.permute.xlu0 %1394
        %1396 = vrot.lane.b32.xlu0 %v525, 1
        %v1397 = vpop.permute.xlu0 %1396
        %1398 = vrot.lane.b32.xlu0 %v514, 1
        %v1399 = vpop.permute.xlu0 %1398
        %vm1400 = vcmp.lt.s32.totalorder %v534, 1
        %v1401 = vsel %vm1400, %v1397, %v1399
        %v1402 = vsel %vm1400, %v1395, %v1397
        %v1403 = vsel %vm1400, %v1399, %v1395
        %1412 = vrot.lane.b32.xlu0 %v1386, 116
        %v1413 = vpop.permute.xlu0 %1412
        %1414 = vrot.lane.b32.xlu0 %v1387, 116
        %v1415 = vpop.permute.xlu0 %1414
        %1416 = vrot.lane.b32.xlu0 %v1388, 116
        %v1417 = vpop.permute.xlu0 %1416
        %1418 = vrot.lane.b32.xlu0 %v1389, 116
        %v1419 = vpop.permute.xlu0 %1418
        %1420 = vrot.lane.b32.xlu0 %v1390, 116
        %v1421 = vpop.permute.xlu0 %1420
        %1422 = vrot.lane.b32.xlu0 %v1391, 116
        %v1423 = vpop.permute.xlu0 %1422
        %1424 = vrot.lane.b32.xlu0 %v1392, 116
        %v1425 = vpop.permute.xlu0 %1424
        %1426 = vrot.lane.b32.xlu0 %v1393, 116
        %v1427 = vpop.permute.xlu0 %1426
        %v1428 = vsel %vm581, %v1413, 0
        %v1430 = vsel %vm581, %v1415, 0
        %v1432 = vsel %vm581, %v1417, 0
        %v1434 = vsel %vm581, %v1419, 0
        %v1436 = vsel %vm581, %v1421, 0
        %v1438 = vsel %vm581, %v1423, 0
        %v1440 = vsel %vm581, %v1425, 0
        %v1442 = vsel %vm581, %v1427, 0
        %v1445 = vsel %vm598, %v1403, 0
        %v1448 = vsel %vm598, %v1402, 0
        %v1451 = vsel %vm598, %v1401, 0
        %1453 = vmatprep.subr.mxu0 %v1448
        %1454 = vmatpush1.msra.mxu0 %v1445
        %1455 = vmatprep.subr.mxu0 0.0
        %1456 = vmatpush1.msra.mxu0 0.0
        %1457 = vmatprep.subr.mxu0 0.0
        %1458 = vmatpush1.msra.mxu0 0.0
        %1459 = vmatprep.subr.mxu0 0.0
        %1460 = vmatpush1.msra.mxu0 0.0
        %1461 = vmatprep.subr.mxu0 0.0
        %1462 = vmatpush1.msra.mxu0 0.0
        %1463 = vmatprep.subr.mxu0 0.0
        %1464 = vmatpush1.msra.mxu0 0.0
        %1465 = vmatprep.subr.mxu0 0.0
        %1466 = vmatpush1.msra.mxu0 0.0
        %1467 = vmatprep.subr.mxu0 0.0
        %1468 = vmatpush1.msra.mxu0 0.0
        %1469 = vmatprep.subr.mxu0 0.0
        %1470 = vmatpush1.msra.mxu0 0.0
        %1471 = vmatprep.subr.mxu0 0.0
        %1472 = vmatpush1.msra.mxu0 0.0
        %1473 = vmatprep.subr.mxu0 0.0
        %1474 = vmatpush1.msra.mxu0 0.0
        %1475 = vmatprep.subr.mxu0 0.0
        %1476 = vmatpush1.msra.mxu0 0.0
        %1477 = vmatprep.subr.mxu0 0.0
        %1478 = vmatpush1.msra.mxu0 0.0
        %1479 = vmatprep.subr.mxu0 0.0
        %1480 = vmatpush1.msra.mxu0 0.0
        %1481 = vmatprep.subr.mxu0 0.0
        %1482 = vmatpush1.msra.mxu0 0.0
        %1483 = vmatprep.subr.mxu0 0.0
        %1484 = vmatpush1.msra.mxu0 0.0
        %1485 = vmatprep.subr.mxu0 0.0
        %1486 = vmatpush1.msra.mxu0 0.0
        %1487 = vmatprep.subr.mxu0 0.0
        %1488 = vmatpush1.msra.mxu0 0.0
        %1489 = vmatprep.subr.mxu0 0.0
        %1490 = vmatpush1.msra.mxu0 0.0
        %1491 = vmatprep.subr.mxu0 0.0
        %1492 = vmatpush1.msra.mxu0 0.0
        %1493 = vmatprep.subr.mxu0 0.0
        %1494 = vmatpush1.msra.mxu0 0.0
        %1495 = vmatprep.subr.mxu0 0.0
        %1496 = vmatpush1.msra.mxu0 0.0
        %1497 = vmatprep.subr.mxu0 0.0
        %1498 = vmatpush1.msra.mxu0 0.0
        %1499 = vmatprep.subr.mxu0 0.0
        %1500 = vmatpush1.msra.mxu0 0.0
        %1501 = vmatprep.subr.mxu0 0.0
        %1502 = vmatpush1.msra.mxu0 0.0
        %1503 = vmatprep.subr.mxu0 0.0
        %1504 = vmatpush1.msra.mxu0 0.0
        %1505 = vmatprep.subr.mxu0 0.0
        %1506 = vmatpush1.msra.mxu0 0.0
        %1507 = vmatprep.subr.mxu0 0.0
        %1508 = vmatpush1.msra.mxu0 0.0
        %1509 = vmatprep.subr.mxu0 0.0
        %1510 = vmatpush1.msra.mxu0 0.0
        %1511 = vmatprep.subr.mxu0 0.0
        %1512 = vmatpush1.msra.mxu0 0.0
        %1513 = vmatprep.subr.mxu0 0.0
        %1514 = vmatpush1.msra.mxu0 0.0
        %1515 = vmatprep.subr.mxu0 0.0
        %1516 = vmatpush1.msra.mxu0 0.0
        %1517 = vmatprep.mubr.f32.mxu0 0.0
        %1518 = vmatmul.mubr.f32.gmra.mrb[0].mxu0 %v1428
        %v1519 = vpop.f32.mrb[0].mxu0
        %v1520 = vadd.f32 0.0, %v1519
        %v1521 = vpop.f32.mrb[0].mxu0
        %v1522 = vadd.f32 0.0, %v1521
        %1523 = vmatprep.mubr.f32.mxu0 0.0
        %1524 = vmatmul.mubr.f32.gmra.mrb[0].mxu0 %v1430
        %v1525 = vpop.f32.mrb[0].mxu0
        %v1526 = vadd.f32 0.0, %v1525
        %v1527 = vpop.f32.mrb[0].mxu0
        %v1528 = vadd.f32 0.0, %v1527
        %1529 = vmatprep.mubr.f32.mxu0 0.0
        %1530 = vmatmul.mubr.f32.gmra.mrb[0].mxu0 %v1432
        %v1531 = vpop.f32.mrb[0].mxu0
        %v1532 = vadd.f32 0.0, %v1531
        %v1533 = vpop.f32.mrb[0].mxu0
        %v1534 = vadd.f32 0.0, %v1533
        %1535 = vmatprep.mubr.f32.mxu0 0.0
        %1536 = vmatmul.mubr.f32.gmra.mrb[0].mxu0 %v1434
        %v1537 = vpop.f32.mrb[0].mxu0
        %v1538 = vadd.f32 0.0, %v1537
        %v1539 = vpop.f32.mrb[0].mxu0
        %v1540 = vadd.f32 0.0, %v1539
        %1541 = vmatprep.mubr.f32.mxu0 0.0
        %1542 = vmatmul.mubr.f32.gmra.mrb[0].mxu0 %v1436
        %v1543 = vpop.f32.mrb[0].mxu0
        %v1544 = vadd.f32 0.0, %v1543
        %v1545 = vpop.f32.mrb[0].mxu0
        %v1546 = vadd.f32 0.0, %v1545
        %1547 = vmatprep.mubr.f32.mxu0 0.0
        %1548 = vmatmul.mubr.f32.gmra.mrb[0].mxu0 %v1438
        %v1549 = vpop.f32.mrb[0].mxu0
        %v1550 = vadd.f32 0.0, %v1549
        %v1551 = vpop.f32.mrb[0].mxu0
        %v1552 = vadd.f32 0.0, %v1551
        %1553 = vmatprep.mubr.f32.mxu0 0.0
        %1554 = vmatmul.mubr.f32.gmra.mrb[0].mxu0 %v1440
        %v1555 = vpop.f32.mrb[0].mxu0
        %v1556 = vadd.f32 0.0, %v1555
        %v1557 = vpop.f32.mrb[0].mxu0
        %v1558 = vadd.f32 0.0, %v1557
        %1559 = vmatprep.mubr.f32.mxu0 0.0
        %1560 = vmatmul.mubr.f32.gmra.mrb[0].mxu0 %v1442
        %v1561 = vpop.f32.mrb[0].mxu0
        %v1562 = vadd.f32 0.0, %v1561
        %v1563 = vpop.f32.mrb[0].mxu0
        %v1564 = vadd.f32 0.0, %v1563
        %1565 = vdwg.mxu0
        %1566 = vmatprep.subr.mxu0 0.0
        %1567 = vmatpush1.msra.mxu0 %v1451
        %1568 = vmatprep.subr.mxu0 0.0
        %1569 = vmatpush1.msra.mxu0 0.0
        %1570 = vmatprep.subr.mxu0 0.0
        %1571 = vmatpush1.msra.mxu0 0.0
        %1572 = vmatprep.subr.mxu0 0.0
        %1573 = vmatpush1.msra.mxu0 0.0
        %1574 = vmatprep.subr.mxu0 0.0
        %1575 = vmatpush1.msra.mxu0 0.0
        %1576 = vmatprep.subr.mxu0 0.0
        %1577 = vmatpush1.msra.mxu0 0.0
        %1578 = vmatprep.subr.mxu0 0.0
        %1579 = vmatpush1.msra.mxu0 0.0
        %1580 = vmatprep.subr.mxu0 0.0
        %1581 = vmatpush1.msra.mxu0 0.0
        %1582 = vmatprep.subr.mxu0 0.0
        %1583 = vmatpush1.msra.mxu0 0.0
        %1584 = vmatprep.subr.mxu0 0.0
        %1585 = vmatpush1.msra.mxu0 0.0
        %1586 = vmatprep.subr.mxu0 0.0
        %1587 = vmatpush1.msra.mxu0 0.0
        %1588 = vmatprep.subr.mxu0 0.0
        %1589 = vmatpush1.msra.mxu0 0.0
        %1590 = vmatprep.subr.mxu0 0.0
        %1591 = vmatpush1.msra.mxu0 0.0
        %1592 = vmatprep.subr.mxu0 0.0
        %1593 = vmatpush1.msra.mxu0 0.0
        %1594 = vmatprep.subr.mxu0 0.0
        %1595 = vmatpush1.msra.mxu0 0.0
        %1596 = vmatprep.subr.mxu0 0.0
        %1597 = vmatpush1.msra.mxu0 0.0
        %1598 = vmatprep.subr.mxu0 0.0
        %1599 = vmatpush1.msra.mxu0 0.0
        %1600 = vmatprep.subr.mxu0 0.0
        %1601 = vmatpush1.msra.mxu0 0.0
        %1602 = vmatprep.subr.mxu0 0.0
        %1603 = vmatpush1.msra.mxu0 0.0
        %1604 = vmatprep.subr.mxu0 0.0
        %1605 = vmatpush1.msra.mxu0 0.0
        %1606 = vmatprep.subr.mxu0 0.0
        %1607 = vmatpush1.msra.mxu0 0.0
        %1608 = vmatprep.subr.mxu0 0.0
        %1609 = vmatpush1.msra.mxu0 0.0
        %1610 = vmatprep.subr.mxu0 0.0
        %1611 = vmatpush1.msra.mxu0 0.0
        %1612 = vmatprep.subr.mxu0 0.0
        %1613 = vmatpush1.msra.mxu0 0.0
        %1614 = vmatprep.subr.mxu0 0.0
        %1615 = vmatpush1.msra.mxu0 0.0
        %1616 = vmatprep.subr.mxu0 0.0
        %1617 = vmatpush1.msra.mxu0 0.0
        %1618 = vmatprep.subr.mxu0 0.0
        %1619 = vmatpush1.msra.mxu0 0.0
        %1620 = vmatprep.subr.mxu0 0.0
        %1621 = vmatpush1.msra.mxu0 0.0
        %1622 = vmatprep.subr.mxu0 0.0
        %1623 = vmatpush1.msra.mxu0 0.0
        %1624 = vmatprep.subr.mxu0 0.0
        %1625 = vmatpush1.msra.mxu0 0.0
        %1626 = vmatprep.subr.mxu0 0.0
        %1627 = vmatpush1.msra.mxu0 0.0
        %1628 = vmatprep.subr.mxu0 0.0
        %1629 = vmatpush1.msra.mxu0 0.0
        %1630 = vmatprep.mubr.f32.mxu0 0.0
        %1631 = vmatmul.mubr.f32.gmra.mrb[0].mxu0 %v1428
        %v1632 = vpop.f32.mrb[0].mxu0
        %v1633 = vadd.f32 0.0, %v1632
        %v1634 = vpop.f32.mrb[0].mxu0
        %1635 = vmatprep.mubr.f32.mxu0 0.0
        %1636 = vmatmul.mubr.f32.gmra.mrb[0].mxu0 %v1430
        %v1637 = vpop.f32.mrb[0].mxu0
        %v1638 = vadd.f32 0.0, %v1637
        %v1639 = vpop.f32.mrb[0].mxu0
        %1640 = vmatprep.mubr.f32.mxu0 0.0
        %1641 = vmatmul.mubr.f32.gmra.mrb[0].mxu0 %v1432
        %v1642 = vpop.f32.mrb[0].mxu0
        %v1643 = vadd.f32 0.0, %v1642
        %v1644 = vpop.f32.mrb[0].mxu0
        %1645 = vmatprep.mubr.f32.mxu0 0.0
        %1646 = vmatmul.mubr.f32.gmra.mrb[0].mxu0 %v1434
        %v1647 = vpop.f32.mrb[0].mxu0
        %v1648 = vadd.f32 0.0, %v1647
        %v1649 = vpop.f32.mrb[0].mxu0
        %1650 = vmatprep.mubr.f32.mxu0 0.0
        %1651 = vmatmul.mubr.f32.gmra.mrb[0].mxu0 %v1436
        %v1652 = vpop.f32.mrb[0].mxu0
        %v1653 = vadd.f32 0.0, %v1652
        %v1654 = vpop.f32.mrb[0].mxu0
        %1655 = vmatprep.mubr.f32.mxu0 0.0
        %1656 = vmatmul.mubr.f32.gmra.mrb[0].mxu0 %v1438
        %v1657 = vpop.f32.mrb[0].mxu0
        %v1658 = vadd.f32 0.0, %v1657
        %v1659 = vpop.f32.mrb[0].mxu0
        %1660 = vmatprep.mubr.f32.mxu0 0.0
        %1661 = vmatmul.mubr.f32.gmra.mrb[0].mxu0 %v1440
        %v1662 = vpop.f32.mrb[0].mxu0
        %v1663 = vadd.f32 0.0, %v1662
        %v1664 = vpop.f32.mrb[0].mxu0
        %1665 = vmatprep.mubr.f32.mxu0 0.0
        %1666 = vmatmul.mubr.f32.gmra.mrb[0].mxu0 %v1442
        %v1667 = vpop.f32.mrb[0].mxu0
        %v1668 = vadd.f32 0.0, %v1667
        %v1669 = vpop.f32.mrb[0].mxu0
        %1670 = vdwg.mxu0
        %v1671 = vadd.f32 %v1362, %v1520
        %v1672 = vadd.f32 %v1363, %v1522
        %v1673 = vadd.f32 %v1364, %v1633
        %v1674 = vadd.f32 %v1365, %v1526
        %v1675 = vadd.f32 %v1366, %v1528
        %v1676 = vadd.f32 %v1367, %v1638
        %v1677 = vadd.f32 %v1368, %v1532
        %v1678 = vadd.f32 %v1369, %v1534
        %v1679 = vadd.f32 %v1370, %v1643
        %v1680 = vadd.f32 %v1371, %v1538
        %v1681 = vadd.f32 %v1372, %v1540
        %v1682 = vadd.f32 %v1373, %v1648
        %v1683 = vadd.f32 %v1374, %v1544
        %v1684 = vadd.f32 %v1375, %v1546
        %v1685 = vadd.f32 %v1376, %v1653
        %v1686 = vadd.f32 %v1377, %v1550
        %v1687 = vadd.f32 %v1378, %v1552
        %v1688 = vadd.f32 %v1379, %v1658
        %v1689 = vadd.f32 %v1380, %v1556
        %v1690 = vadd.f32 %v1381, %v1558
        %v1691 = vadd.f32 %v1382, %v1663
        %v1692 = vadd.f32 %v1383, %v1562
        %v1693 = vadd.f32 %v1384, %v1564
        %v1694 = vadd.f32 %v1385, %v1668
        %v1695 = vld [vmem:[%s2] sm:$0xff]
        %v1696 = vld [vmem:[%s2 + $0x8] sm:$0xff]
        %v1697 = vld [vmem:[%s2 + $0x10] sm:$0xff]
        %v1698 = vld [vmem:[%s2 + $0x18] sm:$0xff]
        %v1699 = vld [vmem:[%s2 + $0x20] sm:$0xff]
        %v1700 = vld [vmem:[%s2 + $0x28] sm:$0xff]
        %v1701 = vld [vmem:[%s2 + $0x30] sm:$0xff]
        %v1702 = vld [vmem:[%s2 + $0x38] sm:$0xff]
        %1711 = vrot.lane.b32.xlu0 %v1695, 112
        %v1712 = vpop.permute.xlu0 %1711
        %1713 = vrot.lane.b32.xlu0 %v1696, 112
        %v1714 = vpop.permute.xlu0 %1713
        %1715 = vrot.lane.b32.xlu0 %v1697, 112
        %v1716 = vpop.permute.xlu0 %1715
        %1717 = vrot.lane.b32.xlu0 %v1698, 112
        %v1718 = vpop.permute.xlu0 %1717
        %1719 = vrot.lane.b32.xlu0 %v1699, 112
        %v1720 = vpop.permute.xlu0 %1719
        %1721 = vrot.lane.b32.xlu0 %v1700, 112
        %v1722 = vpop.permute.xlu0 %1721
        %1723 = vrot.lane.b32.xlu0 %v1701, 112
        %v1724 = vpop.permute.xlu0 %1723
        %1725 = vrot.lane.b32.xlu0 %v1702, 112
        %v1726 = vpop.permute.xlu0 %1725
        %v1727 = vsel %vm581, %v1712, 0
        %v1729 = vsel %vm581, %v1714, 0
        %v1731 = vsel %vm581, %v1716, 0
        %v1733 = vsel %vm581, %v1718, 0
        %v1735 = vsel %vm581, %v1720, 0
        %v1737 = vsel %vm581, %v1722, 0
        %v1739 = vsel %vm581, %v1724, 0
        %v1741 = vsel %vm581, %v1726, 0
        %v1743 = vsel %vm598, %v513, 0
        %v1745 = vsel %vm598, %v525, 0
        %v1747 = vsel %vm598, %v514, 0
        %1749 = vmatprep.subr.mxu0 %v1745
        %1750 = vmatpush1.msra.mxu0 %v1743
        %1751 = vmatprep.subr.mxu0 0.0
        %1752 = vmatpush1.msra.mxu0 0.0
        %1753 = vmatprep.subr.mxu0 0.0
        %1754 = vmatpush1.msra.mxu0 0.0
        %1755 = vmatprep.subr.mxu0 0.0
        %1756 = vmatpush1.msra.mxu0 0.0
        %1757 = vmatprep.subr.mxu0 0.0
        %1758 = vmatpush1.msra.mxu0 0.0
        %1759 = vmatprep.subr.mxu0 0.0
        %1760 = vmatpush1.msra.mxu0 0.0
        %1761 = vmatprep.subr.mxu0 0.0
        %1762 = vmatpush1.msra.mxu0 0.0
        %1763 = vmatprep.subr.mxu0 0.0
        %1764 = vmatpush1.msra.mxu0 0.0
        %1765 = vmatprep.subr.mxu0 0.0
        %1766 = vmatpush1.msra.mxu0 0.0
        %1767 = vmatprep.subr.mxu0 0.0
        %1768 = vmatpush1.msra.mxu0 0.0
        %1769 = vmatprep.subr.mxu0 0.0
        %1770 = vmatpush1.msra.mxu0 0.0
        %1771 = vmatprep.subr.mxu0 0.0
        %1772 = vmatpush1.msra.mxu0 0.0
        %1773 = vmatprep.subr.mxu0 0.0
        %1774 = vmatpush1.msra.mxu0 0.0
        %1775 = vmatprep.subr.mxu0 0.0
        %1776 = vmatpush1.msra.mxu0 0.0
        %1777 = vmatprep.subr.mxu0 0.0
        %1778 = vmatpush1.msra.mxu0 0.0
        %1779 = vmatprep.subr.mxu0 0.0
        %1780 = vmatpush1.msra.mxu0 0.0
        %1781 = vmatprep.subr.mxu0 0.0
        %1782 = vmatpush1.msra.mxu0 0.0
        %1783 = vmatprep.subr.mxu0 0.0
        %1784 = vmatpush1.msra.mxu0 0.0
        %1785 = vmatprep.subr.mxu0 0.0
        %1786 = vmatpush1.msra.mxu0 0.0
        %1787 = vmatprep.subr.mxu0 0.0
        %1788 = vmatpush1.msra.mxu0 0.0
        %1789 = vmatprep.subr.mxu0 0.0
        %1790 = vmatpush1.msra.mxu0 0.0
        %1791 = vmatprep.subr.mxu0 0.0
        %1792 = vmatpush1.msra.mxu0 0.0
        %1793 = vmatprep.subr.mxu0 0.0
        %1794 = vmatpush1.msra.mxu0 0.0
        %1795 = vmatprep.subr.mxu0 0.0
        %1796 = vmatpush1.msra.mxu0 0.0
        %1797 = vmatprep.subr.mxu0 0.0
        %1798 = vmatpush1.msra.mxu0 0.0
        %1799 = vmatprep.subr.mxu0 0.0
        %1800 = vmatpush1.msra.mxu0 0.0
        %1801 = vmatprep.subr.mxu0 0.0
        %1802 = vmatpush1.msra.mxu0 0.0
        %1803 = vmatprep.subr.mxu0 0.0
        %1804 = vmatpush1.msra.mxu0 0.0
        %1805 = vmatprep.subr.mxu0 0.0
        %1806 = vmatpush1.msra.mxu0 0.0
        %1807 = vmatprep.subr.mxu0 0.0
        %1808 = vmatpush1.msra.mxu0 0.0
        %1809 = vmatprep.subr.mxu0 0.0
        %1810 = vmatpush1.msra.mxu0 0.0
        %1811 = vmatprep.subr.mxu0 0.0
        %1812 = vmatpush1.msra.mxu0 0.0
        %1813 = vmatprep.mubr.f32.mxu0 0.0
        %1814 = vmatmul.mubr.f32.gmra.mrb[0].mxu0 %v1727
        %v1815 = vpop.f32.mrb[0].mxu0
        %v1816 = vadd.f32 0.0, %v1815
        %v1817 = vpop.f32.mrb[0].mxu0
        %v1818 = vadd.f32 0.0, %v1817
        %1819 = vmatprep.mubr.f32.mxu0 0.0
        %1820 = vmatmul.mubr.f32.gmra.mrb[0].mxu0 %v1729
        %v1821 = vpop.f32.mrb[0].mxu0
        %v1822 = vadd.f32 0.0, %v1821
        %v1823 = vpop.f32.mrb[0].mxu0
        %v1824 = vadd.f32 0.0, %v1823
        %1825 = vmatprep.mubr.f32.mxu0 0.0
        %1826 = vmatmul.mubr.f32.gmra.mrb[0].mxu0 %v1731
        %v1827 = vpop.f32.mrb[0].mxu0
        %v1828 = vadd.f32 0.0, %v1827
        %v1829 = vpop.f32.mrb[0].mxu0
        %v1830 = vadd.f32 0.0, %v1829
        %1831 = vmatprep.mubr.f32.mxu0 0.0
        %1832 = vmatmul.mubr.f32.gmra.mrb[0].mxu0 %v1733
        %v1833 = vpop.f32.mrb[0].mxu0
        %v1834 = vadd.f32 0.0, %v1833
        %v1835 = vpop.f32.mrb[0].mxu0
        %v1836 = vadd.f32 0.0, %v1835
        %1837 = vmatprep.mubr.f32.mxu0 0.0
        %1838 = vmatmul.mubr.f32.gmra.mrb[0].mxu0 %v1735
        %v1839 = vpop.f32.mrb[0].mxu0
        %v1840 = vadd.f32 0.0, %v1839
        %v1841 = vpop.f32.mrb[0].mxu0
        %v1842 = vadd.f32 0.0, %v1841
        %1843 = vmatprep.mubr.f32.mxu0 0.0
        %1844 = vmatmul.mubr.f32.gmra.mrb[0].mxu0 %v1737
        %v1845 = vpop.f32.mrb[0].mxu0
        %v1846 = vadd.f32 0.0, %v1845
        %v1847 = vpop.f32.mrb[0].mxu0
        %v1848 = vadd.f32 0.0, %v1847
        %1849 = vmatprep.mubr.f32.mxu0 0.0
        %1850 = vmatmul.mubr.f32.gmra.mrb[0].mxu0 %v1739
        %v1851 = vpop.f32.mrb[0].mxu0
        %v1852 = vadd.f32 0.0, %v1851
        %v1853 = vpop.f32.mrb[0].mxu0
        %v1854 = vadd.f32 0.0, %v1853
        %1855 = vmatprep.mubr.f32.mxu0 0.0
        %1856 = vmatmul.mubr.f32.gmra.mrb[0].mxu0 %v1741
        %v1857 = vpop.f32.mrb[0].mxu0
        %v1858 = vadd.f32 0.0, %v1857
        %v1859 = vpop.f32.mrb[0].mxu0
        %v1860 = vadd.f32 0.0, %v1859
        %1861 = vdwg.mxu0
        %1862 = vmatprep.subr.mxu0 0.0
        %1863 = vmatpush1.msra.mxu0 %v1747
        %1864 = vmatprep.subr.mxu0 0.0
        %1865 = vmatpush1.msra.mxu0 0.0
        %1866 = vmatprep.subr.mxu0 0.0
        %1867 = vmatpush1.msra.mxu0 0.0
        %1868 = vmatprep.subr.mxu0 0.0
        %1869 = vmatpush1.msra.mxu0 0.0
        %1870 = vmatprep.subr.mxu0 0.0
        %1871 = vmatpush1.msra.mxu0 0.0
        %1872 = vmatprep.subr.mxu0 0.0
        %1873 = vmatpush1.msra.mxu0 0.0
        %1874 = vmatprep.subr.mxu0 0.0
        %1875 = vmatpush1.msra.mxu0 0.0
        %1876 = vmatprep.subr.mxu0 0.0
        %1877 = vmatpush1.msra.mxu0 0.0
        %1878 = vmatprep.subr.mxu0 0.0
        %1879 = vmatpush1.msra.mxu0 0.0
        %1880 = vmatprep.subr.mxu0 0.0
        %1881 = vmatpush1.msra.mxu0 0.0
        %1882 = vmatprep.subr.mxu0 0.0
        %1883 = vmatpush1.msra.mxu0 0.0
        %1884 = vmatprep.subr.mxu0 0.0
        %1885 = vmatpush1.msra.mxu0 0.0
        %1886 = vmatprep.subr.mxu0 0.0
        %1887 = vmatpush1.msra.mxu0 0.0
        %1888 = vmatprep.subr.mxu0 0.0
        %1889 = vmatpush1.msra.mxu0 0.0
        %1890 = vmatprep.subr.mxu0 0.0
        %1891 = vmatpush1.msra.mxu0 0.0
        %1892 = vmatprep.subr.mxu0 0.0
        %1893 = vmatpush1.msra.mxu0 0.0
        %1894 = vmatprep.subr.mxu0 0.0
        %1895 = vmatpush1.msra.mxu0 0.0
        %1896 = vmatprep.subr.mxu0 0.0
        %1897 = vmatpush1.msra.mxu0 0.0
        %1898 = vmatprep.subr.mxu0 0.0
        %1899 = vmatpush1.msra.mxu0 0.0
        %1900 = vmatprep.subr.mxu0 0.0
        %1901 = vmatpush1.msra.mxu0 0.0
        %1902 = vmatprep.subr.mxu0 0.0
        %1903 = vmatpush1.msra.mxu0 0.0
        %1904 = vmatprep.subr.mxu0 0.0
        %1905 = vmatpush1.msra.mxu0 0.0
        %1906 = vmatprep.subr.mxu0 0.0
        %1907 = vmatpush1.msra.mxu0 0.0
        %1908 = vmatprep.subr.mxu0 0.0
        %1909 = vmatpush1.msra.mxu0 0.0
        %1910 = vmatprep.subr.mxu0 0.0
        %1911 = vmatpush1.msra.mxu0 0.0
        %1912 = vmatprep.subr.mxu0 0.0
        %1913 = vmatpush1.msra.mxu0 0.0
        %1914 = vmatprep.subr.mxu0 0.0
        %1915 = vmatpush1.msra.mxu0 0.0
        %1916 = vmatprep.subr.mxu0 0.0
        %1917 = vmatpush1.msra.mxu0 0.0
        %1918 = vmatprep.subr.mxu0 0.0
        %1919 = vmatpush1.msra.mxu0 0.0
        %1920 = vmatprep.subr.mxu0 0.0
        %1921 = vmatpush1.msra.mxu0 0.0
        %1922 = vmatprep.subr.mxu0 0.0
        %1923 = vmatpush1.msra.mxu0 0.0
        %1924 = vmatprep.subr.mxu0 0.0
        %1925 = vmatpush1.msra.mxu0 0.0
        %1926 = vmatprep.mubr.f32.mxu0 0.0
        %1927 = vmatmul.mubr.f32.gmra.mrb[0].mxu0 %v1727
        %v1928 = vpop.f32.mrb[0].mxu0
        %v1929 = vadd.f32 0.0, %v1928
        %v1930 = vpop.f32.mrb[0].mxu0
        %1931 = vmatprep.mubr.f32.mxu0 0.0
        %1932 = vmatmul.mubr.f32.gmra.mrb[0].mxu0 %v1729
        %v1933 = vpop.f32.mrb[0].mxu0
        %v1934 = vadd.f32 0.0, %v1933
        %v1935 = vpop.f32.mrb[0].mxu0
        %1936 = vmatprep.mubr.f32.mxu0 0.0
        %1937 = vmatmul.mubr.f32.gmra.mrb[0].mxu0 %v1731
        %v1938 = vpop.f32.mrb[0].mxu0
        %v1939 = vadd.f32 0.0, %v1938
        %v1940 = vpop.f32.mrb[0].mxu0
        %1941 = vmatprep.mubr.f32.mxu0 0.0
        %1942 = vmatmul.mubr.f32.gmra.mrb[0].mxu0 %v1733
        %v1943 = vpop.f32.mrb[0].mxu0
        %v1944 = vadd.f32 0.0, %v1943
        %v1945 = vpop.f32.mrb[0].mxu0
        %1946 = vmatprep.mubr.f32.mxu0 0.0
        %1947 = vmatmul.mubr.f32.gmra.mrb[0].mxu0 %v1735
        %v1948 = vpop.f32.mrb[0].mxu0
        %v1949 = vadd.f32 0.0, %v1948
        %v1950 = vpop.f32.mrb[0].mxu0
        %1951 = vmatprep.mubr.f32.mxu0 0.0
        %1952 = vmatmul.mubr.f32.gmra.mrb[0].mxu0 %v1737
        %v1953 = vpop.f32.mrb[0].mxu0
        %v1954 = vadd.f32 0.0, %v1953
        %v1955 = vpop.f32.mrb[0].mxu0
        %1956 = vmatprep.mubr.f32.mxu0 0.0
        %1957 = vmatmul.mubr.f32.gmra.mrb[0].mxu0 %v1739
        %v1958 = vpop.f32.mrb[0].mxu0
        %v1959 = vadd.f32 0.0, %v1958
        %v1960 = vpop.f32.mrb[0].mxu0
        %1961 = vmatprep.mubr.f32.mxu0 0.0
        %1962 = vmatmul.mubr.f32.gmra.mrb[0].mxu0 %v1741
        %v1963 = vpop.f32.mrb[0].mxu0
        %v1964 = vadd.f32 0.0, %v1963
        %v1965 = vpop.f32.mrb[0].mxu0
        %1966 = vdwg.mxu0
        %v1967 = vadd.f32 %v1671, %v1816
        %v1968 = vadd.f32 %v1672, %v1818
        %v1969 = vadd.f32 %v1673, %v1929
        %v1970 = vadd.f32 %v1674, %v1822
        %v1971 = vadd.f32 %v1675, %v1824
        %v1972 = vadd.f32 %v1676, %v1934
        %v1973 = vadd.f32 %v1677, %v1828
        %v1974 = vadd.f32 %v1678, %v1830
        %v1975 = vadd.f32 %v1679, %v1939
        %v1976 = vadd.f32 %v1680, %v1834
        %v1977 = vadd.f32 %v1681, %v1836
        %v1978 = vadd.f32 %v1682, %v1944
        %v1979 = vadd.f32 %v1683, %v1840
        %v1980 = vadd.f32 %v1684, %v1842
        %v1981 = vadd.f32 %v1685, %v1949
        %v1982 = vadd.f32 %v1686, %v1846
        %v1983 = vadd.f32 %v1687, %v1848
        %v1984 = vadd.f32 %v1688, %v1954
        %v1985 = vadd.f32 %v1689, %v1852
        %v1986 = vadd.f32 %v1690, %v1854
        %v1987 = vadd.f32 %v1691, %v1959
        %v1988 = vadd.f32 %v1692, %v1858
        %v1989 = vadd.f32 %v1693, %v1860
        %v1990 = vadd.f32 %v1694, %v1964
        %v1991 = vld [vmem:[%s2] sm:$0xff]
        %v1992 = vld [vmem:[%s2 + $0x8] sm:$0xff]
        %v1993 = vld [vmem:[%s2 + $0x10] sm:$0xff]
        %v1994 = vld [vmem:[%s2 + $0x18] sm:$0xff]
        %v1995 = vld [vmem:[%s2 + $0x20] sm:$0xff]
        %v1996 = vld [vmem:[%s2 + $0x28] sm:$0xff]
        %v1997 = vld [vmem:[%s2 + $0x30] sm:$0xff]
        %v1998 = vld [vmem:[%s2 + $0x38] sm:$0xff]
        %1999 = vrot.lane.b32.xlu0 %v513, 127
        %v2000 = vpop.permute.xlu0 %1999
        %2001 = vrot.lane.b32.xlu0 %v525, 127
        %v2002 = vpop.permute.xlu0 %2001
        %2003 = vrot.lane.b32.xlu0 %v514, 127
        %v2004 = vpop.permute.xlu0 %2003
        %vm2005 = vcmp.lt.s32.totalorder %v534, 127
        %v2006 = vsel %vm2005, %v2002, %v2004
        %v2007 = vsel %vm2005, %v2000, %v2002
        %v2008 = vsel %vm2005, %v2004, %v2000
        %2017 = vrot.lane.b32.xlu0 %v1991, 108
        %v2018 = vpop.permute.xlu0 %2017
        %2019 = vrot.lane.b32.xlu0 %v1992, 108
        %v2020 = vpop.permute.xlu0 %2019
        %2021 = vrot.lane.b32.xlu0 %v1993, 108
        %v2022 = vpop.permute.xlu0 %2021
        %2023 = vrot.lane.b32.xlu0 %v1994, 108
        %v2024 = vpop.permute.xlu0 %2023
        %2025 = vrot.lane.b32.xlu0 %v1995, 108
        %v2026 = vpop.permute.xlu0 %2025
        %2027 = vrot.lane.b32.xlu0 %v1996, 108
        %v2028 = vpop.permute.xlu0 %2027
        %2029 = vrot.lane.b32.xlu0 %v1997, 108
        %v2030 = vpop.permute.xlu0 %2029
        %2031 = vrot.lane.b32.xlu0 %v1998, 108
        %v2032 = vpop.permute.xlu0 %2031
        %v2033 = vsel %vm581, %v2018, 0
        %v2035 = vsel %vm581, %v2020, 0
        %v2037 = vsel %vm581, %v2022, 0
        %v2039 = vsel %vm581, %v2024, 0
        %v2041 = vsel %vm581, %v2026, 0
        %v2043 = vsel %vm581, %v2028, 0
        %v2045 = vsel %vm581, %v2030, 0
        %v2047 = vsel %vm581, %v2032, 0
        %v2050 = vsel %vm598, %v2007, 0
        %v2053 = vsel %vm598, %v2006, 0
        %v2056 = vsel %vm598, %v2008, 0
        %2058 = vmatprep.subr.mxu0 %v2053
        %2059 = vmatpush1.msra.mxu0 %v2050
        %2060 = vmatprep.subr.mxu0 0.0
        %2061 = vmatpush1.msra.mxu0 0.0
        %2062 = vmatprep.subr.mxu0 0.0
        %2063 = vmatpush1.msra.mxu0 0.0
        %2064 = vmatprep.subr.mxu0 0.0
        %2065 = vmatpush1.msra.mxu0 0.0
        %2066 = vmatprep.subr.mxu0 0.0
        %2067 = vmatpush1.msra.mxu0 0.0
        %2068 = vmatprep.subr.mxu0 0.0
        %2069 = vmatpush1.msra.mxu0 0.0
        %2070 = vmatprep.subr.mxu0 0.0
        %2071 = vmatpush1.msra.mxu0 0.0
        %2072 = vmatprep.subr.mxu0 0.0
        %2073 = vmatpush1.msra.mxu0 0.0
        %2074 = vmatprep.subr.mxu0 0.0
        %2075 = vmatpush1.msra.mxu0 0.0
        %2076 = vmatprep.subr.mxu0 0.0
        %2077 = vmatpush1.msra.mxu0 0.0
        %2078 = vmatprep.subr.mxu0 0.0
        %2079 = vmatpush1.msra.mxu0 0.0
        %2080 = vmatprep.subr.mxu0 0.0
        %2081 = vmatpush1.msra.mxu0 0.0
        %2082 = vmatprep.subr.mxu0 0.0
        %2083 = vmatpush1.msra.mxu0 0.0
        %2084 = vmatprep.subr.mxu0 0.0
        %2085 = vmatpush1.msra.mxu0 0.0
        %2086 = vmatprep.subr.mxu0 0.0
        %2087 = vmatpush1.msra.mxu0 0.0
        %2088 = vmatprep.subr.mxu0 0.0
        %2089 = vmatpush1.msra.mxu0 0.0
        %2090 = vmatprep.subr.mxu0 0.0
        %2091 = vmatpush1.msra.mxu0 0.0
        %2092 = vmatprep.subr.mxu0 0.0
        %2093 = vmatpush1.msra.mxu0 0.0
        %2094 = vmatprep.subr.mxu0 0.0
        %2095 = vmatpush1.msra.mxu0 0.0
        %2096 = vmatprep.subr.mxu0 0.0
        %2097 = vmatpush1.msra.mxu0 0.0
        %2098 = vmatprep.subr.mxu0 0.0
        %2099 = vmatpush1.msra.mxu0 0.0
        %2100 = vmatprep.subr.mxu0 0.0
        %2101 = vmatpush1.msra.mxu0 0.0
        %2102 = vmatprep.subr.mxu0 0.0
        %2103 = vmatpush1.msra.mxu0 0.0
        %2104 = vmatprep.subr.mxu0 0.0
        %2105 = vmatpush1.msra.mxu0 0.0
        %2106 = vmatprep.subr.mxu0 0.0
        %2107 = vmatpush1.msra.mxu0 0.0
        %2108 = vmatprep.subr.mxu0 0.0
        %2109 = vmatpush1.msra.mxu0 0.0
        %2110 = vmatprep.subr.mxu0 0.0
        %2111 = vmatpush1.msra.mxu0 0.0
        %2112 = vmatprep.subr.mxu0 0.0
        %2113 = vmatpush1.msra.mxu0 0.0
        %2114 = vmatprep.subr.mxu0 0.0
        %2115 = vmatpush1.msra.mxu0 0.0
        %2116 = vmatprep.subr.mxu0 0.0
        %2117 = vmatpush1.msra.mxu0 0.0
        %2118 = vmatprep.subr.mxu0 0.0
        %2119 = vmatpush1.msra.mxu0 0.0
        %2120 = vmatprep.subr.mxu0 0.0
        %2121 = vmatpush1.msra.mxu0 0.0
        %2122 = vmatprep.mubr.f32.mxu0 0.0
        %2123 = vmatmul.mubr.f32.gmra.mrb[0].mxu0 %v2033
        %v2124 = vpop.f32.mrb[0].mxu0
        %v2125 = vadd.f32 0.0, %v2124
        %v2126 = vpop.f32.mrb[0].mxu0
        %v2127 = vadd.f32 0.0, %v2126
        %2128 = vmatprep.mubr.f32.mxu0 0.0
        %2129 = vmatmul.mubr.f32.gmra.mrb[0].mxu0 %v2035
        %v2130 = vpop.f32.mrb[0].mxu0
        %v2131 = vadd.f32 0.0, %v2130
        %v2132 = vpop.f32.mrb[0].mxu0
        %v2133 = vadd.f32 0.0, %v2132
        %2134 = vmatprep.mubr.f32.mxu0 0.0
        %2135 = vmatmul.mubr.f32.gmra.mrb[0].mxu0 %v2037
        %v2136 = vpop.f32.mrb[0].mxu0
        %v2137 = vadd.f32 0.0, %v2136
        %v2138 = vpop.f32.mrb[0].mxu0
        %v2139 = vadd.f32 0.0, %v2138
        %2140 = vmatprep.mubr.f32.mxu0 0.0
        %2141 = vmatmul.mubr.f32.gmra.mrb[0].mxu0 %v2039
        %v2142 = vpop.f32.mrb[0].mxu0
        %v2143 = vadd.f32 0.0, %v2142
        %v2144 = vpop.f32.mrb[0].mxu0
        %v2145 = vadd.f32 0.0, %v2144
        %2146 = vmatprep.mubr.f32.mxu0 0.0
        %2147 = vmatmul.mubr.f32.gmra.mrb[0].mxu0 %v2041
        %v2148 = vpop.f32.mrb[0].mxu0
        %v2149 = vadd.f32 0.0, %v2148
        %v2150 = vpop.f32.mrb[0].mxu0
        %v2151 = vadd.f32 0.0, %v2150
        %2152 = vmatprep.mubr.f32.mxu0 0.0
        %2153 = vmatmul.mubr.f32.gmra.mrb[0].mxu0 %v2043
        %v2154 = vpop.f32.mrb[0].mxu0
        %v2155 = vadd.f32 0.0, %v2154
        %v2156 = vpop.f32.mrb[0].mxu0
        %v2157 = vadd.f32 0.0, %v2156
        %2158 = vmatprep.mubr.f32.mxu0 0.0
        %2159 = vmatmul.mubr.f32.gmra.mrb[0].mxu0 %v2045
        %v2160 = vpop.f32.mrb[0].mxu0
        %v2161 = vadd.f32 0.0, %v2160
        %v2162 = vpop.f32.mrb[0].mxu0
        %v2163 = vadd.f32 0.0, %v2162
        %2164 = vmatprep.mubr.f32.mxu0 0.0
        %2165 = vmatmul.mubr.f32.gmra.mrb[0].mxu0 %v2047
        %v2166 = vpop.f32.mrb[0].mxu0
        %v2167 = vadd.f32 0.0, %v2166
        %v2168 = vpop.f32.mrb[0].mxu0
        %v2169 = vadd.f32 0.0, %v2168
        %2170 = vdwg.mxu0
        %2171 = vmatprep.subr.mxu0 0.0
        %2172 = vmatpush1.msra.mxu0 %v2056
        %2173 = vmatprep.subr.mxu0 0.0
        %2174 = vmatpush1.msra.mxu0 0.0
        %2175 = vmatprep.subr.mxu0 0.0
        %2176 = vmatpush1.msra.mxu0 0.0
        %2177 = vmatprep.subr.mxu0 0.0
        %2178 = vmatpush1.msra.mxu0 0.0
        %2179 = vmatprep.subr.mxu0 0.0
        %2180 = vmatpush1.msra.mxu0 0.0
        %2181 = vmatprep.subr.mxu0 0.0
        %2182 = vmatpush1.msra.mxu0 0.0
        %2183 = vmatprep.subr.mxu0 0.0
        %2184 = vmatpush1.msra.mxu0 0.0
        %2185 = vmatprep.subr.mxu0 0.0
        %2186 = vmatpush1.msra.mxu0 0.0
        %2187 = vmatprep.subr.mxu0 0.0
        %2188 = vmatpush1.msra.mxu0 0.0
        %2189 = vmatprep.subr.mxu0 0.0
        %2190 = vmatpush1.msra.mxu0 0.0
        %2191 = vmatprep.subr.mxu0 0.0
        %2192 = vmatpush1.msra.mxu0 0.0
        %2193 = vmatprep.subr.mxu0 0.0
        %2194 = vmatpush1.msra.mxu0 0.0
        %2195 = vmatprep.subr.mxu0 0.0
        %2196 = vmatpush1.msra.mxu0 0.0
        %2197 = vmatprep.subr.mxu0 0.0
        %2198 = vmatpush1.msra.mxu0 0.0
        %2199 = vmatprep.subr.mxu0 0.0
        %2200 = vmatpush1.msra.mxu0 0.0
        %2201 = vmatprep.subr.mxu0 0.0
        %2202 = vmatpush1.msra.mxu0 0.0
        %2203 = vmatprep.subr.mxu0 0.0
        %2204 = vmatpush1.msra.mxu0 0.0
        %2205 = vmatprep.subr.mxu0 0.0
        %2206 = vmatpush1.msra.mxu0 0.0
        %2207 = vmatprep.subr.mxu0 0.0
        %2208 = vmatpush1.msra.mxu0 0.0
        %2209 = vmatprep.subr.mxu0 0.0
        %2210 = vmatpush1.msra.mxu0 0.0
        %2211 = vmatprep.subr.mxu0 0.0
        %2212 = vmatpush1.msra.mxu0 0.0
        %2213 = vmatprep.subr.mxu0 0.0
        %2214 = vmatpush1.msra.mxu0 0.0
        %2215 = vmatprep.subr.mxu0 0.0
        %2216 = vmatpush1.msra.mxu0 0.0
        %2217 = vmatprep.subr.mxu0 0.0
        %2218 = vmatpush1.msra.mxu0 0.0
        %2219 = vmatprep.subr.mxu0 0.0
        %2220 = vmatpush1.msra.mxu0 0.0
        %2221 = vmatprep.subr.mxu0 0.0
        %2222 = vmatpush1.msra.mxu0 0.0
        %2223 = vmatprep.subr.mxu0 0.0
        %2224 = vmatpush1.msra.mxu0 0.0
        %2225 = vmatprep.subr.mxu0 0.0
        %2226 = vmatpush1.msra.mxu0 0.0
        %2227 = vmatprep.subr.mxu0 0.0
        %2228 = vmatpush1.msra.mxu0 0.0
        %2229 = vmatprep.subr.mxu0 0.0
        %2230 = vmatpush1.msra.mxu0 0.0
        %2231 = vmatprep.subr.mxu0 0.0
        %2232 = vmatpush1.msra.mxu0 0.0
        %2233 = vmatprep.subr.mxu0 0.0
        %2234 = vmatpush1.msra.mxu0 0.0
        %2235 = vmatprep.mubr.f32.mxu0 0.0
        %2236 = vmatmul.mubr.f32.gmra.mrb[0].mxu0 %v2033
        %v2237 = vpop.f32.mrb[0].mxu0
        %v2238 = vadd.f32 0.0, %v2237
        %v2239 = vpop.f32.mrb[0].mxu0
        %2240 = vmatprep.mubr.f32.mxu0 0.0
        %2241 = vmatmul.mubr.f32.gmra.mrb[0].mxu0 %v2035
        %v2242 = vpop.f32.mrb[0].mxu0
        %v2243 = vadd.f32 0.0, %v2242
        %v2244 = vpop.f32.mrb[0].mxu0
        %2245 = vmatprep.mubr.f32.mxu0 0.0
        %2246 = vmatmul.mubr.f32.gmra.mrb[0].mxu0 %v2037
        %v2247 = vpop.f32.mrb[0].mxu0
        %v2248 = vadd.f32 0.0, %v2247
        %v2249 = vpop.f32.mrb[0].mxu0
        %2250 = vmatprep.mubr.f32.mxu0 0.0
        %2251 = vmatmul.mubr.f32.gmra.mrb[0].mxu0 %v2039
        %v2252 = vpop.f32.mrb[0].mxu0
        %v2253 = vadd.f32 0.0, %v2252
        %v2254 = vpop.f32.mrb[0].mxu0
        %2255 = vmatprep.mubr.f32.mxu0 0.0
        %2256 = vmatmul.mubr.f32.gmra.mrb[0].mxu0 %v2041
        %v2257 = vpop.f32.mrb[0].mxu0
        %v2258 = vadd.f32 0.0, %v2257
        %v2259 = vpop.f32.mrb[0].mxu0
        %2260 = vmatprep.mubr.f32.mxu0 0.0
        %2261 = vmatmul.mubr.f32.gmra.mrb[0].mxu0 %v2043
        %v2262 = vpop.f32.mrb[0].mxu0
        %v2263 = vadd.f32 0.0, %v2262
        %v2264 = vpop.f32.mrb[0].mxu0
        %2265 = vmatprep.mubr.f32.mxu0 0.0
        %2266 = vmatmul.mubr.f32.gmra.mrb[0].mxu0 %v2045
        %v2267 = vpop.f32.mrb[0].mxu0
        %v2268 = vadd.f32 0.0, %v2267
        %v2269 = vpop.f32.mrb[0].mxu0
        %2270 = vmatprep.mubr.f32.mxu0 0.0
        %2271 = vmatmul.mubr.f32.gmra.mrb[0].mxu0 %v2047
        %v2272 = vpop.f32.mrb[0].mxu0
        %v2273 = vadd.f32 0.0, %v2272
        %v2274 = vpop.f32.mrb[0].mxu0
        %2275 = vdwg.mxu0
        %v2276 = vadd.f32 %v1967, %v2125
        %v2277 = vadd.f32 %v1968, %v2127
        %v2278 = vadd.f32 %v1969, %v2238
        %v2279 = vadd.f32 %v1970, %v2131
        %v2280 = vadd.f32 %v1971, %v2133
        %v2281 = vadd.f32 %v1972, %v2243
        %v2282 = vadd.f32 %v1973, %v2137
        %v2283 = vadd.f32 %v1974, %v2139
        %v2284 = vadd.f32 %v1975, %v2248
        %v2285 = vadd.f32 %v1976, %v2143
        %v2286 = vadd.f32 %v1977, %v2145
        %v2287 = vadd.f32 %v1978, %v2253
        %v2288 = vadd.f32 %v1979, %v2149
        %v2289 = vadd.f32 %v1980, %v2151
        %v2290 = vadd.f32 %v1981, %v2258
        %v2291 = vadd.f32 %v1982, %v2155
        %v2292 = vadd.f32 %v1983, %v2157
        %v2293 = vadd.f32 %v1984, %v2263
        %v2294 = vadd.f32 %v1985, %v2161
        %v2295 = vadd.f32 %v1986, %v2163
        %v2296 = vadd.f32 %v1987, %v2268
        %v2297 = vadd.f32 %v1988, %v2167
        %v2298 = vadd.f32 %v1989, %v2169
        %v2299 = vadd.f32 %v1990, %v2273
        %v2300 = vld [vmem:[%s2] sm:$0xff]
        %v2301 = vld [vmem:[%s2 + $0x8] sm:$0xff]
        %v2302 = vld [vmem:[%s2 + $0x10] sm:$0xff]
        %v2303 = vld [vmem:[%s2 + $0x18] sm:$0xff]
        %v2304 = vld [vmem:[%s2 + $0x20] sm:$0xff]
        %v2305 = vld [vmem:[%s2 + $0x28] sm:$0xff]
        %v2306 = vld [vmem:[%s2 + $0x30] sm:$0xff]
        %v2307 = vld [vmem:[%s2 + $0x38] sm:$0xff]
        %2308 = vrot.lane.b32.xlu0 %v513, 111
        %v2309 = vpop.permute.xlu0 %2308
        %2310 = vrot.lane.b32.xlu0 %v525, 111
        %v2311 = vpop.permute.xlu0 %2310
        %2312 = vrot.lane.b32.xlu0 %v514, 111
        %v2313 = vpop.permute.xlu0 %2312
        %vm2314 = vcmp.lt.s32.totalorder %v534, 111
        %v2315 = vsel %vm2314, %v2311, %v2313
        %v2316 = vsel %vm2314, %v2309, %v2311
        %v2317 = vsel %vm2314, %v2313, %v2309
        %2326 = vrot.lane.b32.xlu0 %v2300, 104
        %v2327 = vpop.permute.xlu0 %2326
        %2328 = vrot.lane.b32.xlu0 %v2301, 104
        %v2329 = vpop.permute.xlu0 %2328
        %2330 = vrot.lane.b32.xlu0 %v2302, 104
        %v2331 = vpop.permute.xlu0 %2330
        %2332 = vrot.lane.b32.xlu0 %v2303, 104
        %v2333 = vpop.permute.xlu0 %2332
        %2334 = vrot.lane.b32.xlu0 %v2304, 104
        %v2335 = vpop.permute.xlu0 %2334
        %2336 = vrot.lane.b32.xlu0 %v2305, 104
        %v2337 = vpop.permute.xlu0 %2336
        %2338 = vrot.lane.b32.xlu0 %v2306, 104
        %v2339 = vpop.permute.xlu0 %2338
        %2340 = vrot.lane.b32.xlu0 %v2307, 104
        %v2341 = vpop.permute.xlu0 %2340
        %v2342 = vsel %vm581, %v2327, 0
        %v2344 = vsel %vm581, %v2329, 0
        %v2346 = vsel %vm581, %v2331, 0
        %v2348 = vsel %vm581, %v2333, 0
        %v2350 = vsel %vm581, %v2335, 0
        %v2352 = vsel %vm581, %v2337, 0
        %v2354 = vsel %vm581, %v2339, 0
        %v2356 = vsel %vm581, %v2341, 0
        %v2359 = vsel %vm598, %v2316, 0
        %v2362 = vsel %vm598, %v2315, 0
        %v2365 = vsel %vm598, %v2317, 0
        %2367 = vmatprep.subr.mxu0 %v2362
        %2368 = vmatpush1.msra.mxu0 %v2359
        %2369 = vmatprep.subr.mxu0 0.0
        %2370 = vmatpush1.msra.mxu0 0.0
        %2371 = vmatprep.subr.mxu0 0.0
        %2372 = vmatpush1.msra.mxu0 0.0
        %2373 = vmatprep.subr.mxu0 0.0
        %2374 = vmatpush1.msra.mxu0 0.0
        %2375 = vmatprep.subr.mxu0 0.0
        %2376 = vmatpush1.msra.mxu0 0.0
        %2377 = vmatprep.subr.mxu0 0.0
        %2378 = vmatpush1.msra.mxu0 0.0
        %2379 = vmatprep.subr.mxu0 0.0
        %2380 = vmatpush1.msra.mxu0 0.0
        %2381 = vmatprep.subr.mxu0 0.0
        %2382 = vmatpush1.msra.mxu0 0.0
        %2383 = vmatprep.subr.mxu0 0.0
        %2384 = vmatpush1.msra.mxu0 0.0
        %2385 = vmatprep.subr.mxu0 0.0
        %2386 = vmatpush1.msra.mxu0 0.0
        %2387 = vmatprep.subr.mxu0 0.0
        %2388 = vmatpush1.msra.mxu0 0.0
        %2389 = vmatprep.subr.mxu0 0.0
        %2390 = vmatpush1.msra.mxu0 0.0
        %2391 = vmatprep.subr.mxu0 0.0
        %2392 = vmatpush1.msra.mxu0 0.0
        %2393 = vmatprep.subr.mxu0 0.0
        %2394 = vmatpush1.msra.mxu0 0.0
        %2395 = vmatprep.subr.mxu0 0.0
        %2396 = vmatpush1.msra.mxu0 0.0
        %2397 = vmatprep.subr.mxu0 0.0
        %2398 = vmatpush1.msra.mxu0 0.0
        %2399 = vmatprep.subr.mxu0 0.0
        %2400 = vmatpush1.msra.mxu0 0.0
        %2401 = vmatprep.subr.mxu0 0.0
        %2402 = vmatpush1.msra.mxu0 0.0
        %2403 = vmatprep.subr.mxu0 0.0
        %2404 = vmatpush1.msra.mxu0 0.0
        %2405 = vmatprep.subr.mxu0 0.0
        %2406 = vmatpush1.msra.mxu0 0.0
        %2407 = vmatprep.subr.mxu0 0.0
        %2408 = vmatpush1.msra.mxu0 0.0
        %2409 = vmatprep.subr.mxu0 0.0
        %2410 = vmatpush1.msra.mxu0 0.0
        %2411 = vmatprep.subr.mxu0 0.0
        %2412 = vmatpush1.msra.mxu0 0.0
        %2413 = vmatprep.subr.mxu0 0.0
        %2414 = vmatpush1.msra.mxu0 0.0
        %2415 = vmatprep.subr.mxu0 0.0
        %2416 = vmatpush1.msra.mxu0 0.0
        %2417 = vmatprep.subr.mxu0 0.0
        %2418 = vmatpush1.msra.mxu0 0.0
        %2419 = vmatprep.subr.mxu0 0.0
        %2420 = vmatpush1.msra.mxu0 0.0
        %2421 = vmatprep.subr.mxu0 0.0
        %2422 = vmatpush1.msra.mxu0 0.0
        %2423 = vmatprep.subr.mxu0 0.0
        %2424 = vmatpush1.msra.mxu0 0.0
        %2425 = vmatprep.subr.mxu0 0.0
        %2426 = vmatpush1.msra.mxu0 0.0
        %2427 = vmatprep.subr.mxu0 0.0
        %2428 = vmatpush1.msra.mxu0 0.0
        %2429 = vmatprep.subr.mxu0 0.0
        %2430 = vmatpush1.msra.mxu0 0.0
        %2431 = vmatprep.mubr.f32.mxu0 0.0
        %2432 = vmatmul.mubr.f32.gmra.mrb[0].mxu0 %v2342
        %v2433 = vpop.f32.mrb[0].mxu0
        %v2434 = vadd.f32 0.0, %v2433
        %v2435 = vpop.f32.mrb[0].mxu0
        %v2436 = vadd.f32 0.0, %v2435
        %2437 = vmatprep.mubr.f32.mxu0 0.0
        %2438 = vmatmul.mubr.f32.gmra.mrb[0].mxu0 %v2344
        %v2439 = vpop.f32.mrb[0].mxu0
        %v2440 = vadd.f32 0.0, %v2439
        %v2441 = vpop.f32.mrb[0].mxu0
        %v2442 = vadd.f32 0.0, %v2441
        %2443 = vmatprep.mubr.f32.mxu0 0.0
        %2444 = vmatmul.mubr.f32.gmra.mrb[0].mxu0 %v2346
        %v2445 = vpop.f32.mrb[0].mxu0
        %v2446 = vadd.f32 0.0, %v2445
        %v2447 = vpop.f32.mrb[0].mxu0
        %v2448 = vadd.f32 0.0, %v2447
        %2449 = vmatprep.mubr.f32.mxu0 0.0
        %2450 = vmatmul.mubr.f32.gmra.mrb[0].mxu0 %v2348
        %v2451 = vpop.f32.mrb[0].mxu0
        %v2452 = vadd.f32 0.0, %v2451
        %v2453 = vpop.f32.mrb[0].mxu0
        %v2454 = vadd.f32 0.0, %v2453
        %2455 = vmatprep.mubr.f32.mxu0 0.0
        %2456 = vmatmul.mubr.f32.gmra.mrb[0].mxu0 %v2350
        %v2457 = vpop.f32.mrb[0].mxu0
        %v2458 = vadd.f32 0.0, %v2457
        %v2459 = vpop.f32.mrb[0].mxu0
        %v2460 = vadd.f32 0.0, %v2459
        %2461 = vmatprep.mubr.f32.mxu0 0.0
        %2462 = vmatmul.mubr.f32.gmra.mrb[0].mxu0 %v2352
        %v2463 = vpop.f32.mrb[0].mxu0
        %v2464 = vadd.f32 0.0, %v2463
        %v2465 = vpop.f32.mrb[0].mxu0
        %v2466 = vadd.f32 0.0, %v2465
        %2467 = vmatprep.mubr.f32.mxu0 0.0
        %2468 = vmatmul.mubr.f32.gmra.mrb[0].mxu0 %v2354
        %v2469 = vpop.f32.mrb[0].mxu0
        %v2470 = vadd.f32 0.0, %v2469
        %v2471 = vpop.f32.mrb[0].mxu0
        %v2472 = vadd.f32 0.0, %v2471
        %2473 = vmatprep.mubr.f32.mxu0 0.0
        %2474 = vmatmul.mubr.f32.gmra.mrb[0].mxu0 %v2356
        %v2475 = vpop.f32.mrb[0].mxu0
        %v2476 = vadd.f32 0.0, %v2475
        %v2477 = vpop.f32.mrb[0].mxu0
        %v2478 = vadd.f32 0.0, %v2477
        %2479 = vdwg.mxu0
        %2480 = vmatprep.subr.mxu0 0.0
        %2481 = vmatpush1.msra.mxu0 %v2365
        %2482 = vmatprep.subr.mxu0 0.0
        %2483 = vmatpush1.msra.mxu0 0.0
        %2484 = vmatprep.subr.mxu0 0.0
        %2485 = vmatpush1.msra.mxu0 0.0
        %2486 = vmatprep.subr.mxu0 0.0
        %2487 = vmatpush1.msra.mxu0 0.0
        %2488 = vmatprep.subr.mxu0 0.0
        %2489 = vmatpush1.msra.mxu0 0.0
        %2490 = vmatprep.subr.mxu0 0.0
        %2491 = vmatpush1.msra.mxu0 0.0
        %2492 = vmatprep.subr.mxu0 0.0
        %2493 = vmatpush1.msra.mxu0 0.0
        %2494 = vmatprep.subr.mxu0 0.0
        %2495 = vmatpush1.msra.mxu0 0.0
        %2496 = vmatprep.subr.mxu0 0.0
        %2497 = vmatpush1.msra.mxu0 0.0
        %2498 = vmatprep.subr.mxu0 0.0
        %2499 = vmatpush1.msra.mxu0 0.0
        %2500 = vmatprep.subr.mxu0 0.0
        %2501 = vmatpush1.msra.mxu0 0.0
        %2502 = vmatprep.subr.mxu0 0.0
        %2503 = vmatpush1.msra.mxu0 0.0
        %2504 = vmatprep.subr.mxu0 0.0
        %2505 = vmatpush1.msra.mxu0 0.0
        %2506 = vmatprep.subr.mxu0 0.0
        %2507 = vmatpush1.msra.mxu0 0.0
        %2508 = vmatprep.subr.mxu0 0.0
        %2509 = vmatpush1.msra.mxu0 0.0
        %2510 = vmatprep.subr.mxu0 0.0
        %2511 = vmatpush1.msra.mxu0 0.0
        %2512 = vmatprep.subr.mxu0 0.0
        %2513 = vmatpush1.msra.mxu0 0.0
        %2514 = vmatprep.subr.mxu0 0.0
        %2515 = vmatpush1.msra.mxu0 0.0
        %2516 = vmatprep.subr.mxu0 0.0
        %2517 = vmatpush1.msra.mxu0 0.0
        %2518 = vmatprep.subr.mxu0 0.0
        %2519 = vmatpush1.msra.mxu0 0.0
        %2520 = vmatprep.subr.mxu0 0.0
        %2521 = vmatpush1.msra.mxu0 0.0
        %2522 = vmatprep.subr.mxu0 0.0
        %2523 = vmatpush1.msra.mxu0 0.0
        %2524 = vmatprep.subr.mxu0 0.0
        %2525 = vmatpush1.msra.mxu0 0.0
        %2526 = vmatprep.subr.mxu0 0.0
        %2527 = vmatpush1.msra.mxu0 0.0
        %2528 = vmatprep.subr.mxu0 0.0
        %2529 = vmatpush1.msra.mxu0 0.0
        %2530 = vmatprep.subr.mxu0 0.0
        %2531 = vmatpush1.msra.mxu0 0.0
        %2532 = vmatprep.subr.mxu0 0.0
        %2533 = vmatpush1.msra.mxu0 0.0
        %2534 = vmatprep.subr.mxu0 0.0
        %2535 = vmatpush1.msra.mxu0 0.0
        %2536 = vmatprep.subr.mxu0 0.0
        %2537 = vmatpush1.msra.mxu0 0.0
        %2538 = vmatprep.subr.mxu0 0.0
        %2539 = vmatpush1.msra.mxu0 0.0
        %2540 = vmatprep.subr.mxu0 0.0
        %2541 = vmatpush1.msra.mxu0 0.0
        %2542 = vmatprep.subr.mxu0 0.0
        %2543 = vmatpush1.msra.mxu0 0.0
        %2544 = vmatprep.mubr.f32.mxu0 0.0
        %2545 = vmatmul.mubr.f32.gmra.mrb[0].mxu0 %v2342
        %v2546 = vpop.f32.mrb[0].mxu0
        %v2547 = vadd.f32 0.0, %v2546
        %v2548 = vpop.f32.mrb[0].mxu0
        %2549 = vmatprep.mubr.f32.mxu0 0.0
        %2550 = vmatmul.mubr.f32.gmra.mrb[0].mxu0 %v2344
        %v2551 = vpop.f32.mrb[0].mxu0
        %v2552 = vadd.f32 0.0, %v2551
        %v2553 = vpop.f32.mrb[0].mxu0
        %2554 = vmatprep.mubr.f32.mxu0 0.0
        %2555 = vmatmul.mubr.f32.gmra.mrb[0].mxu0 %v2346
        %v2556 = vpop.f32.mrb[0].mxu0
        %v2557 = vadd.f32 0.0, %v2556
        %v2558 = vpop.f32.mrb[0].mxu0
        %2559 = vmatprep.mubr.f32.mxu0 0.0
        %2560 = vmatmul.mubr.f32.gmra.mrb[0].mxu0 %v2348
        %v2561 = vpop.f32.mrb[0].mxu0
        %v2562 = vadd.f32 0.0, %v2561
        %v2563 = vpop.f32.mrb[0].mxu0
        %2564 = vmatprep.mubr.f32.mxu0 0.0
        %2565 = vmatmul.mubr.f32.gmra.mrb[0].mxu0 %v2350
        %v2566 = vpop.f32.mrb[0].mxu0
        %v2567 = vadd.f32 0.0, %v2566
        %v2568 = vpop.f32.mrb[0].mxu0
        %2569 = vmatprep.mubr.f32.mxu0 0.0
        %2570 = vmatmul.mubr.f32.gmra.mrb[0].mxu0 %v2352
        %v2571 = vpop.f32.mrb[0].mxu0
        %v2572 = vadd.f32 0.0, %v2571
        %v2573 = vpop.f32.mrb[0].mxu0
        %2574 = vmatprep.mubr.f32.mxu0 0.0
        %2575 = vmatmul.mubr.f32.gmra.mrb[0].mxu0 %v2354
        %v2576 = vpop.f32.mrb[0].mxu0
        %v2577 = vadd.f32 0.0, %v2576
        %v2578 = vpop.f32.mrb[0].mxu0
        %2579 = vmatprep.mubr.f32.mxu0 0.0
        %2580 = vmatmul.mubr.f32.gmra.mrb[0].mxu0 %v2356
        %v2581 = vpop.f32.mrb[0].mxu0
        %v2582 = vadd.f32 0.0, %v2581
        %v2583 = vpop.f32.mrb[0].mxu0
        %2584 = vdwg.mxu0
        %v2585 = vadd.f32 %v2276, %v2434
        %v2586 = vadd.f32 %v2277, %v2436
        %v2587 = vadd.f32 %v2278, %v2547
        %v2588 = vadd.f32 %v2279, %v2440
        %v2589 = vadd.f32 %v2280, %v2442
        %v2590 = vadd.f32 %v2281, %v2552
        %v2591 = vadd.f32 %v2282, %v2446
        %v2592 = vadd.f32 %v2283, %v2448
        %v2593 = vadd.f32 %v2284, %v2557
        %v2594 = vadd.f32 %v2285, %v2452
        %v2595 = vadd.f32 %v2286, %v2454
        %v2596 = vadd.f32 %v2287, %v2562
        %v2597 = vadd.f32 %v2288, %v2458
        %v2598 = vadd.f32 %v2289, %v2460
        %v2599 = vadd.f32 %v2290, %v2567
        %v2600 = vadd.f32 %v2291, %v2464
        %v2601 = vadd.f32 %v2292, %v2466
        %v2602 = vadd.f32 %v2293, %v2572
        %v2603 = vadd.f32 %v2294, %v2470
        %v2604 = vadd.f32 %v2295, %v2472
        %v2605 = vadd.f32 %v2296, %v2577
        %v2606 = vadd.f32 %v2297, %v2476
        %v2607 = vadd.f32 %v2298, %v2478
        %v2608 = vadd.f32 %v2299, %v2582
        %v2609 = vld [vmem:[%s2] sm:$0xff]
        %v2610 = vld [vmem:[%s2 + $0x8] sm:$0xff]
        %v2611 = vld [vmem:[%s2 + $0x10] sm:$0xff]
        %v2612 = vld [vmem:[%s2 + $0x18] sm:$0xff]
        %v2613 = vld [vmem:[%s2 + $0x20] sm:$0xff]
        %v2614 = vld [vmem:[%s2 + $0x28] sm:$0xff]
        %v2615 = vld [vmem:[%s2 + $0x30] sm:$0xff]
        %v2616 = vld [vmem:[%s2 + $0x38] sm:$0xff]
        %2617 = vrot.lane.b32.xlu0 %v513, 110
        %v2618 = vpop.permute.xlu0 %2617
        %2619 = vrot.lane.b32.xlu0 %v525, 110
        %v2620 = vpop.permute.xlu0 %2619
        %2621 = vrot.lane.b32.xlu0 %v514, 110
        %v2622 = vpop.permute.xlu0 %2621
        %vm2623 = vcmp.lt.s32.totalorder %v534, 110
        %v2624 = vsel %vm2623, %v2620, %v2622
        %v2625 = vsel %vm2623, %v2618, %v2620
        %v2626 = vsel %vm2623, %v2622, %v2618
        %2635 = vrot.lane.b32.xlu0 %v2609, 100
        %v2636 = vpop.permute.xlu0 %2635
        %2637 = vrot.lane.b32.xlu0 %v2610, 100
        %v2638 = vpop.permute.xlu0 %2637
        %2639 = vrot.lane.b32.xlu0 %v2611, 100
        %v2640 = vpop.permute.xlu0 %2639
        %2641 = vrot.lane.b32.xlu0 %v2612, 100
        %v2642 = vpop.permute.xlu0 %2641
        %2643 = vrot.lane.b32.xlu0 %v2613, 100
        %v2644 = vpop.permute.xlu0 %2643
        %2645 = vrot.lane.b32.xlu0 %v2614, 100
        %v2646 = vpop.permute.xlu0 %2645
        %2647 = vrot.lane.b32.xlu0 %v2615, 100
        %v2648 = vpop.permute.xlu0 %2647
        %2649 = vrot.lane.b32.xlu0 %v2616, 100
        %v2650 = vpop.permute.xlu0 %2649
        %v2651 = vsel %vm581, %v2636, 0
        %v2653 = vsel %vm581, %v2638, 0
        %v2655 = vsel %vm581, %v2640, 0
        %v2657 = vsel %vm581, %v2642, 0
        %v2659 = vsel %vm581, %v2644, 0
        %v2661 = vsel %vm581, %v2646, 0
        %v2663 = vsel %vm581, %v2648, 0
        %v2665 = vsel %vm581, %v2650, 0
        %v2668 = vsel %vm598, %v2625, 0
        %v2671 = vsel %vm598, %v2624, 0
        %v2674 = vsel %vm598, %v2626, 0
        %2676 = vmatprep.subr.mxu0 %v2671
        %2677 = vmatpush1.msra.mxu0 %v2668
        %2678 = vmatprep.subr.mxu0 0.0
        %2679 = vmatpush1.msra.mxu0 0.0
        %2680 = vmatprep.subr.mxu0 0.0
        %2681 = vmatpush1.msra.mxu0 0.0
        %2682 = vmatprep.subr.mxu0 0.0
        %2683 = vmatpush1.msra.mxu0 0.0
        %2684 = vmatprep.subr.mxu0 0.0
        %2685 = vmatpush1.msra.mxu0 0.0
        %2686 = vmatprep.subr.mxu0 0.0
        %2687 = vmatpush1.msra.mxu0 0.0
        %2688 = vmatprep.subr.mxu0 0.0
        %2689 = vmatpush1.msra.mxu0 0.0
        %2690 = vmatprep.subr.mxu0 0.0
        %2691 = vmatpush1.msra.mxu0 0.0
        %2692 = vmatprep.subr.mxu0 0.0
        %2693 = vmatpush1.msra.mxu0 0.0
        %2694 = vmatprep.subr.mxu0 0.0
        %2695 = vmatpush1.msra.mxu0 0.0
        %2696 = vmatprep.subr.mxu0 0.0
        %2697 = vmatpush1.msra.mxu0 0.0
        %2698 = vmatprep.subr.mxu0 0.0
        %2699 = vmatpush1.msra.mxu0 0.0
        %2700 = vmatprep.subr.mxu0 0.0
        %2701 = vmatpush1.msra.mxu0 0.0
        %2702 = vmatprep.subr.mxu0 0.0
        %2703 = vmatpush1.msra.mxu0 0.0
        %2704 = vmatprep.subr.mxu0 0.0
        %2705 = vmatpush1.msra.mxu0 0.0
        %2706 = vmatprep.subr.mxu0 0.0
        %2707 = vmatpush1.msra.mxu0 0.0
        %2708 = vmatprep.subr.mxu0 0.0
        %2709 = vmatpush1.msra.mxu0 0.0
        %2710 = vmatprep.subr.mxu0 0.0
        %2711 = vmatpush1.msra.mxu0 0.0
        %2712 = vmatprep.subr.mxu0 0.0
        %2713 = vmatpush1.msra.mxu0 0.0
        %2714 = vmatprep.subr.mxu0 0.0
        %2715 = vmatpush1.msra.mxu0 0.0
        %2716 = vmatprep.subr.mxu0 0.0
        %2717 = vmatpush1.msra.mxu0 0.0
        %2718 = vmatprep.subr.mxu0 0.0
        %2719 = vmatpush1.msra.mxu0 0.0
        %2720 = vmatprep.subr.mxu0 0.0
        %2721 = vmatpush1.msra.mxu0 0.0
        %2722 = vmatprep.subr.mxu0 0.0
        %2723 = vmatpush1.msra.mxu0 0.0
        %2724 = vmatprep.subr.mxu0 0.0
        %2725 = vmatpush1.msra.mxu0 0.0
        %2726 = vmatprep.subr.mxu0 0.0
        %2727 = vmatpush1.msra.mxu0 0.0
        %2728 = vmatprep.subr.mxu0 0.0
        %2729 = vmatpush1.msra.mxu0 0.0
        %2730 = vmatprep.subr.mxu0 0.0
        %2731 = vmatpush1.msra.mxu0 0.0
        %2732 = vmatprep.subr.mxu0 0.0
        %2733 = vmatpush1.msra.mxu0 0.0
        %2734 = vmatprep.subr.mxu0 0.0
        %2735 = vmatpush1.msra.mxu0 0.0
        %2736 = vmatprep.subr.mxu0 0.0
        %2737 = vmatpush1.msra.mxu0 0.0
        %2738 = vmatprep.subr.mxu0 0.0
        %2739 = vmatpush1.msra.mxu0 0.0
        %2740 = vmatprep.mubr.f32.mxu0 0.0
        %2741 = vmatmul.mubr.f32.gmra.mrb[0].mxu0 %v2651
        %v2742 = vpop.f32.mrb[0].mxu0
        %v2743 = vadd.f32 0.0, %v2742
        %v2744 = vpop.f32.mrb[0].mxu0
        %v2745 = vadd.f32 0.0, %v2744
        %2746 = vmatprep.mubr.f32.mxu0 0.0
        %2747 = vmatmul.mubr.f32.gmra.mrb[0].mxu0 %v2653
        %v2748 = vpop.f32.mrb[0].mxu0
        %v2749 = vadd.f32 0.0, %v2748
        %v2750 = vpop.f32.mrb[0].mxu0
        %v2751 = vadd.f32 0.0, %v2750
        %2752 = vmatprep.mubr.f32.mxu0 0.0
        %2753 = vmatmul.mubr.f32.gmra.mrb[0].mxu0 %v2655
        %v2754 = vpop.f32.mrb[0].mxu0
        %v2755 = vadd.f32 0.0, %v2754
        %v2756 = vpop.f32.mrb[0].mxu0
        %v2757 = vadd.f32 0.0, %v2756
        %2758 = vmatprep.mubr.f32.mxu0 0.0
        %2759 = vmatmul.mubr.f32.gmra.mrb[0].mxu0 %v2657
        %v2760 = vpop.f32.mrb[0].mxu0
        %v2761 = vadd.f32 0.0, %v2760
        %v2762 = vpop.f32.mrb[0].mxu0
        %v2763 = vadd.f32 0.0, %v2762
        %2764 = vmatprep.mubr.f32.mxu0 0.0
        %2765 = vmatmul.mubr.f32.gmra.mrb[0].mxu0 %v2659
        %v2766 = vpop.f32.mrb[0].mxu0
        %v2767 = vadd.f32 0.0, %v2766
        %v2768 = vpop.f32.mrb[0].mxu0
        %v2769 = vadd.f32 0.0, %v2768
        %2770 = vmatprep.mubr.f32.mxu0 0.0
        %2771 = vmatmul.mubr.f32.gmra.mrb[0].mxu0 %v2661
        %v2772 = vpop.f32.mrb[0].mxu0
        %v2773 = vadd.f32 0.0, %v2772
        %v2774 = vpop.f32.mrb[0].mxu0
        %v2775 = vadd.f32 0.0, %v2774
        %2776 = vmatprep.mubr.f32.mxu0 0.0
        %2777 = vmatmul.mubr.f32.gmra.mrb[0].mxu0 %v2663
        %v2778 = vpop.f32.mrb[0].mxu0
        %v2779 = vadd.f32 0.0, %v2778
        %v2780 = vpop.f32.mrb[0].mxu0
        %v2781 = vadd.f32 0.0, %v2780
        %2782 = vmatprep.mubr.f32.mxu0 0.0
        %2783 = vmatmul.mubr.f32.gmra.mrb[0].mxu0 %v2665
        %v2784 = vpop.f32.mrb[0].mxu0
        %v2785 = vadd.f32 0.0, %v2784
        %v2786 = vpop.f32.mrb[0].mxu0
        %v2787 = vadd.f32 0.0, %v2786
        %2788 = vdwg.mxu0
        %2789 = vmatprep.subr.mxu0 0.0
        %2790 = vmatpush1.msra.mxu0 %v2674
        %2791 = vmatprep.subr.mxu0 0.0
        %2792 = vmatpush1.msra.mxu0 0.0
        %2793 = vmatprep.subr.mxu0 0.0
        %2794 = vmatpush1.msra.mxu0 0.0
        %2795 = vmatprep.subr.mxu0 0.0
        %2796 = vmatpush1.msra.mxu0 0.0
        %2797 = vmatprep.subr.mxu0 0.0
        %2798 = vmatpush1.msra.mxu0 0.0
        %2799 = vmatprep.subr.mxu0 0.0
        %2800 = vmatpush1.msra.mxu0 0.0
        %2801 = vmatprep.subr.mxu0 0.0
        %2802 = vmatpush1.msra.mxu0 0.0
        %2803 = vmatprep.subr.mxu0 0.0
        %2804 = vmatpush1.msra.mxu0 0.0
        %2805 = vmatprep.subr.mxu0 0.0
        %2806 = vmatpush1.msra.mxu0 0.0
        %2807 = vmatprep.subr.mxu0 0.0
        %2808 = vmatpush1.msra.mxu0 0.0
        %2809 = vmatprep.subr.mxu0 0.0
        %2810 = vmatpush1.msra.mxu0 0.0
        %2811 = vmatprep.subr.mxu0 0.0
        %2812 = vmatpush1.msra.mxu0 0.0
        %2813 = vmatprep.subr.mxu0 0.0
        %2814 = vmatpush1.msra.mxu0 0.0
        %2815 = vmatprep.subr.mxu0 0.0
        %2816 = vmatpush1.msra.mxu0 0.0
        %2817 = vmatprep.subr.mxu0 0.0
        %2818 = vmatpush1.msra.mxu0 0.0
        %2819 = vmatprep.subr.mxu0 0.0
        %2820 = vmatpush1.msra.mxu0 0.0
        %2821 = vmatprep.subr.mxu0 0.0
        %2822 = vmatpush1.msra.mxu0 0.0
        %2823 = vmatprep.subr.mxu0 0.0
        %2824 = vmatpush1.msra.mxu0 0.0
        %2825 = vmatprep.subr.mxu0 0.0
        %2826 = vmatpush1.msra.mxu0 0.0
        %2827 = vmatprep.subr.mxu0 0.0
        %2828 = vmatpush1.msra.mxu0 0.0
        %2829 = vmatprep.subr.mxu0 0.0
        %2830 = vmatpush1.msra.mxu0 0.0
        %2831 = vmatprep.subr.mxu0 0.0
        %2832 = vmatpush1.msra.mxu0 0.0
        %2833 = vmatprep.subr.mxu0 0.0
        %2834 = vmatpush1.msra.mxu0 0.0
        %2835 = vmatprep.subr.mxu0 0.0
        %2836 = vmatpush1.msra.mxu0 0.0
        %2837 = vmatprep.subr.mxu0 0.0
        %2838 = vmatpush1.msra.mxu0 0.0
        %2839 = vmatprep.subr.mxu0 0.0
        %2840 = vmatpush1.msra.mxu0 0.0
        %2841 = vmatprep.subr.mxu0 0.0
        %2842 = vmatpush1.msra.mxu0 0.0
        %2843 = vmatprep.subr.mxu0 0.0
        %2844 = vmatpush1.msra.mxu0 0.0
        %2845 = vmatprep.subr.mxu0 0.0
        %2846 = vmatpush1.msra.mxu0 0.0
        %2847 = vmatprep.subr.mxu0 0.0
        %2848 = vmatpush1.msra.mxu0 0.0
        %2849 = vmatprep.subr.mxu0 0.0
        %2850 = vmatpush1.msra.mxu0 0.0
        %2851 = vmatprep.subr.mxu0 0.0
        %2852 = vmatpush1.msra.mxu0 0.0
        %2853 = vmatprep.mubr.f32.mxu0 0.0
        %2854 = vmatmul.mubr.f32.gmra.mrb[0].mxu0 %v2651
        %v2855 = vpop.f32.mrb[0].mxu0
        %v2856 = vadd.f32 0.0, %v2855
        %v2857 = vpop.f32.mrb[0].mxu0
        %2858 = vmatprep.mubr.f32.mxu0 0.0
        %2859 = vmatmul.mubr.f32.gmra.mrb[0].mxu0 %v2653
        %v2860 = vpop.f32.mrb[0].mxu0
        %v2861 = vadd.f32 0.0, %v2860
        %v2862 = vpop.f32.mrb[0].mxu0
        %2863 = vmatprep.mubr.f32.mxu0 0.0
        %2864 = vmatmul.mubr.f32.gmra.mrb[0].mxu0 %v2655
        %v2865 = vpop.f32.mrb[0].mxu0
        %v2866 = vadd.f32 0.0, %v2865
        %v2867 = vpop.f32.mrb[0].mxu0
        %2868 = vmatprep.mubr.f32.mxu0 0.0
        %2869 = vmatmul.mubr.f32.gmra.mrb[0].mxu0 %v2657
        %v2870 = vpop.f32.mrb[0].mxu0
        %v2871 = vadd.f32 0.0, %v2870
        %v2872 = vpop.f32.mrb[0].mxu0
        %2873 = vmatprep.mubr.f32.mxu0 0.0
        %2874 = vmatmul.mubr.f32.gmra.mrb[0].mxu0 %v2659
        %v2875 = vpop.f32.mrb[0].mxu0
        %v2876 = vadd.f32 0.0, %v2875
        %v2877 = vpop.f32.mrb[0].mxu0
        %2878 = vmatprep.mubr.f32.mxu0 0.0
        %2879 = vmatmul.mubr.f32.gmra.mrb[0].mxu0 %v2661
        %v2880 = vpop.f32.mrb[0].mxu0
        %v2881 = vadd.f32 0.0, %v2880
        %v2882 = vpop.f32.mrb[0].mxu0
        %2883 = vmatprep.mubr.f32.mxu0 0.0
        %2884 = vmatmul.mubr.f32.gmra.mrb[0].mxu0 %v2663
        %v2885 = vpop.f32.mrb[0].mxu0
        %v2886 = vadd.f32 0.0, %v2885
        %v2887 = vpop.f32.mrb[0].mxu0
        %2888 = vmatprep.mubr.f32.mxu0 0.0
        %2889 = vmatmul.mubr.f32.gmra.mrb[0].mxu0 %v2665
        %v2890 = vpop.f32.mrb[0].mxu0
        %v2891 = vadd.f32 0.0, %v2890
        %v2892 = vpop.f32.mrb[0].mxu0
        %2893 = vdwg.mxu0
        %v2894 = vadd.f32 %v2585, %v2743
        %v2895 = vadd.f32 %v2586, %v2745
        %v2896 = vadd.f32 %v2587, %v2856
        %v2897 = vadd.f32 %v2588, %v2749
        %v2898 = vadd.f32 %v2589, %v2751
        %v2899 = vadd.f32 %v2590, %v2861
        %v2900 = vadd.f32 %v2591, %v2755
        %v2901 = vadd.f32 %v2592, %v2757
        %v2902 = vadd.f32 %v2593, %v2866
        %v2903 = vadd.f32 %v2594, %v2761
        %v2904 = vadd.f32 %v2595, %v2763
        %v2905 = vadd.f32 %v2596, %v2871
        %v2906 = vadd.f32 %v2597, %v2767
        %v2907 = vadd.f32 %v2598, %v2769
        %v2908 = vadd.f32 %v2599, %v2876
        %v2909 = vadd.f32 %v2600, %v2773
        %v2910 = vadd.f32 %v2601, %v2775
        %v2911 = vadd.f32 %v2602, %v2881
        %v2912 = vadd.f32 %v2603, %v2779
        %v2913 = vadd.f32 %v2604, %v2781
        %v2914 = vadd.f32 %v2605, %v2886
        %v2915 = vadd.f32 %v2606, %v2785
        %v2916 = vadd.f32 %v2607, %v2787
        %v2917 = vadd.f32 %v2608, %v2891
        %v2918 = vld [vmem:[%s2] sm:$0xff]
        %v2919 = vld [vmem:[%s2 + $0x8] sm:$0xff]
        %v2920 = vld [vmem:[%s2 + $0x10] sm:$0xff]
        %v2921 = vld [vmem:[%s2 + $0x18] sm:$0xff]
        %v2922 = vld [vmem:[%s2 + $0x20] sm:$0xff]
        %v2923 = vld [vmem:[%s2 + $0x28] sm:$0xff]
        %v2924 = vld [vmem:[%s2 + $0x30] sm:$0xff]
        %v2925 = vld [vmem:[%s2 + $0x38] sm:$0xff]
        %2926 = vrot.lane.b32.xlu0 %v513, 109
        %v2927 = vpop.permute.xlu0 %2926
        %2928 = vrot.lane.b32.xlu0 %v525, 109
        %v2929 = vpop.permute.xlu0 %2928
        %2930 = vrot.lane.b32.xlu0 %v514, 109
        %v2931 = vpop.permute.xlu0 %2930
        %vm2932 = vcmp.lt.s32.totalorder %v534, 109
        %v2933 = vsel %vm2932, %v2929, %v2931
        %v2934 = vsel %vm2932, %v2927, %v2929
        %v2935 = vsel %vm2932, %v2931, %v2927
        %2944 = vrot.lane.b32.xlu0 %v2918, 96
        %v2945 = vpop.permute.xlu0 %2944
        %2946 = vrot.lane.b32.xlu0 %v2919, 96
        %v2947 = vpop.permute.xlu0 %2946
        %2948 = vrot.lane.b32.xlu0 %v2920, 96
        %v2949 = vpop.permute.xlu0 %2948
        %2950 = vrot.lane.b32.xlu0 %v2921, 96
        %v2951 = vpop.permute.xlu0 %2950
        %2952 = vrot.lane.b32.xlu0 %v2922, 96
        %v2953 = vpop.permute.xlu0 %2952
        %2954 = vrot.lane.b32.xlu0 %v2923, 96
        %v2955 = vpop.permute.xlu0 %2954
        %2956 = vrot.lane.b32.xlu0 %v2924, 96
        %v2957 = vpop.permute.xlu0 %2956
        %2958 = vrot.lane.b32.xlu0 %v2925, 96
        %v2959 = vpop.permute.xlu0 %2958
        %v2960 = vsel %vm581, %v2945, 0
        %v2962 = vsel %vm581, %v2947, 0
        %v2964 = vsel %vm581, %v2949, 0
        %v2966 = vsel %vm581, %v2951, 0
        %v2968 = vsel %vm581, %v2953, 0
        %v2970 = vsel %vm581, %v2955, 0
        %v2972 = vsel %vm581, %v2957, 0
        %v2974 = vsel %vm581, %v2959, 0
        %v2977 = vsel %vm598, %v2934, 0
        %v2980 = vsel %vm598, %v2933, 0
        %v2983 = vsel %vm598, %v2935, 0
        %2985 = vmatprep.subr.mxu0 %v2980
        %2986 = vmatpush1.msra.mxu0 %v2977
        %2987 = vmatprep.subr.mxu0 0.0
        %2988 = vmatpush1.msra.mxu0 0.0
        %2989 = vmatprep.subr.mxu0 0.0
        %2990 = vmatpush1.msra.mxu0 0.0
        %2991 = vmatprep.subr.mxu0 0.0
        %2992 = vmatpush1.msra.mxu0 0.0
        %2993 = vmatprep.subr.mxu0 0.0
        %2994 = vmatpush1.msra.mxu0 0.0
        %2995 = vmatprep.subr.mxu0 0.0
        %2996 = vmatpush1.msra.mxu0 0.0
        %2997 = vmatprep.subr.mxu0 0.0
        %2998 = vmatpush1.msra.mxu0 0.0
        %2999 = vmatprep.subr.mxu0 0.0
        %3000 = vmatpush1.msra.mxu0 0.0
        %3001 = vmatprep.subr.mxu0 0.0
        %3002 = vmatpush1.msra.mxu0 0.0
        %3003 = vmatprep.subr.mxu0 0.0
        %3004 = vmatpush1.msra.mxu0 0.0
        %3005 = vmatprep.subr.mxu0 0.0
        %3006 = vmatpush1.msra.mxu0 0.0
        %3007 = vmatprep.subr.mxu0 0.0
        %3008 = vmatpush1.msra.mxu0 0.0
        %3009 = vmatprep.subr.mxu0 0.0
        %3010 = vmatpush1.msra.mxu0 0.0
        %3011 = vmatprep.subr.mxu0 0.0
        %3012 = vmatpush1.msra.mxu0 0.0
        %3013 = vmatprep.subr.mxu0 0.0
        %3014 = vmatpush1.msra.mxu0 0.0
        %3015 = vmatprep.subr.mxu0 0.0
        %3016 = vmatpush1.msra.mxu0 0.0
        %3017 = vmatprep.subr.mxu0 0.0
        %3018 = vmatpush1.msra.mxu0 0.0
        %3019 = vmatprep.subr.mxu0 0.0
        %3020 = vmatpush1.msra.mxu0 0.0
        %3021 = vmatprep.subr.mxu0 0.0
        %3022 = vmatpush1.msra.mxu0 0.0
        %3023 = vmatprep.subr.mxu0 0.0
        %3024 = vmatpush1.msra.mxu0 0.0
        %3025 = vmatprep.subr.mxu0 0.0
        %3026 = vmatpush1.msra.mxu0 0.0
        %3027 = vmatprep.subr.mxu0 0.0
        %3028 = vmatpush1.msra.mxu0 0.0
        %3029 = vmatprep.subr.mxu0 0.0
        %3030 = vmatpush1.msra.mxu0 0.0
        %3031 = vmatprep.subr.mxu0 0.0
        %3032 = vmatpush1.msra.mxu0 0.0
        %3033 = vmatprep.subr.mxu0 0.0
        %3034 = vmatpush1.msra.mxu0 0.0
        %3035 = vmatprep.subr.mxu0 0.0
        %3036 = vmatpush1.msra.mxu0 0.0
        %3037 = vmatprep.subr.mxu0 0.0
        %3038 = vmatpush1.msra.mxu0 0.0
        %3039 = vmatprep.subr.mxu0 0.0
        %3040 = vmatpush1.msra.mxu0 0.0
        %3041 = vmatprep.subr.mxu0 0.0
        %3042 = vmatpush1.msra.mxu0 0.0
        %3043 = vmatprep.subr.mxu0 0.0
        %3044 = vmatpush1.msra.mxu0 0.0
        %3045 = vmatprep.subr.mxu0 0.0
        %3046 = vmatpush1.msra.mxu0 0.0
        %3047 = vmatprep.subr.mxu0 0.0
        %3048 = vmatpush1.msra.mxu0 0.0
        %3049 = vmatprep.mubr.f32.mxu0 0.0
        %3050 = vmatmul.mubr.f32.gmra.mrb[0].mxu0 %v2960
        %v3051 = vpop.f32.mrb[0].mxu0
        %v3052 = vadd.f32 0.0, %v3051
        %v3053 = vpop.f32.mrb[0].mxu0
        %v3054 = vadd.f32 0.0, %v3053
        %3055 = vmatprep.mubr.f32.mxu0 0.0
        %3056 = vmatmul.mubr.f32.gmra.mrb[0].mxu0 %v2962
        %v3057 = vpop.f32.mrb[0].mxu0
        %v3058 = vadd.f32 0.0, %v3057
        %v3059 = vpop.f32.mrb[0].mxu0
        %v3060 = vadd.f32 0.0, %v3059
        %3061 = vmatprep.mubr.f32.mxu0 0.0
        %3062 = vmatmul.mubr.f32.gmra.mrb[0].mxu0 %v2964
        %v3063 = vpop.f32.mrb[0].mxu0
        %v3064 = vadd.f32 0.0, %v3063
        %v3065 = vpop.f32.mrb[0].mxu0
        %v3066 = vadd.f32 0.0, %v3065
        %3067 = vmatprep.mubr.f32.mxu0 0.0
        %3068 = vmatmul.mubr.f32.gmra.mrb[0].mxu0 %v2966
        %v3069 = vpop.f32.mrb[0].mxu0
        %v3070 = vadd.f32 0.0, %v3069
        %v3071 = vpop.f32.mrb[0].mxu0
        %v3072 = vadd.f32 0.0, %v3071
        %3073 = vmatprep.mubr.f32.mxu0 0.0
        %3074 = vmatmul.mubr.f32.gmra.mrb[0].mxu0 %v2968
        %v3075 = vpop.f32.mrb[0].mxu0
        %v3076 = vadd.f32 0.0, %v3075
        %v3077 = vpop.f32.mrb[0].mxu0
        %v3078 = vadd.f32 0.0, %v3077
        %3079 = vmatprep.mubr.f32.mxu0 0.0
        %3080 = vmatmul.mubr.f32.gmra.mrb[0].mxu0 %v2970
        %v3081 = vpop.f32.mrb[0].mxu0
        %v3082 = vadd.f32 0.0, %v3081
        %v3083 = vpop.f32.mrb[0].mxu0
        %v3084 = vadd.f32 0.0, %v3083
        %3085 = vmatprep.mubr.f32.mxu0 0.0
        %3086 = vmatmul.mubr.f32.gmra.mrb[0].mxu0 %v2972
        %v3087 = vpop.f32.mrb[0].mxu0
        %v3088 = vadd.f32 0.0, %v3087
        %v3089 = vpop.f32.mrb[0].mxu0
        %v3090 = vadd.f32 0.0, %v3089
        %3091 = vmatprep.mubr.f32.mxu0 0.0
        %3092 = vmatmul.mubr.f32.gmra.mrb[0].mxu0 %v2974
        %v3093 = vpop.f32.mrb[0].mxu0
        %v3094 = vadd.f32 0.0, %v3093
        %v3095 = vpop.f32.mrb[0].mxu0
        %v3096 = vadd.f32 0.0, %v3095
        %3097 = vdwg.mxu0
        %3098 = vmatprep.subr.mxu0 0.0
        %3099 = vmatpush1.msra.mxu0 %v2983
        %3100 = vmatprep.subr.mxu0 0.0
        %3101 = vmatpush1.msra.mxu0 0.0
        %3102 = vmatprep.subr.mxu0 0.0
        %3103 = vmatpush1.msra.mxu0 0.0
        %3104 = vmatprep.subr.mxu0 0.0
        %3105 = vmatpush1.msra.mxu0 0.0
        %3106 = vmatprep.subr.mxu0 0.0
        %3107 = vmatpush1.msra.mxu0 0.0
        %3108 = vmatprep.subr.mxu0 0.0
        %3109 = vmatpush1.msra.mxu0 0.0
        %3110 = vmatprep.subr.mxu0 0.0
        %3111 = vmatpush1.msra.mxu0 0.0
        %3112 = vmatprep.subr.mxu0 0.0
        %3113 = vmatpush1.msra.mxu0 0.0
        %3114 = vmatprep.subr.mxu0 0.0
        %3115 = vmatpush1.msra.mxu0 0.0
        %3116 = vmatprep.subr.mxu0 0.0
        %3117 = vmatpush1.msra.mxu0 0.0
        %3118 = vmatprep.subr.mxu0 0.0
        %3119 = vmatpush1.msra.mxu0 0.0
        %3120 = vmatprep.subr.mxu0 0.0
        %3121 = vmatpush1.msra.mxu0 0.0
        %3122 = vmatprep.subr.mxu0 0.0
        %3123 = vmatpush1.msra.mxu0 0.0
        %3124 = vmatprep.subr.mxu0 0.0
        %3125 = vmatpush1.msra.mxu0 0.0
        %3126 = vmatprep.subr.mxu0 0.0
        %3127 = vmatpush1.msra.mxu0 0.0
        %3128 = vmatprep.subr.mxu0 0.0
        %3129 = vmatpush1.msra.mxu0 0.0
        %3130 = vmatprep.subr.mxu0 0.0
        %3131 = vmatpush1.msra.mxu0 0.0
        %3132 = vmatprep.subr.mxu0 0.0
        %3133 = vmatpush1.msra.mxu0 0.0
        %3134 = vmatprep.subr.mxu0 0.0
        %3135 = vmatpush1.msra.mxu0 0.0
        %3136 = vmatprep.subr.mxu0 0.0
        %3137 = vmatpush1.msra.mxu0 0.0
        %3138 = vmatprep.subr.mxu0 0.0
        %3139 = vmatpush1.msra.mxu0 0.0
        %3140 = vmatprep.subr.mxu0 0.0
        %3141 = vmatpush1.msra.mxu0 0.0
        %3142 = vmatprep.subr.mxu0 0.0
        %3143 = vmatpush1.msra.mxu0 0.0
        %3144 = vmatprep.subr.mxu0 0.0
        %3145 = vmatpush1.msra.mxu0 0.0
        %3146 = vmatprep.subr.mxu0 0.0
        %3147 = vmatpush1.msra.mxu0 0.0
        %3148 = vmatprep.subr.mxu0 0.0
        %3149 = vmatpush1.msra.mxu0 0.0
        %3150 = vmatprep.subr.mxu0 0.0
        %3151 = vmatpush1.msra.mxu0 0.0
        %3152 = vmatprep.subr.mxu0 0.0
        %3153 = vmatpush1.msra.mxu0 0.0
        %3154 = vmatprep.subr.mxu0 0.0
        %3155 = vmatpush1.msra.mxu0 0.0
        %3156 = vmatprep.subr.mxu0 0.0
        %3157 = vmatpush1.msra.mxu0 0.0
        %3158 = vmatprep.subr.mxu0 0.0
        %3159 = vmatpush1.msra.mxu0 0.0
        %3160 = vmatprep.subr.mxu0 0.0
        %3161 = vmatpush1.msra.mxu0 0.0
        %3162 = vmatprep.mubr.f32.mxu0 0.0
        %3163 = vmatmul.mubr.f32.gmra.mrb[0].mxu0 %v2960
        %v3164 = vpop.f32.mrb[0].mxu0
        %v3165 = vadd.f32 0.0, %v3164
        %v3166 = vpop.f32.mrb[0].mxu0
        %3167 = vmatprep.mubr.f32.mxu0 0.0
        %3168 = vmatmul.mubr.f32.gmra.mrb[0].mxu0 %v2962
        %v3169 = vpop.f32.mrb[0].mxu0
        %v3170 = vadd.f32 0.0, %v3169
        %v3171 = vpop.f32.mrb[0].mxu0
        %3172 = vmatprep.mubr.f32.mxu0 0.0
        %3173 = vmatmul.mubr.f32.gmra.mrb[0].mxu0 %v2964
        %v3174 = vpop.f32.mrb[0].mxu0
        %v3175 = vadd.f32 0.0, %v3174
        %v3176 = vpop.f32.mrb[0].mxu0
        %3177 = vmatprep.mubr.f32.mxu0 0.0
        %3178 = vmatmul.mubr.f32.gmra.mrb[0].mxu0 %v2966
        %v3179 = vpop.f32.mrb[0].mxu0
        %v3180 = vadd.f32 0.0, %v3179
        %v3181 = vpop.f32.mrb[0].mxu0
        %3182 = vmatprep.mubr.f32.mxu0 0.0
        %3183 = vmatmul.mubr.f32.gmra.mrb[0].mxu0 %v2968
        %v3184 = vpop.f32.mrb[0].mxu0
        %v3185 = vadd.f32 0.0, %v3184
        %v3186 = vpop.f32.mrb[0].mxu0
        %3187 = vmatprep.mubr.f32.mxu0 0.0
        %3188 = vmatmul.mubr.f32.gmra.mrb[0].mxu0 %v2970
        %v3189 = vpop.f32.mrb[0].mxu0
        %v3190 = vadd.f32 0.0, %v3189
        %v3191 = vpop.f32.mrb[0].mxu0
        %3192 = vmatprep.mubr.f32.mxu0 0.0
        %3193 = vmatmul.mubr.f32.gmra.mrb[0].mxu0 %v2972
        %v3194 = vpop.f32.mrb[0].mxu0
        %v3195 = vadd.f32 0.0, %v3194
        %v3196 = vpop.f32.mrb[0].mxu0
        %3197 = vmatprep.mubr.f32.mxu0 0.0
        %3198 = vmatmul.mubr.f32.gmra.mrb[0].mxu0 %v2974
        %v3199 = vpop.f32.mrb[0].mxu0
        %v3200 = vadd.f32 0.0, %v3199
        %v3201 = vpop.f32.mrb[0].mxu0
        %3202 = vdwg.mxu0
        %v3203 = vadd.f32 %v2894, %v3052
        %v3204 = vadd.f32 %v2895, %v3054
        %v3205 = vadd.f32 %v2896, %v3165
        %v3206 = vadd.f32 %v2897, %v3058
        %v3207 = vadd.f32 %v2898, %v3060
        %v3208 = vadd.f32 %v2899, %v3170
        %v3209 = vadd.f32 %v2900, %v3064
        %v3210 = vadd.f32 %v2901, %v3066
        %v3211 = vadd.f32 %v2902, %v3175
        %v3212 = vadd.f32 %v2903, %v3070
        %v3213 = vadd.f32 %v2904, %v3072
        %v3214 = vadd.f32 %v2905, %v3180
        %v3215 = vadd.f32 %v2906, %v3076
        %v3216 = vadd.f32 %v2907, %v3078
        %v3217 = vadd.f32 %v2908, %v3185
        %v3218 = vadd.f32 %v2909, %v3082
        %v3219 = vadd.f32 %v2910, %v3084
        %v3220 = vadd.f32 %v2911, %v3190
        %v3221 = vadd.f32 %v2912, %v3088
        %v3222 = vadd.f32 %v2913, %v3090
        %v3223 = vadd.f32 %v2914, %v3195
        %v3224 = vadd.f32 %v2915, %v3094
        %v3225 = vadd.f32 %v2916, %v3096
        %v3226 = vadd.f32 %v2917, %v3200
        %v3227 = vld [vmem:[%s3] sm:$0xff]
        %v3228 = vld [vmem:[%s3 + $0x8] sm:$0xff]
        %v3229 = vld [vmem:[%s3 + $0x10] sm:$0xff]
        %v3230 = vld [vmem:[%s3 + $0x18] sm:$0xff]
        %v3231 = vld [vmem:[%s3 + $0x20] sm:$0xff]
        %v3232 = vld [vmem:[%s3 + $0x28] sm:$0xff]
        %v3233 = vld [vmem:[%s3 + $0x30] sm:$0xff]
        %v3234 = vld [vmem:[%s3 + $0x38] sm:$0xff]
        %3236 = vset.pattern.permute.xlu0 0
        %3237 = vperm.xlu0 %3236, %v3227
        %v3238 = vpop.permute.xlu0 %3237
        %3241 = vset.pattern.permute.xlu0 0
        %3242 = vperm.xlu0 %3241, %v3228
        %v3243 = vpop.permute.xlu0 %3242
        %3246 = vset.pattern.permute.xlu0 0
        %3247 = vperm.xlu0 %3246, %v3229
        %v3248 = vpop.permute.xlu0 %3247
        %3251 = vset.pattern.permute.xlu0 0
        %3252 = vperm.xlu0 %3251, %v3230
        %v3253 = vpop.permute.xlu0 %3252
        %3256 = vset.pattern.permute.xlu0 0
        %3257 = vperm.xlu0 %3256, %v3231
        %v3258 = vpop.permute.xlu0 %3257
        %3261 = vset.pattern.permute.xlu0 0
        %3262 = vperm.xlu0 %3261, %v3232
        %v3263 = vpop.permute.xlu0 %3262
        %3266 = vset.pattern.permute.xlu0 0
        %3267 = vperm.xlu0 %3266, %v3233
        %v3268 = vpop.permute.xlu0 %3267
        %3271 = vset.pattern.permute.xlu0 0
        %3272 = vperm.xlu0 %3271, %v3234
        %v3273 = vpop.permute.xlu0 %3272
        %v3275 = vadd.f32 %v3203, %v3238
        %v3276 = vadd.f32 %v3204, %v3238
        %v3277 = vadd.f32 %v3205, %v3238
        %v3278 = vadd.f32 %v3206, %v3243
        %v3279 = vadd.f32 %v3207, %v3243
        %v3280 = vadd.f32 %v3208, %v3243
        %v3281 = vadd.f32 %v3209, %v3248
        %v3282 = vadd.f32 %v3210, %v3248
        %v3283 = vadd.f32 %v3211, %v3248
        %v3284 = vadd.f32 %v3212, %v3253
        %v3285 = vadd.f32 %v3213, %v3253
        %v3286 = vadd.f32 %v3214, %v3253
        %v3287 = vadd.f32 %v3215, %v3258
        %v3288 = vadd.f32 %v3216, %v3258
        %v3289 = vadd.f32 %v3217, %v3258
        %v3290 = vadd.f32 %v3218, %v3263
        %v3291 = vadd.f32 %v3219, %v3263
        %v3292 = vadd.f32 %v3220, %v3263
        %v3293 = vadd.f32 %v3221, %v3268
        %v3294 = vadd.f32 %v3222, %v3268
        %v3295 = vadd.f32 %v3223, %v3268
        %v3296 = vadd.f32 %v3224, %v3273
        %v3297 = vadd.f32 %v3225, %v3273
        %v3298 = vadd.f32 %v3226, %v3273
        %v3299 = vmax.f32 %v3275, 0.0
        %v3300 = vmax.f32 %v3276, 0.0
        %v3301 = vmax.f32 %v3277, 0.0
        %v3302 = vmax.f32 %v3278, 0.0
        %v3303 = vmax.f32 %v3279, 0.0
        %v3304 = vmax.f32 %v3280, 0.0
        %v3305 = vmax.f32 %v3281, 0.0
        %v3306 = vmax.f32 %v3282, 0.0
        %v3307 = vmax.f32 %v3283, 0.0
        %v3308 = vmax.f32 %v3284, 0.0
        %v3309 = vmax.f32 %v3285, 0.0
        %v3310 = vmax.f32 %v3286, 0.0
        %v3311 = vmax.f32 %v3287, 0.0
        %v3312 = vmax.f32 %v3288, 0.0
        %v3313 = vmax.f32 %v3289, 0.0
        %v3314 = vmax.f32 %v3290, 0.0
        %v3315 = vmax.f32 %v3291, 0.0
        %v3316 = vmax.f32 %v3292, 0.0
        %v3317 = vmax.f32 %v3293, 0.0
        %v3318 = vmax.f32 %v3294, 0.0
        %v3319 = vmax.f32 %v3295, 0.0
        %v3320 = vmax.f32 %v3296, 0.0
        %v3321 = vmax.f32 %v3297, 0.0
        %v3322 = vmax.f32 %v3298, 0.0
        %v3323 = vld [vmem:[#allocation7] sm:$0x7]
        %v3325 = vlaneseq
        %v3326 = vshrl.u32 %v3325, 7
        %v3327 = vsub.s32 0, %v3326
        %v3328 = vrot.slane %v3323, %v3327
        %v3329 = vlaneseq
        %v3330 = vshrl.u32 %v3329, 7
        %v3331 = vsub.s32 1, %v3330
        %v3332 = vrot.slane %v3323, %v3331
        %v3333 = vlaneseq
        %v3334 = vshrl.u32 %v3333, 7
        %v3335 = vsub.s32 2, %v3334
        %v3336 = vrot.slane %v3323, %v3335
        %v3340 = vmul.f32 %v3299, %v3328
        %v3341 = vmul.f32 %v3300, %v3332
        %v3342 = vmul.f32 %v3301, %v3336
        %v3343 = vmul.f32 %v3302, %v3328
        %v3344 = vmul.f32 %v3303, %v3332
        %v3345 = vmul.f32 %v3304, %v3336
        %v3346 = vmul.f32 %v3305, %v3328
        %v3347 = vmul.f32 %v3306, %v3332
        %v3348 = vmul.f32 %v3307, %v3336
        %v3349 = vmul.f32 %v3308, %v3328
        %v3350 = vmul.f32 %v3309, %v3332
        %v3351 = vmul.f32 %v3310, %v3336
        %v3352 = vmul.f32 %v3311, %v3328
        %v3353 = vmul.f32 %v3312, %v3332
        %v3354 = vmul.f32 %v3313, %v3336
        %v3355 = vmul.f32 %v3314, %v3328
        %v3356 = vmul.f32 %v3315, %v3332
        %v3357 = vmul.f32 %v3316, %v3336
        %v3358 = vmul.f32 %v3317, %v3328
        %v3359 = vmul.f32 %v3318, %v3332
        %v3360 = vmul.f32 %v3319, %v3336
        %v3361 = vmul.f32 %v3320, %v3328
        %v3362 = vmul.f32 %v3321, %v3332
        %v3363 = vmul.f32 %v3322, %v3336
        %3364 = vst [vmem:[#allocation3] sm:$0xff] %v3340
        %3365 = vst [vmem:[#allocation3 + $0x8] sm:$0xff] %v3341
        %3366 = vst [vmem:[#allocation3 + $0x10] sm:$0xff] %v3342
        %3367 = vst [vmem:[#allocation3 + $0x18] sm:$0xff] %v3343
        %3368 = vst [vmem:[#allocation3 + $0x20] sm:$0xff] %v3344
        %3369 = vst [vmem:[#allocation3 + $0x28] sm:$0xff] %v3345
        %3370 = vst [vmem:[#allocation3 + $0x30] sm:$0xff] %v3346
        %3371 = vst [vmem:[#allocation3 + $0x38] sm:$0xff] %v3347
        %3372 = vst [vmem:[#allocation3 + $0x40] sm:$0xff] %v3348
        %3373 = vst [vmem:[#allocation3 + $0x48] sm:$0xff] %v3349
        %3374 = vst [vmem:[#allocation3 + $0x50] sm:$0xff] %v3350
        %3375 = vst [vmem:[#allocation3 + $0x58] sm:$0xff] %v3351
        %3376 = vst [vmem:[#allocation3 + $0x60] sm:$0xff] %v3352
        %3377 = vst [vmem:[#allocation3 + $0x68] sm:$0xff] %v3353
        %3378 = vst [vmem:[#allocation3 + $0x70] sm:$0xff] %v3354
        %3379 = vst [vmem:[#allocation3 + $0x78] sm:$0xff] %v3355
        %3380 = vst [vmem:[#allocation3 + $0x80] sm:$0xff] %v3356
        %3381 = vst [vmem:[#allocation3 + $0x88] sm:$0xff] %v3357
        %3382 = vst [vmem:[#allocation3 + $0x90] sm:$0xff] %v3358
        %3383 = vst [vmem:[#allocation3 + $0x98] sm:$0xff] %v3359
        %3384 = vst [vmem:[#allocation3 + $0xa0] sm:$0xff] %v3360
        %3385 = vst [vmem:[#allocation3 + $0xa8] sm:$0xff] %v3361
        %3386 = vst [vmem:[#allocation3 + $0xb0] sm:$0xff] %v3362
        %3387 = vst [vmem:[#allocation3 + $0xb8] sm:$0xff] %v3363
        %v3388 = vld [vmem:[#allocation3] sm:$0xff]
        %v3389 = vld [vmem:[#allocation3 + $0x8] sm:$0xff]
        %v3390 = vld [vmem:[#allocation3 + $0x10] sm:$0xff]
        %v3391 = vld [vmem:[#allocation3 + $0x18] sm:$0xff]
        %v3392 = vld [vmem:[#allocation3 + $0x20] sm:$0xff]
        %v3393 = vld [vmem:[#allocation3 + $0x28] sm:$0xff]
        %v3394 = vld [vmem:[#allocation3 + $0x30] sm:$0xff]
        %v3395 = vld [vmem:[#allocation3 + $0x38] sm:$0xff]
        %v3396 = vld [vmem:[#allocation3 + $0x40] sm:$0xff]
        %v3397 = vld [vmem:[#allocation3 + $0x48] sm:$0xff]
        %v3398 = vld [vmem:[#allocation3 + $0x50] sm:$0xff]
        %v3399 = vld [vmem:[#allocation3 + $0x58] sm:$0xff]
        %v3400 = vld [vmem:[#allocation3 + $0x60] sm:$0xff]
        %v3401 = vld [vmem:[#allocation3 + $0x68] sm:$0xff]
        %v3402 = vld [vmem:[#allocation3 + $0x70] sm:$0xff]
        %v3403 = vld [vmem:[#allocation3 + $0x78] sm:$0xff]
        %v3404 = vld [vmem:[#allocation3 + $0x80] sm:$0xff]
        %v3405 = vld [vmem:[#allocation3 + $0x88] sm:$0xff]
        %v3406 = vld [vmem:[#allocation3 + $0x90] sm:$0xff]
        %v3407 = vld [vmem:[#allocation3 + $0x98] sm:$0xff]
        %v3408 = vld [vmem:[#allocation3 + $0xa0] sm:$0xff]
        %v3409 = vld [vmem:[#allocation3 + $0xa8] sm:$0xff]
        %v3410 = vld [vmem:[#allocation3 + $0xb0] sm:$0xff]
        %v3411 = vld [vmem:[#allocation3 + $0xb8] sm:$0xff]
        %3412 = vrot.lane.b32.xlu0 %v3388, 19
        %v3413 = vpop.permute.xlu0 %3412
        %3414 = vrot.lane.b32.xlu0 %v3391, 19
        %v3415 = vpop.permute.xlu0 %3414
        %3416 = vrot.lane.b32.xlu0 %v3394, 19
        %v3417 = vpop.permute.xlu0 %3416
        %3418 = vrot.lane.b32.xlu0 %v3397, 19
        %v3419 = vpop.permute.xlu0 %3418
        %3420 = vrot.lane.b32.xlu0 %v3400, 19
        %v3421 = vpop.permute.xlu0 %3420
        %3422 = vrot.lane.b32.xlu0 %v3403, 19
        %v3423 = vpop.permute.xlu0 %3422
        %3424 = vrot.lane.b32.xlu0 %v3406, 19
        %v3425 = vpop.permute.xlu0 %3424
        %3426 = vrot.lane.b32.xlu0 %v3409, 19
        %v3427 = vpop.permute.xlu0 %3426
        %3428 = vrot.lane.b32.xlu0 %v3389, 19
        %v3429 = vpop.permute.xlu0 %3428
        %3430 = vrot.lane.b32.xlu0 %v3392, 19
        %v3431 = vpop.permute.xlu0 %3430
        %3432 = vrot.lane.b32.xlu0 %v3395, 19
        %v3433 = vpop.permute.xlu0 %3432
        %3434 = vrot.lane.b32.xlu0 %v3398, 19
        %v3435 = vpop.permute.xlu0 %3434
        %3436 = vrot.lane.b32.xlu0 %v3401, 19
        %v3437 = vpop.permute.xlu0 %3436
        %3438 = vrot.lane.b32.xlu0 %v3404, 19
        %v3439 = vpop.permute.xlu0 %3438
        %3440 = vrot.lane.b32.xlu0 %v3407, 19
        %v3441 = vpop.permute.xlu0 %3440
        %3442 = vrot.lane.b32.xlu0 %v3410, 19
        %v3443 = vpop.permute.xlu0 %3442
        %3444 = vrot.lane.b32.xlu0 %v3390, 19
        %v3445 = vpop.permute.xlu0 %3444
        %3446 = vrot.lane.b32.xlu0 %v3393, 19
        %v3447 = vpop.permute.xlu0 %3446
        %3448 = vrot.lane.b32.xlu0 %v3396, 19
        %v3449 = vpop.permute.xlu0 %3448
        %3450 = vrot.lane.b32.xlu0 %v3399, 19
        %v3451 = vpop.permute.xlu0 %3450
        %3452 = vrot.lane.b32.xlu0 %v3402, 19
        %v3453 = vpop.permute.xlu0 %3452
        %3454 = vrot.lane.b32.xlu0 %v3405, 19
        %v3455 = vpop.permute.xlu0 %3454
        %3456 = vrot.lane.b32.xlu0 %v3408, 19
        %v3457 = vpop.permute.xlu0 %3456
        %3458 = vrot.lane.b32.xlu0 %v3411, 19
        %v3459 = vpop.permute.xlu0 %3458
        %v3460 = vsel %vm535, %v3429, %v3445
        %v3461 = vsel %vm535, %v3431, %v3447
        %v3462 = vsel %vm535, %v3433, %v3449
        %v3463 = vsel %vm535, %v3435, %v3451
        %v3464 = vsel %vm535, %v3437, %v3453
        %v3465 = vsel %vm535, %v3439, %v3455
        %v3466 = vsel %vm535, %v3441, %v3457
        %v3467 = vsel %vm535, %v3443, %v3459
        %v3468 = vsel %vm535, %v3413, %v3429
        %v3469 = vsel %vm535, %v3415, %v3431
        %v3470 = vsel %vm535, %v3417, %v3433
        %v3471 = vsel %vm535, %v3419, %v3435
        %v3472 = vsel %vm535, %v3421, %v3437
        %v3473 = vsel %vm535, %v3423, %v3439
        %v3474 = vsel %vm535, %v3425, %v3441
        %v3475 = vsel %vm535, %v3427, %v3443
        %v3476 = vsel %vm535, %v3445, %v3413
        %v3477 = vsel %vm535, %v3447, %v3415
        %v3478 = vsel %vm535, %v3449, %v3417
        %v3479 = vsel %vm535, %v3451, %v3419
        %v3480 = vsel %vm535, %v3453, %v3421
        %v3481 = vsel %vm535, %v3455, %v3423
        %v3482 = vsel %vm535, %v3457, %v3425
        %v3483 = vsel %vm535, %v3459, %v3427
        %3484 = vst [vmem:[#allocation2] sm:$0xff] %v3476
        %3485 = vst [vmem:[#allocation2 + $0x8] sm:$0xff] %v3468
        %3486 = vst [vmem:[#allocation2 + $0x10] sm:$0xff] %v3460
        %3487 = vst [vmem:[#allocation2 + $0x18] sm:$0xff] %v3477
        %3488 = vst [vmem:[#allocation2 + $0x20] sm:$0xff] %v3469
        %3489 = vst [vmem:[#allocation2 + $0x28] sm:$0xff] %v3461
        %3490 = vst [vmem:[#allocation2 + $0x30] sm:$0xff] %v3478
        %3491 = vst [vmem:[#allocation2 + $0x38] sm:$0xff] %v3470
        %3492 = vst [vmem:[#allocation2 + $0x40] sm:$0xff] %v3462
        %3493 = vst [vmem:[#allocation2 + $0x48] sm:$0xff] %v3479
        %3494 = vst [vmem:[#allocation2 + $0x50] sm:$0xff] %v3471
        %3495 = vst [vmem:[#allocation2 + $0x58] sm:$0xff] %v3463
        %3496 = vst [vmem:[#allocation2 + $0x60] sm:$0xff] %v3480
        %3497 = vst [vmem:[#allocation2 + $0x68] sm:$0xff] %v3472
        %3498 = vst [vmem:[#allocation2 + $0x70] sm:$0xff] %v3464
        %3499 = vst [vmem:[#allocation2 + $0x78] sm:$0xff] %v3481
        %3500 = vst [vmem:[#allocation2 + $0x80] sm:$0xff] %v3473
        %3501 = vst [vmem:[#allocation2 + $0x88] sm:$0xff] %v3465
        %3502 = vst [vmem:[#allocation2 + $0x90] sm:$0xff] %v3482
        %3503 = vst [vmem:[#allocation2 + $0x98] sm:$0xff] %v3474
        %3504 = vst [vmem:[#allocation2 + $0xa0] sm:$0xff] %v3466
        %3505 = vst [vmem:[#allocation2 + $0xa8] sm:$0xff] %v3483
        %3506 = vst [vmem:[#allocation2 + $0xb0] sm:$0xff] %v3475
        %3507 = vst [vmem:[#allocation2 + $0xb8] sm:$0xff] %v3467
        %3508 = vrot.lane.b32.xlu0 %v3388, 18
        %v3509 = vpop.permute.xlu0 %3508
        %3510 = vrot.lane.b32.xlu0 %v3391, 18
        %v3511 = vpop.permute.xlu0 %3510
        %3512 = vrot.lane.b32.xlu0 %v3394, 18
        %v3513 = vpop.permute.xlu0 %3512
        %3514 = vrot.lane.b32.xlu0 %v3397, 18
        %v3515 = vpop.permute.xlu0 %3514
        %3516 = vrot.lane.b32.xlu0 %v3400, 18
        %v3517 = vpop.permute.xlu0 %3516
        %3518 = vrot.lane.b32.xlu0 %v3403, 18
        %v3519 = vpop.permute.xlu0 %3518
        %3520 = vrot.lane.b32.xlu0 %v3406, 18
        %v3521 = vpop.permute.xlu0 %3520
        %3522 = vrot.lane.b32.xlu0 %v3409, 18
        %v3523 = vpop.permute.xlu0 %3522
        %3524 = vrot.lane.b32.xlu0 %v3389, 18
        %v3525 = vpop.permute.xlu0 %3524
        %3526 = vrot.lane.b32.xlu0 %v3392, 18
        %v3527 = vpop.permute.xlu0 %3526
        %3528 = vrot.lane.b32.xlu0 %v3395, 18
        %v3529 = vpop.permute.xlu0 %3528
        %3530 = vrot.lane.b32.xlu0 %v3398, 18
        %v3531 = vpop.permute.xlu0 %3530
        %3532 = vrot.lane.b32.xlu0 %v3401, 18
        %v3533 = vpop.permute.xlu0 %3532
        %3534 = vrot.lane.b32.xlu0 %v3404, 18
        %v3535 = vpop.permute.xlu0 %3534
        %3536 = vrot.lane.b32.xlu0 %v3407, 18
        %v3537 = vpop.permute.xlu0 %3536
        %3538 = vrot.lane.b32.xlu0 %v3410, 18
        %v3539 = vpop.permute.xlu0 %3538
        %3540 = vrot.lane.b32.xlu0 %v3390, 18
        %v3541 = vpop.permute.xlu0 %3540
        %3542 = vrot.lane.b32.xlu0 %v3393, 18
        %v3543 = vpop.permute.xlu0 %3542
        %3544 = vrot.lane.b32.xlu0 %v3396, 18
        %v3545 = vpop.permute.xlu0 %3544
        %3546 = vrot.lane.b32.xlu0 %v3399, 18
        %v3547 = vpop.permute.xlu0 %3546
        %3548 = vrot.lane.b32.xlu0 %v3402, 18
        %v3549 = vpop.permute.xlu0 %3548
        %3550 = vrot.lane.b32.xlu0 %v3405, 18
        %v3551 = vpop.permute.xlu0 %3550
        %3552 = vrot.lane.b32.xlu0 %v3408, 18
        %v3553 = vpop.permute.xlu0 %3552
        %3554 = vrot.lane.b32.xlu0 %v3411, 18
        %v3555 = vpop.permute.xlu0 %3554
        %v3556 = vsel %vm553, %v3525, %v3541
        %v3557 = vsel %vm553, %v3527, %v3543
        %v3558 = vsel %vm553, %v3529, %v3545
        %v3559 = vsel %vm553, %v3531, %v3547
        %v3560 = vsel %vm553, %v3533, %v3549
        %v3561 = vsel %vm553, %v3535, %v3551
        %v3562 = vsel %vm553, %v3537, %v3553
        %v3563 = vsel %vm553, %v3539, %v3555
        %v3564 = vsel %vm553, %v3509, %v3525
        %v3565 = vsel %vm553, %v3511, %v3527
        %v3566 = vsel %vm553, %v3513, %v3529
        %v3567 = vsel %vm553, %v3515, %v3531
        %v3568 = vsel %vm553, %v3517, %v3533
        %v3569 = vsel %vm553, %v3519, %v3535
        %v3570 = vsel %vm553, %v3521, %v3537
        %v3571 = vsel %vm553, %v3523, %v3539
        %v3572 = vsel %vm553, %v3541, %v3509
        %v3573 = vsel %vm553, %v3543, %v3511
        %v3574 = vsel %vm553, %v3545, %v3513
        %v3575 = vsel %vm553, %v3547, %v3515
        %v3576 = vsel %vm553, %v3549, %v3517
        %v3577 = vsel %vm553, %v3551, %v3519
        %v3578 = vsel %vm553, %v3553, %v3521
        %v3579 = vsel %vm553, %v3555, %v3523
        %3580 = vst [vmem:[#allocation2 + $0xc0] sm:$0xff] %v3572
        %3581 = vst [vmem:[#allocation2 + $0xc8] sm:$0xff] %v3564
        %3582 = vst [vmem:[#allocation2 + $0xd0] sm:$0xff] %v3556
        %3583 = vst [vmem:[#allocation2 + $0xd8] sm:$0xff] %v3573
        %3584 = vst [vmem:[#allocation2 + $0xe0] sm:$0xff] %v3565
        %3585 = vst [vmem:[#allocation2 + $0xe8] sm:$0xff] %v3557
        %3586 = vst [vmem:[#allocation2 + $0xf0] sm:$0xff] %v3574
        %3587 = vst [vmem:[#allocation2 + $0xf8] sm:$0xff] %v3566
        %3588 = vst [vmem:[#allocation2 + $0x100] sm:$0xff] %v3558
        %3589 = vst [vmem:[#allocation2 + $0x108] sm:$0xff] %v3575
        %3590 = vst [vmem:[#allocation2 + $0x110] sm:$0xff] %v3567
        %3591 = vst [vmem:[#allocation2 + $0x118] sm:$0xff] %v3559
        %3592 = vst [vmem:[#allocation2 + $0x120] sm:$0xff] %v3576
        %3593 = vst [vmem:[#allocation2 + $0x128] sm:$0xff] %v3568
        %3594 = vst [vmem:[#allocation2 + $0x130] sm:$0xff] %v3560
        %3595 = vst [vmem:[#allocation2 + $0x138] sm:$0xff] %v3577
        %3596 = vst [vmem:[#allocation2 + $0x140] sm:$0xff] %v3569
        %3597 = vst [vmem:[#allocation2 + $0x148] sm:$0xff] %v3561
        %3598 = vst [vmem:[#allocation2 + $0x150] sm:$0xff] %v3578
        %3599 = vst [vmem:[#allocation2 + $0x158] sm:$0xff] %v3570
        %3600 = vst [vmem:[#allocation2 + $0x160] sm:$0xff] %v3562
        %3601 = vst [vmem:[#allocation2 + $0x168] sm:$0xff] %v3579
        %3602 = vst [vmem:[#allocation2 + $0x170] sm:$0xff] %v3571
        %3603 = vst [vmem:[#allocation2 + $0x178] sm:$0xff] %v3563
        %3604 = vrot.lane.b32.xlu0 %v3388, 17
        %v3605 = vpop.permute.xlu0 %3604
        %3606 = vrot.lane.b32.xlu0 %v3391, 17
        %v3607 = vpop.permute.xlu0 %3606
        %3608 = vrot.lane.b32.xlu0 %v3394, 17
        %v3609 = vpop.permute.xlu0 %3608
        %3610 = vrot.lane.b32.xlu0 %v3397, 17
        %v3611 = vpop.permute.xlu0 %3610
        %3612 = vrot.lane.b32.xlu0 %v3400, 17
        %v3613 = vpop.permute.xlu0 %3612
        %3614 = vrot.lane.b32.xlu0 %v3403, 17
        %v3615 = vpop.permute.xlu0 %3614
        %3616 = vrot.lane.b32.xlu0 %v3406, 17
        %v3617 = vpop.permute.xlu0 %3616
        %3618 = vrot.lane.b32.xlu0 %v3409, 17
        %v3619 = vpop.permute.xlu0 %3618
        %3620 = vrot.lane.b32.xlu0 %v3389, 17
        %v3621 = vpop.permute.xlu0 %3620
        %3622 = vrot.lane.b32.xlu0 %v3392, 17
        %v3623 = vpop.permute.xlu0 %3622
        %3624 = vrot.lane.b32.xlu0 %v3395, 17
        %v3625 = vpop.permute.xlu0 %3624
        %3626 = vrot.lane.b32.xlu0 %v3398, 17
        %v3627 = vpop.permute.xlu0 %3626
        %3628 = vrot.lane.b32.xlu0 %v3401, 17
        %v3629 = vpop.permute.xlu0 %3628
        %3630 = vrot.lane.b32.xlu0 %v3404, 17
        %v3631 = vpop.permute.xlu0 %3630
        %3632 = vrot.lane.b32.xlu0 %v3407, 17
        %v3633 = vpop.permute.xlu0 %3632
        %3634 = vrot.lane.b32.xlu0 %v3410, 17
        %v3635 = vpop.permute.xlu0 %3634
        %3636 = vrot.lane.b32.xlu0 %v3390, 17
        %v3637 = vpop.permute.xlu0 %3636
        %3638 = vrot.lane.b32.xlu0 %v3393, 17
        %v3639 = vpop.permute.xlu0 %3638
        %3640 = vrot.lane.b32.xlu0 %v3396, 17
        %v3641 = vpop.permute.xlu0 %3640
        %3642 = vrot.lane.b32.xlu0 %v3399, 17
        %v3643 = vpop.permute.xlu0 %3642
        %3644 = vrot.lane.b32.xlu0 %v3402, 17
        %v3645 = vpop.permute.xlu0 %3644
        %3646 = vrot.lane.b32.xlu0 %v3405, 17
        %v3647 = vpop.permute.xlu0 %3646
        %3648 = vrot.lane.b32.xlu0 %v3408, 17
        %v3649 = vpop.permute.xlu0 %3648
        %3650 = vrot.lane.b32.xlu0 %v3411, 17
        %v3651 = vpop.permute.xlu0 %3650
        %v3652 = vsel %vm1091, %v3621, %v3637
        %v3653 = vsel %vm1091, %v3623, %v3639
        %v3654 = vsel %vm1091, %v3625, %v3641
        %v3655 = vsel %vm1091, %v3627, %v3643
        %v3656 = vsel %vm1091, %v3629, %v3645
        %v3657 = vsel %vm1091, %v3631, %v3647
        %v3658 = vsel %vm1091, %v3633, %v3649
        %v3659 = vsel %vm1091, %v3635, %v3651
        %v3660 = vsel %vm1091, %v3605, %v3621
        %v3661 = vsel %vm1091, %v3607, %v3623
        %v3662 = vsel %vm1091, %v3609, %v3625
        %v3663 = vsel %vm1091, %v3611, %v3627
        %v3664 = vsel %vm1091, %v3613, %v3629
        %v3665 = vsel %vm1091, %v3615, %v3631
        %v3666 = vsel %vm1091, %v3617, %v3633
        %v3667 = vsel %vm1091, %v3619, %v3635
        %v3668 = vsel %vm1091, %v3637, %v3605
        %v3669 = vsel %vm1091, %v3639, %v3607
        %v3670 = vsel %vm1091, %v3641, %v3609
        %v3671 = vsel %vm1091, %v3643, %v3611
        %v3672 = vsel %vm1091, %v3645, %v3613
        %v3673 = vsel %vm1091, %v3647, %v3615
        %v3674 = vsel %vm1091, %v3649, %v3617
        %v3675 = vsel %vm1091, %v3651, %v3619
        %3676 = vst [vmem:[#allocation2 + $0x180] sm:$0xff] %v3668
        %3677 = vst [vmem:[#allocation2 + $0x188] sm:$0xff] %v3660
        %3678 = vst [vmem:[#allocation2 + $0x190] sm:$0xff] %v3652
        %3679 = vst [vmem:[#allocation2 + $0x198] sm:$0xff] %v3669
        %3680 = vst [vmem:[#allocation2 + $0x1a0] sm:$0xff] %v3661
        %3681 = vst [vmem:[#allocation2 + $0x1a8] sm:$0xff] %v3653
        %3682 = vst [vmem:[#allocation2 + $0x1b0] sm:$0xff] %v3670
        %3683 = vst [vmem:[#allocation2 + $0x1b8] sm:$0xff] %v3662
        %3684 = vst [vmem:[#allocation2 + $0x1c0] sm:$0xff] %v3654
        %3685 = vst [vmem:[#allocation2 + $0x1c8] sm:$0xff] %v3671
        %3686 = vst [vmem:[#allocation2 + $0x1d0] sm:$0xff] %v3663
        %3687 = vst [vmem:[#allocation2 + $0x1d8] sm:$0xff] %v3655
        %3688 = vst [vmem:[#allocation2 + $0x1e0] sm:$0xff] %v3672
        %3689 = vst [vmem:[#allocation2 + $0x1e8] sm:$0xff] %v3664
        %3690 = vst [vmem:[#allocation2 + $0x1f0] sm:$0xff] %v3656
        %3691 = vst [vmem:[#allocation2 + $0x1f8] sm:$0xff] %v3673
        %3692 = vst [vmem:[#allocation2 + $0x200] sm:$0xff] %v3665
        %3693 = vst [vmem:[#allocation2 + $0x208] sm:$0xff] %v3657
        %3694 = vst [vmem:[#allocation2 + $0x210] sm:$0xff] %v3674
        %3695 = vst [vmem:[#allocation2 + $0x218] sm:$0xff] %v3666
        %3696 = vst [vmem:[#allocation2 + $0x220] sm:$0xff] %v3658
        %3697 = vst [vmem:[#allocation2 + $0x228] sm:$0xff] %v3675
        %3698 = vst [vmem:[#allocation2 + $0x230] sm:$0xff] %v3667
        %3699 = vst [vmem:[#allocation2 + $0x238] sm:$0xff] %v3659
        %3700 = vrot.lane.b32.xlu0 %v3388, 1
        %v3701 = vpop.permute.xlu0 %3700
        %3702 = vrot.lane.b32.xlu0 %v3391, 1
        %v3703 = vpop.permute.xlu0 %3702
        %3704 = vrot.lane.b32.xlu0 %v3394, 1
        %v3705 = vpop.permute.xlu0 %3704
        %3706 = vrot.lane.b32.xlu0 %v3397, 1
        %v3707 = vpop.permute.xlu0 %3706
        %3708 = vrot.lane.b32.xlu0 %v3400, 1
        %v3709 = vpop.permute.xlu0 %3708
        %3710 = vrot.lane.b32.xlu0 %v3403, 1
        %v3711 = vpop.permute.xlu0 %3710
        %3712 = vrot.lane.b32.xlu0 %v3406, 1
        %v3713 = vpop.permute.xlu0 %3712
        %3714 = vrot.lane.b32.xlu0 %v3409, 1
        %v3715 = vpop.permute.xlu0 %3714
        %3716 = vrot.lane.b32.xlu0 %v3389, 1
        %v3717 = vpop.permute.xlu0 %3716
        %3718 = vrot.lane.b32.xlu0 %v3392, 1
        %v3719 = vpop.permute.xlu0 %3718
        %3720 = vrot.lane.b32.xlu0 %v3395, 1
        %v3721 = vpop.permute.xlu0 %3720
        %3722 = vrot.lane.b32.xlu0 %v3398, 1
        %v3723 = vpop.permute.xlu0 %3722
        %3724 = vrot.lane.b32.xlu0 %v3401, 1
        %v3725 = vpop.permute.xlu0 %3724
        %3726 = vrot.lane.b32.xlu0 %v3404, 1
        %v3727 = vpop.permute.xlu0 %3726
        %3728 = vrot.lane.b32.xlu0 %v3407, 1
        %v3729 = vpop.permute.xlu0 %3728
        %3730 = vrot.lane.b32.xlu0 %v3410, 1
        %v3731 = vpop.permute.xlu0 %3730
        %3732 = vrot.lane.b32.xlu0 %v3390, 1
        %v3733 = vpop.permute.xlu0 %3732
        %3734 = vrot.lane.b32.xlu0 %v3393, 1
        %v3735 = vpop.permute.xlu0 %3734
        %3736 = vrot.lane.b32.xlu0 %v3396, 1
        %v3737 = vpop.permute.xlu0 %3736
        %3738 = vrot.lane.b32.xlu0 %v3399, 1
        %v3739 = vpop.permute.xlu0 %3738
        %3740 = vrot.lane.b32.xlu0 %v3402, 1
        %v3741 = vpop.permute.xlu0 %3740
        %3742 = vrot.lane.b32.xlu0 %v3405, 1
        %v3743 = vpop.permute.xlu0 %3742
        %3744 = vrot.lane.b32.xlu0 %v3408, 1
        %v3745 = vpop.permute.xlu0 %3744
        %3746 = vrot.lane.b32.xlu0 %v3411, 1
        %v3747 = vpop.permute.xlu0 %3746
        %v3748 = vsel %vm1400, %v3717, %v3733
        %v3749 = vsel %vm1400, %v3719, %v3735
        %v3750 = vsel %vm1400, %v3721, %v3737
        %v3751 = vsel %vm1400, %v3723, %v3739
        %v3752 = vsel %vm1400, %v3725, %v3741
        %v3753 = vsel %vm1400, %v3727, %v3743
        %v3754 = vsel %vm1400, %v3729, %v3745
        %v3755 = vsel %vm1400, %v3731, %v3747
        %v3756 = vsel %vm1400, %v3701, %v3717
        %v3757 = vsel %vm1400, %v3703, %v3719
        %v3758 = vsel %vm1400, %v3705, %v3721
        %v3759 = vsel %vm1400, %v3707, %v3723
        %v3760 = vsel %vm1400, %v3709, %v3725
        %v3761 = vsel %vm1400, %v3711, %v3727
        %v3762 = vsel %vm1400, %v3713, %v3729
        %v3763 = vsel %vm1400, %v3715, %v3731
        %v3764 = vsel %vm1400, %v3733, %v3701
        %v3765 = vsel %vm1400, %v3735, %v3703
        %v3766 = vsel %vm1400, %v3737, %v3705
        %v3767 = vsel %vm1400, %v3739, %v3707
        %v3768 = vsel %vm1400, %v3741, %v3709
        %v3769 = vsel %vm1400, %v3743, %v3711
        %v3770 = vsel %vm1400, %v3745, %v3713
        %v3771 = vsel %vm1400, %v3747, %v3715
        %3772 = vst [vmem:[#allocation2 + $0x240] sm:$0xff] %v3764
        %3773 = vst [vmem:[#allocation2 + $0x248] sm:$0xff] %v3756
        %3774 = vst [vmem:[#allocation2 + $0x250] sm:$0xff] %v3748
        %3775 = vst [vmem:[#allocation2 + $0x258] sm:$0xff] %v3765
        %3776 = vst [vmem:[#allocation2 + $0x260] sm:$0xff] %v3757
        %3777 = vst [vmem:[#allocation2 + $0x268] sm:$0xff] %v3749
        %3778 = vst [vmem:[#allocation2 + $0x270] sm:$0xff] %v3766
        %3779 = vst [vmem:[#allocation2 + $0x278] sm:$0xff] %v3758
        %3780 = vst [vmem:[#allocation2 + $0x280] sm:$0xff] %v3750
        %3781 = vst [vmem:[#allocation2 + $0x288] sm:$0xff] %v3767
        %3782 = vst [vmem:[#allocation2 + $0x290] sm:$0xff] %v3759
        %3783 = vst [vmem:[#allocation2 + $0x298] sm:$0xff] %v3751
        %3784 = vst [vmem:[#allocation2 + $0x2a0] sm:$0xff] %v3768
        %3785 = vst [vmem:[#allocation2 + $0x2a8] sm:$0xff] %v3760
        %3786 = vst [vmem:[#allocation2 + $0x2b0] sm:$0xff] %v3752
        %3787 = vst [vmem:[#allocation2 + $0x2b8] sm:$0xff] %v3769
        %3788 = vst [vmem:[#allocation2 + $0x2c0] sm:$0xff] %v3761
        %3789 = vst [vmem:[#allocation2 + $0x2c8] sm:$0xff] %v3753
        %3790 = vst [vmem:[#allocation2 + $0x2d0] sm:$0xff] %v3770
        %3791 = vst [vmem:[#allocation2 + $0x2d8] sm:$0xff] %v3762
        %3792 = vst [vmem:[#allocation2 + $0x2e0] sm:$0xff] %v3754
        %3793 = vst [vmem:[#allocation2 + $0x2e8] sm:$0xff] %v3771
        %3794 = vst [vmem:[#allocation2 + $0x2f0] sm:$0xff] %v3763
        %3795 = vst [vmem:[#allocation2 + $0x2f8] sm:$0xff] %v3755
        %3796 = vst [vmem:[#allocation2 + $0x300] sm:$0xff] %v3388
        %3797 = vst [vmem:[#allocation2 + $0x308] sm:$0xff] %v3389
        %3798 = vst [vmem:[#allocation2 + $0x310] sm:$0xff] %v3390
        %3799 = vst [vmem:[#allocation2 + $0x318] sm:$0xff] %v3391
        %3800 = vst [vmem:[#allocation2 + $0x320] sm:$0xff] %v3392
        %3801 = vst [vmem:[#allocation2 + $0x328] sm:$0xff] %v3393
        %3802 = vst [vmem:[#allocation2 + $0x330] sm:$0xff] %v3394
        %3803 = vst [vmem:[#allocation2 + $0x338] sm:$0xff] %v3395
        %3804 = vst [vmem:[#allocation2 + $0x340] sm:$0xff] %v3396
        %3805 = vst [vmem:[#allocation2 + $0x348] sm:$0xff] %v3397
        %3806 = vst [vmem:[#allocation2 + $0x350] sm:$0xff] %v3398
        %3807 = vst [vmem:[#allocation2 + $0x358] sm:$0xff] %v3399
        %3808 = vst [vmem:[#allocation2 + $0x360] sm:$0xff] %v3400
        %3809 = vst [vmem:[#allocation2 + $0x368] sm:$0xff] %v3401
        %3810 = vst [vmem:[#allocation2 + $0x370] sm:$0xff] %v3402
        %3811 = vst [vmem:[#allocation2 + $0x378] sm:$0xff] %v3403
        %3812 = vst [vmem:[#allocation2 + $0x380] sm:$0xff] %v3404
        %3813 = vst [vmem:[#allocation2 + $0x388] sm:$0xff] %v3405
        %3814 = vst [vmem:[#allocation2 + $0x390] sm:$0xff] %v3406
        %3815 = vst [vmem:[#allocation2 + $0x398] sm:$0xff] %v3407
        %3816 = vst [vmem:[#allocation2 + $0x3a0] sm:$0xff] %v3408
        %3817 = vst [vmem:[#allocation2 + $0x3a8] sm:$0xff] %v3409
        %3818 = vst [vmem:[#allocation2 + $0x3b0] sm:$0xff] %v3410
        %3819 = vst [vmem:[#allocation2 + $0x3b8] sm:$0xff] %v3411
        %3820 = vrot.lane.b32.xlu0 %v3388, 127
        %v3821 = vpop.permute.xlu0 %3820
        %3822 = vrot.lane.b32.xlu0 %v3391, 127
        %v3823 = vpop.permute.xlu0 %3822
        %3824 = vrot.lane.b32.xlu0 %v3394, 127
        %v3825 = vpop.permute.xlu0 %3824
        %3826 = vrot.lane.b32.xlu0 %v3397, 127
        %v3827 = vpop.permute.xlu0 %3826
        %3828 = vrot.lane.b32.xlu0 %v3400, 127
        %v3829 = vpop.permute.xlu0 %3828
        %3830 = vrot.lane.b32.xlu0 %v3403, 127
        %v3831 = vpop.permute.xlu0 %3830
        %3832 = vrot.lane.b32.xlu0 %v3406, 127
        %v3833 = vpop.permute.xlu0 %3832
        %3834 = vrot.lane.b32.xlu0 %v3409, 127
        %v3835 = vpop.permute.xlu0 %3834
        %3836 = vrot.lane.b32.xlu0 %v3389, 127
        %v3837 = vpop.permute.xlu0 %3836
        %3838 = vrot.lane.b32.xlu0 %v3392, 127
        %v3839 = vpop.permute.xlu0 %3838
        %3840 = vrot.lane.b32.xlu0 %v3395, 127
        %v3841 = vpop.permute.xlu0 %3840
        %3842 = vrot.lane.b32.xlu0 %v3398, 127
        %v3843 = vpop.permute.xlu0 %3842
        %3844 = vrot.lane.b32.xlu0 %v3401, 127
        %v3845 = vpop.permute.xlu0 %3844
        %3846 = vrot.lane.b32.xlu0 %v3404, 127
        %v3847 = vpop.permute.xlu0 %3846
        %3848 = vrot.lane.b32.xlu0 %v3407, 127
        %v3849 = vpop.permute.xlu0 %3848
        %3850 = vrot.lane.b32.xlu0 %v3410, 127
        %v3851 = vpop.permute.xlu0 %3850
        %3852 = vrot.lane.b32.xlu0 %v3390, 127
        %v3853 = vpop.permute.xlu0 %3852
        %3854 = vrot.lane.b32.xlu0 %v3393, 127
        %v3855 = vpop.permute.xlu0 %3854
        %3856 = vrot.lane.b32.xlu0 %v3396, 127
        %v3857 = vpop.permute.xlu0 %3856
        %3858 = vrot.lane.b32.xlu0 %v3399, 127
        %v3859 = vpop.permute.xlu0 %3858
        %3860 = vrot.lane.b32.xlu0 %v3402, 127
        %v3861 = vpop.permute.xlu0 %3860
        %3862 = vrot.lane.b32.xlu0 %v3405, 127
        %v3863 = vpop.permute.xlu0 %3862
        %3864 = vrot.lane.b32.xlu0 %v3408, 127
        %v3865 = vpop.permute.xlu0 %3864
        %3866 = vrot.lane.b32.xlu0 %v3411, 127
        %v3867 = vpop.permute.xlu0 %3866
        %v3868 = vsel %vm2005, %v3837, %v3853
        %v3869 = vsel %vm2005, %v3839, %v3855
        %v3870 = vsel %vm2005, %v3841, %v3857
        %v3871 = vsel %vm2005, %v3843, %v3859
        %v3872 = vsel %vm2005, %v3845, %v3861
        %v3873 = vsel %vm2005, %v3847, %v3863
        %v3874 = vsel %vm2005, %v3849, %v3865
        %v3875 = vsel %vm2005, %v3851, %v3867
        %v3876 = vsel %vm2005, %v3821, %v3837
        %v3877 = vsel %vm2005, %v3823, %v3839
        %v3878 = vsel %vm2005, %v3825, %v3841
        %v3879 = vsel %vm2005, %v3827, %v3843
        %v3880 = vsel %vm2005, %v3829, %v3845
        %v3881 = vsel %vm2005, %v3831, %v3847
        %v3882 = vsel %vm2005, %v3833, %v3849
        %v3883 = vsel %vm2005, %v3835, %v3851
        %v3884 = vsel %vm2005, %v3853, %v3821
        %v3885 = vsel %vm2005, %v3855, %v3823
        %v3886 = vsel %vm2005, %v3857, %v3825
        %v3887 = vsel %vm2005, %v3859, %v3827
        %v3888 = vsel %vm2005, %v3861, %v3829
        %v3889 = vsel %vm2005, %v3863, %v3831
        %v3890 = vsel %vm2005, %v3865, %v3833
        %v3891 = vsel %vm2005, %v3867, %v3835
        %3892 = vst [vmem:[#allocation2 + $0x3c0] sm:$0xff] %v3876
        %3893 = vst [vmem:[#allocation2 + $0x3c8] sm:$0xff] %v3868
        %3894 = vst [vmem:[#allocation2 + $0x3d0] sm:$0xff] %v3884
        %3895 = vst [vmem:[#allocation2 + $0x3d8] sm:$0xff] %v3877
        %3896 = vst [vmem:[#allocation2 + $0x3e0] sm:$0xff] %v3869
        %3897 = vst [vmem:[#allocation2 + $0x3e8] sm:$0xff] %v3885
        %3898 = vst [vmem:[#allocation2 + $0x3f0] sm:$0xff] %v3878
        %3899 = vst [vmem:[#allocation2 + $0x3f8] sm:$0xff] %v3870
        %3900 = vst [vmem:[#allocation2 + $0x400] sm:$0xff] %v3886
        %3901 = vst [vmem:[#allocation2 + $0x408] sm:$0xff] %v3879
        %3902 = vst [vmem:[#allocation2 + $0x410] sm:$0xff] %v3871
        %3903 = vst [vmem:[#allocation2 + $0x418] sm:$0xff] %v3887
        %3904 = vst [vmem:[#allocation2 + $0x420] sm:$0xff] %v3880
        %3905 = vst [vmem:[#allocation2 + $0x428] sm:$0xff] %v3872
        %3906 = vst [vmem:[#allocation2 + $0x430] sm:$0xff] %v3888
        %3907 = vst [vmem:[#allocation2 + $0x438] sm:$0xff] %v3881
        %3908 = vst [vmem:[#allocation2 + $0x440] sm:$0xff] %v3873
        %3909 = vst [vmem:[#allocation2 + $0x448] sm:$0xff] %v3889
        %3910 = vst [vmem:[#allocation2 + $0x450] sm:$0xff] %v3882
        %3911 = vst [vmem:[#allocation2 + $0x458] sm:$0xff] %v3874
        %3912 = vst [vmem:[#allocation2 + $0x460] sm:$0xff] %v3890
        %3913 = vst [vmem:[#allocation2 + $0x468] sm:$0xff] %v3883
        %3914 = vst [vmem:[#allocation2 + $0x470] sm:$0xff] %v3875
        %3915 = vst [vmem:[#allocation2 + $0x478] sm:$0xff] %v3891
        %3916 = vrot.lane.b32.xlu0 %v3388, 111
        %v3917 = vpop.permute.xlu0 %3916
        %3918 = vrot.lane.b32.xlu0 %v3391, 111
        %v3919 = vpop.permute.xlu0 %3918
        %3920 = vrot.lane.b32.xlu0 %v3394, 111
        %v3921 = vpop.permute.xlu0 %3920
        %3922 = vrot.lane.b32.xlu0 %v3397, 111
        %v3923 = vpop.permute.xlu0 %3922
        %3924 = vrot.lane.b32.xlu0 %v3400, 111
        %v3925 = vpop.permute.xlu0 %3924
        %3926 = vrot.lane.b32.xlu0 %v3403, 111
        %v3927 = vpop.permute.xlu0 %3926
        %3928 = vrot.lane.b32.xlu0 %v3406, 111
        %v3929 = vpop.permute.xlu0 %3928
        %3930 = vrot.lane.b32.xlu0 %v3409, 111
        %v3931 = vpop.permute.xlu0 %3930
        %3932 = vrot.lane.b32.xlu0 %v3389, 111
        %v3933 = vpop.permute.xlu0 %3932
        %3934 = vrot.lane.b32.xlu0 %v3392, 111
        %v3935 = vpop.permute.xlu0 %3934
        %3936 = vrot.lane.b32.xlu0 %v3395, 111
        %v3937 = vpop.permute.xlu0 %3936
        %3938 = vrot.lane.b32.xlu0 %v3398, 111
        %v3939 = vpop.permute.xlu0 %3938
        %3940 = vrot.lane.b32.xlu0 %v3401, 111
        %v3941 = vpop.permute.xlu0 %3940
        %3942 = vrot.lane.b32.xlu0 %v3404, 111
        %v3943 = vpop.permute.xlu0 %3942
        %3944 = vrot.lane.b32.xlu0 %v3407, 111
        %v3945 = vpop.permute.xlu0 %3944
        %3946 = vrot.lane.b32.xlu0 %v3410, 111
        %v3947 = vpop.permute.xlu0 %3946
        %3948 = vrot.lane.b32.xlu0 %v3390, 111
        %v3949 = vpop.permute.xlu0 %3948
        %3950 = vrot.lane.b32.xlu0 %v3393, 111
        %v3951 = vpop.permute.xlu0 %3950
        %3952 = vrot.lane.b32.xlu0 %v3396, 111
        %v3953 = vpop.permute.xlu0 %3952
        %3954 = vrot.lane.b32.xlu0 %v3399, 111
        %v3955 = vpop.permute.xlu0 %3954
        %3956 = vrot.lane.b32.xlu0 %v3402, 111
        %v3957 = vpop.permute.xlu0 %3956
        %3958 = vrot.lane.b32.xlu0 %v3405, 111
        %v3959 = vpop.permute.xlu0 %3958
        %3960 = vrot.lane.b32.xlu0 %v3408, 111
        %v3961 = vpop.permute.xlu0 %3960
        %3962 = vrot.lane.b32.xlu0 %v3411, 111
        %v3963 = vpop.permute.xlu0 %3962
        %v3964 = vsel %vm2314, %v3933, %v3949
        %v3965 = vsel %vm2314, %v3935, %v3951
        %v3966 = vsel %vm2314, %v3937, %v3953
        %v3967 = vsel %vm2314, %v3939, %v3955
        %v3968 = vsel %vm2314, %v3941, %v3957
        %v3969 = vsel %vm2314, %v3943, %v3959
        %v3970 = vsel %vm2314, %v3945, %v3961
        %v3971 = vsel %vm2314, %v3947, %v3963
        %v3972 = vsel %vm2314, %v3917, %v3933
        %v3973 = vsel %vm2314, %v3919, %v3935
        %v3974 = vsel %vm2314, %v3921, %v3937
        %v3975 = vsel %vm2314, %v3923, %v3939
        %v3976 = vsel %vm2314, %v3925, %v3941
        %v3977 = vsel %vm2314, %v3927, %v3943
        %v3978 = vsel %vm2314, %v3929, %v3945
        %v3979 = vsel %vm2314, %v3931, %v3947
        %v3980 = vsel %vm2314, %v3949, %v3917
        %v3981 = vsel %vm2314, %v3951, %v3919
        %v3982 = vsel %vm2314, %v3953, %v3921
        %v3983 = vsel %vm2314, %v3955, %v3923
        %v3984 = vsel %vm2314, %v3957, %v3925
        %v3985 = vsel %vm2314, %v3959, %v3927
        %v3986 = vsel %vm2314, %v3961, %v3929
        %v3987 = vsel %vm2314, %v3963, %v3931
        %3988 = vst [vmem:[#allocation2 + $0x480] sm:$0xff] %v3972
        %3989 = vst [vmem:[#allocation2 + $0x488] sm:$0xff] %v3964
        %3990 = vst [vmem:[#allocation2 + $0x490] sm:$0xff] %v3980
        %3991 = vst [vmem:[#allocation2 + $0x498] sm:$0xff] %v3973
        %3992 = vst [vmem:[#allocation2 + $0x4a0] sm:$0xff] %v3965
        %3993 = vst [vmem:[#allocation2 + $0x4a8] sm:$0xff] %v3981
        %3994 = vst [vmem:[#allocation2 + $0x4b0] sm:$0xff] %v3974
        %3995 = vst [vmem:[#allocation2 + $0x4b8] sm:$0xff] %v3966
        %3996 = vst [vmem:[#allocation2 + $0x4c0] sm:$0xff] %v3982
        %3997 = vst [vmem:[#allocation2 + $0x4c8] sm:$0xff] %v3975
        %3998 = vst [vmem:[#allocation2 + $0x4d0] sm:$0xff] %v3967
        %3999 = vst [vmem:[#allocation2 + $0x4d8] sm:$0xff] %v3983
        %4000 = vst [vmem:[#allocation2 + $0x4e0] sm:$0xff] %v3976
        %4001 = vst [vmem:[#allocation2 + $0x4e8] sm:$0xff] %v3968
        %4002 = vst [vmem:[#allocation2 + $0x4f0] sm:$0xff] %v3984
        %4003 = vst [vmem:[#allocation2 + $0x4f8] sm:$0xff] %v3977
        %4004 = vst [vmem:[#allocation2 + $0x500] sm:$0xff] %v3969
        %4005 = vst [vmem:[#allocation2 + $0x508] sm:$0xff] %v3985
        %4006 = vst [vmem:[#allocation2 + $0x510] sm:$0xff] %v3978
        %4007 = vst [vmem:[#allocation2 + $0x518] sm:$0xff] %v3970
        %4008 = vst [vmem:[#allocation2 + $0x520] sm:$0xff] %v3986
        %4009 = vst [vmem:[#allocation2 + $0x528] sm:$0xff] %v3979
        %4010 = vst [vmem:[#allocation2 + $0x530] sm:$0xff] %v3971
        %4011 = vst [vmem:[#allocation2 + $0x538] sm:$0xff] %v3987
        %4012 = vrot.lane.b32.xlu0 %v3388, 110
        %v4013 = vpop.permute.xlu0 %4012
        %4014 = vrot.lane.b32.xlu0 %v3391, 110
        %v4015 = vpop.permute.xlu0 %4014
        %4016 = vrot.lane.b32.xlu0 %v3394, 110
        %v4017 = vpop.permute.xlu0 %4016
        %4018 = vrot.lane.b32.xlu0 %v3397, 110
        %v4019 = vpop.permute.xlu0 %4018
        %4020 = vrot.lane.b32.xlu0 %v3400, 110
        %v4021 = vpop.permute.xlu0 %4020
        %4022 = vrot.lane.b32.xlu0 %v3403, 110
        %v4023 = vpop.permute.xlu0 %4022
        %4024 = vrot.lane.b32.xlu0 %v3406, 110
        %v4025 = vpop.permute.xlu0 %4024
        %4026 = vrot.lane.b32.xlu0 %v3409, 110
        %v4027 = vpop.permute.xlu0 %4026
        %4028 = vrot.lane.b32.xlu0 %v3389, 110
        %v4029 = vpop.permute.xlu0 %4028
        %4030 = vrot.lane.b32.xlu0 %v3392, 110
        %v4031 = vpop.permute.xlu0 %4030
        %4032 = vrot.lane.b32.xlu0 %v3395, 110
        %v4033 = vpop.permute.xlu0 %4032
        %4034 = vrot.lane.b32.xlu0 %v3398, 110
        %v4035 = vpop.permute.xlu0 %4034
        %4036 = vrot.lane.b32.xlu0 %v3401, 110
        %v4037 = vpop.permute.xlu0 %4036
        %4038 = vrot.lane.b32.xlu0 %v3404, 110
        %v4039 = vpop.permute.xlu0 %4038
        %4040 = vrot.lane.b32.xlu0 %v3407, 110
        %v4041 = vpop.permute.xlu0 %4040
        %4042 = vrot.lane.b32.xlu0 %v3410, 110
        %v4043 = vpop.permute.xlu0 %4042
        %4044 = vrot.lane.b32.xlu0 %v3390, 110
        %v4045 = vpop.permute.xlu0 %4044
        %4046 = vrot.lane.b32.xlu0 %v3393, 110
        %v4047 = vpop.permute.xlu0 %4046
        %4048 = vrot.lane.b32.xlu0 %v3396, 110
        %v4049 = vpop.permute.xlu0 %4048
        %4050 = vrot.lane.b32.xlu0 %v3399, 110
        %v4051 = vpop.permute.xlu0 %4050
        %4052 = vrot.lane.b32.xlu0 %v3402, 110
        %v4053 = vpop.permute.xlu0 %4052
        %4054 = vrot.lane.b32.xlu0 %v3405, 110
        %v4055 = vpop.permute.xlu0 %4054
        %4056 = vrot.lane.b32.xlu0 %v3408, 110
        %v4057 = vpop.permute.xlu0 %4056
        %4058 = vrot.lane.b32.xlu0 %v3411, 110
        %v4059 = vpop.permute.xlu0 %4058
        %v4060 = vsel %vm2623, %v4029, %v4045
        %v4061 = vsel %vm2623, %v4031, %v4047
        %v4062 = vsel %vm2623, %v4033, %v4049
        %v4063 = vsel %vm2623, %v4035, %v4051
        %v4064 = vsel %vm2623, %v4037, %v4053
        %v4065 = vsel %vm2623, %v4039, %v4055
        %v4066 = vsel %vm2623, %v4041, %v4057
        %v4067 = vsel %vm2623, %v4043, %v4059
        %v4068 = vsel %vm2623, %v4013, %v4029
        %v4069 = vsel %vm2623, %v4015, %v4031
        %v4070 = vsel %vm2623, %v4017, %v4033
        %v4071 = vsel %vm2623, %v4019, %v4035
        %v4072 = vsel %vm2623, %v4021, %v4037
        %v4073 = vsel %vm2623, %v4023, %v4039
        %v4074 = vsel %vm2623, %v4025, %v4041
        %v4075 = vsel %vm2623, %v4027, %v4043
        %v4076 = vsel %vm2623, %v4045, %v4013
        %v4077 = vsel %vm2623, %v4047, %v4015
        %v4078 = vsel %vm2623, %v4049, %v4017
        %v4079 = vsel %vm2623, %v4051, %v4019
        %v4080 = vsel %vm2623, %v4053, %v4021
        %v4081 = vsel %vm2623, %v4055, %v4023
        %v4082 = vsel %vm2623, %v4057, %v4025
        %v4083 = vsel %vm2623, %v4059, %v4027
        %4084 = vst [vmem:[#allocation2 + $0x540] sm:$0xff] %v4068
        %4085 = vst [vmem:[#allocation2 + $0x548] sm:$0xff] %v4060
        %4086 = vst [vmem:[#allocation2 + $0x550] sm:$0xff] %v4076
        %4087 = vst [vmem:[#allocation2 + $0x558] sm:$0xff] %v4069
        %4088 = vst [vmem:[#allocation2 + $0x560] sm:$0xff] %v4061
        %4089 = vst [vmem:[#allocation2 + $0x568] sm:$0xff] %v4077
        %4090 = vst [vmem:[#allocation2 + $0x570] sm:$0xff] %v4070
        %4091 = vst [vmem:[#allocation2 + $0x578] sm:$0xff] %v4062
        %4092 = vst [vmem:[#allocation2 + $0x580] sm:$0xff] %v4078
        %4093 = vst [vmem:[#allocation2 + $0x588] sm:$0xff] %v4071
        %4094 = vst [vmem:[#allocation2 + $0x590] sm:$0xff] %v4063
        %4095 = vst [vmem:[#allocation2 + $0x598] sm:$0xff] %v4079
        %4096 = vst [vmem:[#allocation2 + $0x5a0] sm:$0xff] %v4072
        %4097 = vst [vmem:[#allocation2 + $0x5a8] sm:$0xff] %v4064
        %4098 = vst [vmem:[#allocation2 + $0x5b0] sm:$0xff] %v4080
        %4099 = vst [vmem:[#allocation2 + $0x5b8] sm:$0xff] %v4073
        %4100 = vst [vmem:[#allocation2 + $0x5c0] sm:$0xff] %v4065
        %4101 = vst [vmem:[#allocation2 + $0x5c8] sm:$0xff] %v4081
        %4102 = vst [vmem:[#allocation2 + $0x5d0] sm:$0xff] %v4074
        %4103 = vst [vmem:[#allocation2 + $0x5d8] sm:$0xff] %v4066
        %4104 = vst [vmem:[#allocation2 + $0x5e0] sm:$0xff] %v4082
        %4105 = vst [vmem:[#allocation2 + $0x5e8] sm:$0xff] %v4075
        %4106 = vst [vmem:[#allocation2 + $0x5f0] sm:$0xff] %v4067
        %4107 = vst [vmem:[#allocation2 + $0x5f8] sm:$0xff] %v4083
        %4108 = vrot.lane.b32.xlu0 %v3388, 109
        %v4109 = vpop.permute.xlu0 %4108
        %4110 = vrot.lane.b32.xlu0 %v3391, 109
        %v4111 = vpop.permute.xlu0 %4110
        %4112 = vrot.lane.b32.xlu0 %v3394, 109
        %v4113 = vpop.permute.xlu0 %4112
        %4114 = vrot.lane.b32.xlu0 %v3397, 109
        %v4115 = vpop.permute.xlu0 %4114
        %4116 = vrot.lane.b32.xlu0 %v3400, 109
        %v4117 = vpop.permute.xlu0 %4116
        %4118 = vrot.lane.b32.xlu0 %v3403, 109
        %v4119 = vpop.permute.xlu0 %4118
        %4120 = vrot.lane.b32.xlu0 %v3406, 109
        %v4121 = vpop.permute.xlu0 %4120
        %4122 = vrot.lane.b32.xlu0 %v3409, 109
        %v4123 = vpop.permute.xlu0 %4122
        %4124 = vrot.lane.b32.xlu0 %v3389, 109
        %v4125 = vpop.permute.xlu0 %4124
        %4126 = vrot.lane.b32.xlu0 %v3392, 109
        %v4127 = vpop.permute.xlu0 %4126
        %4128 = vrot.lane.b32.xlu0 %v3395, 109
        %v4129 = vpop.permute.xlu0 %4128
        %4130 = vrot.lane.b32.xlu0 %v3398, 109
        %v4131 = vpop.permute.xlu0 %4130
        %4132 = vrot.lane.b32.xlu0 %v3401, 109
        %v4133 = vpop.permute.xlu0 %4132
        %4134 = vrot.lane.b32.xlu0 %v3404, 109
        %v4135 = vpop.permute.xlu0 %4134
        %4136 = vrot.lane.b32.xlu0 %v3407, 109
        %v4137 = vpop.permute.xlu0 %4136
        %4138 = vrot.lane.b32.xlu0 %v3410, 109
        %v4139 = vpop.permute.xlu0 %4138
        %4140 = vrot.lane.b32.xlu0 %v3390, 109
        %v4141 = vpop.permute.xlu0 %4140
        %4142 = vrot.lane.b32.xlu0 %v3393, 109
        %v4143 = vpop.permute.xlu0 %4142
        %4144 = vrot.lane.b32.xlu0 %v3396, 109
        %v4145 = vpop.permute.xlu0 %4144
        %4146 = vrot.lane.b32.xlu0 %v3399, 109
        %v4147 = vpop.permute.xlu0 %4146
        %4148 = vrot.lane.b32.xlu0 %v3402, 109
        %v4149 = vpop.permute.xlu0 %4148
        %4150 = vrot.lane.b32.xlu0 %v3405, 109
        %v4151 = vpop.permute.xlu0 %4150
        %4152 = vrot.lane.b32.xlu0 %v3408, 109
        %v4153 = vpop.permute.xlu0 %4152
        %4154 = vrot.lane.b32.xlu0 %v3411, 109
        %v4155 = vpop.permute.xlu0 %4154
        %v4156 = vsel %vm2932, %v4125, %v4141
        %v4157 = vsel %vm2932, %v4127, %v4143
        %v4158 = vsel %vm2932, %v4129, %v4145
        %v4159 = vsel %vm2932, %v4131, %v4147
        %v4160 = vsel %vm2932, %v4133, %v4149
        %v4161 = vsel %vm2932, %v4135, %v4151
        %v4162 = vsel %vm2932, %v4137, %v4153
        %v4163 = vsel %vm2932, %v4139, %v4155
        %v4164 = vsel %vm2932, %v4109, %v4125
        %v4165 = vsel %vm2932, %v4111, %v4127
        %v4166 = vsel %vm2932, %v4113, %v4129
        %v4167 = vsel %vm2932, %v4115, %v4131
        %v4168 = vsel %vm2932, %v4117, %v4133
        %v4169 = vsel %vm2932, %v4119, %v4135
        %v4170 = vsel %vm2932, %v4121, %v4137
        %v4171 = vsel %vm2932, %v4123, %v4139
        %v4172 = vsel %vm2932, %v4141, %v4109
        %v4173 = vsel %vm2932, %v4143, %v4111
        %v4174 = vsel %vm2932, %v4145, %v4113
        %v4175 = vsel %vm2932, %v4147, %v4115
        %v4176 = vsel %vm2932, %v4149, %v4117
        %v4177 = vsel %vm2932, %v4151, %v4119
        %v4178 = vsel %vm2932, %v4153, %v4121
        %v4179 = vsel %vm2932, %v4155, %v4123
        %4180 = vst [vmem:[#allocation2 + $0x600] sm:$0xff] %v4164
        %4181 = vst [vmem:[#allocation2 + $0x608] sm:$0xff] %v4156
        %4182 = vst [vmem:[#allocation2 + $0x610] sm:$0xff] %v4172
        %4183 = vst [vmem:[#allocation2 + $0x618] sm:$0xff] %v4165
        %4184 = vst [vmem:[#allocation2 + $0x620] sm:$0xff] %v4157
        %4185 = vst [vmem:[#allocation2 + $0x628] sm:$0xff] %v4173
        %4186 = vst [vmem:[#allocation2 + $0x630] sm:$0xff] %v4166
        %4187 = vst [vmem:[#allocation2 + $0x638] sm:$0xff] %v4158
        %4188 = vst [vmem:[#allocation2 + $0x640] sm:$0xff] %v4174
        %4189 = vst [vmem:[#allocation2 + $0x648] sm:$0xff] %v4167
        %4190 = vst [vmem:[#allocation2 + $0x650] sm:$0xff] %v4159
        %4191 = vst [vmem:[#allocation2 + $0x658] sm:$0xff] %v4175
        %4192 = vst [vmem:[#allocation2 + $0x660] sm:$0xff] %v4168
        %4193 = vst [vmem:[#allocation2 + $0x668] sm:$0xff] %v4160
        %4194 = vst [vmem:[#allocation2 + $0x670] sm:$0xff] %v4176
        %4195 = vst [vmem:[#allocation2 + $0x678] sm:$0xff] %v4169
        %4196 = vst [vmem:[#allocation2 + $0x680] sm:$0xff] %v4161
        %4197 = vst [vmem:[#allocation2 + $0x688] sm:$0xff] %v4177
        %4198 = vst [vmem:[#allocation2 + $0x690] sm:$0xff] %v4170
        %4199 = vst [vmem:[#allocation2 + $0x698] sm:$0xff] %v4162
        %4200 = vst [vmem:[#allocation2 + $0x6a0] sm:$0xff] %v4178
        %4201 = vst [vmem:[#allocation2 + $0x6a8] sm:$0xff] %v4171
        %4202 = vst [vmem:[#allocation2 + $0x6b0] sm:$0xff] %v4163
        %4203 = vst [vmem:[#allocation2 + $0x6b8] sm:$0xff] %v4179
        %v4204 = vld [vmem:[#allocation9] sm:$0xff]
        %v4205 = vld [vmem:[#allocation9 + $0x8] sm:$0xff]
        %v4206 = vld [vmem:[#allocation9 + $0x10] sm:$0xff]
        %v4207 = vld [vmem:[#allocation9 + $0x18] sm:$0xff]
        %v4208 = vld [vmem:[#allocation9 + $0x20] sm:$0xff]
        %v4209 = vld [vmem:[#allocation9 + $0x28] sm:$0xff]
        %v4210 = vld [vmem:[#allocation9 + $0x30] sm:$0xff]
        %v4211 = vld [vmem:[#allocation9 + $0x38] sm:$0xff]
        %v4212 = vld [vmem:[#allocation9 + $0x40] sm:$0xff]
        %v4213 = vld [vmem:[#allocation9 + $0x48] sm:$0xff]
        %v4214 = vld [vmem:[#allocation9 + $0x50] sm:$0xff]
        %v4215 = vld [vmem:[#allocation9 + $0x58] sm:$0xff]
        %v4216 = vld [vmem:[#allocation9 + $0x60] sm:$0xff]
        %v4217 = vld [vmem:[#allocation9 + $0x68] sm:$0xff]
        %v4218 = vld [vmem:[#allocation9 + $0x70] sm:$0xff]
        %v4219 = vld [vmem:[#allocation9 + $0x78] sm:$0xff]
        %v4220 = vld [vmem:[#allocation9 + $0x80] sm:$0xff]
        %v4221 = vld [vmem:[#allocation9 + $0x88] sm:$0xff]
        %v4222 = vld [vmem:[#allocation9 + $0x90] sm:$0xff]
        %v4223 = vld [vmem:[#allocation9 + $0x98] sm:$0xff]
        %v4224 = vld [vmem:[#allocation9 + $0xa0] sm:$0xff]
        %v4225 = vld [vmem:[#allocation9 + $0xa8] sm:$0xff]
        %v4226 = vld [vmem:[#allocation9 + $0xb0] sm:$0xff]
        %v4227 = vld [vmem:[#allocation9 + $0xb8] sm:$0xff]
        %v4228 = vld [vmem:[#allocation9 + $0xc0] sm:$0xff]
        %v4229 = vld [vmem:[#allocation9 + $0xc8] sm:$0xff]
        %v4230 = vld [vmem:[#allocation9 + $0xd0] sm:$0xff]
        %v4231 = vld [vmem:[#allocation9 + $0xd8] sm:$0xff]
        %v4232 = vld [vmem:[#allocation9 + $0xe0] sm:$0xff]
        %v4233 = vld [vmem:[#allocation9 + $0xe8] sm:$0xff]
        %v4234 = vld [vmem:[#allocation9 + $0xf0] sm:$0xff]
        %v4235 = vld [vmem:[#allocation9 + $0xf8] sm:$0xff]
        %v4236 = vld [vmem:[#allocation9 + $0x100] sm:$0xff]
        %v4237 = vld [vmem:[#allocation9 + $0x108] sm:$0xff]
        %v4238 = vld [vmem:[#allocation9 + $0x110] sm:$0xff]
        %v4239 = vld [vmem:[#allocation9 + $0x118] sm:$0xff]
        %v4240 = vld [vmem:[#allocation9 + $0x120] sm:$0xff]
        %v4241 = vld [vmem:[#allocation9 + $0x128] sm:$0xff]
        %v4242 = vld [vmem:[#allocation9 + $0x130] sm:$0xff]
        %v4243 = vld [vmem:[#allocation9 + $0x138] sm:$0xff]
        %v4244 = vld [vmem:[#allocation2] sm:$0xff]
        %v4245 = vld [vmem:[#allocation2 + $0x8] sm:$0xff]
        %v4246 = vld [vmem:[#allocation2 + $0x10] sm:$0xff]
        %v4247 = vld [vmem:[#allocation2 + $0x18] sm:$0xff]
        %v4248 = vld [vmem:[#allocation2 + $0x20] sm:$0xff]
        %v4249 = vld [vmem:[#allocation2 + $0x28] sm:$0xff]
        %v4250 = vld [vmem:[#allocation2 + $0x30] sm:$0xff]
        %v4251 = vld [vmem:[#allocation2 + $0x38] sm:$0xff]
        %v4252 = vld [vmem:[#allocation2 + $0x40] sm:$0xff]
        %v4253 = vld [vmem:[#allocation2 + $0x48] sm:$0xff]
        %v4254 = vld [vmem:[#allocation2 + $0x50] sm:$0xff]
        %v4255 = vld [vmem:[#allocation2 + $0x58] sm:$0xff]
        %v4256 = vld [vmem:[#allocation2 + $0x60] sm:$0xff]
        %v4257 = vld [vmem:[#allocation2 + $0x68] sm:$0xff]
        %v4258 = vld [vmem:[#allocation2 + $0x70] sm:$0xff]
        %v4259 = vld [vmem:[#allocation2 + $0x78] sm:$0xff]
        %v4260 = vld [vmem:[#allocation2 + $0x80] sm:$0xff]
        %v4261 = vld [vmem:[#allocation2 + $0x88] sm:$0xff]
        %v4262 = vld [vmem:[#allocation2 + $0x90] sm:$0xff]
        %v4263 = vld [vmem:[#allocation2 + $0x98] sm:$0xff]
        %v4264 = vld [vmem:[#allocation2 + $0xa0] sm:$0xff]
        %v4265 = vld [vmem:[#allocation2 + $0xa8] sm:$0xff]
        %v4266 = vld [vmem:[#allocation2 + $0xb0] sm:$0xff]
        %v4267 = vld [vmem:[#allocation2 + $0xb8] sm:$0xff]
        %v4268 = vld [vmem:[#allocation2 + $0xc0] sm:$0xff]
        %v4269 = vld [vmem:[#allocation2 + $0xc8] sm:$0xff]
        %v4270 = vld [vmem:[#allocation2 + $0xd0] sm:$0xff]
        %v4271 = vld [vmem:[#allocation2 + $0xd8] sm:$0xff]
        %v4272 = vld [vmem:[#allocation2 + $0xe0] sm:$0xff]
        %v4273 = vld [vmem:[#allocation2 + $0xe8] sm:$0xff]
        %v4274 = vld [vmem:[#allocation2 + $0xf0] sm:$0xff]
        %v4275 = vld [vmem:[#allocation2 + $0xf8] sm:$0xff]
        %v4276 = vld [vmem:[#allocation2 + $0x100] sm:$0xff]
        %v4277 = vld [vmem:[#allocation2 + $0x108] sm:$0xff]
        %v4278 = vld [vmem:[#allocation2 + $0x110] sm:$0xff]
        %v4279 = vld [vmem:[#allocation2 + $0x118] sm:$0xff]
        %v4280 = vld [vmem:[#allocation2 + $0x120] sm:$0xff]
        %v4281 = vld [vmem:[#allocation2 + $0x128] sm:$0xff]
        %v4282 = vld [vmem:[#allocation2 + $0x130] sm:$0xff]
        %v4283 = vld [vmem:[#allocation2 + $0x138] sm:$0xff]
        %v4284 = vld [vmem:[#allocation2 + $0x140] sm:$0xff]
        %v4285 = vld [vmem:[#allocation2 + $0x148] sm:$0xff]
        %v4286 = vld [vmem:[#allocation2 + $0x150] sm:$0xff]
        %v4287 = vld [vmem:[#allocation2 + $0x158] sm:$0xff]
        %v4288 = vld [vmem:[#allocation2 + $0x160] sm:$0xff]
        %v4289 = vld [vmem:[#allocation2 + $0x168] sm:$0xff]
        %v4290 = vld [vmem:[#allocation2 + $0x170] sm:$0xff]
        %v4291 = vld [vmem:[#allocation2 + $0x178] sm:$0xff]
        %v4292 = vld [vmem:[#allocation2 + $0x180] sm:$0xff]
        %v4293 = vld [vmem:[#allocation2 + $0x188] sm:$0xff]
        %v4294 = vld [vmem:[#allocation2 + $0x190] sm:$0xff]
        %v4295 = vld [vmem:[#allocation2 + $0x198] sm:$0xff]
        %v4296 = vld [vmem:[#allocation2 + $0x1a0] sm:$0xff]
        %v4297 = vld [vmem:[#allocation2 + $0x1a8] sm:$0xff]
        %v4298 = vld [vmem:[#allocation2 + $0x1b0] sm:$0xff]
        %v4299 = vld [vmem:[#allocation2 + $0x1b8] sm:$0xff]
        %v4300 = vld [vmem:[#allocation2 + $0x1c0] sm:$0xff]
        %v4301 = vld [vmem:[#allocation2 + $0x1c8] sm:$0xff]
        %v4302 = vld [vmem:[#allocation2 + $0x1d0] sm:$0xff]
        %v4303 = vld [vmem:[#allocation2 + $0x1d8] sm:$0xff]
        %v4304 = vld [vmem:[#allocation2 + $0x1e0] sm:$0xff]
        %v4305 = vld [vmem:[#allocation2 + $0x1e8] sm:$0xff]
        %v4306 = vld [vmem:[#allocation2 + $0x1f0] sm:$0xff]
        %v4307 = vld [vmem:[#allocation2 + $0x1f8] sm:$0xff]
        %v4308 = vld [vmem:[#allocation2 + $0x200] sm:$0xff]
        %v4309 = vld [vmem:[#allocation2 + $0x208] sm:$0xff]
        %v4310 = vld [vmem:[#allocation2 + $0x210] sm:$0xff]
        %v4311 = vld [vmem:[#allocation2 + $0x218] sm:$0xff]
        %v4312 = vld [vmem:[#allocation2 + $0x220] sm:$0xff]
        %v4313 = vld [vmem:[#allocation2 + $0x228] sm:$0xff]
        %v4314 = vld [vmem:[#allocation2 + $0x230] sm:$0xff]
        %v4315 = vld [vmem:[#allocation2 + $0x238] sm:$0xff]
        %v4316 = vld [vmem:[#allocation2 + $0x240] sm:$0xff]
        %v4317 = vld [vmem:[#allocation2 + $0x248] sm:$0xff]
        %v4318 = vld [vmem:[#allocation2 + $0x250] sm:$0xff]
        %v4319 = vld [vmem:[#allocation2 + $0x258] sm:$0xff]
        %v4320 = vld [vmem:[#allocation2 + $0x260] sm:$0xff]
        %v4321 = vld [vmem:[#allocation2 + $0x268] sm:$0xff]
        %v4322 = vld [vmem:[#allocation2 + $0x270] sm:$0xff]
        %v4323 = vld [vmem:[#allocation2 + $0x278] sm:$0xff]
        %v4324 = vld [vmem:[#allocation2 + $0x280] sm:$0xff]
        %v4325 = vld [vmem:[#allocation2 + $0x288] sm:$0xff]
        %v4326 = vld [vmem:[#allocation2 + $0x290] sm:$0xff]
        %v4327 = vld [vmem:[#allocation2 + $0x298] sm:$0xff]
        %v4328 = vld [vmem:[#allocation2 + $0x2a0] sm:$0xff]
        %v4329 = vld [vmem:[#allocation2 + $0x2a8] sm:$0xff]
        %v4330 = vld [vmem:[#allocation2 + $0x2b0] sm:$0xff]
        %v4331 = vld [vmem:[#allocation2 + $0x2b8] sm:$0xff]
        %v4332 = vld [vmem:[#allocation2 + $0x2c0] sm:$0xff]
        %v4333 = vld [vmem:[#allocation2 + $0x2c8] sm:$0xff]
        %v4334 = vld [vmem:[#allocation2 + $0x2d0] sm:$0xff]
        %v4335 = vld [vmem:[#allocation2 + $0x2d8] sm:$0xff]
        %v4336 = vld [vmem:[#allocation2 + $0x2e0] sm:$0xff]
        %v4337 = vld [vmem:[#allocation2 + $0x2e8] sm:$0xff]
        %v4338 = vld [vmem:[#allocation2 + $0x2f0] sm:$0xff]
        %v4339 = vld [vmem:[#allocation2 + $0x2f8] sm:$0xff]
        %v4340 = vld [vmem:[#allocation2 + $0x300] sm:$0xff]
        %v4341 = vld [vmem:[#allocation2 + $0x308] sm:$0xff]
        %v4342 = vld [vmem:[#allocation2 + $0x310] sm:$0xff]
        %v4343 = vld [vmem:[#allocation2 + $0x318] sm:$0xff]
        %v4344 = vld [vmem:[#allocation2 + $0x320] sm:$0xff]
        %v4345 = vld [vmem:[#allocation2 + $0x328] sm:$0xff]
        %v4346 = vld [vmem:[#allocation2 + $0x330] sm:$0xff]
        %v4347 = vld [vmem:[#allocation2 + $0x338] sm:$0xff]
        %v4348 = vld [vmem:[#allocation2 + $0x340] sm:$0xff]
        %v4349 = vld [vmem:[#allocation2 + $0x348] sm:$0xff]
        %v4350 = vld [vmem:[#allocation2 + $0x350] sm:$0xff]
        %v4351 = vld [vmem:[#allocation2 + $0x358] sm:$0xff]
        %v4352 = vld [vmem:[#allocation2 + $0x360] sm:$0xff]
        %v4353 = vld [vmem:[#allocation2 + $0x368] sm:$0xff]
        %v4354 = vld [vmem:[#allocation2 + $0x370] sm:$0xff]
        %v4355 = vld [vmem:[#allocation2 + $0x378] sm:$0xff]
        %v4356 = vld [vmem:[#allocation2 + $0x380] sm:$0xff]
        %v4357 = vld [vmem:[#allocation2 + $0x388] sm:$0xff]
        %v4358 = vld [vmem:[#allocation2 + $0x390] sm:$0xff]
        %v4359 = vld [vmem:[#allocation2 + $0x398] sm:$0xff]
        %v4360 = vld [vmem:[#allocation2 + $0x3a0] sm:$0xff]
        %v4361 = vld [vmem:[#allocation2 + $0x3a8] sm:$0xff]
        %v4362 = vld [vmem:[#allocation2 + $0x3b0] sm:$0xff]
        %v4363 = vld [vmem:[#allocation2 + $0x3b8] sm:$0xff]
        %v4364 = vld [vmem:[#allocation2 + $0x3c0] sm:$0xff]
        %v4365 = vld [vmem:[#allocation2 + $0x3c8] sm:$0xff]
        %v4366 = vld [vmem:[#allocation2 + $0x3d0] sm:$0xff]
        %v4367 = vld [vmem:[#allocation2 + $0x3d8] sm:$0xff]
        %v4368 = vld [vmem:[#allocation2 + $0x3e0] sm:$0xff]
        %v4369 = vld [vmem:[#allocation2 + $0x3e8] sm:$0xff]
        %v4370 = vld [vmem:[#allocation2 + $0x3f0] sm:$0xff]
        %v4371 = vld [vmem:[#allocation2 + $0x3f8] sm:$0xff]
        %v4372 = vld [vmem:[#allocation2 + $0x400] sm:$0xff]
        %v4373 = vld [vmem:[#allocation2 + $0x408] sm:$0xff]
        %v4374 = vld [vmem:[#allocation2 + $0x410] sm:$0xff]
        %v4375 = vld [vmem:[#allocation2 + $0x418] sm:$0xff]
        %v4376 = vld [vmem:[#allocation2 + $0x420] sm:$0xff]
        %v4377 = vld [vmem:[#allocation2 + $0x428] sm:$0xff]
        %v4378 = vld [vmem:[#allocation2 + $0x430] sm:$0xff]
        %v4379 = vld [vmem:[#allocation2 + $0x438] sm:$0xff]
        %v4380 = vld [vmem:[#allocation2 + $0x440] sm:$0xff]
        %v4381 = vld [vmem:[#allocation2 + $0x448] sm:$0xff]
        %v4382 = vld [vmem:[#allocation2 + $0x450] sm:$0xff]
        %v4383 = vld [vmem:[#allocation2 + $0x458] sm:$0xff]
        %v4384 = vld [vmem:[#allocation2 + $0x460] sm:$0xff]
        %v4385 = vld [vmem:[#allocation2 + $0x468] sm:$0xff]
        %v4386 = vld [vmem:[#allocation2 + $0x470] sm:$0xff]
        %v4387 = vld [vmem:[#allocation2 + $0x478] sm:$0xff]
        %v4388 = vld [vmem:[#allocation2 + $0x480] sm:$0xff]
        %v4389 = vld [vmem:[#allocation2 + $0x488] sm:$0xff]
        %v4390 = vld [vmem:[#allocation2 + $0x490] sm:$0xff]
        %v4391 = vld [vmem:[#allocation2 + $0x498] sm:$0xff]
        %v4392 = vld [vmem:[#allocation2 + $0x4a0] sm:$0xff]
        %v4393 = vld [vmem:[#allocation2 + $0x4a8] sm:$0xff]
        %v4394 = vld [vmem:[#allocation2 + $0x4b0] sm:$0xff]
        %v4395 = vld [vmem:[#allocation2 + $0x4b8] sm:$0xff]
        %v4396 = vld [vmem:[#allocation2 + $0x4c0] sm:$0xff]
        %v4397 = vld [vmem:[#allocation2 + $0x4c8] sm:$0xff]
        %v4398 = vld [vmem:[#allocation2 + $0x4d0] sm:$0xff]
        %v4399 = vld [vmem:[#allocation2 + $0x4d8] sm:$0xff]
        %v4400 = vld [vmem:[#allocation2 + $0x4e0] sm:$0xff]
        %v4401 = vld [vmem:[#allocation2 + $0x4e8] sm:$0xff]
        %v4402 = vld [vmem:[#allocation2 + $0x4f0] sm:$0xff]
        %v4403 = vld [vmem:[#allocation2 + $0x4f8] sm:$0xff]
        %v4404 = vld [vmem:[#allocation2 + $0x500] sm:$0xff]
        %v4405 = vld [vmem:[#allocation2 + $0x508] sm:$0xff]
        %v4406 = vld [vmem:[#allocation2 + $0x510] sm:$0xff]
        %v4407 = vld [vmem:[#allocation2 + $0x518] sm:$0xff]
        %v4408 = vld [vmem:[#allocation2 + $0x520] sm:$0xff]
        %v4409 = vld [vmem:[#allocation2 + $0x528] sm:$0xff]
        %v4410 = vld [vmem:[#allocation2 + $0x530] sm:$0xff]
        %v4411 = vld [vmem:[#allocation2 + $0x538] sm:$0xff]
        %v4412 = vld [vmem:[#allocation2 + $0x540] sm:$0xff]
        %v4413 = vld [vmem:[#allocation2 + $0x548] sm:$0xff]
        %v4414 = vld [vmem:[#allocation2 + $0x550] sm:$0xff]
        %v4415 = vld [vmem:[#allocation2 + $0x558] sm:$0xff]
        %v4416 = vld [vmem:[#allocation2 + $0x560] sm:$0xff]
        %v4417 = vld [vmem:[#allocation2 + $0x568] sm:$0xff]
        %v4418 = vld [vmem:[#allocation2 + $0x570] sm:$0xff]
        %v4419 = vld [vmem:[#allocation2 + $0x578] sm:$0xff]
        %v4420 = vld [vmem:[#allocation2 + $0x580] sm:$0xff]
        %v4421 = vld [vmem:[#allocation2 + $0x588] sm:$0xff]
        %v4422 = vld [vmem:[#allocation2 + $0x590] sm:$0xff]
        %v4423 = vld [vmem:[#allocation2 + $0x598] sm:$0xff]
        %v4424 = vld [vmem:[#allocation2 + $0x5a0] sm:$0xff]
        %v4425 = vld [vmem:[#allocation2 + $0x5a8] sm:$0xff]
        %v4426 = vld [vmem:[#allocation2 + $0x5b0] sm:$0xff]
        %v4427 = vld [vmem:[#allocation2 + $0x5b8] sm:$0xff]
        %v4428 = vld [vmem:[#allocation2 + $0x5c0] sm:$0xff]
        %v4429 = vld [vmem:[#allocation2 + $0x5c8] sm:$0xff]
        %v4430 = vld [vmem:[#allocation2 + $0x5d0] sm:$0xff]
        %v4431 = vld [vmem:[#allocation2 + $0x5d8] sm:$0xff]
        %v4432 = vld [vmem:[#allocation2 + $0x5e0] sm:$0xff]
        %v4433 = vld [vmem:[#allocation2 + $0x5e8] sm:$0xff]
        %v4434 = vld [vmem:[#allocation2 + $0x5f0] sm:$0xff]
        %v4435 = vld [vmem:[#allocation2 + $0x5f8] sm:$0xff]
        %v4436 = vld [vmem:[#allocation2 + $0x600] sm:$0xff]
        %v4437 = vld [vmem:[#allocation2 + $0x608] sm:$0xff]
        %v4438 = vld [vmem:[#allocation2 + $0x610] sm:$0xff]
        %v4439 = vld [vmem:[#allocation2 + $0x618] sm:$0xff]
        %v4440 = vld [vmem:[#allocation2 + $0x620] sm:$0xff]
        %v4441 = vld [vmem:[#allocation2 + $0x628] sm:$0xff]
        %v4442 = vld [vmem:[#allocation2 + $0x630] sm:$0xff]
        %v4443 = vld [vmem:[#allocation2 + $0x638] sm:$0xff]
        %v4444 = vld [vmem:[#allocation2 + $0x640] sm:$0xff]
        %v4445 = vld [vmem:[#allocation2 + $0x648] sm:$0xff]
        %v4446 = vld [vmem:[#allocation2 + $0x650] sm:$0xff]
        %v4447 = vld [vmem:[#allocation2 + $0x658] sm:$0xff]
        %v4448 = vld [vmem:[#allocation2 + $0x660] sm:$0xff]
        %v4449 = vld [vmem:[#allocation2 + $0x668] sm:$0xff]
        %v4450 = vld [vmem:[#allocation2 + $0x670] sm:$0xff]
        %v4451 = vld [vmem:[#allocation2 + $0x678] sm:$0xff]
        %v4452 = vld [vmem:[#allocation2 + $0x680] sm:$0xff]
        %v4453 = vld [vmem:[#allocation2 + $0x688] sm:$0xff]
        %v4454 = vld [vmem:[#allocation2 + $0x690] sm:$0xff]
        %v4455 = vld [vmem:[#allocation2 + $0x698] sm:$0xff]
        %v4456 = vld [vmem:[#allocation2 + $0x6a0] sm:$0xff]
        %v4457 = vld [vmem:[#allocation2 + $0x6a8] sm:$0xff]
        %v4458 = vld [vmem:[#allocation2 + $0x6b0] sm:$0xff]
        %v4459 = vld [vmem:[#allocation2 + $0x6b8] sm:$0xff]
        %v4460 = vld [vmem:[%s5] sm:$0xff]
        %v4461 = vld [vmem:[%s5 + $0x8] sm:$0xff]
        %v4462 = vld [vmem:[%s5 + $0x10] sm:$0xff]
        %v4463 = vld [vmem:[%s5 + $0x18] sm:$0xff]
        %v4464 = vld [vmem:[%s5 + $0x20] sm:$0xff]
        %v4465 = vld [vmem:[%s5 + $0x28] sm:$0xff]
        %v4466 = vld [vmem:[%s5 + $0x30] sm:$0xff]
        %v4467 = vld [vmem:[%s5 + $0x38] sm:$0xff]
        %4469 = vset.pattern.permute.xlu0 0
        %4470 = vperm.xlu0 %4469, %v4460
        %v4471 = vpop.permute.xlu0 %4470
        %4474 = vset.pattern.permute.xlu0 0
        %4475 = vperm.xlu0 %4474, %v4461
        %v4476 = vpop.permute.xlu0 %4475
        %4479 = vset.pattern.permute.xlu0 0
        %4480 = vperm.xlu0 %4479, %v4462
        %v4481 = vpop.permute.xlu0 %4480
        %4484 = vset.pattern.permute.xlu0 0
        %4485 = vperm.xlu0 %4484, %v4463
        %v4486 = vpop.permute.xlu0 %4485
        %4489 = vset.pattern.permute.xlu0 0
        %4490 = vperm.xlu0 %4489, %v4464
        %v4491 = vpop.permute.xlu0 %4490
        %4494 = vset.pattern.permute.xlu0 0
        %4495 = vperm.xlu0 %4494, %v4465
        %v4496 = vpop.permute.xlu0 %4495
        %4499 = vset.pattern.permute.xlu0 0
        %4500 = vperm.xlu0 %4499, %v4466
        %v4501 = vpop.permute.xlu0 %4500
        %4504 = vset.pattern.permute.xlu0 0
        %4505 = vperm.xlu0 %4504, %v4467
        %v4506 = vpop.permute.xlu0 %4505
        %vm4508 = vcmask 523264
        %v4510 = vsel %vm4508, %v4208, 0
        %v4513 = vsel %vm4508, %v4213, 0
        %v4516 = vsel %vm4508, %v4218, 0
        %v4519 = vsel %vm4508, %v4223, 0
        %v4522 = vsel %vm4508, %v4228, 0
        %v4525 = vsel %vm4508, %v4233, 0
        %v4528 = vsel %vm4508, %v4238, 0
        %v4531 = vsel %vm4508, %v4243, 0
        %4533 = vmatprep.subr.mxu0 %v4245
        %4534 = vmatpush1.msra.mxu0 %v4244
        %4535 = vmatprep.subr.mxu0 %v4248
        %4536 = vmatpush1.msra.mxu0 %v4247
        %4537 = vmatprep.subr.mxu0 %v4251
        %4538 = vmatpush1.msra.mxu0 %v4250
        %4539 = vmatprep.subr.mxu0 %v4254
        %4540 = vmatpush1.msra.mxu0 %v4253
        %4541 = vmatprep.subr.mxu0 %v4257
        %4542 = vmatpush1.msra.mxu0 %v4256
        %4543 = vmatprep.subr.mxu0 %v4260
        %4544 = vmatpush1.msra.mxu0 %v4259
        %4545 = vmatprep.subr.mxu0 %v4263
        %4546 = vmatpush1.msra.mxu0 %v4262
        %4547 = vmatprep.subr.mxu0 %v4266
        %4548 = vmatpush1.msra.mxu0 %v4265
        %4549 = vmatprep.subr.mxu0 %v4269
        %4550 = vmatpush1.msra.mxu0 %v4268
        %4551 = vmatprep.subr.mxu0 %v4272
        %4552 = vmatpush1.msra.mxu0 %v4271
        %4553 = vmatprep.subr.mxu0 %v4275
        %4554 = vmatpush1.msra.mxu0 %v4274
        %4555 = vmatprep.subr.mxu0 %v4278
        %4556 = vmatpush1.msra.mxu0 %v4277
        %4557 = vmatprep.subr.mxu0 %v4281
        %4558 = vmatpush1.msra.mxu0 %v4280
        %4559 = vmatprep.subr.mxu0 %v4284
        %4560 = vmatpush1.msra.mxu0 %v4283
        %4561 = vmatprep.subr.mxu0 %v4287
        %4562 = vmatpush1.msra.mxu0 %v4286
        %4563 = vmatprep.subr.mxu0 %v4290
        %4564 = vmatpush1.msra.mxu0 %v4289
        %4565 = vmatprep.subr.mxu0 %v4293
        %4566 = vmatpush1.msra.mxu0 %v4292
        %4567 = vmatprep.subr.mxu0 %v4296
        %4568 = vmatpush1.msra.mxu0 %v4295
        %4569 = vmatprep.subr.mxu0 %v4299
        %4570 = vmatpush1.msra.mxu0 %v4298
        %4571 = vmatprep.subr.mxu0 %v4302
        %4572 = vmatpush1.msra.mxu0 %v4301
        %4573 = vmatprep.subr.mxu0 %v4305
        %4574 = vmatpush1.msra.mxu0 %v4304
        %4575 = vmatprep.subr.mxu0 %v4308
        %4576 = vmatpush1.msra.mxu0 %v4307
        %4577 = vmatprep.subr.mxu0 %v4311
        %4578 = vmatpush1.msra.mxu0 %v4310
        %4579 = vmatprep.subr.mxu0 %v4314
        %4580 = vmatpush1.msra.mxu0 %v4313
        %4581 = vmatprep.subr.mxu0 %v4317
        %4582 = vmatpush1.msra.mxu0 %v4316
        %4583 = vmatprep.subr.mxu0 %v4320
        %4584 = vmatpush1.msra.mxu0 %v4319
        %4585 = vmatprep.subr.mxu0 %v4323
        %4586 = vmatpush1.msra.mxu0 %v4322
        %4587 = vmatprep.subr.mxu0 %v4326
        %4588 = vmatpush1.msra.mxu0 %v4325
        %4589 = vmatprep.subr.mxu0 %v4329
        %4590 = vmatpush1.msra.mxu0 %v4328
        %4591 = vmatprep.subr.mxu0 %v4332
        %4592 = vmatpush1.msra.mxu0 %v4331
        %4593 = vmatprep.subr.mxu0 %v4335
        %4594 = vmatpush1.msra.mxu0 %v4334
        %4595 = vmatprep.subr.mxu0 %v4338
        %4596 = vmatpush1.msra.mxu0 %v4337
        %4597 = vmatprep.mubr.f32.mxu0 %v4205
        %4598 = vmatmul.mubr.f32.gmra.mrb[0].mxu0 %v4204
        %v4599 = vpop.f32.mrb[0].mxu0
        %v4600 = vadd.f32 %v4471, %v4599
        %v4601 = vpop.f32.mrb[0].mxu0
        %v4602 = vadd.f32 %v4471, %v4601
        %4603 = vmatprep.mubr.f32.mxu0 %v4210
        %4604 = vmatmul.mubr.f32.gmra.mrb[0].mxu0 %v4209
        %v4605 = vpop.f32.mrb[0].mxu0
        %v4606 = vadd.f32 %v4476, %v4605
        %v4607 = vpop.f32.mrb[0].mxu0
        %v4608 = vadd.f32 %v4476, %v4607
        %4609 = vmatprep.mubr.f32.mxu0 %v4215
        %4610 = vmatmul.mubr.f32.gmra.mrb[0].mxu0 %v4214
        %v4611 = vpop.f32.mrb[0].mxu0
        %v4612 = vadd.f32 %v4481, %v4611
        %v4613 = vpop.f32.mrb[0].mxu0
        %v4614 = vadd.f32 %v4481, %v4613
        %4615 = vmatprep.mubr.f32.mxu0 %v4220
        %4616 = vmatmul.mubr.f32.gmra.mrb[0].mxu0 %v4219
        %v4617 = vpop.f32.mrb[0].mxu0
        %v4618 = vadd.f32 %v4486, %v4617
        %v4619 = vpop.f32.mrb[0].mxu0
        %v4620 = vadd.f32 %v4486, %v4619
        %4621 = vmatprep.mubr.f32.mxu0 %v4225
        %4622 = vmatmul.mubr.f32.gmra.mrb[0].mxu0 %v4224
        %v4623 = vpop.f32.mrb[0].mxu0
        %v4624 = vadd.f32 %v4491, %v4623
        %v4625 = vpop.f32.mrb[0].mxu0
        %v4626 = vadd.f32 %v4491, %v4625
        %4627 = vmatprep.mubr.f32.mxu0 %v4230
        %4628 = vmatmul.mubr.f32.gmra.mrb[0].mxu0 %v4229
        %v4629 = vpop.f32.mrb[0].mxu0
        %v4630 = vadd.f32 %v4496, %v4629
        %v4631 = vpop.f32.mrb[0].mxu0
        %v4632 = vadd.f32 %v4496, %v4631
        %4633 = vmatprep.mubr.f32.mxu0 %v4235
        %4634 = vmatmul.mubr.f32.gmra.mrb[0].mxu0 %v4234
        %v4635 = vpop.f32.mrb[0].mxu0
        %v4636 = vadd.f32 %v4501, %v4635
        %v4637 = vpop.f32.mrb[0].mxu0
        %v4638 = vadd.f32 %v4501, %v4637
        %4639 = vmatprep.mubr.f32.mxu0 %v4240
        %4640 = vmatmul.mubr.f32.gmra.mrb[0].mxu0 %v4239
        %v4641 = vpop.f32.mrb[0].mxu0
        %v4642 = vadd.f32 %v4506, %v4641
        %v4643 = vpop.f32.mrb[0].mxu0
        %v4644 = vadd.f32 %v4506, %v4643
        %4645 = vdwg.mxu0
        %4646 = vmatprep.subr.mxu0 %v4341
        %4647 = vmatpush1.msra.mxu0 %v4340
        %4648 = vmatprep.subr.mxu0 %v4344
        %4649 = vmatpush1.msra.mxu0 %v4343
        %4650 = vmatprep.subr.mxu0 %v4347
        %4651 = vmatpush1.msra.mxu0 %v4346
        %4652 = vmatprep.subr.mxu0 %v4350
        %4653 = vmatpush1.msra.mxu0 %v4349
        %4654 = vmatprep.subr.mxu0 %v4353
        %4655 = vmatpush1.msra.mxu0 %v4352
        %4656 = vmatprep.subr.mxu0 %v4356
        %4657 = vmatpush1.msra.mxu0 %v4355
        %4658 = vmatprep.subr.mxu0 %v4359
        %4659 = vmatpush1.msra.mxu0 %v4358
        %4660 = vmatprep.subr.mxu0 %v4362
        %4661 = vmatpush1.msra.mxu0 %v4361
        %4662 = vmatprep.subr.mxu0 %v4365
        %4663 = vmatpush1.msra.mxu0 %v4364
        %4664 = vmatprep.subr.mxu0 %v4368
        %4665 = vmatpush1.msra.mxu0 %v4367
        %4666 = vmatprep.subr.mxu0 %v4371
        %4667 = vmatpush1.msra.mxu0 %v4370
        %4668 = vmatprep.subr.mxu0 %v4374
        %4669 = vmatpush1.msra.mxu0 %v4373
        %4670 = vmatprep.subr.mxu0 %v4377
        %4671 = vmatpush1.msra.mxu0 %v4376
        %4672 = vmatprep.subr.mxu0 %v4380
        %4673 = vmatpush1.msra.mxu0 %v4379
        %4674 = vmatprep.subr.mxu0 %v4383
        %4675 = vmatpush1.msra.mxu0 %v4382
        %4676 = vmatprep.subr.mxu0 %v4386
        %4677 = vmatpush1.msra.mxu0 %v4385
        %4678 = vmatprep.subr.mxu0 %v4389
        %4679 = vmatpush1.msra.mxu0 %v4388
        %4680 = vmatprep.subr.mxu0 %v4392
        %4681 = vmatpush1.msra.mxu0 %v4391
        %4682 = vmatprep.subr.mxu0 %v4395
        %4683 = vmatpush1.msra.mxu0 %v4394
        %4684 = vmatprep.subr.mxu0 %v4398
        %4685 = vmatpush1.msra.mxu0 %v4397
        %4686 = vmatprep.subr.mxu0 %v4401
        %4687 = vmatpush1.msra.mxu0 %v4400
        %4688 = vmatprep.subr.mxu0 %v4404
        %4689 = vmatpush1.msra.mxu0 %v4403
        %4690 = vmatprep.subr.mxu0 %v4407
        %4691 = vmatpush1.msra.mxu0 %v4406
        %4692 = vmatprep.subr.mxu0 %v4410
        %4693 = vmatpush1.msra.mxu0 %v4409
        %4694 = vmatprep.subr.mxu0 %v4413
        %4695 = vmatpush1.msra.mxu0 %v4412
        %4696 = vmatprep.subr.mxu0 %v4416
        %4697 = vmatpush1.msra.mxu0 %v4415
        %4698 = vmatprep.subr.mxu0 %v4419
        %4699 = vmatpush1.msra.mxu0 %v4418
        %4700 = vmatprep.subr.mxu0 %v4422
        %4701 = vmatpush1.msra.mxu0 %v4421
        %4702 = vmatprep.subr.mxu0 %v4425
        %4703 = vmatpush1.msra.mxu0 %v4424
        %4704 = vmatprep.subr.mxu0 %v4428
        %4705 = vmatpush1.msra.mxu0 %v4427
        %4706 = vmatprep.subr.mxu0 %v4431
        %4707 = vmatpush1.msra.mxu0 %v4430
        %4708 = vmatprep.subr.mxu0 %v4434
        %4709 = vmatpush1.msra.mxu0 %v4433
        %4710 = vmatprep.mubr.f32.mxu0 %v4207
        %4711 = vmatmul.mubr.f32.gmra.mrb[0].mxu0 %v4206
        %v4712 = vpop.f32.mrb[0].mxu0
        %v4713 = vadd.f32 %v4600, %v4712
        %v4714 = vpop.f32.mrb[0].mxu0
        %v4715 = vadd.f32 %v4602, %v4714
        %4716 = vmatprep.mubr.f32.mxu0 %v4212
        %4717 = vmatmul.mubr.f32.gmra.mrb[0].mxu0 %v4211
        %v4718 = vpop.f32.mrb[0].mxu0
        %v4719 = vadd.f32 %v4606, %v4718
        %v4720 = vpop.f32.mrb[0].mxu0
        %v4721 = vadd.f32 %v4608, %v4720
        %4722 = vmatprep.mubr.f32.mxu0 %v4217
        %4723 = vmatmul.mubr.f32.gmra.mrb[0].mxu0 %v4216
        %v4724 = vpop.f32.mrb[0].mxu0
        %v4725 = vadd.f32 %v4612, %v4724
        %v4726 = vpop.f32.mrb[0].mxu0
        %v4727 = vadd.f32 %v4614, %v4726
        %4728 = vmatprep.mubr.f32.mxu0 %v4222
        %4729 = vmatmul.mubr.f32.gmra.mrb[0].mxu0 %v4221
        %v4730 = vpop.f32.mrb[0].mxu0
        %v4731 = vadd.f32 %v4618, %v4730
        %v4732 = vpop.f32.mrb[0].mxu0
        %v4733 = vadd.f32 %v4620, %v4732
        %4734 = vmatprep.mubr.f32.mxu0 %v4227
        %4735 = vmatmul.mubr.f32.gmra.mrb[0].mxu0 %v4226
        %v4736 = vpop.f32.mrb[0].mxu0
        %v4737 = vadd.f32 %v4624, %v4736
        %v4738 = vpop.f32.mrb[0].mxu0
        %v4739 = vadd.f32 %v4626, %v4738
        %4740 = vmatprep.mubr.f32.mxu0 %v4232
        %4741 = vmatmul.mubr.f32.gmra.mrb[0].mxu0 %v4231
        %v4742 = vpop.f32.mrb[0].mxu0
        %v4743 = vadd.f32 %v4630, %v4742
        %v4744 = vpop.f32.mrb[0].mxu0
        %v4745 = vadd.f32 %v4632, %v4744
        %4746 = vmatprep.mubr.f32.mxu0 %v4237
        %4747 = vmatmul.mubr.f32.gmra.mrb[0].mxu0 %v4236
        %v4748 = vpop.f32.mrb[0].mxu0
        %v4749 = vadd.f32 %v4636, %v4748
        %v4750 = vpop.f32.mrb[0].mxu0
        %v4751 = vadd.f32 %v4638, %v4750
        %4752 = vmatprep.mubr.f32.mxu0 %v4242
        %4753 = vmatmul.mubr.f32.gmra.mrb[0].mxu0 %v4241
        %v4754 = vpop.f32.mrb[0].mxu0
        %v4755 = vadd.f32 %v4642, %v4754
        %v4756 = vpop.f32.mrb[0].mxu0
        %v4757 = vadd.f32 %v4644, %v4756
        %4758 = vdwg.mxu0
        %4759 = vmatprep.subr.mxu0 %v4437
        %4760 = vmatpush1.msra.mxu0 %v4436
        %4761 = vmatprep.subr.mxu0 %v4440
        %4762 = vmatpush1.msra.mxu0 %v4439
        %4763 = vmatprep.subr.mxu0 %v4443
        %4764 = vmatpush1.msra.mxu0 %v4442
        %4765 = vmatprep.subr.mxu0 %v4446
        %4766 = vmatpush1.msra.mxu0 %v4445
        %4767 = vmatprep.subr.mxu0 %v4449
        %4768 = vmatpush1.msra.mxu0 %v4448
        %4769 = vmatprep.subr.mxu0 %v4452
        %4770 = vmatpush1.msra.mxu0 %v4451
        %4771 = vmatprep.subr.mxu0 %v4455
        %4772 = vmatpush1.msra.mxu0 %v4454
        %4773 = vmatprep.subr.mxu0 %v4458
        %4774 = vmatpush1.msra.mxu0 %v4457
        %4775 = vmatprep.subr.mxu0 0.0
        %4776 = vmatpush1.msra.mxu0 0.0
        %4777 = vmatprep.subr.mxu0 0.0
        %4778 = vmatpush1.msra.mxu0 0.0
        %4779 = vmatprep.subr.mxu0 0.0
        %4780 = vmatpush1.msra.mxu0 0.0
        %4781 = vmatprep.subr.mxu0 0.0
        %4782 = vmatpush1.msra.mxu0 0.0
        %4783 = vmatprep.subr.mxu0 0.0
        %4784 = vmatpush1.msra.mxu0 0.0
        %4785 = vmatprep.subr.mxu0 0.0
        %4786 = vmatpush1.msra.mxu0 0.0
        %4787 = vmatprep.subr.mxu0 0.0
        %4788 = vmatpush1.msra.mxu0 0.0
        %4789 = vmatprep.subr.mxu0 0.0
        %4790 = vmatpush1.msra.mxu0 0.0
        %4791 = vmatprep.subr.mxu0 0.0
        %4792 = vmatpush1.msra.mxu0 0.0
        %4793 = vmatprep.subr.mxu0 0.0
        %4794 = vmatpush1.msra.mxu0 0.0
        %4795 = vmatprep.subr.mxu0 0.0
        %4796 = vmatpush1.msra.mxu0 0.0
        %4797 = vmatprep.subr.mxu0 0.0
        %4798 = vmatpush1.msra.mxu0 0.0
        %4799 = vmatprep.subr.mxu0 0.0
        %4800 = vmatpush1.msra.mxu0 0.0
        %4801 = vmatprep.subr.mxu0 0.0
        %4802 = vmatpush1.msra.mxu0 0.0
        %4803 = vmatprep.subr.mxu0 0.0
        %4804 = vmatpush1.msra.mxu0 0.0
        %4805 = vmatprep.subr.mxu0 0.0
        %4806 = vmatpush1.msra.mxu0 0.0
        %4807 = vmatprep.subr.mxu0 0.0
        %4808 = vmatpush1.msra.mxu0 0.0
        %4809 = vmatprep.subr.mxu0 0.0
        %4810 = vmatpush1.msra.mxu0 0.0
        %4811 = vmatprep.subr.mxu0 0.0
        %4812 = vmatpush1.msra.mxu0 0.0
        %4813 = vmatprep.subr.mxu0 0.0
        %4814 = vmatpush1.msra.mxu0 0.0
        %4815 = vmatprep.subr.mxu0 0.0
        %4816 = vmatpush1.msra.mxu0 0.0
        %4817 = vmatprep.subr.mxu0 0.0
        %4818 = vmatpush1.msra.mxu0 0.0
        %4819 = vmatprep.subr.mxu0 0.0
        %4820 = vmatpush1.msra.mxu0 0.0
        %4821 = vmatprep.subr.mxu0 0.0
        %4822 = vmatpush1.msra.mxu0 0.0
        %4823 = vmatprep.mubr.f32.mxu0 0.0
        %4824 = vmatmul.mubr.f32.gmra.mrb[0].mxu0 %v4510
        %v4825 = vpop.f32.mrb[0].mxu0
        %v4826 = vadd.f32 %v4713, %v4825
        %v4827 = vpop.f32.mrb[0].mxu0
        %v4828 = vadd.f32 %v4715, %v4827
        %4829 = vmatprep.mubr.f32.mxu0 0.0
        %4830 = vmatmul.mubr.f32.gmra.mrb[0].mxu0 %v4513
        %v4831 = vpop.f32.mrb[0].mxu0
        %v4832 = vadd.f32 %v4719, %v4831
        %v4833 = vpop.f32.mrb[0].mxu0
        %v4834 = vadd.f32 %v4721, %v4833
        %4835 = vmatprep.mubr.f32.mxu0 0.0
        %4836 = vmatmul.mubr.f32.gmra.mrb[0].mxu0 %v4516
        %v4837 = vpop.f32.mrb[0].mxu0
        %v4838 = vadd.f32 %v4725, %v4837
        %v4839 = vpop.f32.mrb[0].mxu0
        %v4840 = vadd.f32 %v4727, %v4839
        %4841 = vmatprep.mubr.f32.mxu0 0.0
        %4842 = vmatmul.mubr.f32.gmra.mrb[0].mxu0 %v4519
        %v4843 = vpop.f32.mrb[0].mxu0
        %v4844 = vadd.f32 %v4731, %v4843
        %v4845 = vpop.f32.mrb[0].mxu0
        %v4846 = vadd.f32 %v4733, %v4845
        %4847 = vmatprep.mubr.f32.mxu0 0.0
        %4848 = vmatmul.mubr.f32.gmra.mrb[0].mxu0 %v4522
        %v4849 = vpop.f32.mrb[0].mxu0
        %v4850 = vadd.f32 %v4737, %v4849
        %v4851 = vpop.f32.mrb[0].mxu0
        %v4852 = vadd.f32 %v4739, %v4851
        %4853 = vmatprep.mubr.f32.mxu0 0.0
        %4854 = vmatmul.mubr.f32.gmra.mrb[0].mxu0 %v4525
        %v4855 = vpop.f32.mrb[0].mxu0
        %v4856 = vadd.f32 %v4743, %v4855
        %v4857 = vpop.f32.mrb[0].mxu0
        %v4858 = vadd.f32 %v4745, %v4857
        %4859 = vmatprep.mubr.f32.mxu0 0.0
        %4860 = vmatmul.mubr.f32.gmra.mrb[0].mxu0 %v4528
        %v4861 = vpop.f32.mrb[0].mxu0
        %v4862 = vadd.f32 %v4749, %v4861
        %v4863 = vpop.f32.mrb[0].mxu0
        %v4864 = vadd.f32 %v4751, %v4863
        %4865 = vmatprep.mubr.f32.mxu0 0.0
        %4866 = vmatmul.mubr.f32.gmra.mrb[0].mxu0 %v4531
        %v4867 = vpop.f32.mrb[0].mxu0
        %v4868 = vadd.f32 %v4755, %v4867
        %v4869 = vpop.f32.mrb[0].mxu0
        %v4870 = vadd.f32 %v4757, %v4869
        %4871 = vdwg.mxu0
        %4872 = vmatprep.subr.mxu0 0.0
        %4873 = vmatpush1.msra.mxu0 %v4246
        %4874 = vmatprep.subr.mxu0 0.0
        %4875 = vmatpush1.msra.mxu0 %v4249
        %4876 = vmatprep.subr.mxu0 0.0
        %4877 = vmatpush1.msra.mxu0 %v4252
        %4878 = vmatprep.subr.mxu0 0.0
        %4879 = vmatpush1.msra.mxu0 %v4255
        %4880 = vmatprep.subr.mxu0 0.0
        %4881 = vmatpush1.msra.mxu0 %v4258
        %4882 = vmatprep.subr.mxu0 0.0
        %4883 = vmatpush1.msra.mxu0 %v4261
        %4884 = vmatprep.subr.mxu0 0.0
        %4885 = vmatpush1.msra.mxu0 %v4264
        %4886 = vmatprep.subr.mxu0 0.0
        %4887 = vmatpush1.msra.mxu0 %v4267
        %4888 = vmatprep.subr.mxu0 0.0
        %4889 = vmatpush1.msra.mxu0 %v4270
        %4890 = vmatprep.subr.mxu0 0.0
        %4891 = vmatpush1.msra.mxu0 %v4273
        %4892 = vmatprep.subr.mxu0 0.0
        %4893 = vmatpush1.msra.mxu0 %v4276
        %4894 = vmatprep.subr.mxu0 0.0
        %4895 = vmatpush1.msra.mxu0 %v4279
        %4896 = vmatprep.subr.mxu0 0.0
        %4897 = vmatpush1.msra.mxu0 %v4282
        %4898 = vmatprep.subr.mxu0 0.0
        %4899 = vmatpush1.msra.mxu0 %v4285
        %4900 = vmatprep.subr.mxu0 0.0
        %4901 = vmatpush1.msra.mxu0 %v4288
        %4902 = vmatprep.subr.mxu0 0.0
        %4903 = vmatpush1.msra.mxu0 %v4291
        %4904 = vmatprep.subr.mxu0 0.0
        %4905 = vmatpush1.msra.mxu0 %v4294
        %4906 = vmatprep.subr.mxu0 0.0
        %4907 = vmatpush1.msra.mxu0 %v4297
        %4908 = vmatprep.subr.mxu0 0.0
        %4909 = vmatpush1.msra.mxu0 %v4300
        %4910 = vmatprep.subr.mxu0 0.0
        %4911 = vmatpush1.msra.mxu0 %v4303
        %4912 = vmatprep.subr.mxu0 0.0
        %4913 = vmatpush1.msra.mxu0 %v4306
        %4914 = vmatprep.subr.mxu0 0.0
        %4915 = vmatpush1.msra.mxu0 %v4309
        %4916 = vmatprep.subr.mxu0 0.0
        %4917 = vmatpush1.msra.mxu0 %v4312
        %4918 = vmatprep.subr.mxu0 0.0
        %4919 = vmatpush1.msra.mxu0 %v4315
        %4920 = vmatprep.subr.mxu0 0.0
        %4921 = vmatpush1.msra.mxu0 %v4318
        %4922 = vmatprep.subr.mxu0 0.0
        %4923 = vmatpush1.msra.mxu0 %v4321
        %4924 = vmatprep.subr.mxu0 0.0
        %4925 = vmatpush1.msra.mxu0 %v4324
        %4926 = vmatprep.subr.mxu0 0.0
        %4927 = vmatpush1.msra.mxu0 %v4327
        %4928 = vmatprep.subr.mxu0 0.0
        %4929 = vmatpush1.msra.mxu0 %v4330
        %4930 = vmatprep.subr.mxu0 0.0
        %4931 = vmatpush1.msra.mxu0 %v4333
        %4932 = vmatprep.subr.mxu0 0.0
        %4933 = vmatpush1.msra.mxu0 %v4336
        %4934 = vmatprep.subr.mxu0 0.0
        %4935 = vmatpush1.msra.mxu0 %v4339
        %4936 = vmatprep.mubr.f32.mxu0 %v4205
        %4937 = vmatmul.mubr.f32.gmra.mrb[0].mxu0 %v4204
        %v4938 = vpop.f32.mrb[0].mxu0
        %v4939 = vadd.f32 %v4471, %v4938
        %v4940 = vpop.f32.mrb[0].mxu0
        %4941 = vmatprep.mubr.f32.mxu0 %v4210
        %4942 = vmatmul.mubr.f32.gmra.mrb[0].mxu0 %v4209
        %v4943 = vpop.f32.mrb[0].mxu0
        %v4944 = vadd.f32 %v4476, %v4943
        %v4945 = vpop.f32.mrb[0].mxu0
        %4946 = vmatprep.mubr.f32.mxu0 %v4215
        %4947 = vmatmul.mubr.f32.gmra.mrb[0].mxu0 %v4214
        %v4948 = vpop.f32.mrb[0].mxu0
        %v4949 = vadd.f32 %v4481, %v4948
        %v4950 = vpop.f32.mrb[0].mxu0
        %4951 = vmatprep.mubr.f32.mxu0 %v4220
        %4952 = vmatmul.mubr.f32.gmra.mrb[0].mxu0 %v4219
        %v4953 = vpop.f32.mrb[0].mxu0
        %v4954 = vadd.f32 %v4486, %v4953
        %v4955 = vpop.f32.mrb[0].mxu0
        %4956 = vmatprep.mubr.f32.mxu0 %v4225
        %4957 = vmatmul.mubr.f32.gmra.mrb[0].mxu0 %v4224
        %v4958 = vpop.f32.mrb[0].mxu0
        %v4959 = vadd.f32 %v4491, %v4958
        %v4960 = vpop.f32.mrb[0].mxu0
        %4961 = vmatprep.mubr.f32.mxu0 %v4230
        %4962 = vmatmul.mubr.f32.gmra.mrb[0].mxu0 %v4229
        %v4963 = vpop.f32.mrb[0].mxu0
        %v4964 = vadd.f32 %v4496, %v4963
        %v4965 = vpop.f32.mrb[0].mxu0
        %4966 = vmatprep.mubr.f32.mxu0 %v4235
        %4967 = vmatmul.mubr.f32.gmra.mrb[0].mxu0 %v4234
        %v4968 = vpop.f32.mrb[0].mxu0
        %v4969 = vadd.f32 %v4501, %v4968
        %v4970 = vpop.f32.mrb[0].mxu0
        %4971 = vmatprep.mubr.f32.mxu0 %v4240
        %4972 = vmatmul.mubr.f32.gmra.mrb[0].mxu0 %v4239
        %v4973 = vpop.f32.mrb[0].mxu0
        %v4974 = vadd.f32 %v4506, %v4973
        %v4975 = vpop.f32.mrb[0].mxu0
        %4976 = vdwg.mxu0
        %4977 = vmatprep.subr.mxu0 0.0
        %4978 = vmatpush1.msra.mxu0 %v4342
        %4979 = vmatprep.subr.mxu0 0.0
        %4980 = vmatpush1.msra.mxu0 %v4345
        %4981 = vmatprep.subr.mxu0 0.0
        %4982 = vmatpush1.msra.mxu0 %v4348
        %4983 = vmatprep.subr.mxu0 0.0
        %4984 = vmatpush1.msra.mxu0 %v4351
        %4985 = vmatprep.subr.mxu0 0.0
        %4986 = vmatpush1.msra.mxu0 %v4354
        %4987 = vmatprep.subr.mxu0 0.0
        %4988 = vmatpush1.msra.mxu0 %v4357
        %4989 = vmatprep.subr.mxu0 0.0
        %4990 = vmatpush1.msra.mxu0 %v4360
        %4991 = vmatprep.subr.mxu0 0.0
        %4992 = vmatpush1.msra.mxu0 %v4363
        %4993 = vmatprep.subr.mxu0 0.0
        %4994 = vmatpush1.msra.mxu0 %v4366
        %4995 = vmatprep.subr.mxu0 0.0
        %4996 = vmatpush1.msra.mxu0 %v4369
        %4997 = vmatprep.subr.mxu0 0.0
        %4998 = vmatpush1.msra.mxu0 %v4372
        %4999 = vmatprep.subr.mxu0 0.0
        %5000 = vmatpush1.msra.mxu0 %v4375
        %5001 = vmatprep.subr.mxu0 0.0
        %5002 = vmatpush1.msra.mxu0 %v4378
        %5003 = vmatprep.subr.mxu0 0.0
        %5004 = vmatpush1.msra.mxu0 %v4381
        %5005 = vmatprep.subr.mxu0 0.0
        %5006 = vmatpush1.msra.mxu0 %v4384
        %5007 = vmatprep.subr.mxu0 0.0
        %5008 = vmatpush1.msra.mxu0 %v4387
        %5009 = vmatprep.subr.mxu0 0.0
        %5010 = vmatpush1.msra.mxu0 %v4390
        %5011 = vmatprep.subr.mxu0 0.0
        %5012 = vmatpush1.msra.mxu0 %v4393
        %5013 = vmatprep.subr.mxu0 0.0
        %5014 = vmatpush1.msra.mxu0 %v4396
        %5015 = vmatprep.subr.mxu0 0.0
        %5016 = vmatpush1.msra.mxu0 %v4399
        %5017 = vmatprep.subr.mxu0 0.0
        %5018 = vmatpush1.msra.mxu0 %v4402
        %5019 = vmatprep.subr.mxu0 0.0
        %5020 = vmatpush1.msra.mxu0 %v4405
        %5021 = vmatprep.subr.mxu0 0.0
        %5022 = vmatpush1.msra.mxu0 %v4408
        %5023 = vmatprep.subr.mxu0 0.0
        %5024 = vmatpush1.msra.mxu0 %v4411
        %5025 = vmatprep.subr.mxu0 0.0
        %5026 = vmatpush1.msra.mxu0 %v4414
        %5027 = vmatprep.subr.mxu0 0.0
        %5028 = vmatpush1.msra.mxu0 %v4417
        %5029 = vmatprep.subr.mxu0 0.0
        %5030 = vmatpush1.msra.mxu0 %v4420
        %5031 = vmatprep.subr.mxu0 0.0
        %5032 = vmatpush1.msra.mxu0 %v4423
        %5033 = vmatprep.subr.mxu0 0.0
        %5034 = vmatpush1.msra.mxu0 %v4426
        %5035 = vmatprep.subr.mxu0 0.0
        %5036 = vmatpush1.msra.mxu0 %v4429
        %5037 = vmatprep.subr.mxu0 0.0
        %5038 = vmatpush1.msra.mxu0 %v4432
        %5039 = vmatprep.subr.mxu0 0.0
        %5040 = vmatpush1.msra.mxu0 %v4435
        %5041 = vmatprep.mubr.f32.mxu0 %v4207
        %5042 = vmatmul.mubr.f32.gmra.mrb[0].mxu0 %v4206
        %v5043 = vpop.f32.mrb[0].mxu0
        %v5044 = vadd.f32 %v4939, %v5043
        %v5045 = vpop.f32.mrb[0].mxu0
        %5046 = vmatprep.mubr.f32.mxu0 %v4212
        %5047 = vmatmul.mubr.f32.gmra.mrb[0].mxu0 %v4211
        %v5048 = vpop.f32.mrb[0].mxu0
        %v5049 = vadd.f32 %v4944, %v5048
        %v5050 = vpop.f32.mrb[0].mxu0
        %5051 = vmatprep.mubr.f32.mxu0 %v4217
        %5052 = vmatmul.mubr.f32.gmra.mrb[0].mxu0 %v4216
        %v5053 = vpop.f32.mrb[0].mxu0
        %v5054 = vadd.f32 %v4949, %v5053
        %v5055 = vpop.f32.mrb[0].mxu0
        %5056 = vmatprep.mubr.f32.mxu0 %v4222
        %5057 = vmatmul.mubr.f32.gmra.mrb[0].mxu0 %v4221
        %v5058 = vpop.f32.mrb[0].mxu0
        %v5059 = vadd.f32 %v4954, %v5058
        %v5060 = vpop.f32.mrb[0].mxu0
        %5061 = vmatprep.mubr.f32.mxu0 %v4227
        %5062 = vmatmul.mubr.f32.gmra.mrb[0].mxu0 %v4226
        %v5063 = vpop.f32.mrb[0].mxu0
        %v5064 = vadd.f32 %v4959, %v5063
        %v5065 = vpop.f32.mrb[0].mxu0
        %5066 = vmatprep.mubr.f32.mxu0 %v4232
        %5067 = vmatmul.mubr.f32.gmra.mrb[0].mxu0 %v4231
        %v5068 = vpop.f32.mrb[0].mxu0
        %v5069 = vadd.f32 %v4964, %v5068
        %v5070 = vpop.f32.mrb[0].mxu0
        %5071 = vmatprep.mubr.f32.mxu0 %v4237
        %5072 = vmatmul.mubr.f32.gmra.mrb[0].mxu0 %v4236
        %v5073 = vpop.f32.mrb[0].mxu0
        %v5074 = vadd.f32 %v4969, %v5073
        %v5075 = vpop.f32.mrb[0].mxu0
        %5076 = vmatprep.mubr.f32.mxu0 %v4242
        %5077 = vmatmul.mubr.f32.gmra.mrb[0].mxu0 %v4241
        %v5078 = vpop.f32.mrb[0].mxu0
        %v5079 = vadd.f32 %v4974, %v5078
        %v5080 = vpop.f32.mrb[0].mxu0
        %5081 = vdwg.mxu0
        %5082 = vmatprep.subr.mxu0 0.0
        %5083 = vmatpush1.msra.mxu0 %v4438
        %5084 = vmatprep.subr.mxu0 0.0
        %5085 = vmatpush1.msra.mxu0 %v4441
        %5086 = vmatprep.subr.mxu0 0.0
        %5087 = vmatpush1.msra.mxu0 %v4444
        %5088 = vmatprep.subr.mxu0 0.0
        %5089 = vmatpush1.msra.mxu0 %v4447
        %5090 = vmatprep.subr.mxu0 0.0
        %5091 = vmatpush1.msra.mxu0 %v4450
        %5092 = vmatprep.subr.mxu0 0.0
        %5093 = vmatpush1.msra.mxu0 %v4453
        %5094 = vmatprep.subr.mxu0 0.0
        %5095 = vmatpush1.msra.mxu0 %v4456
        %5096 = vmatprep.subr.mxu0 0.0
        %5097 = vmatpush1.msra.mxu0 %v4459
        %5098 = vmatprep.subr.mxu0 0.0
        %5099 = vmatpush1.msra.mxu0 0.0
        %5100 = vmatprep.subr.mxu0 0.0
        %5101 = vmatpush1.msra.mxu0 0.0
        %5102 = vmatprep.subr.mxu0 0.0
        %5103 = vmatpush1.msra.mxu0 0.0
        %5104 = vmatprep.subr.mxu0 0.0
        %5105 = vmatpush1.msra.mxu0 0.0
        %5106 = vmatprep.subr.mxu0 0.0
        %5107 = vmatpush1.msra.mxu0 0.0
        %5108 = vmatprep.subr.mxu0 0.0
        %5109 = vmatpush1.msra.mxu0 0.0
        %5110 = vmatprep.subr.mxu0 0.0
        %5111 = vmatpush1.msra.mxu0 0.0
        %5112 = vmatprep.subr.mxu0 0.0
        %5113 = vmatpush1.msra.mxu0 0.0
        %5114 = vmatprep.subr.mxu0 0.0
        %5115 = vmatpush1.msra.mxu0 0.0
        %5116 = vmatprep.subr.mxu0 0.0
        %5117 = vmatpush1.msra.mxu0 0.0
        %5118 = vmatprep.subr.mxu0 0.0
        %5119 = vmatpush1.msra.mxu0 0.0
        %5120 = vmatprep.subr.mxu0 0.0
        %5121 = vmatpush1.msra.mxu0 0.0
        %5122 = vmatprep.subr.mxu0 0.0
        %5123 = vmatpush1.msra.mxu0 0.0
        %5124 = vmatprep.subr.mxu0 0.0
        %5125 = vmatpush1.msra.mxu0 0.0
        %5126 = vmatprep.subr.mxu0 0.0
        %5127 = vmatpush1.msra.mxu0 0.0
        %5128 = vmatprep.subr.mxu0 0.0
        %5129 = vmatpush1.msra.mxu0 0.0
        %5130 = vmatprep.subr.mxu0 0.0
        %5131 = vmatpush1.msra.mxu0 0.0
        %5132 = vmatprep.subr.mxu0 0.0
        %5133 = vmatpush1.msra.mxu0 0.0
        %5134 = vmatprep.subr.mxu0 0.0
        %5135 = vmatpush1.msra.mxu0 0.0
        %5136 = vmatprep.subr.mxu0 0.0
        %5137 = vmatpush1.msra.mxu0 0.0
        %5138 = vmatprep.subr.mxu0 0.0
        %5139 = vmatpush1.msra.mxu0 0.0
        %5140 = vmatprep.subr.mxu0 0.0
        %5141 = vmatpush1.msra.mxu0 0.0
        %5142 = vmatprep.subr.mxu0 0.0
        %5143 = vmatpush1.msra.mxu0 0.0
        %5144 = vmatprep.subr.mxu0 0.0
        %5145 = vmatpush1.msra.mxu0 0.0
        %5146 = vmatprep.mubr.f32.mxu0 0.0
        %5147 = vmatmul.mubr.f32.gmra.mrb[0].mxu0 %v4510
        %v5148 = vpop.f32.mrb[0].mxu0
        %v5149 = vadd.f32 %v5044, %v5148
        %v5150 = vpop.f32.mrb[0].mxu0
        %5151 = vmatprep.mubr.f32.mxu0 0.0
        %5152 = vmatmul.mubr.f32.gmra.mrb[0].mxu0 %v4513
        %v5153 = vpop.f32.mrb[0].mxu0
        %v5154 = vadd.f32 %v5049, %v5153
        %v5155 = vpop.f32.mrb[0].mxu0
        %5156 = vmatprep.mubr.f32.mxu0 0.0
        %5157 = vmatmul.mubr.f32.gmra.mrb[0].mxu0 %v4516
        %v5158 = vpop.f32.mrb[0].mxu0
        %v5159 = vadd.f32 %v5054, %v5158
        %v5160 = vpop.f32.mrb[0].mxu0
        %5161 = vmatprep.mubr.f32.mxu0 0.0
        %5162 = vmatmul.mubr.f32.gmra.mrb[0].mxu0 %v4519
        %v5163 = vpop.f32.mrb[0].mxu0
        %v5164 = vadd.f32 %v5059, %v5163
        %v5165 = vpop.f32.mrb[0].mxu0
        %5166 = vmatprep.mubr.f32.mxu0 0.0
        %5167 = vmatmul.mubr.f32.gmra.mrb[0].mxu0 %v4522
        %v5168 = vpop.f32.mrb[0].mxu0
        %v5169 = vadd.f32 %v5064, %v5168
        %v5170 = vpop.f32.mrb[0].mxu0
        %5171 = vmatprep.mubr.f32.mxu0 0.0
        %5172 = vmatmul.mubr.f32.gmra.mrb[0].mxu0 %v4525
        %v5173 = vpop.f32.mrb[0].mxu0
        %v5174 = vadd.f32 %v5069, %v5173
        %v5175 = vpop.f32.mrb[0].mxu0
        %5176 = vmatprep.mubr.f32.mxu0 0.0
        %5177 = vmatmul.mubr.f32.gmra.mrb[0].mxu0 %v4528
        %v5178 = vpop.f32.mrb[0].mxu0
        %v5179 = vadd.f32 %v5074, %v5178
        %v5180 = vpop.f32.mrb[0].mxu0
        %5181 = vmatprep.mubr.f32.mxu0 0.0
        %5182 = vmatmul.mubr.f32.gmra.mrb[0].mxu0 %v4531
        %v5183 = vpop.f32.mrb[0].mxu0
        %v5184 = vadd.f32 %v5079, %v5183
        %v5185 = vpop.f32.mrb[0].mxu0
        %5186 = vdwg.mxu0
        %v5187 = vmax.f32 %v4826, 0.0
        %v5188 = vmax.f32 %v4828, 0.0
        %v5189 = vmax.f32 %v5149, 0.0
        %v5190 = vmax.f32 %v4832, 0.0
        %v5191 = vmax.f32 %v4834, 0.0
        %v5192 = vmax.f32 %v5154, 0.0
        %v5193 = vmax.f32 %v4838, 0.0
        %v5194 = vmax.f32 %v4840, 0.0
        %v5195 = vmax.f32 %v5159, 0.0
        %v5196 = vmax.f32 %v4844, 0.0
        %v5197 = vmax.f32 %v4846, 0.0
        %v5198 = vmax.f32 %v5164, 0.0
        %v5199 = vmax.f32 %v4850, 0.0
        %v5200 = vmax.f32 %v4852, 0.0
        %v5201 = vmax.f32 %v5169, 0.0
        %v5202 = vmax.f32 %v4856, 0.0
        %v5203 = vmax.f32 %v4858, 0.0
        %v5204 = vmax.f32 %v5174, 0.0
        %v5205 = vmax.f32 %v4862, 0.0
        %v5206 = vmax.f32 %v4864, 0.0
        %v5207 = vmax.f32 %v5179, 0.0
        %v5208 = vmax.f32 %v4868, 0.0
        %v5209 = vmax.f32 %v4870, 0.0
        %v5210 = vmax.f32 %v5184, 0.0
        %v5211 = vld [vmem:[#allocation7] sm:$0x7]
        %v5213 = vlaneseq
        %v5214 = vshrl.u32 %v5213, 7
        %v5215 = vsub.s32 0, %v5214
        %v5216 = vrot.slane %v5211, %v5215
        %v5217 = vlaneseq
        %v5218 = vshrl.u32 %v5217, 7
        %v5219 = vsub.s32 1, %v5218
        %v5220 = vrot.slane %v5211, %v5219
        %v5221 = vlaneseq
        %v5222 = vshrl.u32 %v5221, 7
        %v5223 = vsub.s32 2, %v5222
        %v5224 = vrot.slane %v5211, %v5223
        %v5228 = vmul.f32 %v5187, %v5216
        %v5229 = vmul.f32 %v5188, %v5220
        %v5230 = vmul.f32 %v5189, %v5224
        %v5231 = vmul.f32 %v5190, %v5216
        %v5232 = vmul.f32 %v5191, %v5220
        %v5233 = vmul.f32 %v5192, %v5224
        %v5234 = vmul.f32 %v5193, %v5216
        %v5235 = vmul.f32 %v5194, %v5220
        %v5236 = vmul.f32 %v5195, %v5224
        %v5237 = vmul.f32 %v5196, %v5216
        %v5238 = vmul.f32 %v5197, %v5220
        %v5239 = vmul.f32 %v5198, %v5224
        %v5240 = vmul.f32 %v5199, %v5216
        %v5241 = vmul.f32 %v5200, %v5220
        %v5242 = vmul.f32 %v5201, %v5224
        %v5243 = vmul.f32 %v5202, %v5216
        %v5244 = vmul.f32 %v5203, %v5220
        %v5245 = vmul.f32 %v5204, %v5224
        %v5246 = vmul.f32 %v5205, %v5216
        %v5247 = vmul.f32 %v5206, %v5220
        %v5248 = vmul.f32 %v5207, %v5224
        %v5249 = vmul.f32 %v5208, %v5216
        %v5250 = vmul.f32 %v5209, %v5220
        %v5251 = vmul.f32 %v5210, %v5224
        %5252 = vst [vmem:[#allocation3] sm:$0xff] %v5228
        %5253 = vst [vmem:[#allocation3 + $0x8] sm:$0xff] %v5229
        %5254 = vst [vmem:[#allocation3 + $0x10] sm:$0xff] %v5230
        %5255 = vst [vmem:[#allocation3 + $0x18] sm:$0xff] %v5231
        %5256 = vst [vmem:[#allocation3 + $0x20] sm:$0xff] %v5232
        %5257 = vst [vmem:[#allocation3 + $0x28] sm:$0xff] %v5233
        %5258 = vst [vmem:[#allocation3 + $0x30] sm:$0xff] %v5234
        %5259 = vst [vmem:[#allocation3 + $0x38] sm:$0xff] %v5235
        %5260 = vst [vmem:[#allocation3 + $0x40] sm:$0xff] %v5236
        %5261 = vst [vmem:[#allocation3 + $0x48] sm:$0xff] %v5237
        %5262 = vst [vmem:[#allocation3 + $0x50] sm:$0xff] %v5238
        %5263 = vst [vmem:[#allocation3 + $0x58] sm:$0xff] %v5239
        %5264 = vst [vmem:[#allocation3 + $0x60] sm:$0xff] %v5240
        %5265 = vst [vmem:[#allocation3 + $0x68] sm:$0xff] %v5241
        %5266 = vst [vmem:[#allocation3 + $0x70] sm:$0xff] %v5242
        %5267 = vst [vmem:[#allocation3 + $0x78] sm:$0xff] %v5243
        %5268 = vst [vmem:[#allocation3 + $0x80] sm:$0xff] %v5244
        %5269 = vst [vmem:[#allocation3 + $0x88] sm:$0xff] %v5245
        %5270 = vst [vmem:[#allocation3 + $0x90] sm:$0xff] %v5246
        %5271 = vst [vmem:[#allocation3 + $0x98] sm:$0xff] %v5247
        %5272 = vst [vmem:[#allocation3 + $0xa0] sm:$0xff] %v5248
        %5273 = vst [vmem:[#allocation3 + $0xa8] sm:$0xff] %v5249
        %5274 = vst [vmem:[#allocation3 + $0xb0] sm:$0xff] %v5250
        %5275 = vst [vmem:[#allocation3 + $0xb8] sm:$0xff] %v5251
        %v5276 = vld [vmem:[#allocation3] sm:$0xff]
        %v5277 = vld [vmem:[#allocation3 + $0x8] sm:$0xff]
        %v5278 = vld [vmem:[#allocation3 + $0x10] sm:$0xff]
        %v5279 = vld [vmem:[#allocation3 + $0x18] sm:$0xff]
        %v5280 = vld [vmem:[#allocation3 + $0x20] sm:$0xff]
        %v5281 = vld [vmem:[#allocation3 + $0x28] sm:$0xff]
        %v5282 = vld [vmem:[#allocation3 + $0x30] sm:$0xff]
        %v5283 = vld [vmem:[#allocation3 + $0x38] sm:$0xff]
        %v5284 = vld [vmem:[#allocation3 + $0x40] sm:$0xff]
        %v5285 = vld [vmem:[#allocation3 + $0x48] sm:$0xff]
        %v5286 = vld [vmem:[#allocation3 + $0x50] sm:$0xff]
        %v5287 = vld [vmem:[#allocation3 + $0x58] sm:$0xff]
        %v5288 = vld [vmem:[#allocation3 + $0x60] sm:$0xff]
        %v5289 = vld [vmem:[#allocation3 + $0x68] sm:$0xff]
        %v5290 = vld [vmem:[#allocation3 + $0x70] sm:$0xff]
        %v5291 = vld [vmem:[#allocation3 + $0x78] sm:$0xff]
        %v5292 = vld [vmem:[#allocation3 + $0x80] sm:$0xff]
        %v5293 = vld [vmem:[#allocation3 + $0x88] sm:$0xff]
        %v5294 = vld [vmem:[#allocation3 + $0x90] sm:$0xff]
        %v5295 = vld [vmem:[#allocation3 + $0x98] sm:$0xff]
        %v5296 = vld [vmem:[#allocation3 + $0xa0] sm:$0xff]
        %v5297 = vld [vmem:[#allocation3 + $0xa8] sm:$0xff]
        %v5298 = vld [vmem:[#allocation3 + $0xb0] sm:$0xff]
        %v5299 = vld [vmem:[#allocation3 + $0xb8] sm:$0xff]
        %5300 = vrot.lane.b32.xlu0 %v5276, 19
        %v5301 = vpop.permute.xlu0 %5300
        %5302 = vrot.lane.b32.xlu0 %v5279, 19
        %v5303 = vpop.permute.xlu0 %5302
        %5304 = vrot.lane.b32.xlu0 %v5282, 19
        %v5305 = vpop.permute.xlu0 %5304
        %5306 = vrot.lane.b32.xlu0 %v5285, 19
        %v5307 = vpop.permute.xlu0 %5306
        %5308 = vrot.lane.b32.xlu0 %v5288, 19
        %v5309 = vpop.permute.xlu0 %5308
        %5310 = vrot.lane.b32.xlu0 %v5291, 19
        %v5311 = vpop.permute.xlu0 %5310
        %5312 = vrot.lane.b32.xlu0 %v5294, 19
        %v5313 = vpop.permute.xlu0 %5312
        %5314 = vrot.lane.b32.xlu0 %v5297, 19
        %v5315 = vpop.permute.xlu0 %5314
        %5316 = vrot.lane.b32.xlu0 %v5277, 19
        %v5317 = vpop.permute.xlu0 %5316
        %5318 = vrot.lane.b32.xlu0 %v5280, 19
        %v5319 = vpop.permute.xlu0 %5318
        %5320 = vrot.lane.b32.xlu0 %v5283, 19
        %v5321 = vpop.permute.xlu0 %5320
        %5322 = vrot.lane.b32.xlu0 %v5286, 19
        %v5323 = vpop.permute.xlu0 %5322
        %5324 = vrot.lane.b32.xlu0 %v5289, 19
        %v5325 = vpop.permute.xlu0 %5324
        %5326 = vrot.lane.b32.xlu0 %v5292, 19
        %v5327 = vpop.permute.xlu0 %5326
        %5328 = vrot.lane.b32.xlu0 %v5295, 19
        %v5329 = vpop.permute.xlu0 %5328
        %5330 = vrot.lane.b32.xlu0 %v5298, 19
        %v5331 = vpop.permute.xlu0 %5330
        %5332 = vrot.lane.b32.xlu0 %v5278, 19
        %v5333 = vpop.permute.xlu0 %5332
        %5334 = vrot.lane.b32.xlu0 %v5281, 19
        %v5335 = vpop.permute.xlu0 %5334
        %5336 = vrot.lane.b32.xlu0 %v5284, 19
        %v5337 = vpop.permute.xlu0 %5336
        %5338 = vrot.lane.b32.xlu0 %v5287, 19
        %v5339 = vpop.permute.xlu0 %5338
        %5340 = vrot.lane.b32.xlu0 %v5290, 19
        %v5341 = vpop.permute.xlu0 %5340
        %5342 = vrot.lane.b32.xlu0 %v5293, 19
        %v5343 = vpop.permute.xlu0 %5342
        %5344 = vrot.lane.b32.xlu0 %v5296, 19
        %v5345 = vpop.permute.xlu0 %5344
        %5346 = vrot.lane.b32.xlu0 %v5299, 19
        %v5347 = vpop.permute.xlu0 %5346
        %v5348 = vsel %vm535, %v5317, %v5333
        %v5349 = vsel %vm535, %v5319, %v5335
        %v5350 = vsel %vm535, %v5321, %v5337
        %v5351 = vsel %vm535, %v5323, %v5339
        %v5352 = vsel %vm535, %v5325, %v5341
        %v5353 = vsel %vm535, %v5327, %v5343
        %v5354 = vsel %vm535, %v5329, %v5345
        %v5355 = vsel %vm535, %v5331, %v5347
        %v5356 = vsel %vm535, %v5301, %v5317
        %v5357 = vsel %vm535, %v5303, %v5319
        %v5358 = vsel %vm535, %v5305, %v5321
        %v5359 = vsel %vm535, %v5307, %v5323
        %v5360 = vsel %vm535, %v5309, %v5325
        %v5361 = vsel %vm535, %v5311, %v5327
        %v5362 = vsel %vm535, %v5313, %v5329
        %v5363 = vsel %vm535, %v5315, %v5331
        %v5364 = vsel %vm535, %v5333, %v5301
        %v5365 = vsel %vm535, %v5335, %v5303
        %v5366 = vsel %vm535, %v5337, %v5305
        %v5367 = vsel %vm535, %v5339, %v5307
        %v5368 = vsel %vm535, %v5341, %v5309
        %v5369 = vsel %vm535, %v5343, %v5311
        %v5370 = vsel %vm535, %v5345, %v5313
        %v5371 = vsel %vm535, %v5347, %v5315
        %5372 = vst [vmem:[#allocation2] sm:$0xff] %v5364
        %5373 = vst [vmem:[#allocation2 + $0x8] sm:$0xff] %v5356
        %5374 = vst [vmem:[#allocation2 + $0x10] sm:$0xff] %v5348
        %5375 = vst [vmem:[#allocation2 + $0x18] sm:$0xff] %v5365
        %5376 = vst [vmem:[#allocation2 + $0x20] sm:$0xff] %v5357
        %5377 = vst [vmem:[#allocation2 + $0x28] sm:$0xff] %v5349
        %5378 = vst [vmem:[#allocation2 + $0x30] sm:$0xff] %v5366
        %5379 = vst [vmem:[#allocation2 + $0x38] sm:$0xff] %v5358
        %5380 = vst [vmem:[#allocation2 + $0x40] sm:$0xff] %v5350
        %5381 = vst [vmem:[#allocation2 + $0x48] sm:$0xff] %v5367
        %5382 = vst [vmem:[#allocation2 + $0x50] sm:$0xff] %v5359
        %5383 = vst [vmem:[#allocation2 + $0x58] sm:$0xff] %v5351
        %5384 = vst [vmem:[#allocation2 + $0x60] sm:$0xff] %v5368
        %5385 = vst [vmem:[#allocation2 + $0x68] sm:$0xff] %v5360
        %5386 = vst [vmem:[#allocation2 + $0x70] sm:$0xff] %v5352
        %5387 = vst [vmem:[#allocation2 + $0x78] sm:$0xff] %v5369
        %5388 = vst [vmem:[#allocation2 + $0x80] sm:$0xff] %v5361
        %5389 = vst [vmem:[#allocation2 + $0x88] sm:$0xff] %v5353
        %5390 = vst [vmem:[#allocation2 + $0x90] sm:$0xff] %v5370
        %5391 = vst [vmem:[#allocation2 + $0x98] sm:$0xff] %v5362
        %5392 = vst [vmem:[#allocation2 + $0xa0] sm:$0xff] %v5354
        %5393 = vst [vmem:[#allocation2 + $0xa8] sm:$0xff] %v5371
        %5394 = vst [vmem:[#allocation2 + $0xb0] sm:$0xff] %v5363
        %5395 = vst [vmem:[#allocation2 + $0xb8] sm:$0xff] %v5355
        %5396 = vrot.lane.b32.xlu0 %v5276, 18
        %v5397 = vpop.permute.xlu0 %5396
        %5398 = vrot.lane.b32.xlu0 %v5279, 18
        %v5399 = vpop.permute.xlu0 %5398
        %5400 = vrot.lane.b32.xlu0 %v5282, 18
        %v5401 = vpop.permute.xlu0 %5400
        %5402 = vrot.lane.b32.xlu0 %v5285, 18
        %v5403 = vpop.permute.xlu0 %5402
        %5404 = vrot.lane.b32.xlu0 %v5288, 18
        %v5405 = vpop.permute.xlu0 %5404
        %5406 = vrot.lane.b32.xlu0 %v5291, 18
        %v5407 = vpop.permute.xlu0 %5406
        %5408 = vrot.lane.b32.xlu0 %v5294, 18
        %v5409 = vpop.permute.xlu0 %5408
        %5410 = vrot.lane.b32.xlu0 %v5297, 18
        %v5411 = vpop.permute.xlu0 %5410
        %5412 = vrot.lane.b32.xlu0 %v5277, 18
        %v5413 = vpop.permute.xlu0 %5412
        %5414 = vrot.lane.b32.xlu0 %v5280, 18
        %v5415 = vpop.permute.xlu0 %5414
        %5416 = vrot.lane.b32.xlu0 %v5283, 18
        %v5417 = vpop.permute.xlu0 %5416
        %5418 = vrot.lane.b32.xlu0 %v5286, 18
        %v5419 = vpop.permute.xlu0 %5418
        %5420 = vrot.lane.b32.xlu0 %v5289, 18
        %v5421 = vpop.permute.xlu0 %5420
        %5422 = vrot.lane.b32.xlu0 %v5292, 18
        %v5423 = vpop.permute.xlu0 %5422
        %5424 = vrot.lane.b32.xlu0 %v5295, 18
        %v5425 = vpop.permute.xlu0 %5424
        %5426 = vrot.lane.b32.xlu0 %v5298, 18
        %v5427 = vpop.permute.xlu0 %5426
        %5428 = vrot.lane.b32.xlu0 %v5278, 18
        %v5429 = vpop.permute.xlu0 %5428
        %5430 = vrot.lane.b32.xlu0 %v5281, 18
        %v5431 = vpop.permute.xlu0 %5430
        %5432 = vrot.lane.b32.xlu0 %v5284, 18
        %v5433 = vpop.permute.xlu0 %5432
        %5434 = vrot.lane.b32.xlu0 %v5287, 18
        %v5435 = vpop.permute.xlu0 %5434
        %5436 = vrot.lane.b32.xlu0 %v5290, 18
        %v5437 = vpop.permute.xlu0 %5436
        %5438 = vrot.lane.b32.xlu0 %v5293, 18
        %v5439 = vpop.permute.xlu0 %5438
        %5440 = vrot.lane.b32.xlu0 %v5296, 18
        %v5441 = vpop.permute.xlu0 %5440
        %5442 = vrot.lane.b32.xlu0 %v5299, 18
        %v5443 = vpop.permute.xlu0 %5442
        %v5444 = vsel %vm553, %v5413, %v5429
        %v5445 = vsel %vm553, %v5415, %v5431
        %v5446 = vsel %vm553, %v5417, %v5433
        %v5447 = vsel %vm553, %v5419, %v5435
        %v5448 = vsel %vm553, %v5421, %v5437
        %v5449 = vsel %vm553, %v5423, %v5439
        %v5450 = vsel %vm553, %v5425, %v5441
        %v5451 = vsel %vm553, %v5427, %v5443
        %v5452 = vsel %vm553, %v5397, %v5413
        %v5453 = vsel %vm553, %v5399, %v5415
        %v5454 = vsel %vm553, %v5401, %v5417
        %v5455 = vsel %vm553, %v5403, %v5419
        %v5456 = vsel %vm553, %v5405, %v5421
        %v5457 = vsel %vm553, %v5407, %v5423
        %v5458 = vsel %vm553, %v5409, %v5425
        %v5459 = vsel %vm553, %v5411, %v5427
        %v5460 = vsel %vm553, %v5429, %v5397
        %v5461 = vsel %vm553, %v5431, %v5399
        %v5462 = vsel %vm553, %v5433, %v5401
        %v5463 = vsel %vm553, %v5435, %v5403
        %v5464 = vsel %vm553, %v5437, %v5405
        %v5465 = vsel %vm553, %v5439, %v5407
        %v5466 = vsel %vm553, %v5441, %v5409
        %v5467 = vsel %vm553, %v5443, %v5411
        %5468 = vst [vmem:[#allocation2 + $0xc0] sm:$0xff] %v5460
        %5469 = vst [vmem:[#allocation2 + $0xc8] sm:$0xff] %v5452
        %5470 = vst [vmem:[#allocation2 + $0xd0] sm:$0xff] %v5444
        %5471 = vst [vmem:[#allocation2 + $0xd8] sm:$0xff] %v5461
        %5472 = vst [vmem:[#allocation2 + $0xe0] sm:$0xff] %v5453
        %5473 = vst [vmem:[#allocation2 + $0xe8] sm:$0xff] %v5445
        %5474 = vst [vmem:[#allocation2 + $0xf0] sm:$0xff] %v5462
        %5475 = vst [vmem:[#allocation2 + $0xf8] sm:$0xff] %v5454
        %5476 = vst [vmem:[#allocation2 + $0x100] sm:$0xff] %v5446
        %5477 = vst [vmem:[#allocation2 + $0x108] sm:$0xff] %v5463
        %5478 = vst [vmem:[#allocation2 + $0x110] sm:$0xff] %v5455
        %5479 = vst [vmem:[#allocation2 + $0x118] sm:$0xff] %v5447
        %5480 = vst [vmem:[#allocation2 + $0x120] sm:$0xff] %v5464
        %5481 = vst [vmem:[#allocation2 + $0x128] sm:$0xff] %v5456
        %5482 = vst [vmem:[#allocation2 + $0x130] sm:$0xff] %v5448
        %5483 = vst [vmem:[#allocation2 + $0x138] sm:$0xff] %v5465
        %5484 = vst [vmem:[#allocation2 + $0x140] sm:$0xff] %v5457
        %5485 = vst [vmem:[#allocation2 + $0x148] sm:$0xff] %v5449
        %5486 = vst [vmem:[#allocation2 + $0x150] sm:$0xff] %v5466
        %5487 = vst [vmem:[#allocation2 + $0x158] sm:$0xff] %v5458
        %5488 = vst [vmem:[#allocation2 + $0x160] sm:$0xff] %v5450
        %5489 = vst [vmem:[#allocation2 + $0x168] sm:$0xff] %v5467
        %5490 = vst [vmem:[#allocation2 + $0x170] sm:$0xff] %v5459
        %5491 = vst [vmem:[#allocation2 + $0x178] sm:$0xff] %v5451
        %5492 = vrot.lane.b32.xlu0 %v5276, 17
        %v5493 = vpop.permute.xlu0 %5492
        %5494 = vrot.lane.b32.xlu0 %v5279, 17
        %v5495 = vpop.permute.xlu0 %5494
        %5496 = vrot.lane.b32.xlu0 %v5282, 17
        %v5497 = vpop.permute.xlu0 %5496
        %5498 = vrot.lane.b32.xlu0 %v5285, 17
        %v5499 = vpop.permute.xlu0 %5498
        %5500 = vrot.lane.b32.xlu0 %v5288, 17
        %v5501 = vpop.permute.xlu0 %5500
        %5502 = vrot.lane.b32.xlu0 %v5291, 17
        %v5503 = vpop.permute.xlu0 %5502
        %5504 = vrot.lane.b32.xlu0 %v5294, 17
        %v5505 = vpop.permute.xlu0 %5504
        %5506 = vrot.lane.b32.xlu0 %v5297, 17
        %v5507 = vpop.permute.xlu0 %5506
        %5508 = vrot.lane.b32.xlu0 %v5277, 17
        %v5509 = vpop.permute.xlu0 %5508
        %5510 = vrot.lane.b32.xlu0 %v5280, 17
        %v5511 = vpop.permute.xlu0 %5510
        %5512 = vrot.lane.b32.xlu0 %v5283, 17
        %v5513 = vpop.permute.xlu0 %5512
        %5514 = vrot.lane.b32.xlu0 %v5286, 17
        %v5515 = vpop.permute.xlu0 %5514
        %5516 = vrot.lane.b32.xlu0 %v5289, 17
        %v5517 = vpop.permute.xlu0 %5516
        %5518 = vrot.lane.b32.xlu0 %v5292, 17
        %v5519 = vpop.permute.xlu0 %5518
        %5520 = vrot.lane.b32.xlu0 %v5295, 17
        %v5521 = vpop.permute.xlu0 %5520
        %5522 = vrot.lane.b32.xlu0 %v5298, 17
        %v5523 = vpop.permute.xlu0 %5522
        %5524 = vrot.lane.b32.xlu0 %v5278, 17
        %v5525 = vpop.permute.xlu0 %5524
        %5526 = vrot.lane.b32.xlu0 %v5281, 17
        %v5527 = vpop.permute.xlu0 %5526
        %5528 = vrot.lane.b32.xlu0 %v5284, 17
        %v5529 = vpop.permute.xlu0 %5528
        %5530 = vrot.lane.b32.xlu0 %v5287, 17
        %v5531 = vpop.permute.xlu0 %5530
        %5532 = vrot.lane.b32.xlu0 %v5290, 17
        %v5533 = vpop.permute.xlu0 %5532
        %5534 = vrot.lane.b32.xlu0 %v5293, 17
        %v5535 = vpop.permute.xlu0 %5534
        %5536 = vrot.lane.b32.xlu0 %v5296, 17
        %v5537 = vpop.permute.xlu0 %5536
        %5538 = vrot.lane.b32.xlu0 %v5299, 17
        %v5539 = vpop.permute.xlu0 %5538
        %v5540 = vsel %vm1091, %v5509, %v5525
        %v5541 = vsel %vm1091, %v5511, %v5527
        %v5542 = vsel %vm1091, %v5513, %v5529
        %v5543 = vsel %vm1091, %v5515, %v5531
        %v5544 = vsel %vm1091, %v5517, %v5533
        %v5545 = vsel %vm1091, %v5519, %v5535
        %v5546 = vsel %vm1091, %v5521, %v5537
        %v5547 = vsel %vm1091, %v5523, %v5539
        %v5548 = vsel %vm1091, %v5493, %v5509
        %v5549 = vsel %vm1091, %v5495, %v5511
        %v5550 = vsel %vm1091, %v5497, %v5513
        %v5551 = vsel %vm1091, %v5499, %v5515
        %v5552 = vsel %vm1091, %v5501, %v5517
        %v5553 = vsel %vm1091, %v5503, %v5519
        %v5554 = vsel %vm1091, %v5505, %v5521
        %v5555 = vsel %vm1091, %v5507, %v5523
        %v5556 = vsel %vm1091, %v5525, %v5493
        %v5557 = vsel %vm1091, %v5527, %v5495
        %v5558 = vsel %vm1091, %v5529, %v5497
        %v5559 = vsel %vm1091, %v5531, %v5499
        %v5560 = vsel %vm1091, %v5533, %v5501
        %v5561 = vsel %vm1091, %v5535, %v5503
        %v5562 = vsel %vm1091, %v5537, %v5505
        %v5563 = vsel %vm1091, %v5539, %v5507
        %5564 = vst [vmem:[#allocation2 + $0x180] sm:$0xff] %v5556
        %5565 = vst [vmem:[#allocation2 + $0x188] sm:$0xff] %v5548
        %5566 = vst [vmem:[#allocation2 + $0x190] sm:$0xff] %v5540
        %5567 = vst [vmem:[#allocation2 + $0x198] sm:$0xff] %v5557
        %5568 = vst [vmem:[#allocation2 + $0x1a0] sm:$0xff] %v5549
        %5569 = vst [vmem:[#allocation2 + $0x1a8] sm:$0xff] %v5541
        %5570 = vst [vmem:[#allocation2 + $0x1b0] sm:$0xff] %v5558
        %5571 = vst [vmem:[#allocation2 + $0x1b8] sm:$0xff] %v5550
        %5572 = vst [vmem:[#allocation2 + $0x1c0] sm:$0xff] %v5542
        %5573 = vst [vmem:[#allocation2 + $0x1c8] sm:$0xff] %v5559
        %5574 = vst [vmem:[#allocation2 + $0x1d0] sm:$0xff] %v5551
        %5575 = vst [vmem:[#allocation2 + $0x1d8] sm:$0xff] %v5543
        %5576 = vst [vmem:[#allocation2 + $0x1e0] sm:$0xff] %v5560
        %5577 = vst [vmem:[#allocation2 + $0x1e8] sm:$0xff] %v5552
        %5578 = vst [vmem:[#allocation2 + $0x1f0] sm:$0xff] %v5544
        %5579 = vst [vmem:[#allocation2 + $0x1f8] sm:$0xff] %v5561
        %5580 = vst [vmem:[#allocation2 + $0x200] sm:$0xff] %v5553
        %5581 = vst [vmem:[#allocation2 + $0x208] sm:$0xff] %v5545
        %5582 = vst [vmem:[#allocation2 + $0x210] sm:$0xff] %v5562
        %5583 = vst [vmem:[#allocation2 + $0x218] sm:$0xff] %v5554
        %5584 = vst [vmem:[#allocation2 + $0x220] sm:$0xff] %v5546
        %5585 = vst [vmem:[#allocation2 + $0x228] sm:$0xff] %v5563
        %5586 = vst [vmem:[#allocation2 + $0x230] sm:$0xff] %v5555
        %5587 = vst [vmem:[#allocation2 + $0x238] sm:$0xff] %v5547
        %5588 = vrot.lane.b32.xlu0 %v5276, 1
        %v5589 = vpop.permute.xlu0 %5588
        %5590 = vrot.lane.b32.xlu0 %v5279, 1
        %v5591 = vpop.permute.xlu0 %5590
        %5592 = vrot.lane.b32.xlu0 %v5282, 1
        %v5593 = vpop.permute.xlu0 %5592
        %5594 = vrot.lane.b32.xlu0 %v5285, 1
        %v5595 = vpop.permute.xlu0 %5594
        %5596 = vrot.lane.b32.xlu0 %v5288, 1
        %v5597 = vpop.permute.xlu0 %5596
        %5598 = vrot.lane.b32.xlu0 %v5291, 1
        %v5599 = vpop.permute.xlu0 %5598
        %5600 = vrot.lane.b32.xlu0 %v5294, 1
        %v5601 = vpop.permute.xlu0 %5600
        %5602 = vrot.lane.b32.xlu0 %v5297, 1
        %v5603 = vpop.permute.xlu0 %5602
        %5604 = vrot.lane.b32.xlu0 %v5277, 1
        %v5605 = vpop.permute.xlu0 %5604
        %5606 = vrot.lane.b32.xlu0 %v5280, 1
        %v5607 = vpop.permute.xlu0 %5606
        %5608 = vrot.lane.b32.xlu0 %v5283, 1
        %v5609 = vpop.permute.xlu0 %5608
        %5610 = vrot.lane.b32.xlu0 %v5286, 1
        %v5611 = vpop.permute.xlu0 %5610
        %5612 = vrot.lane.b32.xlu0 %v5289, 1
        %v5613 = vpop.permute.xlu0 %5612
        %5614 = vrot.lane.b32.xlu0 %v5292, 1
        %v5615 = vpop.permute.xlu0 %5614
        %5616 = vrot.lane.b32.xlu0 %v5295, 1
        %v5617 = vpop.permute.xlu0 %5616
        %5618 = vrot.lane.b32.xlu0 %v5298, 1
        %v5619 = vpop.permute.xlu0 %5618
        %5620 = vrot.lane.b32.xlu0 %v5278, 1
        %v5621 = vpop.permute.xlu0 %5620
        %5622 = vrot.lane.b32.xlu0 %v5281, 1
        %v5623 = vpop.permute.xlu0 %5622
        %5624 = vrot.lane.b32.xlu0 %v5284, 1
        %v5625 = vpop.permute.xlu0 %5624
        %5626 = vrot.lane.b32.xlu0 %v5287, 1
        %v5627 = vpop.permute.xlu0 %5626
        %5628 = vrot.lane.b32.xlu0 %v5290, 1
        %v5629 = vpop.permute.xlu0 %5628
        %5630 = vrot.lane.b32.xlu0 %v5293, 1
        %v5631 = vpop.permute.xlu0 %5630
        %5632 = vrot.lane.b32.xlu0 %v5296, 1
        %v5633 = vpop.permute.xlu0 %5632
        %5634 = vrot.lane.b32.xlu0 %v5299, 1
        %v5635 = vpop.permute.xlu0 %5634
        %v5636 = vsel %vm1400, %v5605, %v5621
        %v5637 = vsel %vm1400, %v5607, %v5623
        %v5638 = vsel %vm1400, %v5609, %v5625
        %v5639 = vsel %vm1400, %v5611, %v5627
        %v5640 = vsel %vm1400, %v5613, %v5629
        %v5641 = vsel %vm1400, %v5615, %v5631
        %v5642 = vsel %vm1400, %v5617, %v5633
        %v5643 = vsel %vm1400, %v5619, %v5635
        %v5644 = vsel %vm1400, %v5589, %v5605
        %v5645 = vsel %vm1400, %v5591, %v5607
        %v5646 = vsel %vm1400, %v5593, %v5609
        %v5647 = vsel %vm1400, %v5595, %v5611
        %v5648 = vsel %vm1400, %v5597, %v5613
        %v5649 = vsel %vm1400, %v5599, %v5615
        %v5650 = vsel %vm1400, %v5601, %v5617
        %v5651 = vsel %vm1400, %v5603, %v5619
        %v5652 = vsel %vm1400, %v5621, %v5589
        %v5653 = vsel %vm1400, %v5623, %v5591
        %v5654 = vsel %vm1400, %v5625, %v5593
        %v5655 = vsel %vm1400, %v5627, %v5595
        %v5656 = vsel %vm1400, %v5629, %v5597
        %v5657 = vsel %vm1400, %v5631, %v5599
        %v5658 = vsel %vm1400, %v5633, %v5601
        %v5659 = vsel %vm1400, %v5635, %v5603
        %5660 = vst [vmem:[#allocation2 + $0x240] sm:$0xff] %v5652
        %5661 = vst [vmem:[#allocation2 + $0x248] sm:$0xff] %v5644
        %5662 = vst [vmem:[#allocation2 + $0x250] sm:$0xff] %v5636
        %5663 = vst [vmem:[#allocation2 + $0x258] sm:$0xff] %v5653
        %5664 = vst [vmem:[#allocation2 + $0x260] sm:$0xff] %v5645
        %5665 = vst [vmem:[#allocation2 + $0x268] sm:$0xff] %v5637
        %5666 = vst [vmem:[#allocation2 + $0x270] sm:$0xff] %v5654
        %5667 = vst [vmem:[#allocation2 + $0x278] sm:$0xff] %v5646
        %5668 = vst [vmem:[#allocation2 + $0x280] sm:$0xff] %v5638
        %5669 = vst [vmem:[#allocation2 + $0x288] sm:$0xff] %v5655
        %5670 = vst [vmem:[#allocation2 + $0x290] sm:$0xff] %v5647
        %5671 = vst [vmem:[#allocation2 + $0x298] sm:$0xff] %v5639
        %5672 = vst [vmem:[#allocation2 + $0x2a0] sm:$0xff] %v5656
        %5673 = vst [vmem:[#allocation2 + $0x2a8] sm:$0xff] %v5648
        %5674 = vst [vmem:[#allocation2 + $0x2b0] sm:$0xff] %v5640
        %5675 = vst [vmem:[#allocation2 + $0x2b8] sm:$0xff] %v5657
        %5676 = vst [vmem:[#allocation2 + $0x2c0] sm:$0xff] %v5649
        %5677 = vst [vmem:[#allocation2 + $0x2c8] sm:$0xff] %v5641
        %5678 = vst [vmem:[#allocation2 + $0x2d0] sm:$0xff] %v5658
        %5679 = vst [vmem:[#allocation2 + $0x2d8] sm:$0xff] %v5650
        %5680 = vst [vmem:[#allocation2 + $0x2e0] sm:$0xff] %v5642
        %5681 = vst [vmem:[#allocation2 + $0x2e8] sm:$0xff] %v5659
        %5682 = vst [vmem:[#allocation2 + $0x2f0] sm:$0xff] %v5651
        %5683 = vst [vmem:[#allocation2 + $0x2f8] sm:$0xff] %v5643
        %5684 = vst [vmem:[#allocation2 + $0x300] sm:$0xff] %v5276
        %5685 = vst [vmem:[#allocation2 + $0x308] sm:$0xff] %v5277
        %5686 = vst [vmem:[#allocation2 + $0x310] sm:$0xff] %v5278
        %5687 = vst [vmem:[#allocation2 + $0x318] sm:$0xff] %v5279
        %5688 = vst [vmem:[#allocation2 + $0x320] sm:$0xff] %v5280
        %5689 = vst [vmem:[#allocation2 + $0x328] sm:$0xff] %v5281
        %5690 = vst [vmem:[#allocation2 + $0x330] sm:$0xff] %v5282
        %5691 = vst [vmem:[#allocation2 + $0x338] sm:$0xff] %v5283
        %5692 = vst [vmem:[#allocation2 + $0x340] sm:$0xff] %v5284
        %5693 = vst [vmem:[#allocation2 + $0x348] sm:$0xff] %v5285
        %5694 = vst [vmem:[#allocation2 + $0x350] sm:$0xff] %v5286
        %5695 = vst [vmem:[#allocation2 + $0x358] sm:$0xff] %v5287
        %5696 = vst [vmem:[#allocation2 + $0x360] sm:$0xff] %v5288
        %5697 = vst [vmem:[#allocation2 + $0x368] sm:$0xff] %v5289
        %5698 = vst [vmem:[#allocation2 + $0x370] sm:$0xff] %v5290
        %5699 = vst [vmem:[#allocation2 + $0x378] sm:$0xff] %v5291
        %5700 = vst [vmem:[#allocation2 + $0x380] sm:$0xff] %v5292
        %5701 = vst [vmem:[#allocation2 + $0x388] sm:$0xff] %v5293
        %5702 = vst [vmem:[#allocation2 + $0x390] sm:$0xff] %v5294
        %5703 = vst [vmem:[#allocation2 + $0x398] sm:$0xff] %v5295
        %5704 = vst [vmem:[#allocation2 + $0x3a0] sm:$0xff] %v5296
        %5705 = vst [vmem:[#allocation2 + $0x3a8] sm:$0xff] %v5297
        %5706 = vst [vmem:[#allocation2 + $0x3b0] sm:$0xff] %v5298
        %5707 = vst [vmem:[#allocation2 + $0x3b8] sm:$0xff] %v5299
        %5708 = vrot.lane.b32.xlu0 %v5276, 127
        %v5709 = vpop.permute.xlu0 %5708
        %5710 = vrot.lane.b32.xlu0 %v5279, 127
        %v5711 = vpop.permute.xlu0 %5710
        %5712 = vrot.lane.b32.xlu0 %v5282, 127
        %v5713 = vpop.permute.xlu0 %5712
        %5714 = vrot.lane.b32.xlu0 %v5285, 127
        %v5715 = vpop.permute.xlu0 %5714
        %5716 = vrot.lane.b32.xlu0 %v5288, 127
        %v5717 = vpop.permute.xlu0 %5716
        %5718 = vrot.lane.b32.xlu0 %v5291, 127
        %v5719 = vpop.permute.xlu0 %5718
        %5720 = vrot.lane.b32.xlu0 %v5294, 127
        %v5721 = vpop.permute.xlu0 %5720
        %5722 = vrot.lane.b32.xlu0 %v5297, 127
        %v5723 = vpop.permute.xlu0 %5722
        %5724 = vrot.lane.b32.xlu0 %v5277, 127
        %v5725 = vpop.permute.xlu0 %5724
        %5726 = vrot.lane.b32.xlu0 %v5280, 127
        %v5727 = vpop.permute.xlu0 %5726
        %5728 = vrot.lane.b32.xlu0 %v5283, 127
        %v5729 = vpop.permute.xlu0 %5728
        %5730 = vrot.lane.b32.xlu0 %v5286, 127
        %v5731 = vpop.permute.xlu0 %5730
        %5732 = vrot.lane.b32.xlu0 %v5289, 127
        %v5733 = vpop.permute.xlu0 %5732
        %5734 = vrot.lane.b32.xlu0 %v5292, 127
        %v5735 = vpop.permute.xlu0 %5734
        %5736 = vrot.lane.b32.xlu0 %v5295, 127
        %v5737 = vpop.permute.xlu0 %5736
        %5738 = vrot.lane.b32.xlu0 %v5298, 127
        %v5739 = vpop.permute.xlu0 %5738
        %5740 = vrot.lane.b32.xlu0 %v5278, 127
        %v5741 = vpop.permute.xlu0 %5740
        %5742 = vrot.lane.b32.xlu0 %v5281, 127
        %v5743 = vpop.permute.xlu0 %5742
        %5744 = vrot.lane.b32.xlu0 %v5284, 127
        %v5745 = vpop.permute.xlu0 %5744
        %5746 = vrot.lane.b32.xlu0 %v5287, 127
        %v5747 = vpop.permute.xlu0 %5746
        %5748 = vrot.lane.b32.xlu0 %v5290, 127
        %v5749 = vpop.permute.xlu0 %5748
        %5750 = vrot.lane.b32.xlu0 %v5293, 127
        %v5751 = vpop.permute.xlu0 %5750
        %5752 = vrot.lane.b32.xlu0 %v5296, 127
        %v5753 = vpop.permute.xlu0 %5752
        %5754 = vrot.lane.b32.xlu0 %v5299, 127
        %v5755 = vpop.permute.xlu0 %5754
        %v5756 = vsel %vm2005, %v5725, %v5741
        %v5757 = vsel %vm2005, %v5727, %v5743
        %v5758 = vsel %vm2005, %v5729, %v5745
        %v5759 = vsel %vm2005, %v5731, %v5747
        %v5760 = vsel %vm2005, %v5733, %v5749
        %v5761 = vsel %vm2005, %v5735, %v5751
        %v5762 = vsel %vm2005, %v5737, %v5753
        %v5763 = vsel %vm2005, %v5739, %v5755
        %v5764 = vsel %vm2005, %v5709, %v5725
        %v5765 = vsel %vm2005, %v5711, %v5727
        %v5766 = vsel %vm2005, %v5713, %v5729
        %v5767 = vsel %vm2005, %v5715, %v5731
        %v5768 = vsel %vm2005, %v5717, %v5733
        %v5769 = vsel %vm2005, %v5719, %v5735
        %v5770 = vsel %vm2005, %v5721, %v5737
        %v5771 = vsel %vm2005, %v5723, %v5739
        %v5772 = vsel %vm2005, %v5741, %v5709
        %v5773 = vsel %vm2005, %v5743, %v5711
        %v5774 = vsel %vm2005, %v5745, %v5713
        %v5775 = vsel %vm2005, %v5747, %v5715
        %v5776 = vsel %vm2005, %v5749, %v5717
        %v5777 = vsel %vm2005, %v5751, %v5719
        %v5778 = vsel %vm2005, %v5753, %v5721
        %v5779 = vsel %vm2005, %v5755, %v5723
        %5780 = vst [vmem:[#allocation2 + $0x3c0] sm:$0xff] %v5764
        %5781 = vst [vmem:[#allocation2 + $0x3c8] sm:$0xff] %v5756
        %5782 = vst [vmem:[#allocation2 + $0x3d0] sm:$0xff] %v5772
        %5783 = vst [vmem:[#allocation2 + $0x3d8] sm:$0xff] %v5765
        %5784 = vst [vmem:[#allocation2 + $0x3e0] sm:$0xff] %v5757
        %5785 = vst [vmem:[#allocation2 + $0x3e8] sm:$0xff] %v5773
        %5786 = vst [vmem:[#allocation2 + $0x3f0] sm:$0xff] %v5766
        %5787 = vst [vmem:[#allocation2 + $0x3f8] sm:$0xff] %v5758
        %5788 = vst [vmem:[#allocation2 + $0x400] sm:$0xff] %v5774
        %5789 = vst [vmem:[#allocation2 + $0x408] sm:$0xff] %v5767
        %5790 = vst [vmem:[#allocation2 + $0x410] sm:$0xff] %v5759
        %5791 = vst [vmem:[#allocation2 + $0x418] sm:$0xff] %v5775
        %5792 = vst [vmem:[#allocation2 + $0x420] sm:$0xff] %v5768
        %5793 = vst [vmem:[#allocation2 + $0x428] sm:$0xff] %v5760
        %5794 = vst [vmem:[#allocation2 + $0x430] sm:$0xff] %v5776
        %5795 = vst [vmem:[#allocation2 + $0x438] sm:$0xff] %v5769
        %5796 = vst [vmem:[#allocation2 + $0x440] sm:$0xff] %v5761
        %5797 = vst [vmem:[#allocation2 + $0x448] sm:$0xff] %v5777
        %5798 = vst [vmem:[#allocation2 + $0x450] sm:$0xff] %v5770
        %5799 = vst [vmem:[#allocation2 + $0x458] sm:$0xff] %v5762
        %5800 = vst [vmem:[#allocation2 + $0x460] sm:$0xff] %v5778
        %5801 = vst [vmem:[#allocation2 + $0x468] sm:$0xff] %v5771
        %5802 = vst [vmem:[#allocation2 + $0x470] sm:$0xff] %v5763
        %5803 = vst [vmem:[#allocation2 + $0x478] sm:$0xff] %v5779
        %5804 = vrot.lane.b32.xlu0 %v5276, 111
        %v5805 = vpop.permute.xlu0 %5804
        %5806 = vrot.lane.b32.xlu0 %v5279, 111
        %v5807 = vpop.permute.xlu0 %5806
        %5808 = vrot.lane.b32.xlu0 %v5282, 111
        %v5809 = vpop.permute.xlu0 %5808
        %5810 = vrot.lane.b32.xlu0 %v5285, 111
        %v5811 = vpop.permute.xlu0 %5810
        %5812 = vrot.lane.b32.xlu0 %v5288, 111
        %v5813 = vpop.permute.xlu0 %5812
        %5814 = vrot.lane.b32.xlu0 %v5291, 111
        %v5815 = vpop.permute.xlu0 %5814
        %5816 = vrot.lane.b32.xlu0 %v5294, 111
        %v5817 = vpop.permute.xlu0 %5816
        %5818 = vrot.lane.b32.xlu0 %v5297, 111
        %v5819 = vpop.permute.xlu0 %5818
        %5820 = vrot.lane.b32.xlu0 %v5277, 111
        %v5821 = vpop.permute.xlu0 %5820
        %5822 = vrot.lane.b32.xlu0 %v5280, 111
        %v5823 = vpop.permute.xlu0 %5822
        %5824 = vrot.lane.b32.xlu0 %v5283, 111
        %v5825 = vpop.permute.xlu0 %5824
        %5826 = vrot.lane.b32.xlu0 %v5286, 111
        %v5827 = vpop.permute.xlu0 %5826
        %5828 = vrot.lane.b32.xlu0 %v5289, 111
        %v5829 = vpop.permute.xlu0 %5828
        %5830 = vrot.lane.b32.xlu0 %v5292, 111
        %v5831 = vpop.permute.xlu0 %5830
        %5832 = vrot.lane.b32.xlu0 %v5295, 111
        %v5833 = vpop.permute.xlu0 %5832
        %5834 = vrot.lane.b32.xlu0 %v5298, 111
        %v5835 = vpop.permute.xlu0 %5834
        %5836 = vrot.lane.b32.xlu0 %v5278, 111
        %v5837 = vpop.permute.xlu0 %5836
        %5838 = vrot.lane.b32.xlu0 %v5281, 111
        %v5839 = vpop.permute.xlu0 %5838
        %5840 = vrot.lane.b32.xlu0 %v5284, 111
        %v5841 = vpop.permute.xlu0 %5840
        %5842 = vrot.lane.b32.xlu0 %v5287, 111
        %v5843 = vpop.permute.xlu0 %5842
        %5844 = vrot.lane.b32.xlu0 %v5290, 111
        %v5845 = vpop.permute.xlu0 %5844
        %5846 = vrot.lane.b32.xlu0 %v5293, 111
        %v5847 = vpop.permute.xlu0 %5846
        %5848 = vrot.lane.b32.xlu0 %v5296, 111
        %v5849 = vpop.permute.xlu0 %5848
        %5850 = vrot.lane.b32.xlu0 %v5299, 111
        %v5851 = vpop.permute.xlu0 %5850
        %v5852 = vsel %vm2314, %v5821, %v5837
        %v5853 = vsel %vm2314, %v5823, %v5839
        %v5854 = vsel %vm2314, %v5825, %v5841
        %v5855 = vsel %vm2314, %v5827, %v5843
        %v5856 = vsel %vm2314, %v5829, %v5845
        %v5857 = vsel %vm2314, %v5831, %v5847
        %v5858 = vsel %vm2314, %v5833, %v5849
        %v5859 = vsel %vm2314, %v5835, %v5851
        %v5860 = vsel %vm2314, %v5805, %v5821
        %v5861 = vsel %vm2314, %v5807, %v5823
        %v5862 = vsel %vm2314, %v5809, %v5825
        %v5863 = vsel %vm2314, %v5811, %v5827
        %v5864 = vsel %vm2314, %v5813, %v5829
        %v5865 = vsel %vm2314, %v5815, %v5831
        %v5866 = vsel %vm2314, %v5817, %v5833
        %v5867 = vsel %vm2314, %v5819, %v5835
        %v5868 = vsel %vm2314, %v5837, %v5805
        %v5869 = vsel %vm2314, %v5839, %v5807
        %v5870 = vsel %vm2314, %v5841, %v5809
        %v5871 = vsel %vm2314, %v5843, %v5811
        %v5872 = vsel %vm2314, %v5845, %v5813
        %v5873 = vsel %vm2314, %v5847, %v5815
        %v5874 = vsel %vm2314, %v5849, %v5817
        %v5875 = vsel %vm2314, %v5851, %v5819
        %5876 = vst [vmem:[#allocation2 + $0x480] sm:$0xff] %v5860
        %5877 = vst [vmem:[#allocation2 + $0x488] sm:$0xff] %v5852
        %5878 = vst [vmem:[#allocation2 + $0x490] sm:$0xff] %v5868
        %5879 = vst [vmem:[#allocation2 + $0x498] sm:$0xff] %v5861
        %5880 = vst [vmem:[#allocation2 + $0x4a0] sm:$0xff] %v5853
        %5881 = vst [vmem:[#allocation2 + $0x4a8] sm:$0xff] %v5869
        %5882 = vst [vmem:[#allocation2 + $0x4b0] sm:$0xff] %v5862
        %5883 = vst [vmem:[#allocation2 + $0x4b8] sm:$0xff] %v5854
        %5884 = vst [vmem:[#allocation2 + $0x4c0] sm:$0xff] %v5870
        %5885 = vst [vmem:[#allocation2 + $0x4c8] sm:$0xff] %v5863
        %5886 = vst [vmem:[#allocation2 + $0x4d0] sm:$0xff] %v5855
        %5887 = vst [vmem:[#allocation2 + $0x4d8] sm:$0xff] %v5871
        %5888 = vst [vmem:[#allocation2 + $0x4e0] sm:$0xff] %v5864
        %5889 = vst [vmem:[#allocation2 + $0x4e8] sm:$0xff] %v5856
        %5890 = vst [vmem:[#allocation2 + $0x4f0] sm:$0xff] %v5872
        %5891 = vst [vmem:[#allocation2 + $0x4f8] sm:$0xff] %v5865
        %5892 = vst [vmem:[#allocation2 + $0x500] sm:$0xff] %v5857
        %5893 = vst [vmem:[#allocation2 + $0x508] sm:$0xff] %v5873
        %5894 = vst [vmem:[#allocation2 + $0x510] sm:$0xff] %v5866
        %5895 = vst [vmem:[#allocation2 + $0x518] sm:$0xff] %v5858
        %5896 = vst [vmem:[#allocation2 + $0x520] sm:$0xff] %v5874
        %5897 = vst [vmem:[#allocation2 + $0x528] sm:$0xff] %v5867
        %5898 = vst [vmem:[#allocation2 + $0x530] sm:$0xff] %v5859
        %5899 = vst [vmem:[#allocation2 + $0x538] sm:$0xff] %v5875
        %5900 = vrot.lane.b32.xlu0 %v5276, 110
        %v5901 = vpop.permute.xlu0 %5900
        %5902 = vrot.lane.b32.xlu0 %v5279, 110
        %v5903 = vpop.permute.xlu0 %5902
        %5904 = vrot.lane.b32.xlu0 %v5282, 110
        %v5905 = vpop.permute.xlu0 %5904
        %5906 = vrot.lane.b32.xlu0 %v5285, 110
        %v5907 = vpop.permute.xlu0 %5906
        %5908 = vrot.lane.b32.xlu0 %v5288, 110
        %v5909 = vpop.permute.xlu0 %5908
        %5910 = vrot.lane.b32.xlu0 %v5291, 110
        %v5911 = vpop.permute.xlu0 %5910
        %5912 = vrot.lane.b32.xlu0 %v5294, 110
        %v5913 = vpop.permute.xlu0 %5912
        %5914 = vrot.lane.b32.xlu0 %v5297, 110
        %v5915 = vpop.permute.xlu0 %5914
        %5916 = vrot.lane.b32.xlu0 %v5277, 110
        %v5917 = vpop.permute.xlu0 %5916
        %5918 = vrot.lane.b32.xlu0 %v5280, 110
        %v5919 = vpop.permute.xlu0 %5918
        %5920 = vrot.lane.b32.xlu0 %v5283, 110
        %v5921 = vpop.permute.xlu0 %5920
        %5922 = vrot.lane.b32.xlu0 %v5286, 110
        %v5923 = vpop.permute.xlu0 %5922
        %5924 = vrot.lane.b32.xlu0 %v5289, 110
        %v5925 = vpop.permute.xlu0 %5924
        %5926 = vrot.lane.b32.xlu0 %v5292, 110
        %v5927 = vpop.permute.xlu0 %5926
        %5928 = vrot.lane.b32.xlu0 %v5295, 110
        %v5929 = vpop.permute.xlu0 %5928
        %5930 = vrot.lane.b32.xlu0 %v5298, 110
        %v5931 = vpop.permute.xlu0 %5930
        %5932 = vrot.lane.b32.xlu0 %v5278, 110
        %v5933 = vpop.permute.xlu0 %5932
        %5934 = vrot.lane.b32.xlu0 %v5281, 110
        %v5935 = vpop.permute.xlu0 %5934
        %5936 = vrot.lane.b32.xlu0 %v5284, 110
        %v5937 = vpop.permute.xlu0 %5936
        %5938 = vrot.lane.b32.xlu0 %v5287, 110
        %v5939 = vpop.permute.xlu0 %5938
        %5940 = vrot.lane.b32.xlu0 %v5290, 110
        %v5941 = vpop.permute.xlu0 %5940
        %5942 = vrot.lane.b32.xlu0 %v5293, 110
        %v5943 = vpop.permute.xlu0 %5942
        %5944 = vrot.lane.b32.xlu0 %v5296, 110
        %v5945 = vpop.permute.xlu0 %5944
        %5946 = vrot.lane.b32.xlu0 %v5299, 110
        %v5947 = vpop.permute.xlu0 %5946
        %v5948 = vsel %vm2623, %v5917, %v5933
        %v5949 = vsel %vm2623, %v5919, %v5935
        %v5950 = vsel %vm2623, %v5921, %v5937
        %v5951 = vsel %vm2623, %v5923, %v5939
        %v5952 = vsel %vm2623, %v5925, %v5941
        %v5953 = vsel %vm2623, %v5927, %v5943
        %v5954 = vsel %vm2623, %v5929, %v5945
        %v5955 = vsel %vm2623, %v5931, %v5947
        %v5956 = vsel %vm2623, %v5901, %v5917
        %v5957 = vsel %vm2623, %v5903, %v5919
        %v5958 = vsel %vm2623, %v5905, %v5921
        %v5959 = vsel %vm2623, %v5907, %v5923
        %v5960 = vsel %vm2623, %v5909, %v5925
        %v5961 = vsel %vm2623, %v5911, %v5927
        %v5962 = vsel %vm2623, %v5913, %v5929
        %v5963 = vsel %vm2623, %v5915, %v5931
        %v5964 = vsel %vm2623, %v5933, %v5901
        %v5965 = vsel %vm2623, %v5935, %v5903
        %v5966 = vsel %vm2623, %v5937, %v5905
        %v5967 = vsel %vm2623, %v5939, %v5907
        %v5968 = vsel %vm2623, %v5941, %v5909
        %v5969 = vsel %vm2623, %v5943, %v5911
        %v5970 = vsel %vm2623, %v5945, %v5913
        %v5971 = vsel %vm2623, %v5947, %v5915
        %5972 = vst [vmem:[#allocation2 + $0x540] sm:$0xff] %v5956
        %5973 = vst [vmem:[#allocation2 + $0x548] sm:$0xff] %v5948
        %5974 = vst [vmem:[#allocation2 + $0x550] sm:$0xff] %v5964
        %5975 = vst [vmem:[#allocation2 + $0x558] sm:$0xff] %v5957
        %5976 = vst [vmem:[#allocation2 + $0x560] sm:$0xff] %v5949
        %5977 = vst [vmem:[#allocation2 + $0x568] sm:$0xff] %v5965
        %5978 = vst [vmem:[#allocation2 + $0x570] sm:$0xff] %v5958
        %5979 = vst [vmem:[#allocation2 + $0x578] sm:$0xff] %v5950
        %5980 = vst [vmem:[#allocation2 + $0x580] sm:$0xff] %v5966
        %5981 = vst [vmem:[#allocation2 + $0x588] sm:$0xff] %v5959
        %5982 = vst [vmem:[#allocation2 + $0x590] sm:$0xff] %v5951
        %5983 = vst [vmem:[#allocation2 + $0x598] sm:$0xff] %v5967
        %5984 = vst [vmem:[#allocation2 + $0x5a0] sm:$0xff] %v5960
        %5985 = vst [vmem:[#allocation2 + $0x5a8] sm:$0xff] %v5952
        %5986 = vst [vmem:[#allocation2 + $0x5b0] sm:$0xff] %v5968
        %5987 = vst [vmem:[#allocation2 + $0x5b8] sm:$0xff] %v5961
        %5988 = vst [vmem:[#allocation2 + $0x5c0] sm:$0xff] %v5953
        %5989 = vst [vmem:[#allocation2 + $0x5c8] sm:$0xff] %v5969
        %5990 = vst [vmem:[#allocation2 + $0x5d0] sm:$0xff] %v5962
        %5991 = vst [vmem:[#allocation2 + $0x5d8] sm:$0xff] %v5954
        %5992 = vst [vmem:[#allocation2 + $0x5e0] sm:$0xff] %v5970
        %5993 = vst [vmem:[#allocation2 + $0x5e8] sm:$0xff] %v5963
        %5994 = vst [vmem:[#allocation2 + $0x5f0] sm:$0xff] %v5955
        %5995 = vst [vmem:[#allocation2 + $0x5f8] sm:$0xff] %v5971
        %5996 = vrot.lane.b32.xlu0 %v5276, 109
        %v5997 = vpop.permute.xlu0 %5996
        %5998 = vrot.lane.b32.xlu0 %v5279, 109
        %v5999 = vpop.permute.xlu0 %5998
        %6000 = vrot.lane.b32.xlu0 %v5282, 109
        %v6001 = vpop.permute.xlu0 %6000
        %6002 = vrot.lane.b32.xlu0 %v5285, 109
        %v6003 = vpop.permute.xlu0 %6002
        %6004 = vrot.lane.b32.xlu0 %v5288, 109
        %v6005 = vpop.permute.xlu0 %6004
        %6006 = vrot.lane.b32.xlu0 %v5291, 109
        %v6007 = vpop.permute.xlu0 %6006
        %6008 = vrot.lane.b32.xlu0 %v5294, 109
        %v6009 = vpop.permute.xlu0 %6008
        %6010 = vrot.lane.b32.xlu0 %v5297, 109
        %v6011 = vpop.permute.xlu0 %6010
        %6012 = vrot.lane.b32.xlu0 %v5277, 109
        %v6013 = vpop.permute.xlu0 %6012
        %6014 = vrot.lane.b32.xlu0 %v5280, 109
        %v6015 = vpop.permute.xlu0 %6014
        %6016 = vrot.lane.b32.xlu0 %v5283, 109
        %v6017 = vpop.permute.xlu0 %6016
        %6018 = vrot.lane.b32.xlu0 %v5286, 109
        %v6019 = vpop.permute.xlu0 %6018
        %6020 = vrot.lane.b32.xlu0 %v5289, 109
        %v6021 = vpop.permute.xlu0 %6020
        %6022 = vrot.lane.b32.xlu0 %v5292, 109
        %v6023 = vpop.permute.xlu0 %6022
        %6024 = vrot.lane.b32.xlu0 %v5295, 109
        %v6025 = vpop.permute.xlu0 %6024
        %6026 = vrot.lane.b32.xlu0 %v5298, 109
        %v6027 = vpop.permute.xlu0 %6026
        %6028 = vrot.lane.b32.xlu0 %v5278, 109
        %v6029 = vpop.permute.xlu0 %6028
        %6030 = vrot.lane.b32.xlu0 %v5281, 109
        %v6031 = vpop.permute.xlu0 %6030
        %6032 = vrot.lane.b32.xlu0 %v5284, 109
        %v6033 = vpop.permute.xlu0 %6032
        %6034 = vrot.lane.b32.xlu0 %v5287, 109
        %v6035 = vpop.permute.xlu0 %6034
        %6036 = vrot.lane.b32.xlu0 %v5290, 109
        %v6037 = vpop.permute.xlu0 %6036
        %6038 = vrot.lane.b32.xlu0 %v5293, 109
        %v6039 = vpop.permute.xlu0 %6038
        %6040 = vrot.lane.b32.xlu0 %v5296, 109
        %v6041 = vpop.permute.xlu0 %6040
        %6042 = vrot.lane.b32.xlu0 %v5299, 109
        %v6043 = vpop.permute.xlu0 %6042
        %v6044 = vsel %vm2932, %v6013, %v6029
        %v6045 = vsel %vm2932, %v6015, %v6031
        %v6046 = vsel %vm2932, %v6017, %v6033
        %v6047 = vsel %vm2932, %v6019, %v6035
        %v6048 = vsel %vm2932, %v6021, %v6037
        %v6049 = vsel %vm2932, %v6023, %v6039
        %v6050 = vsel %vm2932, %v6025, %v6041
        %v6051 = vsel %vm2932, %v6027, %v6043
        %v6052 = vsel %vm2932, %v5997, %v6013
        %v6053 = vsel %vm2932, %v5999, %v6015
        %v6054 = vsel %vm2932, %v6001, %v6017
        %v6055 = vsel %vm2932, %v6003, %v6019
        %v6056 = vsel %vm2932, %v6005, %v6021
        %v6057 = vsel %vm2932, %v6007, %v6023
        %v6058 = vsel %vm2932, %v6009, %v6025
        %v6059 = vsel %vm2932, %v6011, %v6027
        %v6060 = vsel %vm2932, %v6029, %v5997
        %v6061 = vsel %vm2932, %v6031, %v5999
        %v6062 = vsel %vm2932, %v6033, %v6001
        %v6063 = vsel %vm2932, %v6035, %v6003
        %v6064 = vsel %vm2932, %v6037, %v6005
        %v6065 = vsel %vm2932, %v6039, %v6007
        %v6066 = vsel %vm2932, %v6041, %v6009
        %v6067 = vsel %vm2932, %v6043, %v6011
        %6068 = vst [vmem:[#allocation2 + $0x600] sm:$0xff] %v6052
        %6069 = vst [vmem:[#allocation2 + $0x608] sm:$0xff] %v6044
        %6070 = vst [vmem:[#allocation2 + $0x610] sm:$0xff] %v6060
        %6071 = vst [vmem:[#allocation2 + $0x618] sm:$0xff] %v6053
        %6072 = vst [vmem:[#allocation2 + $0x620] sm:$0xff] %v6045
        %6073 = vst [vmem:[#allocation2 + $0x628] sm:$0xff] %v6061
        %6074 = vst [vmem:[#allocation2 + $0x630] sm:$0xff] %v6054
        %6075 = vst [vmem:[#allocation2 + $0x638] sm:$0xff] %v6046
        %6076 = vst [vmem:[#allocation2 + $0x640] sm:$0xff] %v6062
        %6077 = vst [vmem:[#allocation2 + $0x648] sm:$0xff] %v6055
        %6078 = vst [vmem:[#allocation2 + $0x650] sm:$0xff] %v6047
        %6079 = vst [vmem:[#allocation2 + $0x658] sm:$0xff] %v6063
        %6080 = vst [vmem:[#allocation2 + $0x660] sm:$0xff] %v6056
        %6081 = vst [vmem:[#allocation2 + $0x668] sm:$0xff] %v6048
        %6082 = vst [vmem:[#allocation2 + $0x670] sm:$0xff] %v6064
        %6083 = vst [vmem:[#allocation2 + $0x678] sm:$0xff] %v6057
        %6084 = vst [vmem:[#allocation2 + $0x680] sm:$0xff] %v6049
        %6085 = vst [vmem:[#allocation2 + $0x688] sm:$0xff] %v6065
        %6086 = vst [vmem:[#allocation2 + $0x690] sm:$0xff] %v6058
        %6087 = vst [vmem:[#allocation2 + $0x698] sm:$0xff] %v6050
        %6088 = vst [vmem:[#allocation2 + $0x6a0] sm:$0xff] %v6066
        %6089 = vst [vmem:[#allocation2 + $0x6a8] sm:$0xff] %v6059
        %6090 = vst [vmem:[#allocation2 + $0x6b0] sm:$0xff] %v6051
        %6091 = vst [vmem:[#allocation2 + $0x6b8] sm:$0xff] %v6067
        %v6092 = vld [vmem:[#allocation10] sm:$0xff]
        %v6093 = vld [vmem:[#allocation10 + $0x8] sm:$0xff]
        %v6094 = vld [vmem:[#allocation10 + $0x10] sm:$0xff]
        %v6095 = vld [vmem:[#allocation10 + $0x18] sm:$0xff]
        %v6096 = vld [vmem:[#allocation10 + $0x20] sm:$0xff]
        %v6097 = vld [vmem:[#allocation10 + $0x28] sm:$0xff]
        %v6098 = vld [vmem:[#allocation10 + $0x30] sm:$0xff]
        %v6099 = vld [vmem:[#allocation10 + $0x38] sm:$0xff]
        %v6100 = vld [vmem:[#allocation10 + $0x40] sm:$0xff]
        %v6101 = vld [vmem:[#allocation10 + $0x48] sm:$0xff]
        %v6102 = vld [vmem:[#allocation10 + $0x50] sm:$0xff]
        %v6103 = vld [vmem:[#allocation10 + $0x58] sm:$0xff]
        %v6104 = vld [vmem:[#allocation10 + $0x60] sm:$0xff]
        %v6105 = vld [vmem:[#allocation10 + $0x68] sm:$0xff]
        %v6106 = vld [vmem:[#allocation10 + $0x70] sm:$0xff]
        %v6107 = vld [vmem:[#allocation10 + $0x78] sm:$0xff]
        %v6108 = vld [vmem:[#allocation10 + $0x80] sm:$0xff]
        %v6109 = vld [vmem:[#allocation10 + $0x88] sm:$0xff]
        %v6110 = vld [vmem:[#allocation10 + $0x90] sm:$0xff]
        %v6111 = vld [vmem:[#allocation10 + $0x98] sm:$0xff]
        %v6112 = vld [vmem:[#allocation10 + $0xa0] sm:$0xff]
        %v6113 = vld [vmem:[#allocation10 + $0xa8] sm:$0xff]
        %v6114 = vld [vmem:[#allocation10 + $0xb0] sm:$0xff]
        %v6115 = vld [vmem:[#allocation10 + $0xb8] sm:$0xff]
        %v6116 = vld [vmem:[#allocation10 + $0xc0] sm:$0xff]
        %v6117 = vld [vmem:[#allocation10 + $0xc8] sm:$0xff]
        %v6118 = vld [vmem:[#allocation10 + $0xd0] sm:$0xff]
        %v6119 = vld [vmem:[#allocation10 + $0xd8] sm:$0xff]
        %v6120 = vld [vmem:[#allocation10 + $0xe0] sm:$0xff]
        %v6121 = vld [vmem:[#allocation10 + $0xe8] sm:$0xff]
        %v6122 = vld [vmem:[#allocation10 + $0xf0] sm:$0xff]
        %v6123 = vld [vmem:[#allocation10 + $0xf8] sm:$0xff]
        %v6124 = vld [vmem:[#allocation10 + $0x100] sm:$0xff]
        %v6125 = vld [vmem:[#allocation10 + $0x108] sm:$0xff]
        %v6126 = vld [vmem:[#allocation10 + $0x110] sm:$0xff]
        %v6127 = vld [vmem:[#allocation10 + $0x118] sm:$0xff]
        %v6128 = vld [vmem:[#allocation10 + $0x120] sm:$0xff]
        %v6129 = vld [vmem:[#allocation10 + $0x128] sm:$0xff]
        %v6130 = vld [vmem:[#allocation10 + $0x130] sm:$0xff]
        %v6131 = vld [vmem:[#allocation10 + $0x138] sm:$0xff]
        %v6132 = vld [vmem:[#allocation2] sm:$0xff]
        %v6133 = vld [vmem:[#allocation2 + $0x8] sm:$0xff]
        %v6134 = vld [vmem:[#allocation2 + $0x10] sm:$0xff]
        %v6135 = vld [vmem:[#allocation2 + $0x18] sm:$0xff]
        %v6136 = vld [vmem:[#allocation2 + $0x20] sm:$0xff]
        %v6137 = vld [vmem:[#allocation2 + $0x28] sm:$0xff]
        %v6138 = vld [vmem:[#allocation2 + $0x30] sm:$0xff]
        %v6139 = vld [vmem:[#allocation2 + $0x38] sm:$0xff]
        %v6140 = vld [vmem:[#allocation2 + $0x40] sm:$0xff]
        %v6141 = vld [vmem:[#allocation2 + $0x48] sm:$0xff]
        %v6142 = vld [vmem:[#allocation2 + $0x50] sm:$0xff]
        %v6143 = vld [vmem:[#allocation2 + $0x58] sm:$0xff]
        %v6144 = vld [vmem:[#allocation2 + $0x60] sm:$0xff]
        %v6145 = vld [vmem:[#allocation2 + $0x68] sm:$0xff]
        %v6146 = vld [vmem:[#allocation2 + $0x70] sm:$0xff]
        %v6147 = vld [vmem:[#allocation2 + $0x78] sm:$0xff]
        %v6148 = vld [vmem:[#allocation2 + $0x80] sm:$0xff]
        %v6149 = vld [vmem:[#allocation2 + $0x88] sm:$0xff]
        %v6150 = vld [vmem:[#allocation2 + $0x90] sm:$0xff]
        %v6151 = vld [vmem:[#allocation2 + $0x98] sm:$0xff]
        %v6152 = vld [vmem:[#allocation2 + $0xa0] sm:$0xff]
        %v6153 = vld [vmem:[#allocation2 + $0xa8] sm:$0xff]
        %v6154 = vld [vmem:[#allocation2 + $0xb0] sm:$0xff]
        %v6155 = vld [vmem:[#allocation2 + $0xb8] sm:$0xff]
        %v6156 = vld [vmem:[#allocation2 + $0xc0] sm:$0xff]
        %v6157 = vld [vmem:[#allocation2 + $0xc8] sm:$0xff]
        %v6158 = vld [vmem:[#allocation2 + $0xd0] sm:$0xff]
        %v6159 = vld [vmem:[#allocation2 + $0xd8] sm:$0xff]
        %v6160 = vld [vmem:[#allocation2 + $0xe0] sm:$0xff]
        %v6161 = vld [vmem:[#allocation2 + $0xe8] sm:$0xff]
        %v6162 = vld [vmem:[#allocation2 + $0xf0] sm:$0xff]
        %v6163 = vld [vmem:[#allocation2 + $0xf8] sm:$0xff]
        %v6164 = vld [vmem:[#allocation2 + $0x100] sm:$0xff]
        %v6165 = vld [vmem:[#allocation2 + $0x108] sm:$0xff]
        %v6166 = vld [vmem:[#allocation2 + $0x110] sm:$0xff]
        %v6167 = vld [vmem:[#allocation2 + $0x118] sm:$0xff]
        %v6168 = vld [vmem:[#allocation2 + $0x120] sm:$0xff]
        %v6169 = vld [vmem:[#allocation2 + $0x128] sm:$0xff]
        %v6170 = vld [vmem:[#allocation2 + $0x130] sm:$0xff]
        %v6171 = vld [vmem:[#allocation2 + $0x138] sm:$0xff]
        %v6172 = vld [vmem:[#allocation2 + $0x140] sm:$0xff]
        %v6173 = vld [vmem:[#allocation2 + $0x148] sm:$0xff]
        %v6174 = vld [vmem:[#allocation2 + $0x150] sm:$0xff]
        %v6175 = vld [vmem:[#allocation2 + $0x158] sm:$0xff]
        %v6176 = vld [vmem:[#allocation2 + $0x160] sm:$0xff]
        %v6177 = vld [vmem:[#allocation2 + $0x168] sm:$0xff]
        %v6178 = vld [vmem:[#allocation2 + $0x170] sm:$0xff]
        %v6179 = vld [vmem:[#allocation2 + $0x178] sm:$0xff]
        %v6180 = vld [vmem:[#allocation2 + $0x180] sm:$0xff]
        %v6181 = vld [vmem:[#allocation2 + $0x188] sm:$0xff]
        %v6182 = vld [vmem:[#allocation2 + $0x190] sm:$0xff]
        %v6183 = vld [vmem:[#allocation2 + $0x198] sm:$0xff]
        %v6184 = vld [vmem:[#allocation2 + $0x1a0] sm:$0xff]
        %v6185 = vld [vmem:[#allocation2 + $0x1a8] sm:$0xff]
        %v6186 = vld [vmem:[#allocation2 + $0x1b0] sm:$0xff]
        %v6187 = vld [vmem:[#allocation2 + $0x1b8] sm:$0xff]
        %v6188 = vld [vmem:[#allocation2 + $0x1c0] sm:$0xff]
        %v6189 = vld [vmem:[#allocation2 + $0x1c8] sm:$0xff]
        %v6190 = vld [vmem:[#allocation2 + $0x1d0] sm:$0xff]
        %v6191 = vld [vmem:[#allocation2 + $0x1d8] sm:$0xff]
        %v6192 = vld [vmem:[#allocation2 + $0x1e0] sm:$0xff]
        %v6193 = vld [vmem:[#allocation2 + $0x1e8] sm:$0xff]
        %v6194 = vld [vmem:[#allocation2 + $0x1f0] sm:$0xff]
        %v6195 = vld [vmem:[#allocation2 + $0x1f8] sm:$0xff]
        %v6196 = vld [vmem:[#allocation2 + $0x200] sm:$0xff]
        %v6197 = vld [vmem:[#allocation2 + $0x208] sm:$0xff]
        %v6198 = vld [vmem:[#allocation2 + $0x210] sm:$0xff]
        %v6199 = vld [vmem:[#allocation2 + $0x218] sm:$0xff]
        %v6200 = vld [vmem:[#allocation2 + $0x220] sm:$0xff]
        %v6201 = vld [vmem:[#allocation2 + $0x228] sm:$0xff]
        %v6202 = vld [vmem:[#allocation2 + $0x230] sm:$0xff]
        %v6203 = vld [vmem:[#allocation2 + $0x238] sm:$0xff]
        %v6204 = vld [vmem:[#allocation2 + $0x240] sm:$0xff]
        %v6205 = vld [vmem:[#allocation2 + $0x248] sm:$0xff]
        %v6206 = vld [vmem:[#allocation2 + $0x250] sm:$0xff]
        %v6207 = vld [vmem:[#allocation2 + $0x258] sm:$0xff]
        %v6208 = vld [vmem:[#allocation2 + $0x260] sm:$0xff]
        %v6209 = vld [vmem:[#allocation2 + $0x268] sm:$0xff]
        %v6210 = vld [vmem:[#allocation2 + $0x270] sm:$0xff]
        %v6211 = vld [vmem:[#allocation2 + $0x278] sm:$0xff]
        %v6212 = vld [vmem:[#allocation2 + $0x280] sm:$0xff]
        %v6213 = vld [vmem:[#allocation2 + $0x288] sm:$0xff]
        %v6214 = vld [vmem:[#allocation2 + $0x290] sm:$0xff]
        %v6215 = vld [vmem:[#allocation2 + $0x298] sm:$0xff]
        %v6216 = vld [vmem:[#allocation2 + $0x2a0] sm:$0xff]
        %v6217 = vld [vmem:[#allocation2 + $0x2a8] sm:$0xff]
        %v6218 = vld [vmem:[#allocation2 + $0x2b0] sm:$0xff]
        %v6219 = vld [vmem:[#allocation2 + $0x2b8] sm:$0xff]
        %v6220 = vld [vmem:[#allocation2 + $0x2c0] sm:$0xff]
        %v6221 = vld [vmem:[#allocation2 + $0x2c8] sm:$0xff]
        %v6222 = vld [vmem:[#allocation2 + $0x2d0] sm:$0xff]
        %v6223 = vld [vmem:[#allocation2 + $0x2d8] sm:$0xff]
        %v6224 = vld [vmem:[#allocation2 + $0x2e0] sm:$0xff]
        %v6225 = vld [vmem:[#allocation2 + $0x2e8] sm:$0xff]
        %v6226 = vld [vmem:[#allocation2 + $0x2f0] sm:$0xff]
        %v6227 = vld [vmem:[#allocation2 + $0x2f8] sm:$0xff]
        %v6228 = vld [vmem:[#allocation2 + $0x300] sm:$0xff]
        %v6229 = vld [vmem:[#allocation2 + $0x308] sm:$0xff]
        %v6230 = vld [vmem:[#allocation2 + $0x310] sm:$0xff]
        %v6231 = vld [vmem:[#allocation2 + $0x318] sm:$0xff]
        %v6232 = vld [vmem:[#allocation2 + $0x320] sm:$0xff]
        %v6233 = vld [vmem:[#allocation2 + $0x328] sm:$0xff]
        %v6234 = vld [vmem:[#allocation2 + $0x330] sm:$0xff]
        %v6235 = vld [vmem:[#allocation2 + $0x338] sm:$0xff]
        %v6236 = vld [vmem:[#allocation2 + $0x340] sm:$0xff]
        %v6237 = vld [vmem:[#allocation2 + $0x348] sm:$0xff]
        %v6238 = vld [vmem:[#allocation2 + $0x350] sm:$0xff]
        %v6239 = vld [vmem:[#allocation2 + $0x358] sm:$0xff]
        %v6240 = vld [vmem:[#allocation2 + $0x360] sm:$0xff]
        %v6241 = vld [vmem:[#allocation2 + $0x368] sm:$0xff]
        %v6242 = vld [vmem:[#allocation2 + $0x370] sm:$0xff]
        %v6243 = vld [vmem:[#allocation2 + $0x378] sm:$0xff]
        %v6244 = vld [vmem:[#allocation2 + $0x380] sm:$0xff]
        %v6245 = vld [vmem:[#allocation2 + $0x388] sm:$0xff]
        %v6246 = vld [vmem:[#allocation2 + $0x390] sm:$0xff]
        %v6247 = vld [vmem:[#allocation2 + $0x398] sm:$0xff]
        %v6248 = vld [vmem:[#allocation2 + $0x3a0] sm:$0xff]
        %v6249 = vld [vmem:[#allocation2 + $0x3a8] sm:$0xff]
        %v6250 = vld [vmem:[#allocation2 + $0x3b0] sm:$0xff]
        %v6251 = vld [vmem:[#allocation2 + $0x3b8] sm:$0xff]
        %v6252 = vld [vmem:[#allocation2 + $0x3c0] sm:$0xff]
        %v6253 = vld [vmem:[#allocation2 + $0x3c8] sm:$0xff]
        %v6254 = vld [vmem:[#allocation2 + $0x3d0] sm:$0xff]
        %v6255 = vld [vmem:[#allocation2 + $0x3d8] sm:$0xff]
        %v6256 = vld [vmem:[#allocation2 + $0x3e0] sm:$0xff]
        %v6257 = vld [vmem:[#allocation2 + $0x3e8] sm:$0xff]
        %v6258 = vld [vmem:[#allocation2 + $0x3f0] sm:$0xff]
        %v6259 = vld [vmem:[#allocation2 + $0x3f8] sm:$0xff]
        %v6260 = vld [vmem:[#allocation2 + $0x400] sm:$0xff]
        %v6261 = vld [vmem:[#allocation2 + $0x408] sm:$0xff]
        %v6262 = vld [vmem:[#allocation2 + $0x410] sm:$0xff]
        %v6263 = vld [vmem:[#allocation2 + $0x418] sm:$0xff]
        %v6264 = vld [vmem:[#allocation2 + $0x420] sm:$0xff]
        %v6265 = vld [vmem:[#allocation2 + $0x428] sm:$0xff]
        %v6266 = vld [vmem:[#allocation2 + $0x430] sm:$0xff]
        %v6267 = vld [vmem:[#allocation2 + $0x438] sm:$0xff]
        %v6268 = vld [vmem:[#allocation2 + $0x440] sm:$0xff]
        %v6269 = vld [vmem:[#allocation2 + $0x448] sm:$0xff]
        %v6270 = vld [vmem:[#allocation2 + $0x450] sm:$0xff]
        %v6271 = vld [vmem:[#allocation2 + $0x458] sm:$0xff]
        %v6272 = vld [vmem:[#allocation2 + $0x460] sm:$0xff]
        %v6273 = vld [vmem:[#allocation2 + $0x468] sm:$0xff]
        %v6274 = vld [vmem:[#allocation2 + $0x470] sm:$0xff]
        %v6275 = vld [vmem:[#allocation2 + $0x478] sm:$0xff]
        %v6276 = vld [vmem:[#allocation2 + $0x480] sm:$0xff]
        %v6277 = vld [vmem:[#allocation2 + $0x488] sm:$0xff]
        %v6278 = vld [vmem:[#allocation2 + $0x490] sm:$0xff]
        %v6279 = vld [vmem:[#allocation2 + $0x498] sm:$0xff]
        %v6280 = vld [vmem:[#allocation2 + $0x4a0] sm:$0xff]
        %v6281 = vld [vmem:[#allocation2 + $0x4a8] sm:$0xff]
        %v6282 = vld [vmem:[#allocation2 + $0x4b0] sm:$0xff]
        %v6283 = vld [vmem:[#allocation2 + $0x4b8] sm:$0xff]
        %v6284 = vld [vmem:[#allocation2 + $0x4c0] sm:$0xff]
        %v6285 = vld [vmem:[#allocation2 + $0x4c8] sm:$0xff]
        %v6286 = vld [vmem:[#allocation2 + $0x4d0] sm:$0xff]
        %v6287 = vld [vmem:[#allocation2 + $0x4d8] sm:$0xff]
        %v6288 = vld [vmem:[#allocation2 + $0x4e0] sm:$0xff]
        %v6289 = vld [vmem:[#allocation2 + $0x4e8] sm:$0xff]
        %v6290 = vld [vmem:[#allocation2 + $0x4f0] sm:$0xff]
        %v6291 = vld [vmem:[#allocation2 + $0x4f8] sm:$0xff]
        %v6292 = vld [vmem:[#allocation2 + $0x500] sm:$0xff]
        %v6293 = vld [vmem:[#allocation2 + $0x508] sm:$0xff]
        %v6294 = vld [vmem:[#allocation2 + $0x510] sm:$0xff]
        %v6295 = vld [vmem:[#allocation2 + $0x518] sm:$0xff]
        %v6296 = vld [vmem:[#allocation2 + $0x520] sm:$0xff]
        %v6297 = vld [vmem:[#allocation2 + $0x528] sm:$0xff]
        %v6298 = vld [vmem:[#allocation2 + $0x530] sm:$0xff]
        %v6299 = vld [vmem:[#allocation2 + $0x538] sm:$0xff]
        %v6300 = vld [vmem:[#allocation2 + $0x540] sm:$0xff]
        %v6301 = vld [vmem:[#allocation2 + $0x548] sm:$0xff]
        %v6302 = vld [vmem:[#allocation2 + $0x550] sm:$0xff]
        %v6303 = vld [vmem:[#allocation2 + $0x558] sm:$0xff]
        %v6304 = vld [vmem:[#allocation2 + $0x560] sm:$0xff]
        %v6305 = vld [vmem:[#allocation2 + $0x568] sm:$0xff]
        %v6306 = vld [vmem:[#allocation2 + $0x570] sm:$0xff]
        %v6307 = vld [vmem:[#allocation2 + $0x578] sm:$0xff]
        %v6308 = vld [vmem:[#allocation2 + $0x580] sm:$0xff]
        %v6309 = vld [vmem:[#allocation2 + $0x588] sm:$0xff]
        %v6310 = vld [vmem:[#allocation2 + $0x590] sm:$0xff]
        %v6311 = vld [vmem:[#allocation2 + $0x598] sm:$0xff]
        %v6312 = vld [vmem:[#allocation2 + $0x5a0] sm:$0xff]
        %v6313 = vld [vmem:[#allocation2 + $0x5a8] sm:$0xff]
        %v6314 = vld [vmem:[#allocation2 + $0x5b0] sm:$0xff]
        %v6315 = vld [vmem:[#allocation2 + $0x5b8] sm:$0xff]
        %v6316 = vld [vmem:[#allocation2 + $0x5c0] sm:$0xff]
        %v6317 = vld [vmem:[#allocation2 + $0x5c8] sm:$0xff]
        %v6318 = vld [vmem:[#allocation2 + $0x5d0] sm:$0xff]
        %v6319 = vld [vmem:[#allocation2 + $0x5d8] sm:$0xff]
        %v6320 = vld [vmem:[#allocation2 + $0x5e0] sm:$0xff]
        %v6321 = vld [vmem:[#allocation2 + $0x5e8] sm:$0xff]
        %v6322 = vld [vmem:[#allocation2 + $0x5f0] sm:$0xff]
        %v6323 = vld [vmem:[#allocation2 + $0x5f8] sm:$0xff]
        %v6324 = vld [vmem:[#allocation2 + $0x600] sm:$0xff]
        %v6325 = vld [vmem:[#allocation2 + $0x608] sm:$0xff]
        %v6326 = vld [vmem:[#allocation2 + $0x610] sm:$0xff]
        %v6327 = vld [vmem:[#allocation2 + $0x618] sm:$0xff]
        %v6328 = vld [vmem:[#allocation2 + $0x620] sm:$0xff]
        %v6329 = vld [vmem:[#allocation2 + $0x628] sm:$0xff]
        %v6330 = vld [vmem:[#allocation2 + $0x630] sm:$0xff]
        %v6331 = vld [vmem:[#allocation2 + $0x638] sm:$0xff]
        %v6332 = vld [vmem:[#allocation2 + $0x640] sm:$0xff]
        %v6333 = vld [vmem:[#allocation2 + $0x648] sm:$0xff]
        %v6334 = vld [vmem:[#allocation2 + $0x650] sm:$0xff]
        %v6335 = vld [vmem:[#allocation2 + $0x658] sm:$0xff]
        %v6336 = vld [vmem:[#allocation2 + $0x660] sm:$0xff]
        %v6337 = vld [vmem:[#allocation2 + $0x668] sm:$0xff]
        %v6338 = vld [vmem:[#allocation2 + $0x670] sm:$0xff]
        %v6339 = vld [vmem:[#allocation2 + $0x678] sm:$0xff]
        %v6340 = vld [vmem:[#allocation2 + $0x680] sm:$0xff]
        %v6341 = vld [vmem:[#allocation2 + $0x688] sm:$0xff]
        %v6342 = vld [vmem:[#allocation2 + $0x690] sm:$0xff]
        %v6343 = vld [vmem:[#allocation2 + $0x698] sm:$0xff]
        %v6344 = vld [vmem:[#allocation2 + $0x6a0] sm:$0xff]
        %v6345 = vld [vmem:[#allocation2 + $0x6a8] sm:$0xff]
        %v6346 = vld [vmem:[#allocation2 + $0x6b0] sm:$0xff]
        %v6347 = vld [vmem:[#allocation2 + $0x6b8] sm:$0xff]
        %v6348 = vld [vmem:[%s7] sm:$0xff]
        %v6349 = vld [vmem:[%s7 + $0x8] sm:$0xff]
        %v6350 = vld [vmem:[%s7 + $0x10] sm:$0xff]
        %v6351 = vld [vmem:[%s7 + $0x18] sm:$0xff]
        %v6352 = vld [vmem:[%s7 + $0x20] sm:$0xff]
        %v6353 = vld [vmem:[%s7 + $0x28] sm:$0xff]
        %v6354 = vld [vmem:[%s7 + $0x30] sm:$0xff]
        %v6355 = vld [vmem:[%s7 + $0x38] sm:$0xff]
        %6357 = vset.pattern.permute.xlu0 0
        %6358 = vperm.xlu0 %6357, %v6348
        %v6359 = vpop.permute.xlu0 %6358
        %6362 = vset.pattern.permute.xlu0 0
        %6363 = vperm.xlu0 %6362, %v6349
        %v6364 = vpop.permute.xlu0 %6363
        %6367 = vset.pattern.permute.xlu0 0
        %6368 = vperm.xlu0 %6367, %v6350
        %v6369 = vpop.permute.xlu0 %6368
        %6372 = vset.pattern.permute.xlu0 0
        %6373 = vperm.xlu0 %6372, %v6351
        %v6374 = vpop.permute.xlu0 %6373
        %6377 = vset.pattern.permute.xlu0 0
        %6378 = vperm.xlu0 %6377, %v6352
        %v6379 = vpop.permute.xlu0 %6378
        %6382 = vset.pattern.permute.xlu0 0
        %6383 = vperm.xlu0 %6382, %v6353
        %v6384 = vpop.permute.xlu0 %6383
        %6387 = vset.pattern.permute.xlu0 0
        %6388 = vperm.xlu0 %6387, %v6354
        %v6389 = vpop.permute.xlu0 %6388
        %6392 = vset.pattern.permute.xlu0 0
        %6393 = vperm.xlu0 %6392, %v6355
        %v6394 = vpop.permute.xlu0 %6393
        %v6397 = vsel %vm4508, %v6096, 0
        %v6400 = vsel %vm4508, %v6101, 0
        %v6403 = vsel %vm4508, %v6106, 0
        %v6406 = vsel %vm4508, %v6111, 0
        %v6409 = vsel %vm4508, %v6116, 0
        %v6412 = vsel %vm4508, %v6121, 0
        %v6415 = vsel %vm4508, %v6126, 0
        %v6418 = vsel %vm4508, %v6131, 0
        %6420 = vmatprep.subr.mxu0 %v6133
        %6421 = vmatpush1.msra.mxu0 %v6132
        %6422 = vmatprep.subr.mxu0 %v6136
        %6423 = vmatpush1.msra.mxu0 %v6135
        %6424 = vmatprep.subr.mxu0 %v6139
        %6425 = vmatpush1.msra.mxu0 %v6138
        %6426 = vmatprep.subr.mxu0 %v6142
        %6427 = vmatpush1.msra.mxu0 %v6141
        %6428 = vmatprep.subr.mxu0 %v6145
        %6429 = vmatpush1.msra.mxu0 %v6144
        %6430 = vmatprep.subr.mxu0 %v6148
        %6431 = vmatpush1.msra.mxu0 %v6147
        %6432 = vmatprep.subr.mxu0 %v6151
        %6433 = vmatpush1.msra.mxu0 %v6150
        %6434 = vmatprep.subr.mxu0 %v6154
        %6435 = vmatpush1.msra.mxu0 %v6153
        %6436 = vmatprep.subr.mxu0 %v6157
        %6437 = vmatpush1.msra.mxu0 %v6156
        %6438 = vmatprep.subr.mxu0 %v6160
        %6439 = vmatpush1.msra.mxu0 %v6159
        %6440 = vmatprep.subr.mxu0 %v6163
        %6441 = vmatpush1.msra.mxu0 %v6162
        %6442 = vmatprep.subr.mxu0 %v6166
        %6443 = vmatpush1.msra.mxu0 %v6165
        %6444 = vmatprep.subr.mxu0 %v6169
        %6445 = vmatpush1.msra.mxu0 %v6168
        %6446 = vmatprep.subr.mxu0 %v6172
        %6447 = vmatpush1.msra.mxu0 %v6171
        %6448 = vmatprep.subr.mxu0 %v6175
        %6449 = vmatpush1.msra.mxu0 %v6174
        %6450 = vmatprep.subr.mxu0 %v6178
        %6451 = vmatpush1.msra.mxu0 %v6177
        %6452 = vmatprep.subr.mxu0 %v6181
        %6453 = vmatpush1.msra.mxu0 %v6180
        %6454 = vmatprep.subr.mxu0 %v6184
        %6455 = vmatpush1.msra.mxu0 %v6183
        %6456 = vmatprep.subr.mxu0 %v6187
        %6457 = vmatpush1.msra.mxu0 %v6186
        %6458 = vmatprep.subr.mxu0 %v6190
        %6459 = vmatpush1.msra.mxu0 %v6189
        %6460 = vmatprep.subr.mxu0 %v6193
        %6461 = vmatpush1.msra.mxu0 %v6192
        %6462 = vmatprep.subr.mxu0 %v6196
        %6463 = vmatpush1.msra.mxu0 %v6195
        %6464 = vmatprep.subr.mxu0 %v6199
        %6465 = vmatpush1.msra.mxu0 %v6198
        %6466 = vmatprep.subr.mxu0 %v6202
        %6467 = vmatpush1.msra.mxu0 %v6201
        %6468 = vmatprep.subr.mxu0 %v6205
        %6469 = vmatpush1.msra.mxu0 %v6204
        %6470 = vmatprep.subr.mxu0 %v6208
        %6471 = vmatpush1.msra.mxu0 %v6207
        %6472 = vmatprep.subr.mxu0 %v6211
        %6473 = vmatpush1.msra.mxu0 %v6210
        %6474 = vmatprep.subr.mxu0 %v6214
        %6475 = vmatpush1.msra.mxu0 %v6213
        %6476 = vmatprep.subr.mxu0 %v6217
        %6477 = vmatpush1.msra.mxu0 %v6216
        %6478 = vmatprep.subr.mxu0 %v6220
        %6479 = vmatpush1.msra.mxu0 %v6219
        %6480 = vmatprep.subr.mxu0 %v6223
        %6481 = vmatpush1.msra.mxu0 %v6222
        %6482 = vmatprep.subr.mxu0 %v6226
        %6483 = vmatpush1.msra.mxu0 %v6225
        %6484 = vmatprep.mubr.f32.mxu0 %v6093
        %6485 = vmatmul.mubr.f32.gmra.mrb[0].mxu0 %v6092
        %v6486 = vpop.f32.mrb[0].mxu0
        %v6487 = vadd.f32 %v6359, %v6486
        %v6488 = vpop.f32.mrb[0].mxu0
        %v6489 = vadd.f32 %v6359, %v6488
        %6490 = vmatprep.mubr.f32.mxu0 %v6098
        %6491 = vmatmul.mubr.f32.gmra.mrb[0].mxu0 %v6097
        %v6492 = vpop.f32.mrb[0].mxu0
        %v6493 = vadd.f32 %v6364, %v6492
        %v6494 = vpop.f32.mrb[0].mxu0
        %v6495 = vadd.f32 %v6364, %v6494
        %6496 = vmatprep.mubr.f32.mxu0 %v6103
        %6497 = vmatmul.mubr.f32.gmra.mrb[0].mxu0 %v6102
        %v6498 = vpop.f32.mrb[0].mxu0
        %v6499 = vadd.f32 %v6369, %v6498
        %v6500 = vpop.f32.mrb[0].mxu0
        %v6501 = vadd.f32 %v6369, %v6500
        %6502 = vmatprep.mubr.f32.mxu0 %v6108
        %6503 = vmatmul.mubr.f32.gmra.mrb[0].mxu0 %v6107
        %v6504 = vpop.f32.mrb[0].mxu0
        %v6505 = vadd.f32 %v6374, %v6504
        %v6506 = vpop.f32.mrb[0].mxu0
        %v6507 = vadd.f32 %v6374, %v6506
        %6508 = vmatprep.mubr.f32.mxu0 %v6113
        %6509 = vmatmul.mubr.f32.gmra.mrb[0].mxu0 %v6112
        %v6510 = vpop.f32.mrb[0].mxu0
        %v6511 = vadd.f32 %v6379, %v6510
        %v6512 = vpop.f32.mrb[0].mxu0
        %v6513 = vadd.f32 %v6379, %v6512
        %6514 = vmatprep.mubr.f32.mxu0 %v6118
        %6515 = vmatmul.mubr.f32.gmra.mrb[0].mxu0 %v6117
        %v6516 = vpop.f32.mrb[0].mxu0
        %v6517 = vadd.f32 %v6384, %v6516
        %v6518 = vpop.f32.mrb[0].mxu0
        %v6519 = vadd.f32 %v6384, %v6518
        %6520 = vmatprep.mubr.f32.mxu0 %v6123
        %6521 = vmatmul.mubr.f32.gmra.mrb[0].mxu0 %v6122
        %v6522 = vpop.f32.mrb[0].mxu0
        %v6523 = vadd.f32 %v6389, %v6522
        %v6524 = vpop.f32.mrb[0].mxu0
        %v6525 = vadd.f32 %v6389, %v6524
        %6526 = vmatprep.mubr.f32.mxu0 %v6128
        %6527 = vmatmul.mubr.f32.gmra.mrb[0].mxu0 %v6127
        %v6528 = vpop.f32.mrb[0].mxu0
        %v6529 = vadd.f32 %v6394, %v6528
        %v6530 = vpop.f32.mrb[0].mxu0
        %v6531 = vadd.f32 %v6394, %v6530
        %6532 = vdwg.mxu0
        %6533 = vmatprep.subr.mxu0 %v6229
        %6534 = vmatpush1.msra.mxu0 %v6228
        %6535 = vmatprep.subr.mxu0 %v6232
        %6536 = vmatpush1.msra.mxu0 %v6231
        %6537 = vmatprep.subr.mxu0 %v6235
        %6538 = vmatpush1.msra.mxu0 %v6234
        %6539 = vmatprep.subr.mxu0 %v6238
        %6540 = vmatpush1.msra.mxu0 %v6237
        %6541 = vmatprep.subr.mxu0 %v6241
        %6542 = vmatpush1.msra.mxu0 %v6240
        %6543 = vmatprep.subr.mxu0 %v6244
        %6544 = vmatpush1.msra.mxu0 %v6243
        %6545 = vmatprep.subr.mxu0 %v6247
        %6546 = vmatpush1.msra.mxu0 %v6246
        %6547 = vmatprep.subr.mxu0 %v6250
        %6548 = vmatpush1.msra.mxu0 %v6249
        %6549 = vmatprep.subr.mxu0 %v6253
        %6550 = vmatpush1.msra.mxu0 %v6252
        %6551 = vmatprep.subr.mxu0 %v6256
        %6552 = vmatpush1.msra.mxu0 %v6255
        %6553 = vmatprep.subr.mxu0 %v6259
        %6554 = vmatpush1.msra.mxu0 %v6258
        %6555 = vmatprep.subr.mxu0 %v6262
        %6556 = vmatpush1.msra.mxu0 %v6261
        %6557 = vmatprep.subr.mxu0 %v6265
        %6558 = vmatpush1.msra.mxu0 %v6264
        %6559 = vmatprep.subr.mxu0 %v6268
        %6560 = vmatpush1.msra.mxu0 %v6267
        %6561 = vmatprep.subr.mxu0 %v6271
        %6562 = vmatpush1.msra.mxu0 %v6270
        %6563 = vmatprep.subr.mxu0 %v6274
        %6564 = vmatpush1.msra.mxu0 %v6273
        %6565 = vmatprep.subr.mxu0 %v6277
        %6566 = vmatpush1.msra.mxu0 %v6276
        %6567 = vmatprep.subr.mxu0 %v6280
        %6568 = vmatpush1.msra.mxu0 %v6279
        %6569 = vmatprep.subr.mxu0 %v6283
        %6570 = vmatpush1.msra.mxu0 %v6282
        %6571 = vmatprep.subr.mxu0 %v6286
        %6572 = vmatpush1.msra.mxu0 %v6285
        %6573 = vmatprep.subr.mxu0 %v6289
        %6574 = vmatpush1.msra.mxu0 %v6288
        %6575 = vmatprep.subr.mxu0 %v6292
        %6576 = vmatpush1.msra.mxu0 %v6291
        %6577 = vmatprep.subr.mxu0 %v6295
        %6578 = vmatpush1.msra.mxu0 %v6294
        %6579 = vmatprep.subr.mxu0 %v6298
        %6580 = vmatpush1.msra.mxu0 %v6297
        %6581 = vmatprep.subr.mxu0 %v6301
        %6582 = vmatpush1.msra.mxu0 %v6300
        %6583 = vmatprep.subr.mxu0 %v6304
        %6584 = vmatpush1.msra.mxu0 %v6303
        %6585 = vmatprep.subr.mxu0 %v6307
        %6586 = vmatpush1.msra.mxu0 %v6306
        %6587 = vmatprep.subr.mxu0 %v6310
        %6588 = vmatpush1.msra.mxu0 %v6309
        %6589 = vmatprep.subr.mxu0 %v6313
        %6590 = vmatpush1.msra.mxu0 %v6312
        %6591 = vmatprep.subr.mxu0 %v6316
        %6592 = vmatpush1.msra.mxu0 %v6315
        %6593 = vmatprep.subr.mxu0 %v6319
        %6594 = vmatpush1.msra.mxu0 %v6318
        %6595 = vmatprep.subr.mxu0 %v6322
        %6596 = vmatpush1.msra.mxu0 %v6321
        %6597 = vmatprep.mubr.f32.mxu0 %v6095
        %6598 = vmatmul.mubr.f32.gmra.mrb[0].mxu0 %v6094
        %v6599 = vpop.f32.mrb[0].mxu0
        %v6600 = vadd.f32 %v6487, %v6599
        %v6601 = vpop.f32.mrb[0].mxu0
        %v6602 = vadd.f32 %v6489, %v6601
        %6603 = vmatprep.mubr.f32.mxu0 %v6100
        %6604 = vmatmul.mubr.f32.gmra.mrb[0].mxu0 %v6099
        %v6605 = vpop.f32.mrb[0].mxu0
        %v6606 = vadd.f32 %v6493, %v6605
        %v6607 = vpop.f32.mrb[0].mxu0
        %v6608 = vadd.f32 %v6495, %v6607
        %6609 = vmatprep.mubr.f32.mxu0 %v6105
        %6610 = vmatmul.mubr.f32.gmra.mrb[0].mxu0 %v6104
        %v6611 = vpop.f32.mrb[0].mxu0
        %v6612 = vadd.f32 %v6499, %v6611
        %v6613 = vpop.f32.mrb[0].mxu0
        %v6614 = vadd.f32 %v6501, %v6613
        %6615 = vmatprep.mubr.f32.mxu0 %v6110
        %6616 = vmatmul.mubr.f32.gmra.mrb[0].mxu0 %v6109
        %v6617 = vpop.f32.mrb[0].mxu0
        %v6618 = vadd.f32 %v6505, %v6617
        %v6619 = vpop.f32.mrb[0].mxu0
        %v6620 = vadd.f32 %v6507, %v6619
        %6621 = vmatprep.mubr.f32.mxu0 %v6115
        %6622 = vmatmul.mubr.f32.gmra.mrb[0].mxu0 %v6114
        %v6623 = vpop.f32.mrb[0].mxu0
        %v6624 = vadd.f32 %v6511, %v6623
        %v6625 = vpop.f32.mrb[0].mxu0
        %v6626 = vadd.f32 %v6513, %v6625
        %6627 = vmatprep.mubr.f32.mxu0 %v6120
        %6628 = vmatmul.mubr.f32.gmra.mrb[0].mxu0 %v6119
        %v6629 = vpop.f32.mrb[0].mxu0
        %v6630 = vadd.f32 %v6517, %v6629
        %v6631 = vpop.f32.mrb[0].mxu0
        %v6632 = vadd.f32 %v6519, %v6631
        %6633 = vmatprep.mubr.f32.mxu0 %v6125
        %6634 = vmatmul.mubr.f32.gmra.mrb[0].mxu0 %v6124
        %v6635 = vpop.f32.mrb[0].mxu0
        %v6636 = vadd.f32 %v6523, %v6635
        %v6637 = vpop.f32.mrb[0].mxu0
        %v6638 = vadd.f32 %v6525, %v6637
        %6639 = vmatprep.mubr.f32.mxu0 %v6130
        %6640 = vmatmul.mubr.f32.gmra.mrb[0].mxu0 %v6129
        %v6641 = vpop.f32.mrb[0].mxu0
        %v6642 = vadd.f32 %v6529, %v6641
        %v6643 = vpop.f32.mrb[0].mxu0
        %v6644 = vadd.f32 %v6531, %v6643
        %6645 = vdwg.mxu0
        %6646 = vmatprep.subr.mxu0 %v6325
        %6647 = vmatpush1.msra.mxu0 %v6324
        %6648 = vmatprep.subr.mxu0 %v6328
        %6649 = vmatpush1.msra.mxu0 %v6327
        %6650 = vmatprep.subr.mxu0 %v6331
        %6651 = vmatpush1.msra.mxu0 %v6330
        %6652 = vmatprep.subr.mxu0 %v6334
        %6653 = vmatpush1.msra.mxu0 %v6333
        %6654 = vmatprep.subr.mxu0 %v6337
        %6655 = vmatpush1.msra.mxu0 %v6336
        %6656 = vmatprep.subr.mxu0 %v6340
        %6657 = vmatpush1.msra.mxu0 %v6339
        %6658 = vmatprep.subr.mxu0 %v6343
        %6659 = vmatpush1.msra.mxu0 %v6342
        %6660 = vmatprep.subr.mxu0 %v6346
        %6661 = vmatpush1.msra.mxu0 %v6345
        %6662 = vmatprep.subr.mxu0 0.0
        %6663 = vmatpush1.msra.mxu0 0.0
        %6664 = vmatprep.subr.mxu0 0.0
        %6665 = vmatpush1.msra.mxu0 0.0
        %6666 = vmatprep.subr.mxu0 0.0
        %6667 = vmatpush1.msra.mxu0 0.0
        %6668 = vmatprep.subr.mxu0 0.0
        %6669 = vmatpush1.msra.mxu0 0.0
        %6670 = vmatprep.subr.mxu0 0.0
        %6671 = vmatpush1.msra.mxu0 0.0
        %6672 = vmatprep.subr.mxu0 0.0
        %6673 = vmatpush1.msra.mxu0 0.0
        %6674 = vmatprep.subr.mxu0 0.0
        %6675 = vmatpush1.msra.mxu0 0.0
        %6676 = vmatprep.subr.mxu0 0.0
        %6677 = vmatpush1.msra.mxu0 0.0
        %6678 = vmatprep.subr.mxu0 0.0
        %6679 = vmatpush1.msra.mxu0 0.0
        %6680 = vmatprep.subr.mxu0 0.0
        %6681 = vmatpush1.msra.mxu0 0.0
        %6682 = vmatprep.subr.mxu0 0.0
        %6683 = vmatpush1.msra.mxu0 0.0
        %6684 = vmatprep.subr.mxu0 0.0
        %6685 = vmatpush1.msra.mxu0 0.0
        %6686 = vmatprep.subr.mxu0 0.0
        %6687 = vmatpush1.msra.mxu0 0.0
        %6688 = vmatprep.subr.mxu0 0.0
        %6689 = vmatpush1.msra.mxu0 0.0
        %6690 = vmatprep.subr.mxu0 0.0
        %6691 = vmatpush1.msra.mxu0 0.0
        %6692 = vmatprep.subr.mxu0 0.0
        %6693 = vmatpush1.msra.mxu0 0.0
        %6694 = vmatprep.subr.mxu0 0.0
        %6695 = vmatpush1.msra.mxu0 0.0
        %6696 = vmatprep.subr.mxu0 0.0
        %6697 = vmatpush1.msra.mxu0 0.0
        %6698 = vmatprep.subr.mxu0 0.0
        %6699 = vmatpush1.msra.mxu0 0.0
        %6700 = vmatprep.subr.mxu0 0.0
        %6701 = vmatpush1.msra.mxu0 0.0
        %6702 = vmatprep.subr.mxu0 0.0
        %6703 = vmatpush1.msra.mxu0 0.0
        %6704 = vmatprep.subr.mxu0 0.0
        %6705 = vmatpush1.msra.mxu0 0.0
        %6706 = vmatprep.subr.mxu0 0.0
        %6707 = vmatpush1.msra.mxu0 0.0
        %6708 = vmatprep.subr.mxu0 0.0
        %6709 = vmatpush1.msra.mxu0 0.0
        %6710 = vmatprep.mubr.f32.mxu0 0.0
        %6711 = vmatmul.mubr.f32.gmra.mrb[0].mxu0 %v6397
        %v6712 = vpop.f32.mrb[0].mxu0
        %v6713 = vadd.f32 %v6600, %v6712
        %v6714 = vpop.f32.mrb[0].mxu0
        %v6715 = vadd.f32 %v6602, %v6714
        %6716 = vmatprep.mubr.f32.mxu0 0.0
        %6717 = vmatmul.mubr.f32.gmra.mrb[0].mxu0 %v6400
        %v6718 = vpop.f32.mrb[0].mxu0
        %v6719 = vadd.f32 %v6606, %v6718
        %v6720 = vpop.f32.mrb[0].mxu0
        %v6721 = vadd.f32 %v6608, %v6720
        %6722 = vmatprep.mubr.f32.mxu0 0.0
        %6723 = vmatmul.mubr.f32.gmra.mrb[0].mxu0 %v6403
        %v6724 = vpop.f32.mrb[0].mxu0
        %v6725 = vadd.f32 %v6612, %v6724
        %v6726 = vpop.f32.mrb[0].mxu0
        %v6727 = vadd.f32 %v6614, %v6726
        %6728 = vmatprep.mubr.f32.mxu0 0.0
        %6729 = vmatmul.mubr.f32.gmra.mrb[0].mxu0 %v6406
        %v6730 = vpop.f32.mrb[0].mxu0
        %v6731 = vadd.f32 %v6618, %v6730
        %v6732 = vpop.f32.mrb[0].mxu0
        %v6733 = vadd.f32 %v6620, %v6732
        %6734 = vmatprep.mubr.f32.mxu0 0.0
        %6735 = vmatmul.mubr.f32.gmra.mrb[0].mxu0 %v6409
        %v6736 = vpop.f32.mrb[0].mxu0
        %v6737 = vadd.f32 %v6624, %v6736
        %v6738 = vpop.f32.mrb[0].mxu0
        %v6739 = vadd.f32 %v6626, %v6738
        %6740 = vmatprep.mubr.f32.mxu0 0.0
        %6741 = vmatmul.mubr.f32.gmra.mrb[0].mxu0 %v6412
        %v6742 = vpop.f32.mrb[0].mxu0
        %v6743 = vadd.f32 %v6630, %v6742
        %v6744 = vpop.f32.mrb[0].mxu0
        %v6745 = vadd.f32 %v6632, %v6744
        %6746 = vmatprep.mubr.f32.mxu0 0.0
        %6747 = vmatmul.mubr.f32.gmra.mrb[0].mxu0 %v6415
        %v6748 = vpop.f32.mrb[0].mxu0
        %v6749 = vadd.f32 %v6636, %v6748
        %v6750 = vpop.f32.mrb[0].mxu0
        %v6751 = vadd.f32 %v6638, %v6750
        %6752 = vmatprep.mubr.f32.mxu0 0.0
        %6753 = vmatmul.mubr.f32.gmra.mrb[0].mxu0 %v6418
        %v6754 = vpop.f32.mrb[0].mxu0
        %v6755 = vadd.f32 %v6642, %v6754
        %v6756 = vpop.f32.mrb[0].mxu0
        %v6757 = vadd.f32 %v6644, %v6756
        %6758 = vdwg.mxu0
        %6759 = vmatprep.subr.mxu0 0.0
        %6760 = vmatpush1.msra.mxu0 %v6134
        %6761 = vmatprep.subr.mxu0 0.0
        %6762 = vmatpush1.msra.mxu0 %v6137
        %6763 = vmatprep.subr.mxu0 0.0
        %6764 = vmatpush1.msra.mxu0 %v6140
        %6765 = vmatprep.subr.mxu0 0.0
        %6766 = vmatpush1.msra.mxu0 %v6143
        %6767 = vmatprep.subr.mxu0 0.0
        %6768 = vmatpush1.msra.mxu0 %v6146
        %6769 = vmatprep.subr.mxu0 0.0
        %6770 = vmatpush1.msra.mxu0 %v6149
        %6771 = vmatprep.subr.mxu0 0.0
        %6772 = vmatpush1.msra.mxu0 %v6152
        %6773 = vmatprep.subr.mxu0 0.0
        %6774 = vmatpush1.msra.mxu0 %v6155
        %6775 = vmatprep.subr.mxu0 0.0
        %6776 = vmatpush1.msra.mxu0 %v6158
        %6777 = vmatprep.subr.mxu0 0.0
        %6778 = vmatpush1.msra.mxu0 %v6161
        %6779 = vmatprep.subr.mxu0 0.0
        %6780 = vmatpush1.msra.mxu0 %v6164
        %6781 = vmatprep.subr.mxu0 0.0
        %6782 = vmatpush1.msra.mxu0 %v6167
        %6783 = vmatprep.subr.mxu0 0.0
        %6784 = vmatpush1.msra.mxu0 %v6170
        %6785 = vmatprep.subr.mxu0 0.0
        %6786 = vmatpush1.msra.mxu0 %v6173
        %6787 = vmatprep.subr.mxu0 0.0
        %6788 = vmatpush1.msra.mxu0 %v6176
        %6789 = vmatprep.subr.mxu0 0.0
        %6790 = vmatpush1.msra.mxu0 %v6179
        %6791 = vmatprep.subr.mxu0 0.0
        %6792 = vmatpush1.msra.mxu0 %v6182
        %6793 = vmatprep.subr.mxu0 0.0
        %6794 = vmatpush1.msra.mxu0 %v6185
        %6795 = vmatprep.subr.mxu0 0.0
        %6796 = vmatpush1.msra.mxu0 %v6188
        %6797 = vmatprep.subr.mxu0 0.0
        %6798 = vmatpush1.msra.mxu0 %v6191
        %6799 = vmatprep.subr.mxu0 0.0
        %6800 = vmatpush1.msra.mxu0 %v6194
        %6801 = vmatprep.subr.mxu0 0.0
        %6802 = vmatpush1.msra.mxu0 %v6197
        %6803 = vmatprep.subr.mxu0 0.0
        %6804 = vmatpush1.msra.mxu0 %v6200
        %6805 = vmatprep.subr.mxu0 0.0
        %6806 = vmatpush1.msra.mxu0 %v6203
        %6807 = vmatprep.subr.mxu0 0.0
        %6808 = vmatpush1.msra.mxu0 %v6206
        %6809 = vmatprep.subr.mxu0 0.0
        %6810 = vmatpush1.msra.mxu0 %v6209
        %6811 = vmatprep.subr.mxu0 0.0
        %6812 = vmatpush1.msra.mxu0 %v6212
        %6813 = vmatprep.subr.mxu0 0.0
        %6814 = vmatpush1.msra.mxu0 %v6215
        %6815 = vmatprep.subr.mxu0 0.0
        %6816 = vmatpush1.msra.mxu0 %v6218
        %6817 = vmatprep.subr.mxu0 0.0
        %6818 = vmatpush1.msra.mxu0 %v6221
        %6819 = vmatprep.subr.mxu0 0.0
        %6820 = vmatpush1.msra.mxu0 %v6224
        %6821 = vmatprep.subr.mxu0 0.0
        %6822 = vmatpush1.msra.mxu0 %v6227
        %6823 = vmatprep.mubr.f32.mxu0 %v6093
        %6824 = vmatmul.mubr.f32.gmra.mrb[0].mxu0 %v6092
        %v6825 = vpop.f32.mrb[0].mxu0
        %v6826 = vadd.f32 %v6359, %v6825
        %v6827 = vpop.f32.mrb[0].mxu0
        %6828 = vmatprep.mubr.f32.mxu0 %v6098
        %6829 = vmatmul.mubr.f32.gmra.mrb[0].mxu0 %v6097
        %v6830 = vpop.f32.mrb[0].mxu0
        %v6831 = vadd.f32 %v6364, %v6830
        %v6832 = vpop.f32.mrb[0].mxu0
        %6833 = vmatprep.mubr.f32.mxu0 %v6103
        %6834 = vmatmul.mubr.f32.gmra.mrb[0].mxu0 %v6102
        %v6835 = vpop.f32.mrb[0].mxu0
        %v6836 = vadd.f32 %v6369, %v6835
        %v6837 = vpop.f32.mrb[0].mxu0
        %6838 = vmatprep.mubr.f32.mxu0 %v6108
        %6839 = vmatmul.mubr.f32.gmra.mrb[0].mxu0 %v6107
        %v6840 = vpop.f32.mrb[0].mxu0
        %v6841 = vadd.f32 %v6374, %v6840
        %v6842 = vpop.f32.mrb[0].mxu0
        %6843 = vmatprep.mubr.f32.mxu0 %v6113
        %6844 = vmatmul.mubr.f32.gmra.mrb[0].mxu0 %v6112
        %v6845 = vpop.f32.mrb[0].mxu0
        %v6846 = vadd.f32 %v6379, %v6845
        %v6847 = vpop.f32.mrb[0].mxu0
        %6848 = vmatprep.mubr.f32.mxu0 %v6118
        %6849 = vmatmul.mubr.f32.gmra.mrb[0].mxu0 %v6117
        %v6850 = vpop.f32.mrb[0].mxu0
        %v6851 = vadd.f32 %v6384, %v6850
        %v6852 = vpop.f32.mrb[0].mxu0
        %6853 = vmatprep.mubr.f32.mxu0 %v6123
        %6854 = vmatmul.mubr.f32.gmra.mrb[0].mxu0 %v6122
        %v6855 = vpop.f32.mrb[0].mxu0
        %v6856 = vadd.f32 %v6389, %v6855
        %v6857 = vpop.f32.mrb[0].mxu0
        %6858 = vmatprep.mubr.f32.mxu0 %v6128
        %6859 = vmatmul.mubr.f32.gmra.mrb[0].mxu0 %v6127
        %v6860 = vpop.f32.mrb[0].mxu0
        %v6861 = vadd.f32 %v6394, %v6860
        %v6862 = vpop.f32.mrb[0].mxu0
        %6863 = vdwg.mxu0
        %6864 = vmatprep.subr.mxu0 0.0
        %6865 = vmatpush1.msra.mxu0 %v6230
        %6866 = vmatprep.subr.mxu0 0.0
        %6867 = vmatpush1.msra.mxu0 %v6233
        %6868 = vmatprep.subr.mxu0 0.0
        %6869 = vmatpush1.msra.mxu0 %v6236
        %6870 = vmatprep.subr.mxu0 0.0
        %6871 = vmatpush1.msra.mxu0 %v6239
        %6872 = vmatprep.subr.mxu0 0.0
        %6873 = vmatpush1.msra.mxu0 %v6242
        %6874 = vmatprep.subr.mxu0 0.0
        %6875 = vmatpush1.msra.mxu0 %v6245
        %6876 = vmatprep.subr.mxu0 0.0
        %6877 = vmatpush1.msra.mxu0 %v6248
        %6878 = vmatprep.subr.mxu0 0.0
        %6879 = vmatpush1.msra.mxu0 %v6251
        %6880 = vmatprep.subr.mxu0 0.0
        %6881 = vmatpush1.msra.mxu0 %v6254
        %6882 = vmatprep.subr.mxu0 0.0
        %6883 = vmatpush1.msra.mxu0 %v6257
        %6884 = vmatprep.subr.mxu0 0.0
        %6885 = vmatpush1.msra.mxu0 %v6260
        %6886 = vmatprep.subr.mxu0 0.0
        %6887 = vmatpush1.msra.mxu0 %v6263
        %6888 = vmatprep.subr.mxu0 0.0
        %6889 = vmatpush1.msra.mxu0 %v6266
        %6890 = vmatprep.subr.mxu0 0.0
        %6891 = vmatpush1.msra.mxu0 %v6269
        %6892 = vmatprep.subr.mxu0 0.0
        %6893 = vmatpush1.msra.mxu0 %v6272
        %6894 = vmatprep.subr.mxu0 0.0
        %6895 = vmatpush1.msra.mxu0 %v6275
        %6896 = vmatprep.subr.mxu0 0.0
        %6897 = vmatpush1.msra.mxu0 %v6278
        %6898 = vmatprep.subr.mxu0 0.0
        %6899 = vmatpush1.msra.mxu0 %v6281
        %6900 = vmatprep.subr.mxu0 0.0
        %6901 = vmatpush1.msra.mxu0 %v6284
        %6902 = vmatprep.subr.mxu0 0.0
        %6903 = vmatpush1.msra.mxu0 %v6287
        %6904 = vmatprep.subr.mxu0 0.0
        %6905 = vmatpush1.msra.mxu0 %v6290
        %6906 = vmatprep.subr.mxu0 0.0
        %6907 = vmatpush1.msra.mxu0 %v6293
        %6908 = vmatprep.subr.mxu0 0.0
        %6909 = vmatpush1.msra.mxu0 %v6296
        %6910 = vmatprep.subr.mxu0 0.0
        %6911 = vmatpush1.msra.mxu0 %v6299
        %6912 = vmatprep.subr.mxu0 0.0
        %6913 = vmatpush1.msra.mxu0 %v6302
        %6914 = vmatprep.subr.mxu0 0.0
        %6915 = vmatpush1.msra.mxu0 %v6305
        %6916 = vmatprep.subr.mxu0 0.0
        %6917 = vmatpush1.msra.mxu0 %v6308
        %6918 = vmatprep.subr.mxu0 0.0
        %6919 = vmatpush1.msra.mxu0 %v6311
        %6920 = vmatprep.subr.mxu0 0.0
        %6921 = vmatpush1.msra.mxu0 %v6314
        %6922 = vmatprep.subr.mxu0 0.0
        %6923 = vmatpush1.msra.mxu0 %v6317
        %6924 = vmatprep.subr.mxu0 0.0
        %6925 = vmatpush1.msra.mxu0 %v6320
        %6926 = vmatprep.subr.mxu0 0.0
        %6927 = vmatpush1.msra.mxu0 %v6323
        %6928 = vmatprep.mubr.f32.mxu0 %v6095
        %6929 = vmatmul.mubr.f32.gmra.mrb[0].mxu0 %v6094
        %v6930 = vpop.f32.mrb[0].mxu0
        %v6931 = vadd.f32 %v6826, %v6930
        %v6932 = vpop.f32.mrb[0].mxu0
        %6933 = vmatprep.mubr.f32.mxu0 %v6100
        %6934 = vmatmul.mubr.f32.gmra.mrb[0].mxu0 %v6099
        %v6935 = vpop.f32.mrb[0].mxu0
        %v6936 = vadd.f32 %v6831, %v6935
        %v6937 = vpop.f32.mrb[0].mxu0
        %6938 = vmatprep.mubr.f32.mxu0 %v6105
        %6939 = vmatmul.mubr.f32.gmra.mrb[0].mxu0 %v6104
        %v6940 = vpop.f32.mrb[0].mxu0
        %v6941 = vadd.f32 %v6836, %v6940
        %v6942 = vpop.f32.mrb[0].mxu0
        %6943 = vmatprep.mubr.f32.mxu0 %v6110
        %6944 = vmatmul.mubr.f32.gmra.mrb[0].mxu0 %v6109
        %v6945 = vpop.f32.mrb[0].mxu0
        %v6946 = vadd.f32 %v6841, %v6945
        %v6947 = vpop.f32.mrb[0].mxu0
        %6948 = vmatprep.mubr.f32.mxu0 %v6115
        %6949 = vmatmul.mubr.f32.gmra.mrb[0].mxu0 %v6114
        %v6950 = vpop.f32.mrb[0].mxu0
        %v6951 = vadd.f32 %v6846, %v6950
        %v6952 = vpop.f32.mrb[0].mxu0
        %6953 = vmatprep.mubr.f32.mxu0 %v6120
        %6954 = vmatmul.mubr.f32.gmra.mrb[0].mxu0 %v6119
        %v6955 = vpop.f32.mrb[0].mxu0
        %v6956 = vadd.f32 %v6851, %v6955
        %v6957 = vpop.f32.mrb[0].mxu0
        %6958 = vmatprep.mubr.f32.mxu0 %v6125
        %6959 = vmatmul.mubr.f32.gmra.mrb[0].mxu0 %v6124
        %v6960 = vpop.f32.mrb[0].mxu0
        %v6961 = vadd.f32 %v6856, %v6960
        %v6962 = vpop.f32.mrb[0].mxu0
        %6963 = vmatprep.mubr.f32.mxu0 %v6130
        %6964 = vmatmul.mubr.f32.gmra.mrb[0].mxu0 %v6129
        %v6965 = vpop.f32.mrb[0].mxu0
        %v6966 = vadd.f32 %v6861, %v6965
        %v6967 = vpop.f32.mrb[0].mxu0
        %6968 = vdwg.mxu0
        %6969 = vmatprep.subr.mxu0 0.0
        %6970 = vmatpush1.msra.mxu0 %v6326
        %6971 = vmatprep.subr.mxu0 0.0
        %6972 = vmatpush1.msra.mxu0 %v6329
        %6973 = vmatprep.subr.mxu0 0.0
        %6974 = vmatpush1.msra.mxu0 %v6332
        %6975 = vmatprep.subr.mxu0 0.0
        %6976 = vmatpush1.msra.mxu0 %v6335
        %6977 = vmatprep.subr.mxu0 0.0
        %6978 = vmatpush1.msra.mxu0 %v6338
        %6979 = vmatprep.subr.mxu0 0.0
        %6980 = vmatpush1.msra.mxu0 %v6341
        %6981 = vmatprep.subr.mxu0 0.0
        %6982 = vmatpush1.msra.mxu0 %v6344
        %6983 = vmatprep.subr.mxu0 0.0
        %6984 = vmatpush1.msra.mxu0 %v6347
        %6985 = vmatprep.subr.mxu0 0.0
        %6986 = vmatpush1.msra.mxu0 0.0
        %6987 = vmatprep.subr.mxu0 0.0
        %6988 = vmatpush1.msra.mxu0 0.0
        %6989 = vmatprep.subr.mxu0 0.0
        %6990 = vmatpush1.msra.mxu0 0.0
        %6991 = vmatprep.subr.mxu0 0.0
        %6992 = vmatpush1.msra.mxu0 0.0
        %6993 = vmatprep.subr.mxu0 0.0
        %6994 = vmatpush1.msra.mxu0 0.0
        %6995 = vmatprep.subr.mxu0 0.0
        %6996 = vmatpush1.msra.mxu0 0.0
        %6997 = vmatprep.subr.mxu0 0.0
        %6998 = vmatpush1.msra.mxu0 0.0
        %6999 = vmatprep.subr.mxu0 0.0
        %7000 = vmatpush1.msra.mxu0 0.0
        %7001 = vmatprep.subr.mxu0 0.0
        %7002 = vmatpush1.msra.mxu0 0.0
        %7003 = vmatprep.subr.mxu0 0.0
        %7004 = vmatpush1.msra.mxu0 0.0
        %7005 = vmatprep.subr.mxu0 0.0
        %7006 = vmatpush1.msra.mxu0 0.0
        %7007 = vmatprep.subr.mxu0 0.0
        %7008 = vmatpush1.msra.mxu0 0.0
        %7009 = vmatprep.subr.mxu0 0.0
        %7010 = vmatpush1.msra.mxu0 0.0
        %7011 = vmatprep.subr.mxu0 0.0
        %7012 = vmatpush1.msra.mxu0 0.0
        %7013 = vmatprep.subr.mxu0 0.0
        %7014 = vmatpush1.msra.mxu0 0.0
        %7015 = vmatprep.subr.mxu0 0.0
        %7016 = vmatpush1.msra.mxu0 0.0
        %7017 = vmatprep.subr.mxu0 0.0
        %7018 = vmatpush1.msra.mxu0 0.0
        %7019 = vmatprep.subr.mxu0 0.0
        %7020 = vmatpush1.msra.mxu0 0.0
        %7021 = vmatprep.subr.mxu0 0.0
        %7022 = vmatpush1.msra.mxu0 0.0
        %7023 = vmatprep.subr.mxu0 0.0
        %7024 = vmatpush1.msra.mxu0 0.0
        %7025 = vmatprep.subr.mxu0 0.0
        %7026 = vmatpush1.msra.mxu0 0.0
        %7027 = vmatprep.subr.mxu0 0.0
        %7028 = vmatpush1.msra.mxu0 0.0
        %7029 = vmatprep.subr.mxu0 0.0
        %7030 = vmatpush1.msra.mxu0 0.0
        %7031 = vmatprep.subr.mxu0 0.0
        %7032 = vmatpush1.msra.mxu0 0.0
        %7033 = vmatprep.mubr.f32.mxu0 0.0
        %7034 = vmatmul.mubr.f32.gmra.mrb[0].mxu0 %v6397
        %v7035 = vpop.f32.mrb[0].mxu0
        %v7036 = vadd.f32 %v6931, %v7035
        %v7037 = vpop.f32.mrb[0].mxu0
        %7038 = vmatprep.mubr.f32.mxu0 0.0
        %7039 = vmatmul.mubr.f32.gmra.mrb[0].mxu0 %v6400
        %v7040 = vpop.f32.mrb[0].mxu0
        %v7041 = vadd.f32 %v6936, %v7040
        %v7042 = vpop.f32.mrb[0].mxu0
        %7043 = vmatprep.mubr.f32.mxu0 0.0
        %7044 = vmatmul.mubr.f32.gmra.mrb[0].mxu0 %v6403
        %v7045 = vpop.f32.mrb[0].mxu0
        %v7046 = vadd.f32 %v6941, %v7045
        %v7047 = vpop.f32.mrb[0].mxu0
        %7048 = vmatprep.mubr.f32.mxu0 0.0
        %7049 = vmatmul.mubr.f32.gmra.mrb[0].mxu0 %v6406
        %v7050 = vpop.f32.mrb[0].mxu0
        %v7051 = vadd.f32 %v6946, %v7050
        %v7052 = vpop.f32.mrb[0].mxu0
        %7053 = vmatprep.mubr.f32.mxu0 0.0
        %7054 = vmatmul.mubr.f32.gmra.mrb[0].mxu0 %v6409
        %v7055 = vpop.f32.mrb[0].mxu0
        %v7056 = vadd.f32 %v6951, %v7055
        %v7057 = vpop.f32.mrb[0].mxu0
        %7058 = vmatprep.mubr.f32.mxu0 0.0
        %7059 = vmatmul.mubr.f32.gmra.mrb[0].mxu0 %v6412
        %v7060 = vpop.f32.mrb[0].mxu0
        %v7061 = vadd.f32 %v6956, %v7060
        %v7062 = vpop.f32.mrb[0].mxu0
        %7063 = vmatprep.mubr.f32.mxu0 0.0
        %7064 = vmatmul.mubr.f32.gmra.mrb[0].mxu0 %v6415
        %v7065 = vpop.f32.mrb[0].mxu0
        %v7066 = vadd.f32 %v6961, %v7065
        %v7067 = vpop.f32.mrb[0].mxu0
        %7068 = vmatprep.mubr.f32.mxu0 0.0
        %7069 = vmatmul.mubr.f32.gmra.mrb[0].mxu0 %v6418
        %v7070 = vpop.f32.mrb[0].mxu0
        %v7071 = vadd.f32 %v6966, %v7070
        %v7072 = vpop.f32.mrb[0].mxu0
        %7073 = vdwg.mxu0
        %v7074 = vmax.f32 %v6713, 0.0
        %v7075 = vmax.f32 %v6715, 0.0
        %v7076 = vmax.f32 %v7036, 0.0
        %v7077 = vmax.f32 %v6719, 0.0
        %v7078 = vmax.f32 %v6721, 0.0
        %v7079 = vmax.f32 %v7041, 0.0
        %v7080 = vmax.f32 %v6725, 0.0
        %v7081 = vmax.f32 %v6727, 0.0
        %v7082 = vmax.f32 %v7046, 0.0
        %v7083 = vmax.f32 %v6731, 0.0
        %v7084 = vmax.f32 %v6733, 0.0
        %v7085 = vmax.f32 %v7051, 0.0
        %v7086 = vmax.f32 %v6737, 0.0
        %v7087 = vmax.f32 %v6739, 0.0
        %v7088 = vmax.f32 %v7056, 0.0
        %v7089 = vmax.f32 %v6743, 0.0
        %v7090 = vmax.f32 %v6745, 0.0
        %v7091 = vmax.f32 %v7061, 0.0
        %v7092 = vmax.f32 %v6749, 0.0
        %v7093 = vmax.f32 %v6751, 0.0
        %v7094 = vmax.f32 %v7066, 0.0
        %v7095 = vmax.f32 %v6755, 0.0
        %v7096 = vmax.f32 %v6757, 0.0
        %v7097 = vmax.f32 %v7071, 0.0
        %v7098 = vld [vmem:[#allocation7] sm:$0x7]
        %v7100 = vlaneseq
        %v7101 = vshrl.u32 %v7100, 7
        %v7102 = vsub.s32 0, %v7101
        %v7103 = vrot.slane %v7098, %v7102
        %v7104 = vlaneseq
        %v7105 = vshrl.u32 %v7104, 7
        %v7106 = vsub.s32 1, %v7105
        %v7107 = vrot.slane %v7098, %v7106
        %v7108 = vlaneseq
        %v7109 = vshrl.u32 %v7108, 7
        %v7110 = vsub.s32 2, %v7109
        %v7111 = vrot.slane %v7098, %v7110
        %v7115 = vmul.f32 %v7074, %v7103
        %v7116 = vmul.f32 %v7075, %v7107
        %v7117 = vmul.f32 %v7076, %v7111
        %v7118 = vmul.f32 %v7077, %v7103
        %v7119 = vmul.f32 %v7078, %v7107
        %v7120 = vmul.f32 %v7079, %v7111
        %v7121 = vmul.f32 %v7080, %v7103
        %v7122 = vmul.f32 %v7081, %v7107
        %v7123 = vmul.f32 %v7082, %v7111
        %v7124 = vmul.f32 %v7083, %v7103
        %v7125 = vmul.f32 %v7084, %v7107
        %v7126 = vmul.f32 %v7085, %v7111
        %v7127 = vmul.f32 %v7086, %v7103
        %v7128 = vmul.f32 %v7087, %v7107
        %v7129 = vmul.f32 %v7088, %v7111
        %v7130 = vmul.f32 %v7089, %v7103
        %v7131 = vmul.f32 %v7090, %v7107
        %v7132 = vmul.f32 %v7091, %v7111
        %v7133 = vmul.f32 %v7092, %v7103
        %v7134 = vmul.f32 %v7093, %v7107
        %v7135 = vmul.f32 %v7094, %v7111
        %v7136 = vmul.f32 %v7095, %v7103
        %v7137 = vmul.f32 %v7096, %v7107
        %v7138 = vmul.f32 %v7097, %v7111
        %7139 = vst [vmem:[#allocation3] sm:$0xff] %v7115
        %7140 = vst [vmem:[#allocation3 + $0x8] sm:$0xff] %v7116
        %7141 = vst [vmem:[#allocation3 + $0x10] sm:$0xff] %v7117
        %7142 = vst [vmem:[#allocation3 + $0x18] sm:$0xff] %v7118
        %7143 = vst [vmem:[#allocation3 + $0x20] sm:$0xff] %v7119
        %7144 = vst [vmem:[#allocation3 + $0x28] sm:$0xff] %v7120
        %7145 = vst [vmem:[#allocation3 + $0x30] sm:$0xff] %v7121
        %7146 = vst [vmem:[#allocation3 + $0x38] sm:$0xff] %v7122
        %7147 = vst [vmem:[#allocation3 + $0x40] sm:$0xff] %v7123
        %7148 = vst [vmem:[#allocation3 + $0x48] sm:$0xff] %v7124
        %7149 = vst [vmem:[#allocation3 + $0x50] sm:$0xff] %v7125
        %7150 = vst [vmem:[#allocation3 + $0x58] sm:$0xff] %v7126
        %7151 = vst [vmem:[#allocation3 + $0x60] sm:$0xff] %v7127
        %7152 = vst [vmem:[#allocation3 + $0x68] sm:$0xff] %v7128
        %7153 = vst [vmem:[#allocation3 + $0x70] sm:$0xff] %v7129
        %7154 = vst [vmem:[#allocation3 + $0x78] sm:$0xff] %v7130
        %7155 = vst [vmem:[#allocation3 + $0x80] sm:$0xff] %v7131
        %7156 = vst [vmem:[#allocation3 + $0x88] sm:$0xff] %v7132
        %7157 = vst [vmem:[#allocation3 + $0x90] sm:$0xff] %v7133
        %7158 = vst [vmem:[#allocation3 + $0x98] sm:$0xff] %v7134
        %7159 = vst [vmem:[#allocation3 + $0xa0] sm:$0xff] %v7135
        %7160 = vst [vmem:[#allocation3 + $0xa8] sm:$0xff] %v7136
        %7161 = vst [vmem:[#allocation3 + $0xb0] sm:$0xff] %v7137
        %7162 = vst [vmem:[#allocation3 + $0xb8] sm:$0xff] %v7138
        %v7163 = vld [vmem:[#allocation3] sm:$0xff]
        %v7164 = vld [vmem:[#allocation3 + $0x8] sm:$0xff]
        %v7165 = vld [vmem:[#allocation3 + $0x10] sm:$0xff]
        %v7166 = vld [vmem:[#allocation3 + $0x18] sm:$0xff]
        %v7167 = vld [vmem:[#allocation3 + $0x20] sm:$0xff]
        %v7168 = vld [vmem:[#allocation3 + $0x28] sm:$0xff]
        %v7169 = vld [vmem:[#allocation3 + $0x30] sm:$0xff]
        %v7170 = vld [vmem:[#allocation3 + $0x38] sm:$0xff]
        %v7171 = vld [vmem:[#allocation3 + $0x40] sm:$0xff]
        %v7172 = vld [vmem:[#allocation3 + $0x48] sm:$0xff]
        %v7173 = vld [vmem:[#allocation3 + $0x50] sm:$0xff]
        %v7174 = vld [vmem:[#allocation3 + $0x58] sm:$0xff]
        %v7175 = vld [vmem:[#allocation3 + $0x60] sm:$0xff]
        %v7176 = vld [vmem:[#allocation3 + $0x68] sm:$0xff]
        %v7177 = vld [vmem:[#allocation3 + $0x70] sm:$0xff]
        %v7178 = vld [vmem:[#allocation3 + $0x78] sm:$0xff]
        %v7179 = vld [vmem:[#allocation3 + $0x80] sm:$0xff]
        %v7180 = vld [vmem:[#allocation3 + $0x88] sm:$0xff]
        %v7181 = vld [vmem:[#allocation3 + $0x90] sm:$0xff]
        %v7182 = vld [vmem:[#allocation3 + $0x98] sm:$0xff]
        %v7183 = vld [vmem:[#allocation3 + $0xa0] sm:$0xff]
        %v7184 = vld [vmem:[#allocation3 + $0xa8] sm:$0xff]
        %v7185 = vld [vmem:[#allocation3 + $0xb0] sm:$0xff]
        %v7186 = vld [vmem:[#allocation3 + $0xb8] sm:$0xff]
        %7187 = vrot.lane.b32.xlu0 %v7163, 19
        %v7188 = vpop.permute.xlu0 %7187
        %7189 = vrot.lane.b32.xlu0 %v7166, 19
        %v7190 = vpop.permute.xlu0 %7189
        %7191 = vrot.lane.b32.xlu0 %v7169, 19
        %v7192 = vpop.permute.xlu0 %7191
        %7193 = vrot.lane.b32.xlu0 %v7172, 19
        %v7194 = vpop.permute.xlu0 %7193
        %7195 = vrot.lane.b32.xlu0 %v7175, 19
        %v7196 = vpop.permute.xlu0 %7195
        %7197 = vrot.lane.b32.xlu0 %v7178, 19
        %v7198 = vpop.permute.xlu0 %7197
        %7199 = vrot.lane.b32.xlu0 %v7181, 19
        %v7200 = vpop.permute.xlu0 %7199
        %7201 = vrot.lane.b32.xlu0 %v7184, 19
        %v7202 = vpop.permute.xlu0 %7201
        %7203 = vrot.lane.b32.xlu0 %v7164, 19
        %v7204 = vpop.permute.xlu0 %7203
        %7205 = vrot.lane.b32.xlu0 %v7167, 19
        %v7206 = vpop.permute.xlu0 %7205
        %7207 = vrot.lane.b32.xlu0 %v7170, 19
        %v7208 = vpop.permute.xlu0 %7207
        %7209 = vrot.lane.b32.xlu0 %v7173, 19
        %v7210 = vpop.permute.xlu0 %7209
        %7211 = vrot.lane.b32.xlu0 %v7176, 19
        %v7212 = vpop.permute.xlu0 %7211
        %7213 = vrot.lane.b32.xlu0 %v7179, 19
        %v7214 = vpop.permute.xlu0 %7213
        %7215 = vrot.lane.b32.xlu0 %v7182, 19
        %v7216 = vpop.permute.xlu0 %7215
        %7217 = vrot.lane.b32.xlu0 %v7185, 19
        %v7218 = vpop.permute.xlu0 %7217
        %7219 = vrot.lane.b32.xlu0 %v7165, 19
        %v7220 = vpop.permute.xlu0 %7219
        %7221 = vrot.lane.b32.xlu0 %v7168, 19
        %v7222 = vpop.permute.xlu0 %7221
        %7223 = vrot.lane.b32.xlu0 %v7171, 19
        %v7224 = vpop.permute.xlu0 %7223
        %7225 = vrot.lane.b32.xlu0 %v7174, 19
        %v7226 = vpop.permute.xlu0 %7225
        %7227 = vrot.lane.b32.xlu0 %v7177, 19
        %v7228 = vpop.permute.xlu0 %7227
        %7229 = vrot.lane.b32.xlu0 %v7180, 19
        %v7230 = vpop.permute.xlu0 %7229
        %7231 = vrot.lane.b32.xlu0 %v7183, 19
        %v7232 = vpop.permute.xlu0 %7231
        %7233 = vrot.lane.b32.xlu0 %v7186, 19
        %v7234 = vpop.permute.xlu0 %7233
        %v7235 = vsel %vm535, %v7204, %v7220
        %v7236 = vsel %vm535, %v7206, %v7222
        %v7237 = vsel %vm535, %v7208, %v7224
        %v7238 = vsel %vm535, %v7210, %v7226
        %v7239 = vsel %vm535, %v7212, %v7228
        %v7240 = vsel %vm535, %v7214, %v7230
        %v7241 = vsel %vm535, %v7216, %v7232
        %v7242 = vsel %vm535, %v7218, %v7234
        %v7243 = vsel %vm535, %v7188, %v7204
        %v7244 = vsel %vm535, %v7190, %v7206
        %v7245 = vsel %vm535, %v7192, %v7208
        %v7246 = vsel %vm535, %v7194, %v7210
        %v7247 = vsel %vm535, %v7196, %v7212
        %v7248 = vsel %vm535, %v7198, %v7214
        %v7249 = vsel %vm535, %v7200, %v7216
        %v7250 = vsel %vm535, %v7202, %v7218
        %v7251 = vsel %vm535, %v7220, %v7188
        %v7252 = vsel %vm535, %v7222, %v7190
        %v7253 = vsel %vm535, %v7224, %v7192
        %v7254 = vsel %vm535, %v7226, %v7194
        %v7255 = vsel %vm535, %v7228, %v7196
        %v7256 = vsel %vm535, %v7230, %v7198
        %v7257 = vsel %vm535, %v7232, %v7200
        %v7258 = vsel %vm535, %v7234, %v7202
        %7259 = vst [vmem:[#allocation2] sm:$0xff] %v7251
        %7260 = vst [vmem:[#allocation2 + $0x8] sm:$0xff] %v7243
        %7261 = vst [vmem:[#allocation2 + $0x10] sm:$0xff] %v7235
        %7262 = vst [vmem:[#allocation2 + $0x18] sm:$0xff] %v7252
        %7263 = vst [vmem:[#allocation2 + $0x20] sm:$0xff] %v7244
        %7264 = vst [vmem:[#allocation2 + $0x28] sm:$0xff] %v7236
        %7265 = vst [vmem:[#allocation2 + $0x30] sm:$0xff] %v7253
        %7266 = vst [vmem:[#allocation2 + $0x38] sm:$0xff] %v7245
        %7267 = vst [vmem:[#allocation2 + $0x40] sm:$0xff] %v7237
        %7268 = vst [vmem:[#allocation2 + $0x48] sm:$0xff] %v7254
        %7269 = vst [vmem:[#allocation2 + $0x50] sm:$0xff] %v7246
        %7270 = vst [vmem:[#allocation2 + $0x58] sm:$0xff] %v7238
        %7271 = vst [vmem:[#allocation2 + $0x60] sm:$0xff] %v7255
        %7272 = vst [vmem:[#allocation2 + $0x68] sm:$0xff] %v7247
        %7273 = vst [vmem:[#allocation2 + $0x70] sm:$0xff] %v7239
        %7274 = vst [vmem:[#allocation2 + $0x78] sm:$0xff] %v7256
        %7275 = vst [vmem:[#allocation2 + $0x80] sm:$0xff] %v7248
        %7276 = vst [vmem:[#allocation2 + $0x88] sm:$0xff] %v7240
        %7277 = vst [vmem:[#allocation2 + $0x90] sm:$0xff] %v7257
        %7278 = vst [vmem:[#allocation2 + $0x98] sm:$0xff] %v7249
        %7279 = vst [vmem:[#allocation2 + $0xa0] sm:$0xff] %v7241
        %7280 = vst [vmem:[#allocation2 + $0xa8] sm:$0xff] %v7258
        %7281 = vst [vmem:[#allocation2 + $0xb0] sm:$0xff] %v7250
        %7282 = vst [vmem:[#allocation2 + $0xb8] sm:$0xff] %v7242
        %7283 = vrot.lane.b32.xlu0 %v7163, 18
        %v7284 = vpop.permute.xlu0 %7283
        %7285 = vrot.lane.b32.xlu0 %v7166, 18
        %v7286 = vpop.permute.xlu0 %7285
        %7287 = vrot.lane.b32.xlu0 %v7169, 18
        %v7288 = vpop.permute.xlu0 %7287
        %7289 = vrot.lane.b32.xlu0 %v7172, 18
        %v7290 = vpop.permute.xlu0 %7289
        %7291 = vrot.lane.b32.xlu0 %v7175, 18
        %v7292 = vpop.permute.xlu0 %7291
        %7293 = vrot.lane.b32.xlu0 %v7178, 18
        %v7294 = vpop.permute.xlu0 %7293
        %7295 = vrot.lane.b32.xlu0 %v7181, 18
        %v7296 = vpop.permute.xlu0 %7295
        %7297 = vrot.lane.b32.xlu0 %v7184, 18
        %v7298 = vpop.permute.xlu0 %7297
        %7299 = vrot.lane.b32.xlu0 %v7164, 18
        %v7300 = vpop.permute.xlu0 %7299
        %7301 = vrot.lane.b32.xlu0 %v7167, 18
        %v7302 = vpop.permute.xlu0 %7301
        %7303 = vrot.lane.b32.xlu0 %v7170, 18
        %v7304 = vpop.permute.xlu0 %7303
        %7305 = vrot.lane.b32.xlu0 %v7173, 18
        %v7306 = vpop.permute.xlu0 %7305
        %7307 = vrot.lane.b32.xlu0 %v7176, 18
        %v7308 = vpop.permute.xlu0 %7307
        %7309 = vrot.lane.b32.xlu0 %v7179, 18
        %v7310 = vpop.permute.xlu0 %7309
        %7311 = vrot.lane.b32.xlu0 %v7182, 18
        %v7312 = vpop.permute.xlu0 %7311
        %7313 = vrot.lane.b32.xlu0 %v7185, 18
        %v7314 = vpop.permute.xlu0 %7313
        %7315 = vrot.lane.b32.xlu0 %v7165, 18
        %v7316 = vpop.permute.xlu0 %7315
        %7317 = vrot.lane.b32.xlu0 %v7168, 18
        %v7318 = vpop.permute.xlu0 %7317
        %7319 = vrot.lane.b32.xlu0 %v7171, 18
        %v7320 = vpop.permute.xlu0 %7319
        %7321 = vrot.lane.b32.xlu0 %v7174, 18
        %v7322 = vpop.permute.xlu0 %7321
        %7323 = vrot.lane.b32.xlu0 %v7177, 18
        %v7324 = vpop.permute.xlu0 %7323
        %7325 = vrot.lane.b32.xlu0 %v7180, 18
        %v7326 = vpop.permute.xlu0 %7325
        %7327 = vrot.lane.b32.xlu0 %v7183, 18
        %v7328 = vpop.permute.xlu0 %7327
        %7329 = vrot.lane.b32.xlu0 %v7186, 18
        %v7330 = vpop.permute.xlu0 %7329
        %v7331 = vsel %vm553, %v7300, %v7316
        %v7332 = vsel %vm553, %v7302, %v7318
        %v7333 = vsel %vm553, %v7304, %v7320
        %v7334 = vsel %vm553, %v7306, %v7322
        %v7335 = vsel %vm553, %v7308, %v7324
        %v7336 = vsel %vm553, %v7310, %v7326
        %v7337 = vsel %vm553, %v7312, %v7328
        %v7338 = vsel %vm553, %v7314, %v7330
        %v7339 = vsel %vm553, %v7284, %v7300
        %v7340 = vsel %vm553, %v7286, %v7302
        %v7341 = vsel %vm553, %v7288, %v7304
        %v7342 = vsel %vm553, %v7290, %v7306
        %v7343 = vsel %vm553, %v7292, %v7308
        %v7344 = vsel %vm553, %v7294, %v7310
        %v7345 = vsel %vm553, %v7296, %v7312
        %v7346 = vsel %vm553, %v7298, %v7314
        %v7347 = vsel %vm553, %v7316, %v7284
        %v7348 = vsel %vm553, %v7318, %v7286
        %v7349 = vsel %vm553, %v7320, %v7288
        %v7350 = vsel %vm553, %v7322, %v7290
        %v7351 = vsel %vm553, %v7324, %v7292
        %v7352 = vsel %vm553, %v7326, %v7294
        %v7353 = vsel %vm553, %v7328, %v7296
        %v7354 = vsel %vm553, %v7330, %v7298
        %7355 = vst [vmem:[#allocation2 + $0xc0] sm:$0xff] %v7347
        %7356 = vst [vmem:[#allocation2 + $0xc8] sm:$0xff] %v7339
        %7357 = vst [vmem:[#allocation2 + $0xd0] sm:$0xff] %v7331
        %7358 = vst [vmem:[#allocation2 + $0xd8] sm:$0xff] %v7348
        %7359 = vst [vmem:[#allocation2 + $0xe0] sm:$0xff] %v7340
        %7360 = vst [vmem:[#allocation2 + $0xe8] sm:$0xff] %v7332
        %7361 = vst [vmem:[#allocation2 + $0xf0] sm:$0xff] %v7349
        %7362 = vst [vmem:[#allocation2 + $0xf8] sm:$0xff] %v7341
        %7363 = vst [vmem:[#allocation2 + $0x100] sm:$0xff] %v7333
        %7364 = vst [vmem:[#allocation2 + $0x108] sm:$0xff] %v7350
        %7365 = vst [vmem:[#allocation2 + $0x110] sm:$0xff] %v7342
        %7366 = vst [vmem:[#allocation2 + $0x118] sm:$0xff] %v7334
        %7367 = vst [vmem:[#allocation2 + $0x120] sm:$0xff] %v7351
        %7368 = vst [vmem:[#allocation2 + $0x128] sm:$0xff] %v7343
        %7369 = vst [vmem:[#allocation2 + $0x130] sm:$0xff] %v7335
        %7370 = vst [vmem:[#allocation2 + $0x138] sm:$0xff] %v7352
        %7371 = vst [vmem:[#allocation2 + $0x140] sm:$0xff] %v7344
        %7372 = vst [vmem:[#allocation2 + $0x148] sm:$0xff] %v7336
        %7373 = vst [vmem:[#allocation2 + $0x150] sm:$0xff] %v7353
        %7374 = vst [vmem:[#allocation2 + $0x158] sm:$0xff] %v7345
        %7375 = vst [vmem:[#allocation2 + $0x160] sm:$0xff] %v7337
        %7376 = vst [vmem:[#allocation2 + $0x168] sm:$0xff] %v7354
        %7377 = vst [vmem:[#allocation2 + $0x170] sm:$0xff] %v7346
        %7378 = vst [vmem:[#allocation2 + $0x178] sm:$0xff] %v7338
        %7379 = vrot.lane.b32.xlu0 %v7163, 17
        %v7380 = vpop.permute.xlu0 %7379
        %7381 = vrot.lane.b32.xlu0 %v7166, 17
        %v7382 = vpop.permute.xlu0 %7381
        %7383 = vrot.lane.b32.xlu0 %v7169, 17
        %v7384 = vpop.permute.xlu0 %7383
        %7385 = vrot.lane.b32.xlu0 %v7172, 17
        %v7386 = vpop.permute.xlu0 %7385
        %7387 = vrot.lane.b32.xlu0 %v7175, 17
        %v7388 = vpop.permute.xlu0 %7387
        %7389 = vrot.lane.b32.xlu0 %v7178, 17
        %v7390 = vpop.permute.xlu0 %7389
        %7391 = vrot.lane.b32.xlu0 %v7181, 17
        %v7392 = vpop.permute.xlu0 %7391
        %7393 = vrot.lane.b32.xlu0 %v7184, 17
        %v7394 = vpop.permute.xlu0 %7393
        %7395 = vrot.lane.b32.xlu0 %v7164, 17
        %v7396 = vpop.permute.xlu0 %7395
        %7397 = vrot.lane.b32.xlu0 %v7167, 17
        %v7398 = vpop.permute.xlu0 %7397
        %7399 = vrot.lane.b32.xlu0 %v7170, 17
        %v7400 = vpop.permute.xlu0 %7399
        %7401 = vrot.lane.b32.xlu0 %v7173, 17
        %v7402 = vpop.permute.xlu0 %7401
        %7403 = vrot.lane.b32.xlu0 %v7176, 17
        %v7404 = vpop.permute.xlu0 %7403
        %7405 = vrot.lane.b32.xlu0 %v7179, 17
        %v7406 = vpop.permute.xlu0 %7405
        %7407 = vrot.lane.b32.xlu0 %v7182, 17
        %v7408 = vpop.permute.xlu0 %7407
        %7409 = vrot.lane.b32.xlu0 %v7185, 17
        %v7410 = vpop.permute.xlu0 %7409
        %7411 = vrot.lane.b32.xlu0 %v7165, 17
        %v7412 = vpop.permute.xlu0 %7411
        %7413 = vrot.lane.b32.xlu0 %v7168, 17
        %v7414 = vpop.permute.xlu0 %7413
        %7415 = vrot.lane.b32.xlu0 %v7171, 17
        %v7416 = vpop.permute.xlu0 %7415
        %7417 = vrot.lane.b32.xlu0 %v7174, 17
        %v7418 = vpop.permute.xlu0 %7417
        %7419 = vrot.lane.b32.xlu0 %v7177, 17
        %v7420 = vpop.permute.xlu0 %7419
        %7421 = vrot.lane.b32.xlu0 %v7180, 17
        %v7422 = vpop.permute.xlu0 %7421
        %7423 = vrot.lane.b32.xlu0 %v7183, 17
        %v7424 = vpop.permute.xlu0 %7423
        %7425 = vrot.lane.b32.xlu0 %v7186, 17
        %v7426 = vpop.permute.xlu0 %7425
        %v7427 = vsel %vm1091, %v7396, %v7412
        %v7428 = vsel %vm1091, %v7398, %v7414
        %v7429 = vsel %vm1091, %v7400, %v7416
        %v7430 = vsel %vm1091, %v7402, %v7418
        %v7431 = vsel %vm1091, %v7404, %v7420
        %v7432 = vsel %vm1091, %v7406, %v7422
        %v7433 = vsel %vm1091, %v7408, %v7424
        %v7434 = vsel %vm1091, %v7410, %v7426
        %v7435 = vsel %vm1091, %v7380, %v7396
        %v7436 = vsel %vm1091, %v7382, %v7398
        %v7437 = vsel %vm1091, %v7384, %v7400
        %v7438 = vsel %vm1091, %v7386, %v7402
        %v7439 = vsel %vm1091, %v7388, %v7404
        %v7440 = vsel %vm1091, %v7390, %v7406
        %v7441 = vsel %vm1091, %v7392, %v7408
        %v7442 = vsel %vm1091, %v7394, %v7410
        %v7443 = vsel %vm1091, %v7412, %v7380
        %v7444 = vsel %vm1091, %v7414, %v7382
        %v7445 = vsel %vm1091, %v7416, %v7384
        %v7446 = vsel %vm1091, %v7418, %v7386
        %v7447 = vsel %vm1091, %v7420, %v7388
        %v7448 = vsel %vm1091, %v7422, %v7390
        %v7449 = vsel %vm1091, %v7424, %v7392
        %v7450 = vsel %vm1091, %v7426, %v7394
        %7451 = vst [vmem:[#allocation2 + $0x180] sm:$0xff] %v7443
        %7452 = vst [vmem:[#allocation2 + $0x188] sm:$0xff] %v7435
        %7453 = vst [vmem:[#allocation2 + $0x190] sm:$0xff] %v7427
        %7454 = vst [vmem:[#allocation2 + $0x198] sm:$0xff] %v7444
        %7455 = vst [vmem:[#allocation2 + $0x1a0] sm:$0xff] %v7436
        %7456 = vst [vmem:[#allocation2 + $0x1a8] sm:$0xff] %v7428
        %7457 = vst [vmem:[#allocation2 + $0x1b0] sm:$0xff] %v7445
        %7458 = vst [vmem:[#allocation2 + $0x1b8] sm:$0xff] %v7437
        %7459 = vst [vmem:[#allocation2 + $0x1c0] sm:$0xff] %v7429
        %7460 = vst [vmem:[#allocation2 + $0x1c8] sm:$0xff] %v7446
        %7461 = vst [vmem:[#allocation2 + $0x1d0] sm:$0xff] %v7438
        %7462 = vst [vmem:[#allocation2 + $0x1d8] sm:$0xff] %v7430
        %7463 = vst [vmem:[#allocation2 + $0x1e0] sm:$0xff] %v7447
        %7464 = vst [vmem:[#allocation2 + $0x1e8] sm:$0xff] %v7439
        %7465 = vst [vmem:[#allocation2 + $0x1f0] sm:$0xff] %v7431
        %7466 = vst [vmem:[#allocation2 + $0x1f8] sm:$0xff] %v7448
        %7467 = vst [vmem:[#allocation2 + $0x200] sm:$0xff] %v7440
        %7468 = vst [vmem:[#allocation2 + $0x208] sm:$0xff] %v7432
        %7469 = vst [vmem:[#allocation2 + $0x210] sm:$0xff] %v7449
        %7470 = vst [vmem:[#allocation2 + $0x218] sm:$0xff] %v7441
        %7471 = vst [vmem:[#allocation2 + $0x220] sm:$0xff] %v7433
        %7472 = vst [vmem:[#allocation2 + $0x228] sm:$0xff] %v7450
        %7473 = vst [vmem:[#allocation2 + $0x230] sm:$0xff] %v7442
        %7474 = vst [vmem:[#allocation2 + $0x238] sm:$0xff] %v7434
        %7475 = vrot.lane.b32.xlu0 %v7163, 1
        %v7476 = vpop.permute.xlu0 %7475
        %7477 = vrot.lane.b32.xlu0 %v7166, 1
        %v7478 = vpop.permute.xlu0 %7477
        %7479 = vrot.lane.b32.xlu0 %v7169, 1
        %v7480 = vpop.permute.xlu0 %7479
        %7481 = vrot.lane.b32.xlu0 %v7172, 1
        %v7482 = vpop.permute.xlu0 %7481
        %7483 = vrot.lane.b32.xlu0 %v7175, 1
        %v7484 = vpop.permute.xlu0 %7483
        %7485 = vrot.lane.b32.xlu0 %v7178, 1
        %v7486 = vpop.permute.xlu0 %7485
        %7487 = vrot.lane.b32.xlu0 %v7181, 1
        %v7488 = vpop.permute.xlu0 %7487
        %7489 = vrot.lane.b32.xlu0 %v7184, 1
        %v7490 = vpop.permute.xlu0 %7489
        %7491 = vrot.lane.b32.xlu0 %v7164, 1
        %v7492 = vpop.permute.xlu0 %7491
        %7493 = vrot.lane.b32.xlu0 %v7167, 1
        %v7494 = vpop.permute.xlu0 %7493
        %7495 = vrot.lane.b32.xlu0 %v7170, 1
        %v7496 = vpop.permute.xlu0 %7495
        %7497 = vrot.lane.b32.xlu0 %v7173, 1
        %v7498 = vpop.permute.xlu0 %7497
        %7499 = vrot.lane.b32.xlu0 %v7176, 1
        %v7500 = vpop.permute.xlu0 %7499
        %7501 = vrot.lane.b32.xlu0 %v7179, 1
        %v7502 = vpop.permute.xlu0 %7501
        %7503 = vrot.lane.b32.xlu0 %v7182, 1
        %v7504 = vpop.permute.xlu0 %7503
        %7505 = vrot.lane.b32.xlu0 %v7185, 1
        %v7506 = vpop.permute.xlu0 %7505
        %7507 = vrot.lane.b32.xlu0 %v7165, 1
        %v7508 = vpop.permute.xlu0 %7507
        %7509 = vrot.lane.b32.xlu0 %v7168, 1
        %v7510 = vpop.permute.xlu0 %7509
        %7511 = vrot.lane.b32.xlu0 %v7171, 1
        %v7512 = vpop.permute.xlu0 %7511
        %7513 = vrot.lane.b32.xlu0 %v7174, 1
        %v7514 = vpop.permute.xlu0 %7513
        %7515 = vrot.lane.b32.xlu0 %v7177, 1
        %v7516 = vpop.permute.xlu0 %7515
        %7517 = vrot.lane.b32.xlu0 %v7180, 1
        %v7518 = vpop.permute.xlu0 %7517
        %7519 = vrot.lane.b32.xlu0 %v7183, 1
        %v7520 = vpop.permute.xlu0 %7519
        %7521 = vrot.lane.b32.xlu0 %v7186, 1
        %v7522 = vpop.permute.xlu0 %7521
        %v7523 = vsel %vm1400, %v7492, %v7508
        %v7524 = vsel %vm1400, %v7494, %v7510
        %v7525 = vsel %vm1400, %v7496, %v7512
        %v7526 = vsel %vm1400, %v7498, %v7514
        %v7527 = vsel %vm1400, %v7500, %v7516
        %v7528 = vsel %vm1400, %v7502, %v7518
        %v7529 = vsel %vm1400, %v7504, %v7520
        %v7530 = vsel %vm1400, %v7506, %v7522
        %v7531 = vsel %vm1400, %v7476, %v7492
        %v7532 = vsel %vm1400, %v7478, %v7494
        %v7533 = vsel %vm1400, %v7480, %v7496
        %v7534 = vsel %vm1400, %v7482, %v7498
        %v7535 = vsel %vm1400, %v7484, %v7500
        %v7536 = vsel %vm1400, %v7486, %v7502
        %v7537 = vsel %vm1400, %v7488, %v7504
        %v7538 = vsel %vm1400, %v7490, %v7506
        %v7539 = vsel %vm1400, %v7508, %v7476
        %v7540 = vsel %vm1400, %v7510, %v7478
        %v7541 = vsel %vm1400, %v7512, %v7480
        %v7542 = vsel %vm1400, %v7514, %v7482
        %v7543 = vsel %vm1400, %v7516, %v7484
        %v7544 = vsel %vm1400, %v7518, %v7486
        %v7545 = vsel %vm1400, %v7520, %v7488
        %v7546 = vsel %vm1400, %v7522, %v7490
        %7547 = vst [vmem:[#allocation2 + $0x240] sm:$0xff] %v7539
        %7548 = vst [vmem:[#allocation2 + $0x248] sm:$0xff] %v7531
        %7549 = vst [vmem:[#allocation2 + $0x250] sm:$0xff] %v7523
        %7550 = vst [vmem:[#allocation2 + $0x258] sm:$0xff] %v7540
        %7551 = vst [vmem:[#allocation2 + $0x260] sm:$0xff] %v7532
        %7552 = vst [vmem:[#allocation2 + $0x268] sm:$0xff] %v7524
        %7553 = vst [vmem:[#allocation2 + $0x270] sm:$0xff] %v7541
        %7554 = vst [vmem:[#allocation2 + $0x278] sm:$0xff] %v7533
        %7555 = vst [vmem:[#allocation2 + $0x280] sm:$0xff] %v7525
        %7556 = vst [vmem:[#allocation2 + $0x288] sm:$0xff] %v7542
        %7557 = vst [vmem:[#allocation2 + $0x290] sm:$0xff] %v7534
        %7558 = vst [vmem:[#allocation2 + $0x298] sm:$0xff] %v7526
        %7559 = vst [vmem:[#allocation2 + $0x2a0] sm:$0xff] %v7543
        %7560 = vst [vmem:[#allocation2 + $0x2a8] sm:$0xff] %v7535
        %7561 = vst [vmem:[#allocation2 + $0x2b0] sm:$0xff] %v7527
        %7562 = vst [vmem:[#allocation2 + $0x2b8] sm:$0xff] %v7544
        %7563 = vst [vmem:[#allocation2 + $0x2c0] sm:$0xff] %v7536
        %7564 = vst [vmem:[#allocation2 + $0x2c8] sm:$0xff] %v7528
        %7565 = vst [vmem:[#allocation2 + $0x2d0] sm:$0xff] %v7545
        %7566 = vst [vmem:[#allocation2 + $0x2d8] sm:$0xff] %v7537
        %7567 = vst [vmem:[#allocation2 + $0x2e0] sm:$0xff] %v7529
        %7568 = vst [vmem:[#allocation2 + $0x2e8] sm:$0xff] %v7546
        %7569 = vst [vmem:[#allocation2 + $0x2f0] sm:$0xff] %v7538
        %7570 = vst [vmem:[#allocation2 + $0x2f8] sm:$0xff] %v7530
        %7571 = vst [vmem:[#allocation2 + $0x300] sm:$0xff] %v7163
        %7572 = vst [vmem:[#allocation2 + $0x308] sm:$0xff] %v7164
        %7573 = vst [vmem:[#allocation2 + $0x310] sm:$0xff] %v7165
        %7574 = vst [vmem:[#allocation2 + $0x318] sm:$0xff] %v7166
        %7575 = vst [vmem:[#allocation2 + $0x320] sm:$0xff] %v7167
        %7576 = vst [vmem:[#allocation2 + $0x328] sm:$0xff] %v7168
        %7577 = vst [vmem:[#allocation2 + $0x330] sm:$0xff] %v7169
        %7578 = vst [vmem:[#allocation2 + $0x338] sm:$0xff] %v7170
        %7579 = vst [vmem:[#allocation2 + $0x340] sm:$0xff] %v7171
        %7580 = vst [vmem:[#allocation2 + $0x348] sm:$0xff] %v7172
        %7581 = vst [vmem:[#allocation2 + $0x350] sm:$0xff] %v7173
        %7582 = vst [vmem:[#allocation2 + $0x358] sm:$0xff] %v7174
        %7583 = vst [vmem:[#allocation2 + $0x360] sm:$0xff] %v7175
        %7584 = vst [vmem:[#allocation2 + $0x368] sm:$0xff] %v7176
        %7585 = vst [vmem:[#allocation2 + $0x370] sm:$0xff] %v7177
        %7586 = vst [vmem:[#allocation2 + $0x378] sm:$0xff] %v7178
        %7587 = vst [vmem:[#allocation2 + $0x380] sm:$0xff] %v7179
        %7588 = vst [vmem:[#allocation2 + $0x388] sm:$0xff] %v7180
        %7589 = vst [vmem:[#allocation2 + $0x390] sm:$0xff] %v7181
        %7590 = vst [vmem:[#allocation2 + $0x398] sm:$0xff] %v7182
        %7591 = vst [vmem:[#allocation2 + $0x3a0] sm:$0xff] %v7183
        %7592 = vst [vmem:[#allocation2 + $0x3a8] sm:$0xff] %v7184
        %7593 = vst [vmem:[#allocation2 + $0x3b0] sm:$0xff] %v7185
        %7594 = vst [vmem:[#allocation2 + $0x3b8] sm:$0xff] %v7186
        %7595 = vrot.lane.b32.xlu0 %v7163, 127
        %v7596 = vpop.permute.xlu0 %7595
        %7597 = vrot.lane.b32.xlu0 %v7166, 127
        %v7598 = vpop.permute.xlu0 %7597
        %7599 = vrot.lane.b32.xlu0 %v7169, 127
        %v7600 = vpop.permute.xlu0 %7599
        %7601 = vrot.lane.b32.xlu0 %v7172, 127
        %v7602 = vpop.permute.xlu0 %7601
        %7603 = vrot.lane.b32.xlu0 %v7175, 127
        %v7604 = vpop.permute.xlu0 %7603
        %7605 = vrot.lane.b32.xlu0 %v7178, 127
        %v7606 = vpop.permute.xlu0 %7605
        %7607 = vrot.lane.b32.xlu0 %v7181, 127
        %v7608 = vpop.permute.xlu0 %7607
        %7609 = vrot.lane.b32.xlu0 %v7184, 127
        %v7610 = vpop.permute.xlu0 %7609
        %7611 = vrot.lane.b32.xlu0 %v7164, 127
        %v7612 = vpop.permute.xlu0 %7611
        %7613 = vrot.lane.b32.xlu0 %v7167, 127
        %v7614 = vpop.permute.xlu0 %7613
        %7615 = vrot.lane.b32.xlu0 %v7170, 127
        %v7616 = vpop.permute.xlu0 %7615
        %7617 = vrot.lane.b32.xlu0 %v7173, 127
        %v7618 = vpop.permute.xlu0 %7617
        %7619 = vrot.lane.b32.xlu0 %v7176, 127
        %v7620 = vpop.permute.xlu0 %7619
        %7621 = vrot.lane.b32.xlu0 %v7179, 127
        %v7622 = vpop.permute.xlu0 %7621
        %7623 = vrot.lane.b32.xlu0 %v7182, 127
        %v7624 = vpop.permute.xlu0 %7623
        %7625 = vrot.lane.b32.xlu0 %v7185, 127
        %v7626 = vpop.permute.xlu0 %7625
        %7627 = vrot.lane.b32.xlu0 %v7165, 127
        %v7628 = vpop.permute.xlu0 %7627
        %7629 = vrot.lane.b32.xlu0 %v7168, 127
        %v7630 = vpop.permute.xlu0 %7629
        %7631 = vrot.lane.b32.xlu0 %v7171, 127
        %v7632 = vpop.permute.xlu0 %7631
        %7633 = vrot.lane.b32.xlu0 %v7174, 127
        %v7634 = vpop.permute.xlu0 %7633
        %7635 = vrot.lane.b32.xlu0 %v7177, 127
        %v7636 = vpop.permute.xlu0 %7635
        %7637 = vrot.lane.b32.xlu0 %v7180, 127
        %v7638 = vpop.permute.xlu0 %7637
        %7639 = vrot.lane.b32.xlu0 %v7183, 127
        %v7640 = vpop.permute.xlu0 %7639
        %7641 = vrot.lane.b32.xlu0 %v7186, 127
        %v7642 = vpop.permute.xlu0 %7641
        %v7643 = vsel %vm2005, %v7612, %v7628
        %v7644 = vsel %vm2005, %v7614, %v7630
        %v7645 = vsel %vm2005, %v7616, %v7632
        %v7646 = vsel %vm2005, %v7618, %v7634
        %v7647 = vsel %vm2005, %v7620, %v7636
        %v7648 = vsel %vm2005, %v7622, %v7638
        %v7649 = vsel %vm2005, %v7624, %v7640
        %v7650 = vsel %vm2005, %v7626, %v7642
        %v7651 = vsel %vm2005, %v7596, %v7612
        %v7652 = vsel %vm2005, %v7598, %v7614
        %v7653 = vsel %vm2005, %v7600, %v7616
        %v7654 = vsel %vm2005, %v7602, %v7618
        %v7655 = vsel %vm2005, %v7604, %v7620
        %v7656 = vsel %vm2005, %v7606, %v7622
        %v7657 = vsel %vm2005, %v7608, %v7624
        %v7658 = vsel %vm2005, %v7610, %v7626
        %v7659 = vsel %vm2005, %v7628, %v7596
        %v7660 = vsel %vm2005, %v7630, %v7598
        %v7661 = vsel %vm2005, %v7632, %v7600
        %v7662 = vsel %vm2005, %v7634, %v7602
        %v7663 = vsel %vm2005, %v7636, %v7604
        %v7664 = vsel %vm2005, %v7638, %v7606
        %v7665 = vsel %vm2005, %v7640, %v7608
        %v7666 = vsel %vm2005, %v7642, %v7610
        %7667 = vst [vmem:[#allocation2 + $0x3c0] sm:$0xff] %v7651
        %7668 = vst [vmem:[#allocation2 + $0x3c8] sm:$0xff] %v7643
        %7669 = vst [vmem:[#allocation2 + $0x3d0] sm:$0xff] %v7659
        %7670 = vst [vmem:[#allocation2 + $0x3d8] sm:$0xff] %v7652
        %7671 = vst [vmem:[#allocation2 + $0x3e0] sm:$0xff] %v7644
        %7672 = vst [vmem:[#allocation2 + $0x3e8] sm:$0xff] %v7660
        %7673 = vst [vmem:[#allocation2 + $0x3f0] sm:$0xff] %v7653
        %7674 = vst [vmem:[#allocation2 + $0x3f8] sm:$0xff] %v7645
        %7675 = vst [vmem:[#allocation2 + $0x400] sm:$0xff] %v7661
        %7676 = vst [vmem:[#allocation2 + $0x408] sm:$0xff] %v7654
        %7677 = vst [vmem:[#allocation2 + $0x410] sm:$0xff] %v7646
        %7678 = vst [vmem:[#allocation2 + $0x418] sm:$0xff] %v7662
        %7679 = vst [vmem:[#allocation2 + $0x420] sm:$0xff] %v7655
        %7680 = vst [vmem:[#allocation2 + $0x428] sm:$0xff] %v7647
        %7681 = vst [vmem:[#allocation2 + $0x430] sm:$0xff] %v7663
        %7682 = vst [vmem:[#allocation2 + $0x438] sm:$0xff] %v7656
        %7683 = vst [vmem:[#allocation2 + $0x440] sm:$0xff] %v7648
        %7684 = vst [vmem:[#allocation2 + $0x448] sm:$0xff] %v7664
        %7685 = vst [vmem:[#allocation2 + $0x450] sm:$0xff] %v7657
        %7686 = vst [vmem:[#allocation2 + $0x458] sm:$0xff] %v7649
        %7687 = vst [vmem:[#allocation2 + $0x460] sm:$0xff] %v7665
        %7688 = vst [vmem:[#allocation2 + $0x468] sm:$0xff] %v7658
        %7689 = vst [vmem:[#allocation2 + $0x470] sm:$0xff] %v7650
        %7690 = vst [vmem:[#allocation2 + $0x478] sm:$0xff] %v7666
        %7691 = vrot.lane.b32.xlu0 %v7163, 111
        %v7692 = vpop.permute.xlu0 %7691
        %7693 = vrot.lane.b32.xlu0 %v7166, 111
        %v7694 = vpop.permute.xlu0 %7693
        %7695 = vrot.lane.b32.xlu0 %v7169, 111
        %v7696 = vpop.permute.xlu0 %7695
        %7697 = vrot.lane.b32.xlu0 %v7172, 111
        %v7698 = vpop.permute.xlu0 %7697
        %7699 = vrot.lane.b32.xlu0 %v7175, 111
        %v7700 = vpop.permute.xlu0 %7699
        %7701 = vrot.lane.b32.xlu0 %v7178, 111
        %v7702 = vpop.permute.xlu0 %7701
        %7703 = vrot.lane.b32.xlu0 %v7181, 111
        %v7704 = vpop.permute.xlu0 %7703
        %7705 = vrot.lane.b32.xlu0 %v7184, 111
        %v7706 = vpop.permute.xlu0 %7705
        %7707 = vrot.lane.b32.xlu0 %v7164, 111
        %v7708 = vpop.permute.xlu0 %7707
        %7709 = vrot.lane.b32.xlu0 %v7167, 111
        %v7710 = vpop.permute.xlu0 %7709
        %7711 = vrot.lane.b32.xlu0 %v7170, 111
        %v7712 = vpop.permute.xlu0 %7711
        %7713 = vrot.lane.b32.xlu0 %v7173, 111
        %v7714 = vpop.permute.xlu0 %7713
        %7715 = vrot.lane.b32.xlu0 %v7176, 111
        %v7716 = vpop.permute.xlu0 %7715
        %7717 = vrot.lane.b32.xlu0 %v7179, 111
        %v7718 = vpop.permute.xlu0 %7717
        %7719 = vrot.lane.b32.xlu0 %v7182, 111
        %v7720 = vpop.permute.xlu0 %7719
        %7721 = vrot.lane.b32.xlu0 %v7185, 111
        %v7722 = vpop.permute.xlu0 %7721
        %7723 = vrot.lane.b32.xlu0 %v7165, 111
        %v7724 = vpop.permute.xlu0 %7723
        %7725 = vrot.lane.b32.xlu0 %v7168, 111
        %v7726 = vpop.permute.xlu0 %7725
        %7727 = vrot.lane.b32.xlu0 %v7171, 111
        %v7728 = vpop.permute.xlu0 %7727
        %7729 = vrot.lane.b32.xlu0 %v7174, 111
        %v7730 = vpop.permute.xlu0 %7729
        %7731 = vrot.lane.b32.xlu0 %v7177, 111
        %v7732 = vpop.permute.xlu0 %7731
        %7733 = vrot.lane.b32.xlu0 %v7180, 111
        %v7734 = vpop.permute.xlu0 %7733
        %7735 = vrot.lane.b32.xlu0 %v7183, 111
        %v7736 = vpop.permute.xlu0 %7735
        %7737 = vrot.lane.b32.xlu0 %v7186, 111
        %v7738 = vpop.permute.xlu0 %7737
        %v7739 = vsel %vm2314, %v7708, %v7724
        %v7740 = vsel %vm2314, %v7710, %v7726
        %v7741 = vsel %vm2314, %v7712, %v7728
        %v7742 = vsel %vm2314, %v7714, %v7730
        %v7743 = vsel %vm2314, %v7716, %v7732
        %v7744 = vsel %vm2314, %v7718, %v7734
        %v7745 = vsel %vm2314, %v7720, %v7736
        %v7746 = vsel %vm2314, %v7722, %v7738
        %v7747 = vsel %vm2314, %v7692, %v7708
        %v7748 = vsel %vm2314, %v7694, %v7710
        %v7749 = vsel %vm2314, %v7696, %v7712
        %v7750 = vsel %vm2314, %v7698, %v7714
        %v7751 = vsel %vm2314, %v7700, %v7716
        %v7752 = vsel %vm2314, %v7702, %v7718
        %v7753 = vsel %vm2314, %v7704, %v7720
        %v7754 = vsel %vm2314, %v7706, %v7722
        %v7755 = vsel %vm2314, %v7724, %v7692
        %v7756 = vsel %vm2314, %v7726, %v7694
        %v7757 = vsel %vm2314, %v7728, %v7696
        %v7758 = vsel %vm2314, %v7730, %v7698
        %v7759 = vsel %vm2314, %v7732, %v7700
        %v7760 = vsel %vm2314, %v7734, %v7702
        %v7761 = vsel %vm2314, %v7736, %v7704
        %v7762 = vsel %vm2314, %v7738, %v7706
        %7763 = vst [vmem:[#allocation2 + $0x480] sm:$0xff] %v7747
        %7764 = vst [vmem:[#allocation2 + $0x488] sm:$0xff] %v7739
        %7765 = vst [vmem:[#allocation2 + $0x490] sm:$0xff] %v7755
        %7766 = vst [vmem:[#allocation2 + $0x498] sm:$0xff] %v7748
        %7767 = vst [vmem:[#allocation2 + $0x4a0] sm:$0xff] %v7740
        %7768 = vst [vmem:[#allocation2 + $0x4a8] sm:$0xff] %v7756
        %7769 = vst [vmem:[#allocation2 + $0x4b0] sm:$0xff] %v7749
        %7770 = vst [vmem:[#allocation2 + $0x4b8] sm:$0xff] %v7741
        %7771 = vst [vmem:[#allocation2 + $0x4c0] sm:$0xff] %v7757
        %7772 = vst [vmem:[#allocation2 + $0x4c8] sm:$0xff] %v7750
        %7773 = vst [vmem:[#allocation2 + $0x4d0] sm:$0xff] %v7742
        %7774 = vst [vmem:[#allocation2 + $0x4d8] sm:$0xff] %v7758
        %7775 = vst [vmem:[#allocation2 + $0x4e0] sm:$0xff] %v7751
        %7776 = vst [vmem:[#allocation2 + $0x4e8] sm:$0xff] %v7743
        %7777 = vst [vmem:[#allocation2 + $0x4f0] sm:$0xff] %v7759
        %7778 = vst [vmem:[#allocation2 + $0x4f8] sm:$0xff] %v7752
        %7779 = vst [vmem:[#allocation2 + $0x500] sm:$0xff] %v7744
        %7780 = vst [vmem:[#allocation2 + $0x508] sm:$0xff] %v7760
        %7781 = vst [vmem:[#allocation2 + $0x510] sm:$0xff] %v7753
        %7782 = vst [vmem:[#allocation2 + $0x518] sm:$0xff] %v7745
        %7783 = vst [vmem:[#allocation2 + $0x520] sm:$0xff] %v7761
        %7784 = vst [vmem:[#allocation2 + $0x528] sm:$0xff] %v7754
        %7785 = vst [vmem:[#allocation2 + $0x530] sm:$0xff] %v7746
        %7786 = vst [vmem:[#allocation2 + $0x538] sm:$0xff] %v7762
        %7787 = vrot.lane.b32.xlu0 %v7163, 110
        %v7788 = vpop.permute.xlu0 %7787
        %7789 = vrot.lane.b32.xlu0 %v7166, 110
        %v7790 = vpop.permute.xlu0 %7789
        %7791 = vrot.lane.b32.xlu0 %v7169, 110
        %v7792 = vpop.permute.xlu0 %7791
        %7793 = vrot.lane.b32.xlu0 %v7172, 110
        %v7794 = vpop.permute.xlu0 %7793
        %7795 = vrot.lane.b32.xlu0 %v7175, 110
        %v7796 = vpop.permute.xlu0 %7795
        %7797 = vrot.lane.b32.xlu0 %v7178, 110
        %v7798 = vpop.permute.xlu0 %7797
        %7799 = vrot.lane.b32.xlu0 %v7181, 110
        %v7800 = vpop.permute.xlu0 %7799
        %7801 = vrot.lane.b32.xlu0 %v7184, 110
        %v7802 = vpop.permute.xlu0 %7801
        %7803 = vrot.lane.b32.xlu0 %v7164, 110
        %v7804 = vpop.permute.xlu0 %7803
        %7805 = vrot.lane.b32.xlu0 %v7167, 110
        %v7806 = vpop.permute.xlu0 %7805
        %7807 = vrot.lane.b32.xlu0 %v7170, 110
        %v7808 = vpop.permute.xlu0 %7807
        %7809 = vrot.lane.b32.xlu0 %v7173, 110
        %v7810 = vpop.permute.xlu0 %7809
        %7811 = vrot.lane.b32.xlu0 %v7176, 110
        %v7812 = vpop.permute.xlu0 %7811
        %7813 = vrot.lane.b32.xlu0 %v7179, 110
        %v7814 = vpop.permute.xlu0 %7813
        %7815 = vrot.lane.b32.xlu0 %v7182, 110
        %v7816 = vpop.permute.xlu0 %7815
        %7817 = vrot.lane.b32.xlu0 %v7185, 110
        %v7818 = vpop.permute.xlu0 %7817
        %7819 = vrot.lane.b32.xlu0 %v7165, 110
        %v7820 = vpop.permute.xlu0 %7819
        %7821 = vrot.lane.b32.xlu0 %v7168, 110
        %v7822 = vpop.permute.xlu0 %7821
        %7823 = vrot.lane.b32.xlu0 %v7171, 110
        %v7824 = vpop.permute.xlu0 %7823
        %7825 = vrot.lane.b32.xlu0 %v7174, 110
        %v7826 = vpop.permute.xlu0 %7825
        %7827 = vrot.lane.b32.xlu0 %v7177, 110
        %v7828 = vpop.permute.xlu0 %7827
        %7829 = vrot.lane.b32.xlu0 %v7180, 110
        %v7830 = vpop.permute.xlu0 %7829
        %7831 = vrot.lane.b32.xlu0 %v7183, 110
        %v7832 = vpop.permute.xlu0 %7831
        %7833 = vrot.lane.b32.xlu0 %v7186, 110
        %v7834 = vpop.permute.xlu0 %7833
        %v7835 = vsel %vm2623, %v7804, %v7820
        %v7836 = vsel %vm2623, %v7806, %v7822
        %v7837 = vsel %vm2623, %v7808, %v7824
        %v7838 = vsel %vm2623, %v7810, %v7826
        %v7839 = vsel %vm2623, %v7812, %v7828
        %v7840 = vsel %vm2623, %v7814, %v7830
        %v7841 = vsel %vm2623, %v7816, %v7832
        %v7842 = vsel %vm2623, %v7818, %v7834
        %v7843 = vsel %vm2623, %v7788, %v7804
        %v7844 = vsel %vm2623, %v7790, %v7806
        %v7845 = vsel %vm2623, %v7792, %v7808
        %v7846 = vsel %vm2623, %v7794, %v7810
        %v7847 = vsel %vm2623, %v7796, %v7812
        %v7848 = vsel %vm2623, %v7798, %v7814
        %v7849 = vsel %vm2623, %v7800, %v7816
        %v7850 = vsel %vm2623, %v7802, %v7818
        %v7851 = vsel %vm2623, %v7820, %v7788
        %v7852 = vsel %vm2623, %v7822, %v7790
        %v7853 = vsel %vm2623, %v7824, %v7792
        %v7854 = vsel %vm2623, %v7826, %v7794
        %v7855 = vsel %vm2623, %v7828, %v7796
        %v7856 = vsel %vm2623, %v7830, %v7798
        %v7857 = vsel %vm2623, %v7832, %v7800
        %v7858 = vsel %vm2623, %v7834, %v7802
        %7859 = vst [vmem:[#allocation2 + $0x540] sm:$0xff] %v7843
        %7860 = vst [vmem:[#allocation2 + $0x548] sm:$0xff] %v7835
        %7861 = vst [vmem:[#allocation2 + $0x550] sm:$0xff] %v7851
        %7862 = vst [vmem:[#allocation2 + $0x558] sm:$0xff] %v7844
        %7863 = vst [vmem:[#allocation2 + $0x560] sm:$0xff] %v7836
        %7864 = vst [vmem:[#allocation2 + $0x568] sm:$0xff] %v7852
        %7865 = vst [vmem:[#allocation2 + $0x570] sm:$0xff] %v7845
        %7866 = vst [vmem:[#allocation2 + $0x578] sm:$0xff] %v7837
        %7867 = vst [vmem:[#allocation2 + $0x580] sm:$0xff] %v7853
        %7868 = vst [vmem:[#allocation2 + $0x588] sm:$0xff] %v7846
        %7869 = vst [vmem:[#allocation2 + $0x590] sm:$0xff] %v7838
        %7870 = vst [vmem:[#allocation2 + $0x598] sm:$0xff] %v7854
        %7871 = vst [vmem:[#allocation2 + $0x5a0] sm:$0xff] %v7847
        %7872 = vst [vmem:[#allocation2 + $0x5a8] sm:$0xff] %v7839
        %7873 = vst [vmem:[#allocation2 + $0x5b0] sm:$0xff] %v7855
        %7874 = vst [vmem:[#allocation2 + $0x5b8] sm:$0xff] %v7848
        %7875 = vst [vmem:[#allocation2 + $0x5c0] sm:$0xff] %v7840
        %7876 = vst [vmem:[#allocation2 + $0x5c8] sm:$0xff] %v7856
        %7877 = vst [vmem:[#allocation2 + $0x5d0] sm:$0xff] %v7849
        %7878 = vst [vmem:[#allocation2 + $0x5d8] sm:$0xff] %v7841
        %7879 = vst [vmem:[#allocation2 + $0x5e0] sm:$0xff] %v7857
        %7880 = vst [vmem:[#allocation2 + $0x5e8] sm:$0xff] %v7850
        %7881 = vst [vmem:[#allocation2 + $0x5f0] sm:$0xff] %v7842
        %7882 = vst [vmem:[#allocation2 + $0x5f8] sm:$0xff] %v7858
        %7883 = vrot.lane.b32.xlu0 %v7163, 109
        %v7884 = vpop.permute.xlu0 %7883
        %7885 = vrot.lane.b32.xlu0 %v7166, 109
        %v7886 = vpop.permute.xlu0 %7885
        %7887 = vrot.lane.b32.xlu0 %v7169, 109
        %v7888 = vpop.permute.xlu0 %7887
        %7889 = vrot.lane.b32.xlu0 %v7172, 109
        %v7890 = vpop.permute.xlu0 %7889
        %7891 = vrot.lane.b32.xlu0 %v7175, 109
        %v7892 = vpop.permute.xlu0 %7891
        %7893 = vrot.lane.b32.xlu0 %v7178, 109
        %v7894 = vpop.permute.xlu0 %7893
        %7895 = vrot.lane.b32.xlu0 %v7181, 109
        %v7896 = vpop.permute.xlu0 %7895
        %7897 = vrot.lane.b32.xlu0 %v7184, 109
        %v7898 = vpop.permute.xlu0 %7897
        %7899 = vrot.lane.b32.xlu0 %v7164, 109
        %v7900 = vpop.permute.xlu0 %7899
        %7901 = vrot.lane.b32.xlu0 %v7167, 109
        %v7902 = vpop.permute.xlu0 %7901
        %7903 = vrot.lane.b32.xlu0 %v7170, 109
        %v7904 = vpop.permute.xlu0 %7903
        %7905 = vrot.lane.b32.xlu0 %v7173, 109
        %v7906 = vpop.permute.xlu0 %7905
        %7907 = vrot.lane.b32.xlu0 %v7176, 109
        %v7908 = vpop.permute.xlu0 %7907
        %7909 = vrot.lane.b32.xlu0 %v7179, 109
        %v7910 = vpop.permute.xlu0 %7909
        %7911 = vrot.lane.b32.xlu0 %v7182, 109
        %v7912 = vpop.permute.xlu0 %7911
        %7913 = vrot.lane.b32.xlu0 %v7185, 109
        %v7914 = vpop.permute.xlu0 %7913
        %7915 = vrot.lane.b32.xlu0 %v7165, 109
        %v7916 = vpop.permute.xlu0 %7915
        %7917 = vrot.lane.b32.xlu0 %v7168, 109
        %v7918 = vpop.permute.xlu0 %7917
        %7919 = vrot.lane.b32.xlu0 %v7171, 109
        %v7920 = vpop.permute.xlu0 %7919
        %7921 = vrot.lane.b32.xlu0 %v7174, 109
        %v7922 = vpop.permute.xlu0 %7921
        %7923 = vrot.lane.b32.xlu0 %v7177, 109
        %v7924 = vpop.permute.xlu0 %7923
        %7925 = vrot.lane.b32.xlu0 %v7180, 109
        %v7926 = vpop.permute.xlu0 %7925
        %7927 = vrot.lane.b32.xlu0 %v7183, 109
        %v7928 = vpop.permute.xlu0 %7927
        %7929 = vrot.lane.b32.xlu0 %v7186, 109
        %v7930 = vpop.permute.xlu0 %7929
        %v7931 = vsel %vm2932, %v7900, %v7916
        %v7932 = vsel %vm2932, %v7902, %v7918
        %v7933 = vsel %vm2932, %v7904, %v7920
        %v7934 = vsel %vm2932, %v7906, %v7922
        %v7935 = vsel %vm2932, %v7908, %v7924
        %v7936 = vsel %vm2932, %v7910, %v7926
        %v7937 = vsel %vm2932, %v7912, %v7928
        %v7938 = vsel %vm2932, %v7914, %v7930
        %v7939 = vsel %vm2932, %v7884, %v7900
        %v7940 = vsel %vm2932, %v7886, %v7902
        %v7941 = vsel %vm2932, %v7888, %v7904
        %v7942 = vsel %vm2932, %v7890, %v7906
        %v7943 = vsel %vm2932, %v7892, %v7908
        %v7944 = vsel %vm2932, %v7894, %v7910
        %v7945 = vsel %vm2932, %v7896, %v7912
        %v7946 = vsel %vm2932, %v7898, %v7914
        %v7947 = vsel %vm2932, %v7916, %v7884
        %v7948 = vsel %vm2932, %v7918, %v7886
        %v7949 = vsel %vm2932, %v7920, %v7888
        %v7950 = vsel %vm2932, %v7922, %v7890
        %v7951 = vsel %vm2932, %v7924, %v7892
        %v7952 = vsel %vm2932, %v7926, %v7894
        %v7953 = vsel %vm2932, %v7928, %v7896
        %v7954 = vsel %vm2932, %v7930, %v7898
        %7955 = vst [vmem:[#allocation2 + $0x600] sm:$0xff] %v7939
        %7956 = vst [vmem:[#allocation2 + $0x608] sm:$0xff] %v7931
        %7957 = vst [vmem:[#allocation2 + $0x610] sm:$0xff] %v7947
        %7958 = vst [vmem:[#allocation2 + $0x618] sm:$0xff] %v7940
        %7959 = vst [vmem:[#allocation2 + $0x620] sm:$0xff] %v7932
        %7960 = vst [vmem:[#allocation2 + $0x628] sm:$0xff] %v7948
        %7961 = vst [vmem:[#allocation2 + $0x630] sm:$0xff] %v7941
        %7962 = vst [vmem:[#allocation2 + $0x638] sm:$0xff] %v7933
        %7963 = vst [vmem:[#allocation2 + $0x640] sm:$0xff] %v7949
        %7964 = vst [vmem:[#allocation2 + $0x648] sm:$0xff] %v7942
        %7965 = vst [vmem:[#allocation2 + $0x650] sm:$0xff] %v7934
        %7966 = vst [vmem:[#allocation2 + $0x658] sm:$0xff] %v7950
        %7967 = vst [vmem:[#allocation2 + $0x660] sm:$0xff] %v7943
        %7968 = vst [vmem:[#allocation2 + $0x668] sm:$0xff] %v7935
        %7969 = vst [vmem:[#allocation2 + $0x670] sm:$0xff] %v7951
        %7970 = vst [vmem:[#allocation2 + $0x678] sm:$0xff] %v7944
        %7971 = vst [vmem:[#allocation2 + $0x680] sm:$0xff] %v7936
        %7972 = vst [vmem:[#allocation2 + $0x688] sm:$0xff] %v7952
        %7973 = vst [vmem:[#allocation2 + $0x690] sm:$0xff] %v7945
        %7974 = vst [vmem:[#allocation2 + $0x698] sm:$0xff] %v7937
        %7975 = vst [vmem:[#allocation2 + $0x6a0] sm:$0xff] %v7953
        %7976 = vst [vmem:[#allocation2 + $0x6a8] sm:$0xff] %v7946
        %7977 = vst [vmem:[#allocation2 + $0x6b0] sm:$0xff] %v7938
        %7978 = vst [vmem:[#allocation2 + $0x6b8] sm:$0xff] %v7954
        %v7979 = vld [vmem:[#allocation12] sm:$0xff]
        %v7980 = vld [vmem:[#allocation12 + $0x8] sm:$0xff]
        %v7981 = vld [vmem:[#allocation12 + $0x10] sm:$0xff]
        %v7982 = vld [vmem:[#allocation12 + $0x18] sm:$0xff]
        %v7983 = vld [vmem:[#allocation12 + $0x20] sm:$0xff]
        %v7984 = vld [vmem:[#allocation12 + $0x28] sm:$0xff]
        %v7985 = vld [vmem:[#allocation12 + $0x30] sm:$0xff]
        %v7986 = vld [vmem:[#allocation12 + $0x38] sm:$0xff]
        %v7987 = vld [vmem:[#allocation12 + $0x40] sm:$0xff]
        %v7988 = vld [vmem:[#allocation12 + $0x48] sm:$0xff]
        %v7989 = vld [vmem:[#allocation12 + $0x50] sm:$0xff]
        %v7990 = vld [vmem:[#allocation12 + $0x58] sm:$0xff]
        %v7991 = vld [vmem:[#allocation12 + $0x60] sm:$0xff]
        %v7992 = vld [vmem:[#allocation12 + $0x68] sm:$0xff]
        %v7993 = vld [vmem:[#allocation12 + $0x70] sm:$0xff]
        %v7994 = vld [vmem:[#allocation12 + $0x78] sm:$0xff]
        %v7995 = vld [vmem:[#allocation12 + $0x80] sm:$0xff]
        %v7996 = vld [vmem:[#allocation12 + $0x88] sm:$0xff]
        %v7997 = vld [vmem:[#allocation12 + $0x90] sm:$0xff]
        %v7998 = vld [vmem:[#allocation12 + $0x98] sm:$0xff]
        %v7999 = vld [vmem:[#allocation12 + $0xa0] sm:$0xff]
        %v8000 = vld [vmem:[#allocation12 + $0xa8] sm:$0xff]
        %v8001 = vld [vmem:[#allocation12 + $0xb0] sm:$0xff]
        %v8002 = vld [vmem:[#allocation12 + $0xb8] sm:$0xff]
        %v8003 = vld [vmem:[#allocation12 + $0xc0] sm:$0xff]
        %v8004 = vld [vmem:[#allocation12 + $0xc8] sm:$0xff]
        %v8005 = vld [vmem:[#allocation12 + $0xd0] sm:$0xff]
        %v8006 = vld [vmem:[#allocation12 + $0xd8] sm:$0xff]
        %v8007 = vld [vmem:[#allocation12 + $0xe0] sm:$0xff]
        %v8008 = vld [vmem:[#allocation12 + $0xe8] sm:$0xff]
        %v8009 = vld [vmem:[#allocation12 + $0xf0] sm:$0xff]
        %v8010 = vld [vmem:[#allocation12 + $0xf8] sm:$0xff]
        %v8011 = vld [vmem:[#allocation12 + $0x100] sm:$0xff]
        %v8012 = vld [vmem:[#allocation12 + $0x108] sm:$0xff]
        %v8013 = vld [vmem:[#allocation12 + $0x110] sm:$0xff]
        %v8014 = vld [vmem:[#allocation12 + $0x118] sm:$0xff]
        %v8015 = vld [vmem:[#allocation12 + $0x120] sm:$0xff]
        %v8016 = vld [vmem:[#allocation12 + $0x128] sm:$0xff]
        %v8017 = vld [vmem:[#allocation12 + $0x130] sm:$0xff]
        %v8018 = vld [vmem:[#allocation12 + $0x138] sm:$0xff]
        %v8019 = vld [vmem:[#allocation2] sm:$0xff]
        %v8020 = vld [vmem:[#allocation2 + $0x8] sm:$0xff]
        %v8021 = vld [vmem:[#allocation2 + $0x10] sm:$0xff]
        %v8022 = vld [vmem:[#allocation2 + $0x18] sm:$0xff]
        %v8023 = vld [vmem:[#allocation2 + $0x20] sm:$0xff]
        %v8024 = vld [vmem:[#allocation2 + $0x28] sm:$0xff]
        %v8025 = vld [vmem:[#allocation2 + $0x30] sm:$0xff]
        %v8026 = vld [vmem:[#allocation2 + $0x38] sm:$0xff]
        %v8027 = vld [vmem:[#allocation2 + $0x40] sm:$0xff]
        %v8028 = vld [vmem:[#allocation2 + $0x48] sm:$0xff]
        %v8029 = vld [vmem:[#allocation2 + $0x50] sm:$0xff]
        %v8030 = vld [vmem:[#allocation2 + $0x58] sm:$0xff]
        %v8031 = vld [vmem:[#allocation2 + $0x60] sm:$0xff]
        %v8032 = vld [vmem:[#allocation2 + $0x68] sm:$0xff]
        %v8033 = vld [vmem:[#allocation2 + $0x70] sm:$0xff]
        %v8034 = vld [vmem:[#allocation2 + $0x78] sm:$0xff]
        %v8035 = vld [vmem:[#allocation2 + $0x80] sm:$0xff]
        %v8036 = vld [vmem:[#allocation2 + $0x88] sm:$0xff]
        %v8037 = vld [vmem:[#allocation2 + $0x90] sm:$0xff]
        %v8038 = vld [vmem:[#allocation2 + $0x98] sm:$0xff]
        %v8039 = vld [vmem:[#allocation2 + $0xa0] sm:$0xff]
        %v8040 = vld [vmem:[#allocation2 + $0xa8] sm:$0xff]
        %v8041 = vld [vmem:[#allocation2 + $0xb0] sm:$0xff]
        %v8042 = vld [vmem:[#allocation2 + $0xb8] sm:$0xff]
        %v8043 = vld [vmem:[#allocation2 + $0xc0] sm:$0xff]
        %v8044 = vld [vmem:[#allocation2 + $0xc8] sm:$0xff]
        %v8045 = vld [vmem:[#allocation2 + $0xd0] sm:$0xff]
        %v8046 = vld [vmem:[#allocation2 + $0xd8] sm:$0xff]
        %v8047 = vld [vmem:[#allocation2 + $0xe0] sm:$0xff]
        %v8048 = vld [vmem:[#allocation2 + $0xe8] sm:$0xff]
        %v8049 = vld [vmem:[#allocation2 + $0xf0] sm:$0xff]
        %v8050 = vld [vmem:[#allocation2 + $0xf8] sm:$0xff]
        %v8051 = vld [vmem:[#allocation2 + $0x100] sm:$0xff]
        %v8052 = vld [vmem:[#allocation2 + $0x108] sm:$0xff]
        %v8053 = vld [vmem:[#allocation2 + $0x110] sm:$0xff]
        %v8054 = vld [vmem:[#allocation2 + $0x118] sm:$0xff]
        %v8055 = vld [vmem:[#allocation2 + $0x120] sm:$0xff]
        %v8056 = vld [vmem:[#allocation2 + $0x128] sm:$0xff]
        %v8057 = vld [vmem:[#allocation2 + $0x130] sm:$0xff]
        %v8058 = vld [vmem:[#allocation2 + $0x138] sm:$0xff]
        %v8059 = vld [vmem:[#allocation2 + $0x140] sm:$0xff]
        %v8060 = vld [vmem:[#allocation2 + $0x148] sm:$0xff]
        %v8061 = vld [vmem:[#allocation2 + $0x150] sm:$0xff]
        %v8062 = vld [vmem:[#allocation2 + $0x158] sm:$0xff]
        %v8063 = vld [vmem:[#allocation2 + $0x160] sm:$0xff]
        %v8064 = vld [vmem:[#allocation2 + $0x168] sm:$0xff]
        %v8065 = vld [vmem:[#allocation2 + $0x170] sm:$0xff]
        %v8066 = vld [vmem:[#allocation2 + $0x178] sm:$0xff]
        %v8067 = vld [vmem:[#allocation2 + $0x180] sm:$0xff]
        %v8068 = vld [vmem:[#allocation2 + $0x188] sm:$0xff]
        %v8069 = vld [vmem:[#allocation2 + $0x190] sm:$0xff]
        %v8070 = vld [vmem:[#allocation2 + $0x198] sm:$0xff]
        %v8071 = vld [vmem:[#allocation2 + $0x1a0] sm:$0xff]
        %v8072 = vld [vmem:[#allocation2 + $0x1a8] sm:$0xff]
        %v8073 = vld [vmem:[#allocation2 + $0x1b0] sm:$0xff]
        %v8074 = vld [vmem:[#allocation2 + $0x1b8] sm:$0xff]
        %v8075 = vld [vmem:[#allocation2 + $0x1c0] sm:$0xff]
        %v8076 = vld [vmem:[#allocation2 + $0x1c8] sm:$0xff]
        %v8077 = vld [vmem:[#allocation2 + $0x1d0] sm:$0xff]
        %v8078 = vld [vmem:[#allocation2 + $0x1d8] sm:$0xff]
        %v8079 = vld [vmem:[#allocation2 + $0x1e0] sm:$0xff]
        %v8080 = vld [vmem:[#allocation2 + $0x1e8] sm:$0xff]
        %v8081 = vld [vmem:[#allocation2 + $0x1f0] sm:$0xff]
        %v8082 = vld [vmem:[#allocation2 + $0x1f8] sm:$0xff]
        %v8083 = vld [vmem:[#allocation2 + $0x200] sm:$0xff]
        %v8084 = vld [vmem:[#allocation2 + $0x208] sm:$0xff]
        %v8085 = vld [vmem:[#allocation2 + $0x210] sm:$0xff]
        %v8086 = vld [vmem:[#allocation2 + $0x218] sm:$0xff]
        %v8087 = vld [vmem:[#allocation2 + $0x220] sm:$0xff]
        %v8088 = vld [vmem:[#allocation2 + $0x228] sm:$0xff]
        %v8089 = vld [vmem:[#allocation2 + $0x230] sm:$0xff]
        %v8090 = vld [vmem:[#allocation2 + $0x238] sm:$0xff]
        %v8091 = vld [vmem:[#allocation2 + $0x240] sm:$0xff]
        %v8092 = vld [vmem:[#allocation2 + $0x248] sm:$0xff]
        %v8093 = vld [vmem:[#allocation2 + $0x250] sm:$0xff]
        %v8094 = vld [vmem:[#allocation2 + $0x258] sm:$0xff]
        %v8095 = vld [vmem:[#allocation2 + $0x260] sm:$0xff]
        %v8096 = vld [vmem:[#allocation2 + $0x268] sm:$0xff]
        %v8097 = vld [vmem:[#allocation2 + $0x270] sm:$0xff]
        %v8098 = vld [vmem:[#allocation2 + $0x278] sm:$0xff]
        %v8099 = vld [vmem:[#allocation2 + $0x280] sm:$0xff]
        %v8100 = vld [vmem:[#allocation2 + $0x288] sm:$0xff]
        %v8101 = vld [vmem:[#allocation2 + $0x290] sm:$0xff]
        %v8102 = vld [vmem:[#allocation2 + $0x298] sm:$0xff]
        %v8103 = vld [vmem:[#allocation2 + $0x2a0] sm:$0xff]
        %v8104 = vld [vmem:[#allocation2 + $0x2a8] sm:$0xff]
        %v8105 = vld [vmem:[#allocation2 + $0x2b0] sm:$0xff]
        %v8106 = vld [vmem:[#allocation2 + $0x2b8] sm:$0xff]
        %v8107 = vld [vmem:[#allocation2 + $0x2c0] sm:$0xff]
        %v8108 = vld [vmem:[#allocation2 + $0x2c8] sm:$0xff]
        %v8109 = vld [vmem:[#allocation2 + $0x2d0] sm:$0xff]
        %v8110 = vld [vmem:[#allocation2 + $0x2d8] sm:$0xff]
        %v8111 = vld [vmem:[#allocation2 + $0x2e0] sm:$0xff]
        %v8112 = vld [vmem:[#allocation2 + $0x2e8] sm:$0xff]
        %v8113 = vld [vmem:[#allocation2 + $0x2f0] sm:$0xff]
        %v8114 = vld [vmem:[#allocation2 + $0x2f8] sm:$0xff]
        %v8115 = vld [vmem:[#allocation2 + $0x300] sm:$0xff]
        %v8116 = vld [vmem:[#allocation2 + $0x308] sm:$0xff]
        %v8117 = vld [vmem:[#allocation2 + $0x310] sm:$0xff]
        %v8118 = vld [vmem:[#allocation2 + $0x318] sm:$0xff]
        %v8119 = vld [vmem:[#allocation2 + $0x320] sm:$0xff]
        %v8120 = vld [vmem:[#allocation2 + $0x328] sm:$0xff]
        %v8121 = vld [vmem:[#allocation2 + $0x330] sm:$0xff]
        %v8122 = vld [vmem:[#allocation2 + $0x338] sm:$0xff]
        %v8123 = vld [vmem:[#allocation2 + $0x340] sm:$0xff]
        %v8124 = vld [vmem:[#allocation2 + $0x348] sm:$0xff]
        %v8125 = vld [vmem:[#allocation2 + $0x350] sm:$0xff]
        %v8126 = vld [vmem:[#allocation2 + $0x358] sm:$0xff]
        %v8127 = vld [vmem:[#allocation2 + $0x360] sm:$0xff]
        %v8128 = vld [vmem:[#allocation2 + $0x368] sm:$0xff]
        %v8129 = vld [vmem:[#allocation2 + $0x370] sm:$0xff]
        %v8130 = vld [vmem:[#allocation2 + $0x378] sm:$0xff]
        %v8131 = vld [vmem:[#allocation2 + $0x380] sm:$0xff]
        %v8132 = vld [vmem:[#allocation2 + $0x388] sm:$0xff]
        %v8133 = vld [vmem:[#allocation2 + $0x390] sm:$0xff]
        %v8134 = vld [vmem:[#allocation2 + $0x398] sm:$0xff]
        %v8135 = vld [vmem:[#allocation2 + $0x3a0] sm:$0xff]
        %v8136 = vld [vmem:[#allocation2 + $0x3a8] sm:$0xff]
        %v8137 = vld [vmem:[#allocation2 + $0x3b0] sm:$0xff]
        %v8138 = vld [vmem:[#allocation2 + $0x3b8] sm:$0xff]
        %v8139 = vld [vmem:[#allocation2 + $0x3c0] sm:$0xff]
        %v8140 = vld [vmem:[#allocation2 + $0x3c8] sm:$0xff]
        %v8141 = vld [vmem:[#allocation2 + $0x3d0] sm:$0xff]
        %v8142 = vld [vmem:[#allocation2 + $0x3d8] sm:$0xff]
        %v8143 = vld [vmem:[#allocation2 + $0x3e0] sm:$0xff]
        %v8144 = vld [vmem:[#allocation2 + $0x3e8] sm:$0xff]
        %v8145 = vld [vmem:[#allocation2 + $0x3f0] sm:$0xff]
        %v8146 = vld [vmem:[#allocation2 + $0x3f8] sm:$0xff]
        %v8147 = vld [vmem:[#allocation2 + $0x400] sm:$0xff]
        %v8148 = vld [vmem:[#allocation2 + $0x408] sm:$0xff]
        %v8149 = vld [vmem:[#allocation2 + $0x410] sm:$0xff]
        %v8150 = vld [vmem:[#allocation2 + $0x418] sm:$0xff]
        %v8151 = vld [vmem:[#allocation2 + $0x420] sm:$0xff]
        %v8152 = vld [vmem:[#allocation2 + $0x428] sm:$0xff]
        %v8153 = vld [vmem:[#allocation2 + $0x430] sm:$0xff]
        %v8154 = vld [vmem:[#allocation2 + $0x438] sm:$0xff]
        %v8155 = vld [vmem:[#allocation2 + $0x440] sm:$0xff]
        %v8156 = vld [vmem:[#allocation2 + $0x448] sm:$0xff]
        %v8157 = vld [vmem:[#allocation2 + $0x450] sm:$0xff]
        %v8158 = vld [vmem:[#allocation2 + $0x458] sm:$0xff]
        %v8159 = vld [vmem:[#allocation2 + $0x460] sm:$0xff]
        %v8160 = vld [vmem:[#allocation2 + $0x468] sm:$0xff]
        %v8161 = vld [vmem:[#allocation2 + $0x470] sm:$0xff]
        %v8162 = vld [vmem:[#allocation2 + $0x478] sm:$0xff]
        %v8163 = vld [vmem:[#allocation2 + $0x480] sm:$0xff]
        %v8164 = vld [vmem:[#allocation2 + $0x488] sm:$0xff]
        %v8165 = vld [vmem:[#allocation2 + $0x490] sm:$0xff]
        %v8166 = vld [vmem:[#allocation2 + $0x498] sm:$0xff]
        %v8167 = vld [vmem:[#allocation2 + $0x4a0] sm:$0xff]
        %v8168 = vld [vmem:[#allocation2 + $0x4a8] sm:$0xff]
        %v8169 = vld [vmem:[#allocation2 + $0x4b0] sm:$0xff]
        %v8170 = vld [vmem:[#allocation2 + $0x4b8] sm:$0xff]
        %v8171 = vld [vmem:[#allocation2 + $0x4c0] sm:$0xff]
        %v8172 = vld [vmem:[#allocation2 + $0x4c8] sm:$0xff]
        %v8173 = vld [vmem:[#allocation2 + $0x4d0] sm:$0xff]
        %v8174 = vld [vmem:[#allocation2 + $0x4d8] sm:$0xff]
        %v8175 = vld [vmem:[#allocation2 + $0x4e0] sm:$0xff]
        %v8176 = vld [vmem:[#allocation2 + $0x4e8] sm:$0xff]
        %v8177 = vld [vmem:[#allocation2 + $0x4f0] sm:$0xff]
        %v8178 = vld [vmem:[#allocation2 + $0x4f8] sm:$0xff]
        %v8179 = vld [vmem:[#allocation2 + $0x500] sm:$0xff]
        %v8180 = vld [vmem:[#allocation2 + $0x508] sm:$0xff]
        %v8181 = vld [vmem:[#allocation2 + $0x510] sm:$0xff]
        %v8182 = vld [vmem:[#allocation2 + $0x518] sm:$0xff]
        %v8183 = vld [vmem:[#allocation2 + $0x520] sm:$0xff]
        %v8184 = vld [vmem:[#allocation2 + $0x528] sm:$0xff]
        %v8185 = vld [vmem:[#allocation2 + $0x530] sm:$0xff]
        %v8186 = vld [vmem:[#allocation2 + $0x538] sm:$0xff]
        %v8187 = vld [vmem:[#allocation2 + $0x540] sm:$0xff]
        %v8188 = vld [vmem:[#allocation2 + $0x548] sm:$0xff]
        %v8189 = vld [vmem:[#allocation2 + $0x550] sm:$0xff]
        %v8190 = vld [vmem:[#allocation2 + $0x558] sm:$0xff]
        %v8191 = vld [vmem:[#allocation2 + $0x560] sm:$0xff]
        %v8192 = vld [vmem:[#allocation2 + $0x568] sm:$0xff]
        %v8193 = vld [vmem:[#allocation2 + $0x570] sm:$0xff]
        %v8194 = vld [vmem:[#allocation2 + $0x578] sm:$0xff]
        %v8195 = vld [vmem:[#allocation2 + $0x580] sm:$0xff]
        %v8196 = vld [vmem:[#allocation2 + $0x588] sm:$0xff]
        %v8197 = vld [vmem:[#allocation2 + $0x590] sm:$0xff]
        %v8198 = vld [vmem:[#allocation2 + $0x598] sm:$0xff]
        %v8199 = vld [vmem:[#allocation2 + $0x5a0] sm:$0xff]
        %v8200 = vld [vmem:[#allocation2 + $0x5a8] sm:$0xff]
        %v8201 = vld [vmem:[#allocation2 + $0x5b0] sm:$0xff]
        %v8202 = vld [vmem:[#allocation2 + $0x5b8] sm:$0xff]
        %v8203 = vld [vmem:[#allocation2 + $0x5c0] sm:$0xff]
        %v8204 = vld [vmem:[#allocation2 + $0x5c8] sm:$0xff]
        %v8205 = vld [vmem:[#allocation2 + $0x5d0] sm:$0xff]
        %v8206 = vld [vmem:[#allocation2 + $0x5d8] sm:$0xff]
        %v8207 = vld [vmem:[#allocation2 + $0x5e0] sm:$0xff]
        %v8208 = vld [vmem:[#allocation2 + $0x5e8] sm:$0xff]
        %v8209 = vld [vmem:[#allocation2 + $0x5f0] sm:$0xff]
        %v8210 = vld [vmem:[#allocation2 + $0x5f8] sm:$0xff]
        %v8211 = vld [vmem:[#allocation2 + $0x600] sm:$0xff]
        %v8212 = vld [vmem:[#allocation2 + $0x608] sm:$0xff]
        %v8213 = vld [vmem:[#allocation2 + $0x610] sm:$0xff]
        %v8214 = vld [vmem:[#allocation2 + $0x618] sm:$0xff]
        %v8215 = vld [vmem:[#allocation2 + $0x620] sm:$0xff]
        %v8216 = vld [vmem:[#allocation2 + $0x628] sm:$0xff]
        %v8217 = vld [vmem:[#allocation2 + $0x630] sm:$0xff]
        %v8218 = vld [vmem:[#allocation2 + $0x638] sm:$0xff]
        %v8219 = vld [vmem:[#allocation2 + $0x640] sm:$0xff]
        %v8220 = vld [vmem:[#allocation2 + $0x648] sm:$0xff]
        %v8221 = vld [vmem:[#allocation2 + $0x650] sm:$0xff]
        %v8222 = vld [vmem:[#allocation2 + $0x658] sm:$0xff]
        %v8223 = vld [vmem:[#allocation2 + $0x660] sm:$0xff]
        %v8224 = vld [vmem:[#allocation2 + $0x668] sm:$0xff]
        %v8225 = vld [vmem:[#allocation2 + $0x670] sm:$0xff]
        %v8226 = vld [vmem:[#allocation2 + $0x678] sm:$0xff]
        %v8227 = vld [vmem:[#allocation2 + $0x680] sm:$0xff]
        %v8228 = vld [vmem:[#allocation2 + $0x688] sm:$0xff]
        %v8229 = vld [vmem:[#allocation2 + $0x690] sm:$0xff]
        %v8230 = vld [vmem:[#allocation2 + $0x698] sm:$0xff]
        %v8231 = vld [vmem:[#allocation2 + $0x6a0] sm:$0xff]
        %v8232 = vld [vmem:[#allocation2 + $0x6a8] sm:$0xff]
        %v8233 = vld [vmem:[#allocation2 + $0x6b0] sm:$0xff]
        %v8234 = vld [vmem:[#allocation2 + $0x6b8] sm:$0xff]
        %v8235 = vld [vmem:[%s9] sm:$0xff]
        %v8236 = vld [vmem:[%s9 + $0x8] sm:$0xff]
        %v8237 = vld [vmem:[%s9 + $0x10] sm:$0xff]
        %v8238 = vld [vmem:[%s9 + $0x18] sm:$0xff]
        %v8239 = vld [vmem:[%s9 + $0x20] sm:$0xff]
        %v8240 = vld [vmem:[%s9 + $0x28] sm:$0xff]
        %v8241 = vld [vmem:[%s9 + $0x30] sm:$0xff]
        %v8242 = vld [vmem:[%s9 + $0x38] sm:$0xff]
        %8244 = vset.pattern.permute.xlu0 0
        %8245 = vperm.xlu0 %8244, %v8235
        %v8246 = vpop.permute.xlu0 %8245
        %8249 = vset.pattern.permute.xlu0 0
        %8250 = vperm.xlu0 %8249, %v8236
        %v8251 = vpop.permute.xlu0 %8250
        %8254 = vset.pattern.permute.xlu0 0
        %8255 = vperm.xlu0 %8254, %v8237
        %v8256 = vpop.permute.xlu0 %8255
        %8259 = vset.pattern.permute.xlu0 0
        %8260 = vperm.xlu0 %8259, %v8238
        %v8261 = vpop.permute.xlu0 %8260
        %8264 = vset.pattern.permute.xlu0 0
        %8265 = vperm.xlu0 %8264, %v8239
        %v8266 = vpop.permute.xlu0 %8265
        %8269 = vset.pattern.permute.xlu0 0
        %8270 = vperm.xlu0 %8269, %v8240
        %v8271 = vpop.permute.xlu0 %8270
        %8274 = vset.pattern.permute.xlu0 0
        %8275 = vperm.xlu0 %8274, %v8241
        %v8276 = vpop.permute.xlu0 %8275
        %8279 = vset.pattern.permute.xlu0 0
        %8280 = vperm.xlu0 %8279, %v8242
        %v8281 = vpop.permute.xlu0 %8280
        %v8284 = vsel %vm4508, %v7983, 0
        %v8287 = vsel %vm4508, %v7988, 0
        %v8290 = vsel %vm4508, %v7993, 0
        %v8293 = vsel %vm4508, %v7998, 0
        %v8296 = vsel %vm4508, %v8003, 0
        %v8299 = vsel %vm4508, %v8008, 0
        %v8302 = vsel %vm4508, %v8013, 0
        %v8305 = vsel %vm4508, %v8018, 0
        %8307 = vmatprep.subr.mxu0 %v8020
        %8308 = vmatpush1.msra.mxu0 %v8019
        %8309 = vmatprep.subr.mxu0 %v8023
        %8310 = vmatpush1.msra.mxu0 %v8022
        %8311 = vmatprep.subr.mxu0 %v8026
        %8312 = vmatpush1.msra.mxu0 %v8025
        %8313 = vmatprep.subr.mxu0 %v8029
        %8314 = vmatpush1.msra.mxu0 %v8028
        %8315 = vmatprep.subr.mxu0 %v8032
        %8316 = vmatpush1.msra.mxu0 %v8031
        %8317 = vmatprep.subr.mxu0 %v8035
        %8318 = vmatpush1.msra.mxu0 %v8034
        %8319 = vmatprep.subr.mxu0 %v8038
        %8320 = vmatpush1.msra.mxu0 %v8037
        %8321 = vmatprep.subr.mxu0 %v8041
        %8322 = vmatpush1.msra.mxu0 %v8040
        %8323 = vmatprep.subr.mxu0 %v8044
        %8324 = vmatpush1.msra.mxu0 %v8043
        %8325 = vmatprep.subr.mxu0 %v8047
        %8326 = vmatpush1.msra.mxu0 %v8046
        %8327 = vmatprep.subr.mxu0 %v8050
        %8328 = vmatpush1.msra.mxu0 %v8049
        %8329 = vmatprep.subr.mxu0 %v8053
        %8330 = vmatpush1.msra.mxu0 %v8052
        %8331 = vmatprep.subr.mxu0 %v8056
        %8332 = vmatpush1.msra.mxu0 %v8055
        %8333 = vmatprep.subr.mxu0 %v8059
        %8334 = vmatpush1.msra.mxu0 %v8058
        %8335 = vmatprep.subr.mxu0 %v8062
        %8336 = vmatpush1.msra.mxu0 %v8061
        %8337 = vmatprep.subr.mxu0 %v8065
        %8338 = vmatpush1.msra.mxu0 %v8064
        %8339 = vmatprep.subr.mxu0 %v8068
        %8340 = vmatpush1.msra.mxu0 %v8067
        %8341 = vmatprep.subr.mxu0 %v8071
        %8342 = vmatpush1.msra.mxu0 %v8070
        %8343 = vmatprep.subr.mxu0 %v8074
        %8344 = vmatpush1.msra.mxu0 %v8073
        %8345 = vmatprep.subr.mxu0 %v8077
        %8346 = vmatpush1.msra.mxu0 %v8076
        %8347 = vmatprep.subr.mxu0 %v8080
        %8348 = vmatpush1.msra.mxu0 %v8079
        %8349 = vmatprep.subr.mxu0 %v8083
        %8350 = vmatpush1.msra.mxu0 %v8082
        %8351 = vmatprep.subr.mxu0 %v8086
        %8352 = vmatpush1.msra.mxu0 %v8085
        %8353 = vmatprep.subr.mxu0 %v8089
        %8354 = vmatpush1.msra.mxu0 %v8088
        %8355 = vmatprep.subr.mxu0 %v8092
        %8356 = vmatpush1.msra.mxu0 %v8091
        %8357 = vmatprep.subr.mxu0 %v8095
        %8358 = vmatpush1.msra.mxu0 %v8094
        %8359 = vmatprep.subr.mxu0 %v8098
        %8360 = vmatpush1.msra.mxu0 %v8097
        %8361 = vmatprep.subr.mxu0 %v8101
        %8362 = vmatpush1.msra.mxu0 %v8100
        %8363 = vmatprep.subr.mxu0 %v8104
        %8364 = vmatpush1.msra.mxu0 %v8103
        %8365 = vmatprep.subr.mxu0 %v8107
        %8366 = vmatpush1.msra.mxu0 %v8106
        %8367 = vmatprep.subr.mxu0 %v8110
        %8368 = vmatpush1.msra.mxu0 %v8109
        %8369 = vmatprep.subr.mxu0 %v8113
        %8370 = vmatpush1.msra.mxu0 %v8112
        %8371 = vmatprep.mubr.f32.mxu0 %v7980
        %8372 = vmatmul.mubr.f32.gmra.mrb[0].mxu0 %v7979
        %v8373 = vpop.f32.mrb[0].mxu0
        %v8374 = vadd.f32 %v8246, %v8373
        %v8375 = vpop.f32.mrb[0].mxu0
        %v8376 = vadd.f32 %v8246, %v8375
        %8377 = vmatprep.mubr.f32.mxu0 %v7985
        %8378 = vmatmul.mubr.f32.gmra.mrb[0].mxu0 %v7984
        %v8379 = vpop.f32.mrb[0].mxu0
        %v8380 = vadd.f32 %v8251, %v8379
        %v8381 = vpop.f32.mrb[0].mxu0
        %v8382 = vadd.f32 %v8251, %v8381
        %8383 = vmatprep.mubr.f32.mxu0 %v7990
        %8384 = vmatmul.mubr.f32.gmra.mrb[0].mxu0 %v7989
        %v8385 = vpop.f32.mrb[0].mxu0
        %v8386 = vadd.f32 %v8256, %v8385
        %v8387 = vpop.f32.mrb[0].mxu0
        %v8388 = vadd.f32 %v8256, %v8387
        %8389 = vmatprep.mubr.f32.mxu0 %v7995
        %8390 = vmatmul.mubr.f32.gmra.mrb[0].mxu0 %v7994
        %v8391 = vpop.f32.mrb[0].mxu0
        %v8392 = vadd.f32 %v8261, %v8391
        %v8393 = vpop.f32.mrb[0].mxu0
        %v8394 = vadd.f32 %v8261, %v8393
        %8395 = vmatprep.mubr.f32.mxu0 %v8000
        %8396 = vmatmul.mubr.f32.gmra.mrb[0].mxu0 %v7999
        %v8397 = vpop.f32.mrb[0].mxu0
        %v8398 = vadd.f32 %v8266, %v8397
        %v8399 = vpop.f32.mrb[0].mxu0
        %v8400 = vadd.f32 %v8266, %v8399
        %8401 = vmatprep.mubr.f32.mxu0 %v8005
        %8402 = vmatmul.mubr.f32.gmra.mrb[0].mxu0 %v8004
        %v8403 = vpop.f32.mrb[0].mxu0
        %v8404 = vadd.f32 %v8271, %v8403
        %v8405 = vpop.f32.mrb[0].mxu0
        %v8406 = vadd.f32 %v8271, %v8405
        %8407 = vmatprep.mubr.f32.mxu0 %v8010
        %8408 = vmatmul.mubr.f32.gmra.mrb[0].mxu0 %v8009
        %v8409 = vpop.f32.mrb[0].mxu0
        %v8410 = vadd.f32 %v8276, %v8409
        %v8411 = vpop.f32.mrb[0].mxu0
        %v8412 = vadd.f32 %v8276, %v8411
        %8413 = vmatprep.mubr.f32.mxu0 %v8015
        %8414 = vmatmul.mubr.f32.gmra.mrb[0].mxu0 %v8014
        %v8415 = vpop.f32.mrb[0].mxu0
        %v8416 = vadd.f32 %v8281, %v8415
        %v8417 = vpop.f32.mrb[0].mxu0
        %v8418 = vadd.f32 %v8281, %v8417
        %8419 = vdwg.mxu0
        %8420 = vmatprep.subr.mxu0 %v8116
        %8421 = vmatpush1.msra.mxu0 %v8115
        %8422 = vmatprep.subr.mxu0 %v8119
        %8423 = vmatpush1.msra.mxu0 %v8118
        %8424 = vmatprep.subr.mxu0 %v8122
        %8425 = vmatpush1.msra.mxu0 %v8121
        %8426 = vmatprep.subr.mxu0 %v8125
        %8427 = vmatpush1.msra.mxu0 %v8124
        %8428 = vmatprep.subr.mxu0 %v8128
        %8429 = vmatpush1.msra.mxu0 %v8127
        %8430 = vmatprep.subr.mxu0 %v8131
        %8431 = vmatpush1.msra.mxu0 %v8130
        %8432 = vmatprep.subr.mxu0 %v8134
        %8433 = vmatpush1.msra.mxu0 %v8133
        %8434 = vmatprep.subr.mxu0 %v8137
        %8435 = vmatpush1.msra.mxu0 %v8136
        %8436 = vmatprep.subr.mxu0 %v8140
        %8437 = vmatpush1.msra.mxu0 %v8139
        %8438 = vmatprep.subr.mxu0 %v8143
        %8439 = vmatpush1.msra.mxu0 %v8142
        %8440 = vmatprep.subr.mxu0 %v8146
        %8441 = vmatpush1.msra.mxu0 %v8145
        %8442 = vmatprep.subr.mxu0 %v8149
        %8443 = vmatpush1.msra.mxu0 %v8148
        %8444 = vmatprep.subr.mxu0 %v8152
        %8445 = vmatpush1.msra.mxu0 %v8151
        %8446 = vmatprep.subr.mxu0 %v8155
        %8447 = vmatpush1.msra.mxu0 %v8154
        %8448 = vmatprep.subr.mxu0 %v8158
        %8449 = vmatpush1.msra.mxu0 %v8157
        %8450 = vmatprep.subr.mxu0 %v8161
        %8451 = vmatpush1.msra.mxu0 %v8160
        %8452 = vmatprep.subr.mxu0 %v8164
        %8453 = vmatpush1.msra.mxu0 %v8163
        %8454 = vmatprep.subr.mxu0 %v8167
        %8455 = vmatpush1.msra.mxu0 %v8166
        %8456 = vmatprep.subr.mxu0 %v8170
        %8457 = vmatpush1.msra.mxu0 %v8169
        %8458 = vmatprep.subr.mxu0 %v8173
        %8459 = vmatpush1.msra.mxu0 %v8172
        %8460 = vmatprep.subr.mxu0 %v8176
        %8461 = vmatpush1.msra.mxu0 %v8175
        %8462 = vmatprep.subr.mxu0 %v8179
        %8463 = vmatpush1.msra.mxu0 %v8178
        %8464 = vmatprep.subr.mxu0 %v8182
        %8465 = vmatpush1.msra.mxu0 %v8181
        %8466 = vmatprep.subr.mxu0 %v8185
        %8467 = vmatpush1.msra.mxu0 %v8184
        %8468 = vmatprep.subr.mxu0 %v8188
        %8469 = vmatpush1.msra.mxu0 %v8187
        %8470 = vmatprep.subr.mxu0 %v8191
        %8471 = vmatpush1.msra.mxu0 %v8190
        %8472 = vmatprep.subr.mxu0 %v8194
        %8473 = vmatpush1.msra.mxu0 %v8193
        %8474 = vmatprep.subr.mxu0 %v8197
        %8475 = vmatpush1.msra.mxu0 %v8196
        %8476 = vmatprep.subr.mxu0 %v8200
        %8477 = vmatpush1.msra.mxu0 %v8199
        %8478 = vmatprep.subr.mxu0 %v8203
        %8479 = vmatpush1.msra.mxu0 %v8202
        %8480 = vmatprep.subr.mxu0 %v8206
        %8481 = vmatpush1.msra.mxu0 %v8205
        %8482 = vmatprep.subr.mxu0 %v8209
        %8483 = vmatpush1.msra.mxu0 %v8208
        %8484 = vmatprep.mubr.f32.mxu0 %v7982
        %8485 = vmatmul.mubr.f32.gmra.mrb[0].mxu0 %v7981
        %v8486 = vpop.f32.mrb[0].mxu0
        %v8487 = vadd.f32 %v8374, %v8486
        %v8488 = vpop.f32.mrb[0].mxu0
        %v8489 = vadd.f32 %v8376, %v8488
        %8490 = vmatprep.mubr.f32.mxu0 %v7987
        %8491 = vmatmul.mubr.f32.gmra.mrb[0].mxu0 %v7986
        %v8492 = vpop.f32.mrb[0].mxu0
        %v8493 = vadd.f32 %v8380, %v8492
        %v8494 = vpop.f32.mrb[0].mxu0
        %v8495 = vadd.f32 %v8382, %v8494
        %8496 = vmatprep.mubr.f32.mxu0 %v7992
        %8497 = vmatmul.mubr.f32.gmra.mrb[0].mxu0 %v7991
        %v8498 = vpop.f32.mrb[0].mxu0
        %v8499 = vadd.f32 %v8386, %v8498
        %v8500 = vpop.f32.mrb[0].mxu0
        %v8501 = vadd.f32 %v8388, %v8500
        %8502 = vmatprep.mubr.f32.mxu0 %v7997
        %8503 = vmatmul.mubr.f32.gmra.mrb[0].mxu0 %v7996
        %v8504 = vpop.f32.mrb[0].mxu0
        %v8505 = vadd.f32 %v8392, %v8504
        %v8506 = vpop.f32.mrb[0].mxu0
        %v8507 = vadd.f32 %v8394, %v8506
        %8508 = vmatprep.mubr.f32.mxu0 %v8002
        %8509 = vmatmul.mubr.f32.gmra.mrb[0].mxu0 %v8001
        %v8510 = vpop.f32.mrb[0].mxu0
        %v8511 = vadd.f32 %v8398, %v8510
        %v8512 = vpop.f32.mrb[0].mxu0
        %v8513 = vadd.f32 %v8400, %v8512
        %8514 = vmatprep.mubr.f32.mxu0 %v8007
        %8515 = vmatmul.mubr.f32.gmra.mrb[0].mxu0 %v8006
        %v8516 = vpop.f32.mrb[0].mxu0
        %v8517 = vadd.f32 %v8404, %v8516
        %v8518 = vpop.f32.mrb[0].mxu0
        %v8519 = vadd.f32 %v8406, %v8518
        %8520 = vmatprep.mubr.f32.mxu0 %v8012
        %8521 = vmatmul.mubr.f32.gmra.mrb[0].mxu0 %v8011
        %v8522 = vpop.f32.mrb[0].mxu0
        %v8523 = vadd.f32 %v8410, %v8522
        %v8524 = vpop.f32.mrb[0].mxu0
        %v8525 = vadd.f32 %v8412, %v8524
        %8526 = vmatprep.mubr.f32.mxu0 %v8017
        %8527 = vmatmul.mubr.f32.gmra.mrb[0].mxu0 %v8016
        %v8528 = vpop.f32.mrb[0].mxu0
        %v8529 = vadd.f32 %v8416, %v8528
        %v8530 = vpop.f32.mrb[0].mxu0
        %v8531 = vadd.f32 %v8418, %v8530
        %8532 = vdwg.mxu0
        %8533 = vmatprep.subr.mxu0 %v8212
        %8534 = vmatpush1.msra.mxu0 %v8211
        %8535 = vmatprep.subr.mxu0 %v8215
        %8536 = vmatpush1.msra.mxu0 %v8214
        %8537 = vmatprep.subr.mxu0 %v8218
        %8538 = vmatpush1.msra.mxu0 %v8217
        %8539 = vmatprep.subr.mxu0 %v8221
        %8540 = vmatpush1.msra.mxu0 %v8220
        %8541 = vmatprep.subr.mxu0 %v8224
        %8542 = vmatpush1.msra.mxu0 %v8223
        %8543 = vmatprep.subr.mxu0 %v8227
        %8544 = vmatpush1.msra.mxu0 %v8226
        %8545 = vmatprep.subr.mxu0 %v8230
        %8546 = vmatpush1.msra.mxu0 %v8229
        %8547 = vmatprep.subr.mxu0 %v8233
        %8548 = vmatpush1.msra.mxu0 %v8232
        %8549 = vmatprep.subr.mxu0 0.0
        %8550 = vmatpush1.msra.mxu0 0.0
        %8551 = vmatprep.subr.mxu0 0.0
        %8552 = vmatpush1.msra.mxu0 0.0
        %8553 = vmatprep.subr.mxu0 0.0
        %8554 = vmatpush1.msra.mxu0 0.0
        %8555 = vmatprep.subr.mxu0 0.0
        %8556 = vmatpush1.msra.mxu0 0.0
        %8557 = vmatprep.subr.mxu0 0.0
        %8558 = vmatpush1.msra.mxu0 0.0
        %8559 = vmatprep.subr.mxu0 0.0
        %8560 = vmatpush1.msra.mxu0 0.0
        %8561 = vmatprep.subr.mxu0 0.0
        %8562 = vmatpush1.msra.mxu0 0.0
        %8563 = vmatprep.subr.mxu0 0.0
        %8564 = vmatpush1.msra.mxu0 0.0
        %8565 = vmatprep.subr.mxu0 0.0
        %8566 = vmatpush1.msra.mxu0 0.0
        %8567 = vmatprep.subr.mxu0 0.0
        %8568 = vmatpush1.msra.mxu0 0.0
        %8569 = vmatprep.subr.mxu0 0.0
        %8570 = vmatpush1.msra.mxu0 0.0
        %8571 = vmatprep.subr.mxu0 0.0
        %8572 = vmatpush1.msra.mxu0 0.0
        %8573 = vmatprep.subr.mxu0 0.0
        %8574 = vmatpush1.msra.mxu0 0.0
        %8575 = vmatprep.subr.mxu0 0.0
        %8576 = vmatpush1.msra.mxu0 0.0
        %8577 = vmatprep.subr.mxu0 0.0
        %8578 = vmatpush1.msra.mxu0 0.0
        %8579 = vmatprep.subr.mxu0 0.0
        %8580 = vmatpush1.msra.mxu0 0.0
        %8581 = vmatprep.subr.mxu0 0.0
        %8582 = vmatpush1.msra.mxu0 0.0
        %8583 = vmatprep.subr.mxu0 0.0
        %8584 = vmatpush1.msra.mxu0 0.0
        %8585 = vmatprep.subr.mxu0 0.0
        %8586 = vmatpush1.msra.mxu0 0.0
        %8587 = vmatprep.subr.mxu0 0.0
        %8588 = vmatpush1.msra.mxu0 0.0
        %8589 = vmatprep.subr.mxu0 0.0
        %8590 = vmatpush1.msra.mxu0 0.0
        %8591 = vmatprep.subr.mxu0 0.0
        %8592 = vmatpush1.msra.mxu0 0.0
        %8593 = vmatprep.subr.mxu0 0.0
        %8594 = vmatpush1.msra.mxu0 0.0
        %8595 = vmatprep.subr.mxu0 0.0
        %8596 = vmatpush1.msra.mxu0 0.0
        %8597 = vmatprep.mubr.f32.mxu0 0.0
        %8598 = vmatmul.mubr.f32.gmra.mrb[0].mxu0 %v8284
        %v8599 = vpop.f32.mrb[0].mxu0
        %v8600 = vadd.f32 %v8487, %v8599
        %v8601 = vpop.f32.mrb[0].mxu0
        %v8602 = vadd.f32 %v8489, %v8601
        %8603 = vmatprep.mubr.f32.mxu0 0.0
        %8604 = vmatmul.mubr.f32.gmra.mrb[0].mxu0 %v8287
        %v8605 = vpop.f32.mrb[0].mxu0
        %v8606 = vadd.f32 %v8493, %v8605
        %v8607 = vpop.f32.mrb[0].mxu0
        %v8608 = vadd.f32 %v8495, %v8607
        %8609 = vmatprep.mubr.f32.mxu0 0.0
        %8610 = vmatmul.mubr.f32.gmra.mrb[0].mxu0 %v8290
        %v8611 = vpop.f32.mrb[0].mxu0
        %v8612 = vadd.f32 %v8499, %v8611
        %v8613 = vpop.f32.mrb[0].mxu0
        %v8614 = vadd.f32 %v8501, %v8613
        %8615 = vmatprep.mubr.f32.mxu0 0.0
        %8616 = vmatmul.mubr.f32.gmra.mrb[0].mxu0 %v8293
        %v8617 = vpop.f32.mrb[0].mxu0
        %v8618 = vadd.f32 %v8505, %v8617
        %v8619 = vpop.f32.mrb[0].mxu0
        %v8620 = vadd.f32 %v8507, %v8619
        %8621 = vmatprep.mubr.f32.mxu0 0.0
        %8622 = vmatmul.mubr.f32.gmra.mrb[0].mxu0 %v8296
        %v8623 = vpop.f32.mrb[0].mxu0
        %v8624 = vadd.f32 %v8511, %v8623
        %v8625 = vpop.f32.mrb[0].mxu0
        %v8626 = vadd.f32 %v8513, %v8625
        %8627 = vmatprep.mubr.f32.mxu0 0.0
        %8628 = vmatmul.mubr.f32.gmra.mrb[0].mxu0 %v8299
        %v8629 = vpop.f32.mrb[0].mxu0
        %v8630 = vadd.f32 %v8517, %v8629
        %v8631 = vpop.f32.mrb[0].mxu0
        %v8632 = vadd.f32 %v8519, %v8631
        %8633 = vmatprep.mubr.f32.mxu0 0.0
        %8634 = vmatmul.mubr.f32.gmra.mrb[0].mxu0 %v8302
        %v8635 = vpop.f32.mrb[0].mxu0
        %v8636 = vadd.f32 %v8523, %v8635
        %v8637 = vpop.f32.mrb[0].mxu0
        %v8638 = vadd.f32 %v8525, %v8637
        %8639 = vmatprep.mubr.f32.mxu0 0.0
        %8640 = vmatmul.mubr.f32.gmra.mrb[0].mxu0 %v8305
        %v8641 = vpop.f32.mrb[0].mxu0
        %v8642 = vadd.f32 %v8529, %v8641
        %v8643 = vpop.f32.mrb[0].mxu0
        %v8644 = vadd.f32 %v8531, %v8643
        %8645 = vdwg.mxu0
        %8646 = vmatprep.subr.mxu0 0.0
        %8647 = vmatpush1.msra.mxu0 %v8021
        %8648 = vmatprep.subr.mxu0 0.0
        %8649 = vmatpush1.msra.mxu0 %v8024
        %8650 = vmatprep.subr.mxu0 0.0
        %8651 = vmatpush1.msra.mxu0 %v8027
        %8652 = vmatprep.subr.mxu0 0.0
        %8653 = vmatpush1.msra.mxu0 %v8030
        %8654 = vmatprep.subr.mxu0 0.0
        %8655 = vmatpush1.msra.mxu0 %v8033
        %8656 = vmatprep.subr.mxu0 0.0
        %8657 = vmatpush1.msra.mxu0 %v8036
        %8658 = vmatprep.subr.mxu0 0.0
        %8659 = vmatpush1.msra.mxu0 %v8039
        %8660 = vmatprep.subr.mxu0 0.0
        %8661 = vmatpush1.msra.mxu0 %v8042
        %8662 = vmatprep.subr.mxu0 0.0
        %8663 = vmatpush1.msra.mxu0 %v8045
        %8664 = vmatprep.subr.mxu0 0.0
        %8665 = vmatpush1.msra.mxu0 %v8048
        %8666 = vmatprep.subr.mxu0 0.0
        %8667 = vmatpush1.msra.mxu0 %v8051
        %8668 = vmatprep.subr.mxu0 0.0
        %8669 = vmatpush1.msra.mxu0 %v8054
        %8670 = vmatprep.subr.mxu0 0.0
        %8671 = vmatpush1.msra.mxu0 %v8057
        %8672 = vmatprep.subr.mxu0 0.0
        %8673 = vmatpush1.msra.mxu0 %v8060
        %8674 = vmatprep.subr.mxu0 0.0
        %8675 = vmatpush1.msra.mxu0 %v8063
        %8676 = vmatprep.subr.mxu0 0.0
        %8677 = vmatpush1.msra.mxu0 %v8066
        %8678 = vmatprep.subr.mxu0 0.0
        %8679 = vmatpush1.msra.mxu0 %v8069
        %8680 = vmatprep.subr.mxu0 0.0
        %8681 = vmatpush1.msra.mxu0 %v8072
        %8682 = vmatprep.subr.mxu0 0.0
        %8683 = vmatpush1.msra.mxu0 %v8075
        %8684 = vmatprep.subr.mxu0 0.0
        %8685 = vmatpush1.msra.mxu0 %v8078
        %8686 = vmatprep.subr.mxu0 0.0
        %8687 = vmatpush1.msra.mxu0 %v8081
        %8688 = vmatprep.subr.mxu0 0.0
        %8689 = vmatpush1.msra.mxu0 %v8084
        %8690 = vmatprep.subr.mxu0 0.0
        %8691 = vmatpush1.msra.mxu0 %v8087
        %8692 = vmatprep.subr.mxu0 0.0
        %8693 = vmatpush1.msra.mxu0 %v8090
        %8694 = vmatprep.subr.mxu0 0.0
        %8695 = vmatpush1.msra.mxu0 %v8093
        %8696 = vmatprep.subr.mxu0 0.0
        %8697 = vmatpush1.msra.mxu0 %v8096
        %8698 = vmatprep.subr.mxu0 0.0
        %8699 = vmatpush1.msra.mxu0 %v8099
        %8700 = vmatprep.subr.mxu0 0.0
        %8701 = vmatpush1.msra.mxu0 %v8102
        %8702 = vmatprep.subr.mxu0 0.0
        %8703 = vmatpush1.msra.mxu0 %v8105
        %8704 = vmatprep.subr.mxu0 0.0
        %8705 = vmatpush1.msra.mxu0 %v8108
        %8706 = vmatprep.subr.mxu0 0.0
        %8707 = vmatpush1.msra.mxu0 %v8111
        %8708 = vmatprep.subr.mxu0 0.0
        %8709 = vmatpush1.msra.mxu0 %v8114
        %8710 = vmatprep.mubr.f32.mxu0 %v7980
        %8711 = vmatmul.mubr.f32.gmra.mrb[0].mxu0 %v7979
        %v8712 = vpop.f32.mrb[0].mxu0
        %v8713 = vadd.f32 %v8246, %v8712
        %v8714 = vpop.f32.mrb[0].mxu0
        %8715 = vmatprep.mubr.f32.mxu0 %v7985
        %8716 = vmatmul.mubr.f32.gmra.mrb[0].mxu0 %v7984
        %v8717 = vpop.f32.mrb[0].mxu0
        %v8718 = vadd.f32 %v8251, %v8717
        %v8719 = vpop.f32.mrb[0].mxu0
        %8720 = vmatprep.mubr.f32.mxu0 %v7990
        %8721 = vmatmul.mubr.f32.gmra.mrb[0].mxu0 %v7989
        %v8722 = vpop.f32.mrb[0].mxu0
        %v8723 = vadd.f32 %v8256, %v8722
        %v8724 = vpop.f32.mrb[0].mxu0
        %8725 = vmatprep.mubr.f32.mxu0 %v7995
        %8726 = vmatmul.mubr.f32.gmra.mrb[0].mxu0 %v7994
        %v8727 = vpop.f32.mrb[0].mxu0
        %v8728 = vadd.f32 %v8261, %v8727
        %v8729 = vpop.f32.mrb[0].mxu0
        %8730 = vmatprep.mubr.f32.mxu0 %v8000
        %8731 = vmatmul.mubr.f32.gmra.mrb[0].mxu0 %v7999
        %v8732 = vpop.f32.mrb[0].mxu0
        %v8733 = vadd.f32 %v8266, %v8732
        %v8734 = vpop.f32.mrb[0].mxu0
        %8735 = vmatprep.mubr.f32.mxu0 %v8005
        %8736 = vmatmul.mubr.f32.gmra.mrb[0].mxu0 %v8004
        %v8737 = vpop.f32.mrb[0].mxu0
        %v8738 = vadd.f32 %v8271, %v8737
        %v8739 = vpop.f32.mrb[0].mxu0
        %8740 = vmatprep.mubr.f32.mxu0 %v8010
        %8741 = vmatmul.mubr.f32.gmra.mrb[0].mxu0 %v8009
        %v8742 = vpop.f32.mrb[0].mxu0
        %v8743 = vadd.f32 %v8276, %v8742
        %v8744 = vpop.f32.mrb[0].mxu0
        %8745 = vmatprep.mubr.f32.mxu0 %v8015
        %8746 = vmatmul.mubr.f32.gmra.mrb[0].mxu0 %v8014
        %v8747 = vpop.f32.mrb[0].mxu0
        %v8748 = vadd.f32 %v8281, %v8747
        %v8749 = vpop.f32.mrb[0].mxu0
        %8750 = vdwg.mxu0
        %8751 = vmatprep.subr.mxu0 0.0
        %8752 = vmatpush1.msra.mxu0 %v8117
        %8753 = vmatprep.subr.mxu0 0.0
        %8754 = vmatpush1.msra.mxu0 %v8120
        %8755 = vmatprep.subr.mxu0 0.0
        %8756 = vmatpush1.msra.mxu0 %v8123
        %8757 = vmatprep.subr.mxu0 0.0
        %8758 = vmatpush1.msra.mxu0 %v8126
        %8759 = vmatprep.subr.mxu0 0.0
        %8760 = vmatpush1.msra.mxu0 %v8129
        %8761 = vmatprep.subr.mxu0 0.0
        %8762 = vmatpush1.msra.mxu0 %v8132
        %8763 = vmatprep.subr.mxu0 0.0
        %8764 = vmatpush1.msra.mxu0 %v8135
        %8765 = vmatprep.subr.mxu0 0.0
        %8766 = vmatpush1.msra.mxu0 %v8138
        %8767 = vmatprep.subr.mxu0 0.0
        %8768 = vmatpush1.msra.mxu0 %v8141
        %8769 = vmatprep.subr.mxu0 0.0
        %8770 = vmatpush1.msra.mxu0 %v8144
        %8771 = vmatprep.subr.mxu0 0.0
        %8772 = vmatpush1.msra.mxu0 %v8147
        %8773 = vmatprep.subr.mxu0 0.0
        %8774 = vmatpush1.msra.mxu0 %v8150
        %8775 = vmatprep.subr.mxu0 0.0
        %8776 = vmatpush1.msra.mxu0 %v8153
        %8777 = vmatprep.subr.mxu0 0.0
        %8778 = vmatpush1.msra.mxu0 %v8156
        %8779 = vmatprep.subr.mxu0 0.0
        %8780 = vmatpush1.msra.mxu0 %v8159
        %8781 = vmatprep.subr.mxu0 0.0
        %8782 = vmatpush1.msra.mxu0 %v8162
        %8783 = vmatprep.subr.mxu0 0.0
        %8784 = vmatpush1.msra.mxu0 %v8165
        %8785 = vmatprep.subr.mxu0 0.0
        %8786 = vmatpush1.msra.mxu0 %v8168
        %8787 = vmatprep.subr.mxu0 0.0
        %8788 = vmatpush1.msra.mxu0 %v8171
        %8789 = vmatprep.subr.mxu0 0.0
        %8790 = vmatpush1.msra.mxu0 %v8174
        %8791 = vmatprep.subr.mxu0 0.0
        %8792 = vmatpush1.msra.mxu0 %v8177
        %8793 = vmatprep.subr.mxu0 0.0
        %8794 = vmatpush1.msra.mxu0 %v8180
        %8795 = vmatprep.subr.mxu0 0.0
        %8796 = vmatpush1.msra.mxu0 %v8183
        %8797 = vmatprep.subr.mxu0 0.0
        %8798 = vmatpush1.msra.mxu0 %v8186
        %8799 = vmatprep.subr.mxu0 0.0
        %8800 = vmatpush1.msra.mxu0 %v8189
        %8801 = vmatprep.subr.mxu0 0.0
        %8802 = vmatpush1.msra.mxu0 %v8192
        %8803 = vmatprep.subr.mxu0 0.0
        %8804 = vmatpush1.msra.mxu0 %v8195
        %8805 = vmatprep.subr.mxu0 0.0
        %8806 = vmatpush1.msra.mxu0 %v8198
        %8807 = vmatprep.subr.mxu0 0.0
        %8808 = vmatpush1.msra.mxu0 %v8201
        %8809 = vmatprep.subr.mxu0 0.0
        %8810 = vmatpush1.msra.mxu0 %v8204
        %8811 = vmatprep.subr.mxu0 0.0
        %8812 = vmatpush1.msra.mxu0 %v8207
        %8813 = vmatprep.subr.mxu0 0.0
        %8814 = vmatpush1.msra.mxu0 %v8210
        %8815 = vmatprep.mubr.f32.mxu0 %v7982
        %8816 = vmatmul.mubr.f32.gmra.mrb[0].mxu0 %v7981
        %v8817 = vpop.f32.mrb[0].mxu0
        %v8818 = vadd.f32 %v8713, %v8817
        %v8819 = vpop.f32.mrb[0].mxu0
        %8820 = vmatprep.mubr.f32.mxu0 %v7987
        %8821 = vmatmul.mubr.f32.gmra.mrb[0].mxu0 %v7986
        %v8822 = vpop.f32.mrb[0].mxu0
        %v8823 = vadd.f32 %v8718, %v8822
        %v8824 = vpop.f32.mrb[0].mxu0
        %8825 = vmatprep.mubr.f32.mxu0 %v7992
        %8826 = vmatmul.mubr.f32.gmra.mrb[0].mxu0 %v7991
        %v8827 = vpop.f32.mrb[0].mxu0
        %v8828 = vadd.f32 %v8723, %v8827
        %v8829 = vpop.f32.mrb[0].mxu0
        %8830 = vmatprep.mubr.f32.mxu0 %v7997
        %8831 = vmatmul.mubr.f32.gmra.mrb[0].mxu0 %v7996
        %v8832 = vpop.f32.mrb[0].mxu0
        %v8833 = vadd.f32 %v8728, %v8832
        %v8834 = vpop.f32.mrb[0].mxu0
        %8835 = vmatprep.mubr.f32.mxu0 %v8002
        %8836 = vmatmul.mubr.f32.gmra.mrb[0].mxu0 %v8001
        %v8837 = vpop.f32.mrb[0].mxu0
        %v8838 = vadd.f32 %v8733, %v8837
        %v8839 = vpop.f32.mrb[0].mxu0
        %8840 = vmatprep.mubr.f32.mxu0 %v8007
        %8841 = vmatmul.mubr.f32.gmra.mrb[0].mxu0 %v8006
        %v8842 = vpop.f32.mrb[0].mxu0
        %v8843 = vadd.f32 %v8738, %v8842
        %v8844 = vpop.f32.mrb[0].mxu0
        %8845 = vmatprep.mubr.f32.mxu0 %v8012
        %8846 = vmatmul.mubr.f32.gmra.mrb[0].mxu0 %v8011
        %v8847 = vpop.f32.mrb[0].mxu0
        %v8848 = vadd.f32 %v8743, %v8847
        %v8849 = vpop.f32.mrb[0].mxu0
        %8850 = vmatprep.mubr.f32.mxu0 %v8017
        %8851 = vmatmul.mubr.f32.gmra.mrb[0].mxu0 %v8016
        %v8852 = vpop.f32.mrb[0].mxu0
        %v8853 = vadd.f32 %v8748, %v8852
        %v8854 = vpop.f32.mrb[0].mxu0
        %8855 = vdwg.mxu0
        %8856 = vmatprep.subr.mxu0 0.0
        %8857 = vmatpush1.msra.mxu0 %v8213
        %8858 = vmatprep.subr.mxu0 0.0
        %8859 = vmatpush1.msra.mxu0 %v8216
        %8860 = vmatprep.subr.mxu0 0.0
        %8861 = vmatpush1.msra.mxu0 %v8219
        %8862 = vmatprep.subr.mxu0 0.0
        %8863 = vmatpush1.msra.mxu0 %v8222
        %8864 = vmatprep.subr.mxu0 0.0
        %8865 = vmatpush1.msra.mxu0 %v8225
        %8866 = vmatprep.subr.mxu0 0.0
        %8867 = vmatpush1.msra.mxu0 %v8228
        %8868 = vmatprep.subr.mxu0 0.0
        %8869 = vmatpush1.msra.mxu0 %v8231
        %8870 = vmatprep.subr.mxu0 0.0
        %8871 = vmatpush1.msra.mxu0 %v8234
        %8872 = vmatprep.subr.mxu0 0.0
        %8873 = vmatpush1.msra.mxu0 0.0
        %8874 = vmatprep.subr.mxu0 0.0
        %8875 = vmatpush1.msra.mxu0 0.0
        %8876 = vmatprep.subr.mxu0 0.0
        %8877 = vmatpush1.msra.mxu0 0.0
        %8878 = vmatprep.subr.mxu0 0.0
        %8879 = vmatpush1.msra.mxu0 0.0
        %8880 = vmatprep.subr.mxu0 0.0
        %8881 = vmatpush1.msra.mxu0 0.0
        %8882 = vmatprep.subr.mxu0 0.0
        %8883 = vmatpush1.msra.mxu0 0.0
        %8884 = vmatprep.subr.mxu0 0.0
        %8885 = vmatpush1.msra.mxu0 0.0
        %8886 = vmatprep.subr.mxu0 0.0
        %8887 = vmatpush1.msra.mxu0 0.0
        %8888 = vmatprep.subr.mxu0 0.0
        %8889 = vmatpush1.msra.mxu0 0.0
        %8890 = vmatprep.subr.mxu0 0.0
        %8891 = vmatpush1.msra.mxu0 0.0
        %8892 = vmatprep.subr.mxu0 0.0
        %8893 = vmatpush1.msra.mxu0 0.0
        %8894 = vmatprep.subr.mxu0 0.0
        %8895 = vmatpush1.msra.mxu0 0.0
        %8896 = vmatprep.subr.mxu0 0.0
        %8897 = vmatpush1.msra.mxu0 0.0
        %8898 = vmatprep.subr.mxu0 0.0
        %8899 = vmatpush1.msra.mxu0 0.0
        %8900 = vmatprep.subr.mxu0 0.0
        %8901 = vmatpush1.msra.mxu0 0.0
        %8902 = vmatprep.subr.mxu0 0.0
        %8903 = vmatpush1.msra.mxu0 0.0
        %8904 = vmatprep.subr.mxu0 0.0
        %8905 = vmatpush1.msra.mxu0 0.0
        %8906 = vmatprep.subr.mxu0 0.0
        %8907 = vmatpush1.msra.mxu0 0.0
        %8908 = vmatprep.subr.mxu0 0.0
        %8909 = vmatpush1.msra.mxu0 0.0
        %8910 = vmatprep.subr.mxu0 0.0
        %8911 = vmatpush1.msra.mxu0 0.0
        %8912 = vmatprep.subr.mxu0 0.0
        %8913 = vmatpush1.msra.mxu0 0.0
        %8914 = vmatprep.subr.mxu0 0.0
        %8915 = vmatpush1.msra.mxu0 0.0
        %8916 = vmatprep.subr.mxu0 0.0
        %8917 = vmatpush1.msra.mxu0 0.0
        %8918 = vmatprep.subr.mxu0 0.0
        %8919 = vmatpush1.msra.mxu0 0.0
        %8920 = vmatprep.mubr.f32.mxu0 0.0
        %8921 = vmatmul.mubr.f32.gmra.mrb[0].mxu0 %v8284
        %v8922 = vpop.f32.mrb[0].mxu0
        %v8923 = vadd.f32 %v8818, %v8922
        %v8924 = vpop.f32.mrb[0].mxu0
        %8925 = vmatprep.mubr.f32.mxu0 0.0
        %8926 = vmatmul.mubr.f32.gmra.mrb[0].mxu0 %v8287
        %v8927 = vpop.f32.mrb[0].mxu0
        %v8928 = vadd.f32 %v8823, %v8927
        %v8929 = vpop.f32.mrb[0].mxu0
        %8930 = vmatprep.mubr.f32.mxu0 0.0
        %8931 = vmatmul.mubr.f32.gmra.mrb[0].mxu0 %v8290
        %v8932 = vpop.f32.mrb[0].mxu0
        %v8933 = vadd.f32 %v8828, %v8932
        %v8934 = vpop.f32.mrb[0].mxu0
        %8935 = vmatprep.mubr.f32.mxu0 0.0
        %8936 = vmatmul.mubr.f32.gmra.mrb[0].mxu0 %v8293
        %v8937 = vpop.f32.mrb[0].mxu0
        %v8938 = vadd.f32 %v8833, %v8937
        %v8939 = vpop.f32.mrb[0].mxu0
        %8940 = vmatprep.mubr.f32.mxu0 0.0
        %8941 = vmatmul.mubr.f32.gmra.mrb[0].mxu0 %v8296
        %v8942 = vpop.f32.mrb[0].mxu0
        %v8943 = vadd.f32 %v8838, %v8942
        %v8944 = vpop.f32.mrb[0].mxu0
        %8945 = vmatprep.mubr.f32.mxu0 0.0
        %8946 = vmatmul.mubr.f32.gmra.mrb[0].mxu0 %v8299
        %v8947 = vpop.f32.mrb[0].mxu0
        %v8948 = vadd.f32 %v8843, %v8947
        %v8949 = vpop.f32.mrb[0].mxu0
        %8950 = vmatprep.mubr.f32.mxu0 0.0
        %8951 = vmatmul.mubr.f32.gmra.mrb[0].mxu0 %v8302
        %v8952 = vpop.f32.mrb[0].mxu0
        %v8953 = vadd.f32 %v8848, %v8952
        %v8954 = vpop.f32.mrb[0].mxu0
        %8955 = vmatprep.mubr.f32.mxu0 0.0
        %8956 = vmatmul.mubr.f32.gmra.mrb[0].mxu0 %v8305
        %v8957 = vpop.f32.mrb[0].mxu0
        %v8958 = vadd.f32 %v8853, %v8957
        %v8959 = vpop.f32.mrb[0].mxu0
        %8960 = vdwg.mxu0
        %v8961 = vld [vmem:[%s10] sm:$0xff]
        %v8962 = vld [vmem:[%s10 + $0x8] sm:$0xff]
        %v8963 = vld [vmem:[%s10 + $0x10] sm:$0xff]
        %v8964 = vld [vmem:[%s10 + $0x18] sm:$0xff]
        %v8965 = vld [vmem:[%s10 + $0x20] sm:$0xff]
        %v8966 = vld [vmem:[%s10 + $0x28] sm:$0xff]
        %v8967 = vld [vmem:[%s10 + $0x30] sm:$0xff]
        %v8968 = vld [vmem:[%s10 + $0x38] sm:$0xff]
        %v8969 = vld [vmem:[%s10 + $0x40] sm:$0xff]
        %v8970 = vld [vmem:[%s10 + $0x48] sm:$0xff]
        %v8971 = vld [vmem:[%s10 + $0x50] sm:$0xff]
        %v8972 = vld [vmem:[%s10 + $0x58] sm:$0xff]
        %v8973 = vld [vmem:[%s10 + $0x60] sm:$0xff]
        %v8974 = vld [vmem:[%s10 + $0x68] sm:$0xff]
        %v8975 = vld [vmem:[%s10 + $0x70] sm:$0xff]
        %v8976 = vld [vmem:[%s10 + $0x78] sm:$0xff]
        %v8977 = vld [vmem:[%s10 + $0x80] sm:$0xff]
        %v8978 = vld [vmem:[%s10 + $0x88] sm:$0xff]
        %v8979 = vld [vmem:[%s10 + $0x90] sm:$0xff]
        %v8980 = vld [vmem:[%s10 + $0x98] sm:$0xff]
        %v8981 = vld [vmem:[%s10 + $0xa0] sm:$0xff]
        %v8982 = vld [vmem:[%s10 + $0xa8] sm:$0xff]
        %v8983 = vld [vmem:[%s10 + $0xb0] sm:$0xff]
        %v8984 = vld [vmem:[%s10 + $0xb8] sm:$0xff]
        %v8985 = vld [vmem:[%s10 + $0xc0] sm:$0xff]
        %v8986 = vld [vmem:[%s10 + $0xc8] sm:$0xff]
        %v8987 = vld [vmem:[%s10 + $0xd0] sm:$0xff]
        %v8988 = vld [vmem:[%s10 + $0xd8] sm:$0xff]
        %v8989 = vld [vmem:[%s10 + $0xe0] sm:$0xff]
        %v8990 = vld [vmem:[%s10 + $0xe8] sm:$0xff]
        %v8991 = vld [vmem:[%s10 + $0xf0] sm:$0xff]
        %v8992 = vld [vmem:[%s10 + $0xf8] sm:$0xff]
        %v8993 = vld [vmem:[%s10 + $0x100] sm:$0xff]
        %v8994 = vld [vmem:[%s10 + $0x108] sm:$0xff]
        %v8995 = vld [vmem:[%s10 + $0x110] sm:$0xff]
        %v8996 = vld [vmem:[%s10 + $0x118] sm:$0xff]
        %v8997 = vld [vmem:[%s10 + $0x120] sm:$0xff]
        %v8998 = vld [vmem:[%s10 + $0x128] sm:$0xff]
        %v8999 = vld [vmem:[%s10 + $0x130] sm:$0xff]
        %v9000 = vld [vmem:[%s10 + $0x138] sm:$0xff]
        %v9001 = vld [vmem:[%s10 + $0x140] sm:$0xff]
        %v9002 = vld [vmem:[%s10 + $0x148] sm:$0xff]
        %v9003 = vld [vmem:[%s10 + $0x150] sm:$0xff]
        %v9004 = vld [vmem:[%s10 + $0x158] sm:$0xff]
        %v9005 = vld [vmem:[%s10 + $0x160] sm:$0xff]
        %v9006 = vld [vmem:[%s10 + $0x168] sm:$0xff]
        %v9007 = vld [vmem:[%s10 + $0x170] sm:$0xff]
        %v9008 = vld [vmem:[%s10 + $0x178] sm:$0xff]
        %9009 = vmatprep.subr.mxu0 0.0
        %9010 = vmatpush1.msra.mxu0 %v8961
        %9011 = vmatprep.subr.mxu0 0.0
        %9012 = vmatpush1.msra.mxu0 %v8962
        %9013 = vmatprep.subr.mxu0 0.0
        %9014 = vmatpush1.msra.mxu0 %v8963
        %9015 = vmatprep.subr.mxu0 0.0
        %9016 = vmatpush1.msra.mxu0 %v8964
        %9017 = vmatprep.subr.mxu0 0.0
        %9018 = vmatpush1.msra.mxu0 %v8965
        %9019 = vmatprep.subr.mxu0 0.0
        %9020 = vmatpush1.msra.mxu0 %v8966
        %9021 = vmatprep.subr.mxu0 0.0
        %9022 = vmatpush1.msra.mxu0 %v8967
        %9023 = vmatprep.subr.mxu0 0.0
        %9024 = vmatpush1.msra.mxu0 %v8968
        %9025 = vmatprep.subr.mxu0 0.0
        %9026 = vmatpush1.msra.mxu0 %v8969
        %9027 = vmatprep.subr.mxu0 0.0
        %9028 = vmatpush1.msra.mxu0 %v8970
        %9029 = vmatprep.subr.mxu0 0.0
        %9030 = vmatpush1.msra.mxu0 %v8971
        %9031 = vmatprep.subr.mxu0 0.0
        %9032 = vmatpush1.msra.mxu0 %v8972
        %9033 = vmatprep.subr.mxu0 0.0
        %9034 = vmatpush1.msra.mxu0 %v8973
        %9035 = vmatprep.subr.mxu0 0.0
        %9036 = vmatpush1.msra.mxu0 %v8974
        %9037 = vmatprep.subr.mxu0 0.0
        %9038 = vmatpush1.msra.mxu0 %v8975
        %9039 = vmatprep.subr.mxu0 0.0
        %9040 = vmatpush1.msra.mxu0 %v8976
        %9041 = vmatprep.subr.mxu0 0.0
        %9042 = vmatpush1.msra.mxu0 %v8977
        %9043 = vmatprep.subr.mxu0 0.0
        %9044 = vmatpush1.msra.mxu0 %v8978
        %9045 = vmatprep.subr.mxu0 0.0
        %9046 = vmatpush1.msra.mxu0 %v8979
        %9047 = vmatprep.subr.mxu0 0.0
        %9048 = vmatpush1.msra.mxu0 %v8980
        %9049 = vmatprep.subr.mxu0 0.0
        %9050 = vmatpush1.msra.mxu0 %v8981
        %9051 = vmatprep.subr.mxu0 0.0
        %9052 = vmatpush1.msra.mxu0 %v8982
        %9053 = vmatprep.subr.mxu0 0.0
        %9054 = vmatpush1.msra.mxu0 %v8983
        %9055 = vmatprep.subr.mxu0 0.0
        %9056 = vmatpush1.msra.mxu0 %v8984
        %9057 = vmatprep.subr.mxu0 0.0
        %9058 = vmatpush1.msra.mxu0 %v8985
        %9059 = vmatprep.subr.mxu0 0.0
        %9060 = vmatpush1.msra.mxu0 %v8986
        %9061 = vmatprep.subr.mxu0 0.0
        %9062 = vmatpush1.msra.mxu0 %v8987
        %9063 = vmatprep.subr.mxu0 0.0
        %9064 = vmatpush1.msra.mxu0 %v8988
        %9065 = vmatprep.subr.mxu0 0.0
        %9066 = vmatpush1.msra.mxu0 %v8989
        %9067 = vmatprep.subr.mxu0 0.0
        %9068 = vmatpush1.msra.mxu0 %v8990
        %9069 = vmatprep.subr.mxu0 0.0
        %9070 = vmatpush1.msra.mxu0 %v8991
        %9071 = vmatprep.subr.mxu0 0.0
        %9072 = vmatpush1.msra.mxu0 %v8992
        %9073 = vmatprep.mubr.f32.mxu0 %v8602
        %9074 = vmatmul.mubr.f32.gmra.mrb[0].mxu0 %v8600
        %v9075 = vpop.f32.mrb[0].mxu0
        %v9076 = vadd.f32 0.0, %v9075
        %v9077 = vpop.f32.mrb[0].mxu0
        %9078 = vmatprep.mubr.f32.mxu0 %v8608
        %9079 = vmatmul.mubr.f32.gmra.mrb[0].mxu0 %v8606
        %v9080 = vpop.f32.mrb[0].mxu0
        %v9081 = vadd.f32 0.0, %v9080
        %v9082 = vpop.f32.mrb[0].mxu0
        %9083 = vmatprep.mubr.f32.mxu0 %v8614
        %9084 = vmatmul.mubr.f32.gmra.mrb[0].mxu0 %v8612
        %v9085 = vpop.f32.mrb[0].mxu0
        %v9086 = vadd.f32 0.0, %v9085
        %v9087 = vpop.f32.mrb[0].mxu0
        %9088 = vmatprep.mubr.f32.mxu0 %v8620
        %9089 = vmatmul.mubr.f32.gmra.mrb[0].mxu0 %v8618
        %v9090 = vpop.f32.mrb[0].mxu0
        %v9091 = vadd.f32 0.0, %v9090
        %v9092 = vpop.f32.mrb[0].mxu0
        %9093 = vmatprep.mubr.f32.mxu0 %v8626
        %9094 = vmatmul.mubr.f32.gmra.mrb[0].mxu0 %v8624
        %v9095 = vpop.f32.mrb[0].mxu0
        %v9096 = vadd.f32 0.0, %v9095
        %v9097 = vpop.f32.mrb[0].mxu0
        %9098 = vmatprep.mubr.f32.mxu0 %v8632
        %9099 = vmatmul.mubr.f32.gmra.mrb[0].mxu0 %v8630
        %v9100 = vpop.f32.mrb[0].mxu0
        %v9101 = vadd.f32 0.0, %v9100
        %v9102 = vpop.f32.mrb[0].mxu0
        %9103 = vmatprep.mubr.f32.mxu0 %v8638
        %9104 = vmatmul.mubr.f32.gmra.mrb[0].mxu0 %v8636
        %v9105 = vpop.f32.mrb[0].mxu0
        %v9106 = vadd.f32 0.0, %v9105
        %v9107 = vpop.f32.mrb[0].mxu0
        %9108 = vmatprep.mubr.f32.mxu0 %v8644
        %9109 = vmatmul.mubr.f32.gmra.mrb[0].mxu0 %v8642
        %v9110 = vpop.f32.mrb[0].mxu0
        %v9111 = vadd.f32 0.0, %v9110
        %v9112 = vpop.f32.mrb[0].mxu0
        %9113 = vdwg.mxu0
        %9114 = vmatprep.subr.mxu0 0.0
        %9115 = vmatpush1.msra.mxu0 %v8993
        %9116 = vmatprep.subr.mxu0 0.0
        %9117 = vmatpush1.msra.mxu0 %v8994
        %9118 = vmatprep.subr.mxu0 0.0
        %9119 = vmatpush1.msra.mxu0 %v8995
        %9120 = vmatprep.subr.mxu0 0.0
        %9121 = vmatpush1.msra.mxu0 %v8996
        %9122 = vmatprep.subr.mxu0 0.0
        %9123 = vmatpush1.msra.mxu0 %v8997
        %9124 = vmatprep.subr.mxu0 0.0
        %9125 = vmatpush1.msra.mxu0 %v8998
        %9126 = vmatprep.subr.mxu0 0.0
        %9127 = vmatpush1.msra.mxu0 %v8999
        %9128 = vmatprep.subr.mxu0 0.0
        %9129 = vmatpush1.msra.mxu0 %v9000
        %9130 = vmatprep.subr.mxu0 0.0
        %9131 = vmatpush1.msra.mxu0 %v9001
        %9132 = vmatprep.subr.mxu0 0.0
        %9133 = vmatpush1.msra.mxu0 %v9002
        %9134 = vmatprep.subr.mxu0 0.0
        %9135 = vmatpush1.msra.mxu0 %v9003
        %9136 = vmatprep.subr.mxu0 0.0
        %9137 = vmatpush1.msra.mxu0 %v9004
        %9138 = vmatprep.subr.mxu0 0.0
        %9139 = vmatpush1.msra.mxu0 %v9005
        %9140 = vmatprep.subr.mxu0 0.0
        %9141 = vmatpush1.msra.mxu0 %v9006
        %9142 = vmatprep.subr.mxu0 0.0
        %9143 = vmatpush1.msra.mxu0 %v9007
        %9144 = vmatprep.subr.mxu0 0.0
        %9145 = vmatpush1.msra.mxu0 %v9008
        %9146 = vmatprep.subr.mxu0 0.0
        %9147 = vmatpush1.msra.mxu0 0.0
        %9148 = vmatprep.subr.mxu0 0.0
        %9149 = vmatpush1.msra.mxu0 0.0
        %9150 = vmatprep.subr.mxu0 0.0
        %9151 = vmatpush1.msra.mxu0 0.0
        %9152 = vmatprep.subr.mxu0 0.0
        %9153 = vmatpush1.msra.mxu0 0.0
        %9154 = vmatprep.subr.mxu0 0.0
        %9155 = vmatpush1.msra.mxu0 0.0
        %9156 = vmatprep.subr.mxu0 0.0
        %9157 = vmatpush1.msra.mxu0 0.0
        %9158 = vmatprep.subr.mxu0 0.0
        %9159 = vmatpush1.msra.mxu0 0.0
        %9160 = vmatprep.subr.mxu0 0.0
        %9161 = vmatpush1.msra.mxu0 0.0
        %9162 = vmatprep.subr.mxu0 0.0
        %9163 = vmatpush1.msra.mxu0 0.0
        %9164 = vmatprep.subr.mxu0 0.0
        %9165 = vmatpush1.msra.mxu0 0.0
        %9166 = vmatprep.subr.mxu0 0.0
        %9167 = vmatpush1.msra.mxu0 0.0
        %9168 = vmatprep.subr.mxu0 0.0
        %9169 = vmatpush1.msra.mxu0 0.0
        %9170 = vmatprep.subr.mxu0 0.0
        %9171 = vmatpush1.msra.mxu0 0.0
        %9172 = vmatprep.subr.mxu0 0.0
        %9173 = vmatpush1.msra.mxu0 0.0
        %9174 = vmatprep.subr.mxu0 0.0
        %9175 = vmatpush1.msra.mxu0 0.0
        %9176 = vmatprep.subr.mxu0 0.0
        %9177 = vmatpush1.msra.mxu0 0.0
        %9178 = vmatprep.mubr.f32.mxu0 0.0
        %9179 = vmatmul.mubr.f32.gmra.mrb[0].mxu0 %v8923
        %v9180 = vpop.f32.mrb[0].mxu0
        %v9181 = vadd.f32 %v9076, %v9180
        %v9182 = vpop.f32.mrb[0].mxu0
        %9183 = vmatprep.mubr.f32.mxu0 0.0
        %9184 = vmatmul.mubr.f32.gmra.mrb[0].mxu0 %v8928
        %v9185 = vpop.f32.mrb[0].mxu0
        %v9186 = vadd.f32 %v9081, %v9185
        %v9187 = vpop.f32.mrb[0].mxu0
        %9188 = vmatprep.mubr.f32.mxu0 0.0
        %9189 = vmatmul.mubr.f32.gmra.mrb[0].mxu0 %v8933
        %v9190 = vpop.f32.mrb[0].mxu0
        %v9191 = vadd.f32 %v9086, %v9190
        %v9192 = vpop.f32.mrb[0].mxu0
        %9193 = vmatprep.mubr.f32.mxu0 0.0
        %9194 = vmatmul.mubr.f32.gmra.mrb[0].mxu0 %v8938
        %v9195 = vpop.f32.mrb[0].mxu0
        %v9196 = vadd.f32 %v9091, %v9195
        %v9197 = vpop.f32.mrb[0].mxu0
        %9198 = vmatprep.mubr.f32.mxu0 0.0
        %9199 = vmatmul.mubr.f32.gmra.mrb[0].mxu0 %v8943
        %v9200 = vpop.f32.mrb[0].mxu0
        %v9201 = vadd.f32 %v9096, %v9200
        %v9202 = vpop.f32.mrb[0].mxu0
        %9203 = vmatprep.mubr.f32.mxu0 0.0
        %9204 = vmatmul.mubr.f32.gmra.mrb[0].mxu0 %v8948
        %v9205 = vpop.f32.mrb[0].mxu0
        %v9206 = vadd.f32 %v9101, %v9205
        %v9207 = vpop.f32.mrb[0].mxu0
        %9208 = vmatprep.mubr.f32.mxu0 0.0
        %9209 = vmatmul.mubr.f32.gmra.mrb[0].mxu0 %v8953
        %v9210 = vpop.f32.mrb[0].mxu0
        %v9211 = vadd.f32 %v9106, %v9210
        %v9212 = vpop.f32.mrb[0].mxu0
        %9213 = vmatprep.mubr.f32.mxu0 0.0
        %9214 = vmatmul.mubr.f32.gmra.mrb[0].mxu0 %v8958
        %v9215 = vpop.f32.mrb[0].mxu0
        %v9216 = vadd.f32 %v9111, %v9215
        %v9217 = vpop.f32.mrb[0].mxu0
        %9218 = vdwg.mxu0
        %9219 = vst [vmem:[#allocation3] sm:$0xff] %v9181
        %9220 = vst [vmem:[#allocation3 + $0x18] sm:$0xff] %v9186
        %9221 = vst [vmem:[#allocation3 + $0x30] sm:$0xff] %v9191
        %9222 = vst [vmem:[#allocation3 + $0x48] sm:$0xff] %v9196
        %9223 = vst [vmem:[#allocation3 + $0x60] sm:$0xff] %v9201
        %9224 = vst [vmem:[#allocation3 + $0x78] sm:$0xff] %v9206
        %9225 = vst [vmem:[#allocation3 + $0x90] sm:$0xff] %v9211
        %9226 = vst [vmem:[#allocation3 + $0xa8] sm:$0xff] %v9216
        %v9227 = vld [vmem:[#allocation3] sm:$0xff]
        %v9228 = vld [vmem:[#allocation3 + $0x18] sm:$0xff]
        %v9229 = vld [vmem:[#allocation3 + $0x30] sm:$0xff]
        %v9230 = vld [vmem:[#allocation3 + $0x48] sm:$0xff]
        %v9231 = vld [vmem:[#allocation3 + $0x60] sm:$0xff]
        %v9232 = vld [vmem:[#allocation3 + $0x78] sm:$0xff]
        %v9233 = vld [vmem:[#allocation3 + $0x90] sm:$0xff]
        %v9234 = vld [vmem:[#allocation3 + $0xa8] sm:$0xff]
        %9235 = vrot.lane.b32.xlu0 %v9227, 11
        %v9236 = vpop.permute.xlu0 %9235
        %9237 = vrot.lane.b32.xlu0 %v9228, 11
        %v9238 = vpop.permute.xlu0 %9237
        %9239 = vrot.lane.b32.xlu0 %v9229, 11
        %v9240 = vpop.permute.xlu0 %9239
        %9241 = vrot.lane.b32.xlu0 %v9230, 11
        %v9242 = vpop.permute.xlu0 %9241
        %9243 = vrot.lane.b32.xlu0 %v9231, 11
        %v9244 = vpop.permute.xlu0 %9243
        %9245 = vrot.lane.b32.xlu0 %v9232, 11
        %v9246 = vpop.permute.xlu0 %9245
        %9247 = vrot.lane.b32.xlu0 %v9233, 11
        %v9248 = vpop.permute.xlu0 %9247
        %9249 = vrot.lane.b32.xlu0 %v9234, 11
        %v9250 = vpop.permute.xlu0 %9249
        %9251 = vst [vmem:[#allocation2] sm:$0xff] %v9236
        %9252 = vst [vmem:[#allocation2 + $0x18] sm:$0xff] %v9238
        %9253 = vst [vmem:[#allocation2 + $0x30] sm:$0xff] %v9240
        %9254 = vst [vmem:[#allocation2 + $0x48] sm:$0xff] %v9242
        %9255 = vst [vmem:[#allocation2 + $0x60] sm:$0xff] %v9244
        %9256 = vst [vmem:[#allocation2 + $0x78] sm:$0xff] %v9246
        %9257 = vst [vmem:[#allocation2 + $0x90] sm:$0xff] %v9248
        %9258 = vst [vmem:[#allocation2 + $0xa8] sm:$0xff] %v9250
        %9259 = vrot.lane.b32.xlu0 %v9227, 10
        %v9260 = vpop.permute.xlu0 %9259
        %9261 = vrot.lane.b32.xlu0 %v9228, 10
        %v9262 = vpop.permute.xlu0 %9261
        %9263 = vrot.lane.b32.xlu0 %v9229, 10
        %v9264 = vpop.permute.xlu0 %9263
        %9265 = vrot.lane.b32.xlu0 %v9230, 10
        %v9266 = vpop.permute.xlu0 %9265
        %9267 = vrot.lane.b32.xlu0 %v9231, 10
        %v9268 = vpop.permute.xlu0 %9267
        %9269 = vrot.lane.b32.xlu0 %v9232, 10
        %v9270 = vpop.permute.xlu0 %9269
        %9271 = vrot.lane.b32.xlu0 %v9233, 10
        %v9272 = vpop.permute.xlu0 %9271
        %9273 = vrot.lane.b32.xlu0 %v9234, 10
        %v9274 = vpop.permute.xlu0 %9273
        %9275 = vst [vmem:[#allocation2 + $0xc0] sm:$0xff] %v9260
        %9276 = vst [vmem:[#allocation2 + $0xd8] sm:$0xff] %v9262
        %9277 = vst [vmem:[#allocation2 + $0xf0] sm:$0xff] %v9264
        %9278 = vst [vmem:[#allocation2 + $0x108] sm:$0xff] %v9266
        %9279 = vst [vmem:[#allocation2 + $0x120] sm:$0xff] %v9268
        %9280 = vst [vmem:[#allocation2 + $0x138] sm:$0xff] %v9270
        %9281 = vst [vmem:[#allocation2 + $0x150] sm:$0xff] %v9272
        %9282 = vst [vmem:[#allocation2 + $0x168] sm:$0xff] %v9274
        %9283 = vrot.lane.b32.xlu0 %v9227, 9
        %v9284 = vpop.permute.xlu0 %9283
        %9285 = vrot.lane.b32.xlu0 %v9228, 9
        %v9286 = vpop.permute.xlu0 %9285
        %9287 = vrot.lane.b32.xlu0 %v9229, 9
        %v9288 = vpop.permute.xlu0 %9287
        %9289 = vrot.lane.b32.xlu0 %v9230, 9
        %v9290 = vpop.permute.xlu0 %9289
        %9291 = vrot.lane.b32.xlu0 %v9231, 9
        %v9292 = vpop.permute.xlu0 %9291
        %9293 = vrot.lane.b32.xlu0 %v9232, 9
        %v9294 = vpop.permute.xlu0 %9293
        %9295 = vrot.lane.b32.xlu0 %v9233, 9
        %v9296 = vpop.permute.xlu0 %9295
        %9297 = vrot.lane.b32.xlu0 %v9234, 9
        %v9298 = vpop.permute.xlu0 %9297
        %9299 = vst [vmem:[#allocation2 + $0x180] sm:$0xff] %v9284
        %9300 = vst [vmem:[#allocation2 + $0x198] sm:$0xff] %v9286
        %9301 = vst [vmem:[#allocation2 + $0x1b0] sm:$0xff] %v9288
        %9302 = vst [vmem:[#allocation2 + $0x1c8] sm:$0xff] %v9290
        %9303 = vst [vmem:[#allocation2 + $0x1e0] sm:$0xff] %v9292
        %9304 = vst [vmem:[#allocation2 + $0x1f8] sm:$0xff] %v9294
        %9305 = vst [vmem:[#allocation2 + $0x210] sm:$0xff] %v9296
        %9306 = vst [vmem:[#allocation2 + $0x228] sm:$0xff] %v9298
        %9307 = vrot.lane.b32.xlu0 %v9227, 1
        %v9308 = vpop.permute.xlu0 %9307
        %9309 = vrot.lane.b32.xlu0 %v9228, 1
        %v9310 = vpop.permute.xlu0 %9309
        %9311 = vrot.lane.b32.xlu0 %v9229, 1
        %v9312 = vpop.permute.xlu0 %9311
        %9313 = vrot.lane.b32.xlu0 %v9230, 1
        %v9314 = vpop.permute.xlu0 %9313
        %9315 = vrot.lane.b32.xlu0 %v9231, 1
        %v9316 = vpop.permute.xlu0 %9315
        %9317 = vrot.lane.b32.xlu0 %v9232, 1
        %v9318 = vpop.permute.xlu0 %9317
        %9319 = vrot.lane.b32.xlu0 %v9233, 1
        %v9320 = vpop.permute.xlu0 %9319
        %9321 = vrot.lane.b32.xlu0 %v9234, 1
        %v9322 = vpop.permute.xlu0 %9321
        %9323 = vst [vmem:[#allocation2 + $0x240] sm:$0xff] %v9308
        %9324 = vst [vmem:[#allocation2 + $0x258] sm:$0xff] %v9310
        %9325 = vst [vmem:[#allocation2 + $0x270] sm:$0xff] %v9312
        %9326 = vst [vmem:[#allocation2 + $0x288] sm:$0xff] %v9314
        %9327 = vst [vmem:[#allocation2 + $0x2a0] sm:$0xff] %v9316
        %9328 = vst [vmem:[#allocation2 + $0x2b8] sm:$0xff] %v9318
        %9329 = vst [vmem:[#allocation2 + $0x2d0] sm:$0xff] %v9320
        %9330 = vst [vmem:[#allocation2 + $0x2e8] sm:$0xff] %v9322
        %9331 = vst [vmem:[#allocation2 + $0x300] sm:$0xff] %v9227
        %9332 = vst [vmem:[#allocation2 + $0x318] sm:$0xff] %v9228
        %9333 = vst [vmem:[#allocation2 + $0x330] sm:$0xff] %v9229
        %9334 = vst [vmem:[#allocation2 + $0x348] sm:$0xff] %v9230
        %9335 = vst [vmem:[#allocation2 + $0x360] sm:$0xff] %v9231
        %9336 = vst [vmem:[#allocation2 + $0x378] sm:$0xff] %v9232
        %9337 = vst [vmem:[#allocation2 + $0x390] sm:$0xff] %v9233
        %9338 = vst [vmem:[#allocation2 + $0x3a8] sm:$0xff] %v9234
        %9339 = vrot.lane.b32.xlu0 %v9227, 127
        %v9340 = vpop.permute.xlu0 %9339
        %9341 = vrot.lane.b32.xlu0 %v9228, 127
        %v9342 = vpop.permute.xlu0 %9341
        %9343 = vrot.lane.b32.xlu0 %v9229, 127
        %v9344 = vpop.permute.xlu0 %9343
        %9345 = vrot.lane.b32.xlu0 %v9230, 127
        %v9346 = vpop.permute.xlu0 %9345
        %9347 = vrot.lane.b32.xlu0 %v9231, 127
        %v9348 = vpop.permute.xlu0 %9347
        %9349 = vrot.lane.b32.xlu0 %v9232, 127
        %v9350 = vpop.permute.xlu0 %9349
        %9351 = vrot.lane.b32.xlu0 %v9233, 127
        %v9352 = vpop.permute.xlu0 %9351
        %9353 = vrot.lane.b32.xlu0 %v9234, 127
        %v9354 = vpop.permute.xlu0 %9353
        %9355 = vst [vmem:[#allocation2 + $0x3c0] sm:$0xff] %v9340
        %9356 = vst [vmem:[#allocation2 + $0x3d8] sm:$0xff] %v9342
        %9357 = vst [vmem:[#allocation2 + $0x3f0] sm:$0xff] %v9344
        %9358 = vst [vmem:[#allocation2 + $0x408] sm:$0xff] %v9346
        %9359 = vst [vmem:[#allocation2 + $0x420] sm:$0xff] %v9348
        %9360 = vst [vmem:[#allocation2 + $0x438] sm:$0xff] %v9350
        %9361 = vst [vmem:[#allocation2 + $0x450] sm:$0xff] %v9352
        %9362 = vst [vmem:[#allocation2 + $0x468] sm:$0xff] %v9354
        %9363 = vrot.lane.b32.xlu0 %v9227, 119
        %v9364 = vpop.permute.xlu0 %9363
        %9365 = vrot.lane.b32.xlu0 %v9228, 119
        %v9366 = vpop.permute.xlu0 %9365
        %9367 = vrot.lane.b32.xlu0 %v9229, 119
        %v9368 = vpop.permute.xlu0 %9367
        %9369 = vrot.lane.b32.xlu0 %v9230, 119
        %v9370 = vpop.permute.xlu0 %9369
        %9371 = vrot.lane.b32.xlu0 %v9231, 119
        %v9372 = vpop.permute.xlu0 %9371
        %9373 = vrot.lane.b32.xlu0 %v9232, 119
        %v9374 = vpop.permute.xlu0 %9373
        %9375 = vrot.lane.b32.xlu0 %v9233, 119
        %v9376 = vpop.permute.xlu0 %9375
        %9377 = vrot.lane.b32.xlu0 %v9234, 119
        %v9378 = vpop.permute.xlu0 %9377
        %9379 = vst [vmem:[#allocation2 + $0x480] sm:$0xff] %v9364
        %9380 = vst [vmem:[#allocation2 + $0x498] sm:$0xff] %v9366
        %9381 = vst [vmem:[#allocation2 + $0x4b0] sm:$0xff] %v9368
        %9382 = vst [vmem:[#allocation2 + $0x4c8] sm:$0xff] %v9370
        %9383 = vst [vmem:[#allocation2 + $0x4e0] sm:$0xff] %v9372
        %9384 = vst [vmem:[#allocation2 + $0x4f8] sm:$0xff] %v9374
        %9385 = vst [vmem:[#allocation2 + $0x510] sm:$0xff] %v9376
        %9386 = vst [vmem:[#allocation2 + $0x528] sm:$0xff] %v9378
        %9387 = vrot.lane.b32.xlu0 %v9227, 118
        %v9388 = vpop.permute.xlu0 %9387
        %9389 = vrot.lane.b32.xlu0 %v9228, 118
        %v9390 = vpop.permute.xlu0 %9389
        %9391 = vrot.lane.b32.xlu0 %v9229, 118
        %v9392 = vpop.permute.xlu0 %9391
        %9393 = vrot.lane.b32.xlu0 %v9230, 118
        %v9394 = vpop.permute.xlu0 %9393
        %9395 = vrot.lane.b32.xlu0 %v9231, 118
        %v9396 = vpop.permute.xlu0 %9395
        %9397 = vrot.lane.b32.xlu0 %v9232, 118
        %v9398 = vpop.permute.xlu0 %9397
        %9399 = vrot.lane.b32.xlu0 %v9233, 118
        %v9400 = vpop.permute.xlu0 %9399
        %9401 = vrot.lane.b32.xlu0 %v9234, 118
        %v9402 = vpop.permute.xlu0 %9401
        %9403 = vst [vmem:[#allocation2 + $0x540] sm:$0xff] %v9388
        %9404 = vst [vmem:[#allocation2 + $0x558] sm:$0xff] %v9390
        %9405 = vst [vmem:[#allocation2 + $0x570] sm:$0xff] %v9392
        %9406 = vst [vmem:[#allocation2 + $0x588] sm:$0xff] %v9394
        %9407 = vst [vmem:[#allocation2 + $0x5a0] sm:$0xff] %v9396
        %9408 = vst [vmem:[#allocation2 + $0x5b8] sm:$0xff] %v9398
        %9409 = vst [vmem:[#allocation2 + $0x5d0] sm:$0xff] %v9400
        %9410 = vst [vmem:[#allocation2 + $0x5e8] sm:$0xff] %v9402
        %9411 = vrot.lane.b32.xlu0 %v9227, 117
        %v9412 = vpop.permute.xlu0 %9411
        %9413 = vrot.lane.b32.xlu0 %v9228, 117
        %v9414 = vpop.permute.xlu0 %9413
        %9415 = vrot.lane.b32.xlu0 %v9229, 117
        %v9416 = vpop.permute.xlu0 %9415
        %9417 = vrot.lane.b32.xlu0 %v9230, 117
        %v9418 = vpop.permute.xlu0 %9417
        %9419 = vrot.lane.b32.xlu0 %v9231, 117
        %v9420 = vpop.permute.xlu0 %9419
        %9421 = vrot.lane.b32.xlu0 %v9232, 117
        %v9422 = vpop.permute.xlu0 %9421
        %9423 = vrot.lane.b32.xlu0 %v9233, 117
        %v9424 = vpop.permute.xlu0 %9423
        %9425 = vrot.lane.b32.xlu0 %v9234, 117
        %v9426 = vpop.permute.xlu0 %9425
        %9427 = vst [vmem:[#allocation2 + $0x600] sm:$0xff] %v9412
        %9428 = vst [vmem:[#allocation2 + $0x618] sm:$0xff] %v9414
        %9429 = vst [vmem:[#allocation2 + $0x630] sm:$0xff] %v9416
        %9430 = vst [vmem:[#allocation2 + $0x648] sm:$0xff] %v9418
        %9431 = vst [vmem:[#allocation2 + $0x660] sm:$0xff] %v9420
        %9432 = vst [vmem:[#allocation2 + $0x678] sm:$0xff] %v9422
        %9433 = vst [vmem:[#allocation2 + $0x690] sm:$0xff] %v9424
        %9434 = vst [vmem:[#allocation2 + $0x6a8] sm:$0xff] %v9426
        %v9435 = vld [vmem:[%s11] sm:$0xff]
        %v9436 = vld [vmem:[%s11 + $0x8] sm:$0xff]
        %v9437 = vld [vmem:[%s11 + $0x10] sm:$0xf]
        %v9438 = vld [vmem:[#allocation2] sm:$0xff]
        %v9439 = vld [vmem:[#allocation2 + $0x18] sm:$0xff]
        %v9440 = vld [vmem:[#allocation2 + $0x30] sm:$0xff]
        %v9441 = vld [vmem:[#allocation2 + $0x48] sm:$0xff]
        %v9442 = vld [vmem:[#allocation2 + $0x60] sm:$0xff]
        %v9443 = vld [vmem:[#allocation2 + $0x78] sm:$0xff]
        %v9444 = vld [vmem:[#allocation2 + $0x90] sm:$0xff]
        %v9445 = vld [vmem:[#allocation2 + $0xa8] sm:$0xff]
        %v9446 = vld [vmem:[#allocation2 + $0xc0] sm:$0xff]
        %v9447 = vld [vmem:[#allocation2 + $0xd8] sm:$0xff]
        %v9448 = vld [vmem:[#allocation2 + $0xf0] sm:$0xff]
        %v9449 = vld [vmem:[#allocation2 + $0x108] sm:$0xff]
        %v9450 = vld [vmem:[#allocation2 + $0x120] sm:$0xff]
        %v9451 = vld [vmem:[#allocation2 + $0x138] sm:$0xff]
        %v9452 = vld [vmem:[#allocation2 + $0x150] sm:$0xff]
        %v9453 = vld [vmem:[#allocation2 + $0x168] sm:$0xff]
        %v9454 = vld [vmem:[#allocation2 + $0x180] sm:$0xff]
        %v9455 = vld [vmem:[#allocation2 + $0x198] sm:$0xff]
        %v9456 = vld [vmem:[#allocation2 + $0x1b0] sm:$0xff]
        %v9457 = vld [vmem:[#allocation2 + $0x1c8] sm:$0xff]
        %v9458 = vld [vmem:[#allocation2 + $0x1e0] sm:$0xff]
        %v9459 = vld [vmem:[#allocation2 + $0x1f8] sm:$0xff]
        %v9460 = vld [vmem:[#allocation2 + $0x210] sm:$0xff]
        %v9461 = vld [vmem:[#allocation2 + $0x228] sm:$0xff]
        %v9462 = vld [vmem:[#allocation2 + $0x240] sm:$0xff]
        %v9463 = vld [vmem:[#allocation2 + $0x258] sm:$0xff]
        %v9464 = vld [vmem:[#allocation2 + $0x270] sm:$0xff]
        %v9465 = vld [vmem:[#allocation2 + $0x288] sm:$0xff]
        %v9466 = vld [vmem:[#allocation2 + $0x2a0] sm:$0xff]
        %v9467 = vld [vmem:[#allocation2 + $0x2b8] sm:$0xff]
        %v9468 = vld [vmem:[#allocation2 + $0x2d0] sm:$0xff]
        %v9469 = vld [vmem:[#allocation2 + $0x2e8] sm:$0xff]
        %v9470 = vld [vmem:[#allocation2 + $0x300] sm:$0xff]
        %v9471 = vld [vmem:[#allocation2 + $0x318] sm:$0xff]
        %v9472 = vld [vmem:[#allocation2 + $0x330] sm:$0xff]
        %v9473 = vld [vmem:[#allocation2 + $0x348] sm:$0xff]
        %v9474 = vld [vmem:[#allocation2 + $0x360] sm:$0xff]
        %v9475 = vld [vmem:[#allocation2 + $0x378] sm:$0xff]
        %v9476 = vld [vmem:[#allocation2 + $0x390] sm:$0xff]
        %v9477 = vld [vmem:[#allocation2 + $0x3a8] sm:$0xff]
        %v9478 = vld [vmem:[#allocation2 + $0x3c0] sm:$0xff]
        %v9479 = vld [vmem:[#allocation2 + $0x3d8] sm:$0xff]
        %v9480 = vld [vmem:[#allocation2 + $0x3f0] sm:$0xff]
        %v9481 = vld [vmem:[#allocation2 + $0x408] sm:$0xff]
        %v9482 = vld [vmem:[#allocation2 + $0x420] sm:$0xff]
        %v9483 = vld [vmem:[#allocation2 + $0x438] sm:$0xff]
        %v9484 = vld [vmem:[#allocation2 + $0x450] sm:$0xff]
        %v9485 = vld [vmem:[#allocation2 + $0x468] sm:$0xff]
        %v9486 = vld [vmem:[#allocation2 + $0x480] sm:$0xff]
        %v9487 = vld [vmem:[#allocation2 + $0x498] sm:$0xff]
        %v9488 = vld [vmem:[#allocation2 + $0x4b0] sm:$0xff]
        %v9489 = vld [vmem:[#allocation2 + $0x4c8] sm:$0xff]
        %v9490 = vld [vmem:[#allocation2 + $0x4e0] sm:$0xff]
        %v9491 = vld [vmem:[#allocation2 + $0x4f8] sm:$0xff]
        %v9492 = vld [vmem:[#allocation2 + $0x510] sm:$0xff]
        %v9493 = vld [vmem:[#allocation2 + $0x528] sm:$0xff]
        %v9494 = vld [vmem:[#allocation2 + $0x540] sm:$0xff]
        %v9495 = vld [vmem:[#allocation2 + $0x558] sm:$0xff]
        %v9496 = vld [vmem:[#allocation2 + $0x570] sm:$0xff]
        %v9497 = vld [vmem:[#allocation2 + $0x588] sm:$0xff]
        %v9498 = vld [vmem:[#allocation2 + $0x5a0] sm:$0xff]
        %v9499 = vld [vmem:[#allocation2 + $0x5b8] sm:$0xff]
        %v9500 = vld [vmem:[#allocation2 + $0x5d0] sm:$0xff]
        %v9501 = vld [vmem:[#allocation2 + $0x5e8] sm:$0xff]
        %v9502 = vld [vmem:[#allocation2 + $0x600] sm:$0xff]
        %v9503 = vld [vmem:[#allocation2 + $0x618] sm:$0xff]
        %v9504 = vld [vmem:[#allocation2 + $0x630] sm:$0xff]
        %v9505 = vld [vmem:[#allocation2 + $0x648] sm:$0xff]
        %v9506 = vld [vmem:[#allocation2 + $0x660] sm:$0xff]
        %v9507 = vld [vmem:[#allocation2 + $0x678] sm:$0xff]
        %v9508 = vld [vmem:[#allocation2 + $0x690] sm:$0xff]
        %v9509 = vld [vmem:[#allocation2 + $0x6a8] sm:$0xff]
        %v9510 = vld [vmem:[%s12] sm:$0xf]
        %9512 = vset.pattern.permute.xlu0 0
        %9513 = vperm.xlu0 %9512, %v9510
        %v9514 = vpop.permute.xlu0 %9513
        %v9519 = vcombine.high %v9435, %v9435
        %v9520 = vcombine.high %v9436, %v9436
        %v9523 = vsel %vm4508, %v9437, 0
        %9525 = vmatprep.subr.mxu0 0.0
        %9526 = vmatpush1.msra.mxu0 %v9438
        %9527 = vmatprep.subr.mxu0 0.0
        %9528 = vmatpush1.msra.mxu0 %v9439
        %9529 = vmatprep.subr.mxu0 0.0
        %9530 = vmatpush1.msra.mxu0 %v9440
        %9531 = vmatprep.subr.mxu0 0.0
        %9532 = vmatpush1.msra.mxu0 %v9441
        %9533 = vmatprep.subr.mxu0 0.0
        %9534 = vmatpush1.msra.mxu0 %v9442
        %9535 = vmatprep.subr.mxu0 0.0
        %9536 = vmatpush1.msra.mxu0 %v9443
        %9537 = vmatprep.subr.mxu0 0.0
        %9538 = vmatpush1.msra.mxu0 %v9444
        %9539 = vmatprep.subr.mxu0 0.0
        %9540 = vmatpush1.msra.mxu0 %v9445
        %9541 = vmatprep.subr.mxu0 0.0
        %9542 = vmatpush1.msra.mxu0 %v9446
        %9543 = vmatprep.subr.mxu0 0.0
        %9544 = vmatpush1.msra.mxu0 %v9447
        %9545 = vmatprep.subr.mxu0 0.0
        %9546 = vmatpush1.msra.mxu0 %v9448
        %9547 = vmatprep.subr.mxu0 0.0
        %9548 = vmatpush1.msra.mxu0 %v9449
        %9549 = vmatprep.subr.mxu0 0.0
        %9550 = vmatpush1.msra.mxu0 %v9450
        %9551 = vmatprep.subr.mxu0 0.0
        %9552 = vmatpush1.msra.mxu0 %v9451
        %9553 = vmatprep.subr.mxu0 0.0
        %9554 = vmatpush1.msra.mxu0 %v9452
        %9555 = vmatprep.subr.mxu0 0.0
        %9556 = vmatpush1.msra.mxu0 %v9453
        %9557 = vmatprep.subr.mxu0 0.0
        %9558 = vmatpush1.msra.mxu0 %v9454
        %9559 = vmatprep.subr.mxu0 0.0
        %9560 = vmatpush1.msra.mxu0 %v9455
        %9561 = vmatprep.subr.mxu0 0.0
        %9562 = vmatpush1.msra.mxu0 %v9456
        %9563 = vmatprep.subr.mxu0 0.0
        %9564 = vmatpush1.msra.mxu0 %v9457
        %9565 = vmatprep.subr.mxu0 0.0
        %9566 = vmatpush1.msra.mxu0 %v9458
        %9567 = vmatprep.subr.mxu0 0.0
        %9568 = vmatpush1.msra.mxu0 %v9459
        %9569 = vmatprep.subr.mxu0 0.0
        %9570 = vmatpush1.msra.mxu0 %v9460
        %9571 = vmatprep.subr.mxu0 0.0
        %9572 = vmatpush1.msra.mxu0 %v9461
        %9573 = vmatprep.subr.mxu0 0.0
        %9574 = vmatpush1.msra.mxu0 %v9462
        %9575 = vmatprep.subr.mxu0 0.0
        %9576 = vmatpush1.msra.mxu0 %v9463
        %9577 = vmatprep.subr.mxu0 0.0
        %9578 = vmatpush1.msra.mxu0 %v9464
        %9579 = vmatprep.subr.mxu0 0.0
        %9580 = vmatpush1.msra.mxu0 %v9465
        %9581 = vmatprep.subr.mxu0 0.0
        %9582 = vmatpush1.msra.mxu0 %v9466
        %9583 = vmatprep.subr.mxu0 0.0
        %9584 = vmatpush1.msra.mxu0 %v9467
        %9585 = vmatprep.subr.mxu0 0.0
        %9586 = vmatpush1.msra.mxu0 %v9468
        %9587 = vmatprep.subr.mxu0 0.0
        %9588 = vmatpush1.msra.mxu0 %v9469
        %9589 = vmatprep.mubr.f32.mxu0 %v9519
        %9590 = vmatmul.mubr.f32.gmra.mrb[0].mxu0 %v9435
        %v9591 = vpop.f32.mrb[0].mxu0
        %v9592 = vadd.f32 %v9514, %v9591
        %v9593 = vpop.f32.mrb[0].mxu0
        %9594 = vdwg.mxu0
        %9595 = vmatprep.subr.mxu0 0.0
        %9596 = vmatpush1.msra.mxu0 %v9470
        %9597 = vmatprep.subr.mxu0 0.0
        %9598 = vmatpush1.msra.mxu0 %v9471
        %9599 = vmatprep.subr.mxu0 0.0
        %9600 = vmatpush1.msra.mxu0 %v9472
        %9601 = vmatprep.subr.mxu0 0.0
        %9602 = vmatpush1.msra.mxu0 %v9473
        %9603 = vmatprep.subr.mxu0 0.0
        %9604 = vmatpush1.msra.mxu0 %v9474
        %9605 = vmatprep.subr.mxu0 0.0
        %9606 = vmatpush1.msra.mxu0 %v9475
        %9607 = vmatprep.subr.mxu0 0.0
        %9608 = vmatpush1.msra.mxu0 %v9476
        %9609 = vmatprep.subr.mxu0 0.0
        %9610 = vmatpush1.msra.mxu0 %v9477
        %9611 = vmatprep.subr.mxu0 0.0
        %9612 = vmatpush1.msra.mxu0 %v9478
        %9613 = vmatprep.subr.mxu0 0.0
        %9614 = vmatpush1.msra.mxu0 %v9479
        %9615 = vmatprep.subr.mxu0 0.0
        %9616 = vmatpush1.msra.mxu0 %v9480
        %9617 = vmatprep.subr.mxu0 0.0
        %9618 = vmatpush1.msra.mxu0 %v9481
        %9619 = vmatprep.subr.mxu0 0.0
        %9620 = vmatpush1.msra.mxu0 %v9482
        %9621 = vmatprep.subr.mxu0 0.0
        %9622 = vmatpush1.msra.mxu0 %v9483
        %9623 = vmatprep.subr.mxu0 0.0
        %9624 = vmatpush1.msra.mxu0 %v9484
        %9625 = vmatprep.subr.mxu0 0.0
        %9626 = vmatpush1.msra.mxu0 %v9485
        %9627 = vmatprep.subr.mxu0 0.0
        %9628 = vmatpush1.msra.mxu0 %v9486
        %9629 = vmatprep.subr.mxu0 0.0
        %9630 = vmatpush1.msra.mxu0 %v9487
        %9631 = vmatprep.subr.mxu0 0.0
        %9632 = vmatpush1.msra.mxu0 %v9488
        %9633 = vmatprep.subr.mxu0 0.0
        %9634 = vmatpush1.msra.mxu0 %v9489
        %9635 = vmatprep.subr.mxu0 0.0
        %9636 = vmatpush1.msra.mxu0 %v9490
        %9637 = vmatprep.subr.mxu0 0.0
        %9638 = vmatpush1.msra.mxu0 %v9491
        %9639 = vmatprep.subr.mxu0 0.0
        %9640 = vmatpush1.msra.mxu0 %v9492
        %9641 = vmatprep.subr.mxu0 0.0
        %9642 = vmatpush1.msra.mxu0 %v9493
        %9643 = vmatprep.subr.mxu0 0.0
        %9644 = vmatpush1.msra.mxu0 %v9494
        %9645 = vmatprep.subr.mxu0 0.0
        %9646 = vmatpush1.msra.mxu0 %v9495
        %9647 = vmatprep.subr.mxu0 0.0
        %9648 = vmatpush1.msra.mxu0 %v9496
        %9649 = vmatprep.subr.mxu0 0.0
        %9650 = vmatpush1.msra.mxu0 %v9497
        %9651 = vmatprep.subr.mxu0 0.0
        %9652 = vmatpush1.msra.mxu0 %v9498
        %9653 = vmatprep.subr.mxu0 0.0
        %9654 = vmatpush1.msra.mxu0 %v9499
        %9655 = vmatprep.subr.mxu0 0.0
        %9656 = vmatpush1.msra.mxu0 %v9500
        %9657 = vmatprep.subr.mxu0 0.0
        %9658 = vmatpush1.msra.mxu0 %v9501
        %9659 = vmatprep.mubr.f32.mxu0 %v9520
        %9660 = vmatmul.mubr.f32.gmra.mrb[0].mxu0 %v9436
        %v9661 = vpop.f32.mrb[0].mxu0
        %v9662 = vadd.f32 %v9592, %v9661
        %v9663 = vpop.f32.mrb[0].mxu0
        %9664 = vdwg.mxu0
        %9665 = vmatprep.subr.mxu0 0.0
        %9666 = vmatpush1.msra.mxu0 %v9502
        %9667 = vmatprep.subr.mxu0 0.0
        %9668 = vmatpush1.msra.mxu0 %v9503
        %9669 = vmatprep.subr.mxu0 0.0
        %9670 = vmatpush1.msra.mxu0 %v9504
        %9671 = vmatprep.subr.mxu0 0.0
        %9672 = vmatpush1.msra.mxu0 %v9505
        %9673 = vmatprep.subr.mxu0 0.0
        %9674 = vmatpush1.msra.mxu0 %v9506
        %9675 = vmatprep.subr.mxu0 0.0
        %9676 = vmatpush1.msra.mxu0 %v9507
        %9677 = vmatprep.subr.mxu0 0.0
        %9678 = vmatpush1.msra.mxu0 %v9508
        %9679 = vmatprep.subr.mxu0 0.0
        %9680 = vmatpush1.msra.mxu0 %v9509
        %9681 = vmatprep.subr.mxu0 0.0
        %9682 = vmatpush1.msra.mxu0 0.0
        %9683 = vmatprep.subr.mxu0 0.0
        %9684 = vmatpush1.msra.mxu0 0.0
        %9685 = vmatprep.subr.mxu0 0.0
        %9686 = vmatpush1.msra.mxu0 0.0
        %9687 = vmatprep.subr.mxu0 0.0
        %9688 = vmatpush1.msra.mxu0 0.0
        %9689 = vmatprep.subr.mxu0 0.0
        %9690 = vmatpush1.msra.mxu0 0.0
        %9691 = vmatprep.subr.mxu0 0.0
        %9692 = vmatpush1.msra.mxu0 0.0
        %9693 = vmatprep.subr.mxu0 0.0
        %9694 = vmatpush1.msra.mxu0 0.0
        %9695 = vmatprep.subr.mxu0 0.0
        %9696 = vmatpush1.msra.mxu0 0.0
        %9697 = vmatprep.subr.mxu0 0.0
        %9698 = vmatpush1.msra.mxu0 0.0
        %9699 = vmatprep.subr.mxu0 0.0
        %9700 = vmatpush1.msra.mxu0 0.0
        %9701 = vmatprep.subr.mxu0 0.0
        %9702 = vmatpush1.msra.mxu0 0.0
        %9703 = vmatprep.subr.mxu0 0.0
        %9704 = vmatpush1.msra.mxu0 0.0
        %9705 = vmatprep.subr.mxu0 0.0
        %9706 = vmatpush1.msra.mxu0 0.0
        %9707 = vmatprep.subr.mxu0 0.0
        %9708 = vmatpush1.msra.mxu0 0.0
        %9709 = vmatprep.subr.mxu0 0.0
        %9710 = vmatpush1.msra.mxu0 0.0
        %9711 = vmatprep.subr.mxu0 0.0
        %9712 = vmatpush1.msra.mxu0 0.0
        %9713 = vmatprep.subr.mxu0 0.0
        %9714 = vmatpush1.msra.mxu0 0.0
        %9715 = vmatprep.subr.mxu0 0.0
        %9716 = vmatpush1.msra.mxu0 0.0
        %9717 = vmatprep.subr.mxu0 0.0
        %9718 = vmatpush1.msra.mxu0 0.0
        %9719 = vmatprep.subr.mxu0 0.0
        %9720 = vmatpush1.msra.mxu0 0.0
        %9721 = vmatprep.subr.mxu0 0.0
        %9722 = vmatpush1.msra.mxu0 0.0
        %9723 = vmatprep.subr.mxu0 0.0
        %9724 = vmatpush1.msra.mxu0 0.0
        %9725 = vmatprep.subr.mxu0 0.0
        %9726 = vmatpush1.msra.mxu0 0.0
        %9727 = vmatprep.subr.mxu0 0.0
        %9728 = vmatpush1.msra.mxu0 0.0
        %9729 = vmatprep.mubr.f32.mxu0 0.0
        %9730 = vmatmul.mubr.f32.gmra.mrb[0].mxu0 %v9523
        %v9731 = vpop.f32.mrb[0].mxu0
        %v9732 = vadd.f32 %v9662, %v9731
        %v9733 = vpop.f32.mrb[0].mxu0
        %9734 = vdwg.mxu0
        %9735 = vst [vmem:[%s512] sm:$0xf] %v9732
        %s9736 = sand.u32 %s318, 1
        %s9737 = scalar_lea.sflag [#allocation6], %s9736
        %s9738 = sand.u32 %s318, 1
        %s9739 = smul.addr %s9738, 4
        %s9740 = scalar_lea.vmem [#allocation13], %s9739
        // Predicated region
        $region93: #{tpu_custom_call.1} parent=71 // pred_check
          %p9741 = pneg %p328
        $region94: #{tpu_custom_call.1} parent=71 // pred_check_branch
          %9743 = sbr.rel (%p9741) target = $region96
        $region95: #{tpu_custom_call.1} parent=71 // pred_region
          %s9745 = ssub.s32 64, 64
          %9746 = vsyncadd %s9737, %s9745
          %s9747 = smul.addr %s32, 64
          %s9748 = scalar_lea.hbm %s13, %s9747
          %s9750 = sshll.u32 %s9740, 4
          %s9751 = int_to_ptr.vmem [resolvable:$true] %s9750
          %9753 = dma.vmem_to_hbm [thread:$0]  %s9751, 64, %s9748, %s9737
        $region96: #{tpu_custom_call.1} parent=71 // pred_fallthru
          _
      $region72: #{tpu_custom_call.1} parent=5 // pred_fallthru
        _
      %p9754 = scmp.le.s32.totalorder 2, %s27
      // Predicated region
      $region97: #{tpu_custom_call.1} parent=5 // pred_check
        %p9755 = pneg %p9754
      $region98: #{tpu_custom_call.1} parent=5 // pred_check_branch
        %9757 = sbr.rel (%p9755) target = $region100
      $region99: #{tpu_custom_call.1} parent=5 // pred_region
        %s9758 = ssub.s32 %s27, 2
        // Predicated region
        $region101: #{tpu_custom_call.1} parent=99 // pred_check
          %p9759 = pneg %p334
        $region102: #{tpu_custom_call.1} parent=99 // pred_check_branch
          %9761 = sbr.rel (%p9759) target = $region104
        $region103: #{tpu_custom_call.1} parent=99 // pred_region
          %s9762 = sand.u32 %s319, 1
          %s9763 = scalar_lea.sflag [#allocation6], %s9762
          %s9764 = sand.u32 %s319, 1
          %s9765 = smul.addr %s9764, 4
          %s9766 = scalar_lea.vmem [#allocation13], %s9765
          %9767 = dma.done %s9763, 64
        $region104: #{tpu_custom_call.1} parent=99 // pred_fallthru
          _
      $region100: #{tpu_custom_call.1} parent=5 // pred_fallthru
        _
    $region6: #{tpu_custom_call.1} parent=1 // loop_footer
      %s31 = sadd.s32 1, %s27
    $region7: #{tpu_custom_call.1} parent=1 // loop_footer_branch
      %26 = sbr.rel target = $region3
    $region8: #{tpu_custom_call.1} parent=1 // loop_exit
      _
    %9768 = vsyncpa [#allocation5], 1
    %s9769 = scalar_lea.sflag [#allocation5], 1
    %9770 = vsyncpa %s9769, 1
    %9771 = vsyncpa [#allocation8], 1
    %9772 = vsyncpa [#allocation11], 1
    %9773 = vsyncpa [#allocation6], 1
    %s9774 = scalar_lea.sflag [#allocation6], 1
    %9775 = vsyncpa %s9774, 1

</llo_original>
